<compile_context>
chip_gen: v7x
topology: tpu7x:2x2x1
jax: 0.10.0
libtpu: 0.0.40
codegen_flags: <defaults>
</compile_context>

<pallas_src>
from typing import NamedTuple

import jax
import jax.numpy as jnp
from jax.experimental import pallas as pl
from jax.experimental.pallas import tpu as pltpu


class Config(NamedTuple):
    vocab_size: int
    n_embed: int
    n_head: int
    n_layer: int
    block_size: int


def _round_up(x, m):
    return ((x + m - 1) // m) * m


def _cross_entropy(logits, targets):
    """F.cross_entropy equivalent (plain-JAX scalar reduction, outside the kernel)."""
    V = logits.shape[-1]
    lg = logits.reshape(-1, V).astype(jnp.float32)
    tg = targets.reshape(-1)
    m = jnp.max(lg, axis=-1, keepdims=True)
    logz = jnp.log(jnp.sum(jnp.exp(lg - m), axis=-1)) + m[:, 0]
    gold = jnp.take_along_axis(lg, tg[:, None], axis=-1)[:, 0]
    return jnp.mean(logz - gold)


def init_params(key, cfg: Config):
    """Random parameters.  Matmul weights are stored pre-transposed (in, out) and
    cast to bf16; a real PyTorch checkpoint's nn.Linear weights (out, in) would be
    transposed the same way when packing."""
    C, L = cfg.n_embed, cfg.n_layer
    Vp = _round_up(cfg.vocab_size, 128)
    ks = jax.random.split(key, 17)

    def w(k, shape, std=0.02):
        return jax.random.normal(k, shape, jnp.float32) * std

    return {
        "tok_tab": w(ks[0], (Vp, C)).astype(jnp.bfloat16),            # nn.Embedding(vocab, C)
        "pos_tab": w(ks[1], (cfg.block_size, C)).astype(jnp.bfloat16),
        "ln1_g": 1.0 + w(ks[2], (L, C), 0.05),
        "ln1_b": w(ks[3], (L, C), 0.05),
        # Fused [Wq | Wk | Wv] for ALL heads: (C, 3C), lane-dense.
        "wqkv": w(ks[4], (L, C, 3 * C)).astype(jnp.bfloat16),
        "wo": w(ks[5], (L, C, C)).astype(jnp.bfloat16),               # MHA out proj
        "bo": w(ks[6], (L, C), 0.02),
        "ln2_g": 1.0 + w(ks[7], (L, C), 0.05),
        "ln2_b": w(ks[8], (L, C), 0.05),
        "w1": w(ks[9], (L, C, C)).astype(jnp.bfloat16),               # FFN Linear 1
        "b1": w(ks[10], (L, C), 0.02),
        "w2": w(ks[11], (L, C, C)).astype(jnp.bfloat16),              # FFN Linear 2
        "b2": w(ks[12], (L, C), 0.02),
        "lnf_g": 1.0 + w(ks[13], (1, C), 0.05),
        "lnf_b": w(ks[14], (1, C), 0.05),
        "wlm": w(ks[15], (C, Vp)).astype(jnp.bfloat16),               # lm_head (padded lanes)
        "blm": w(ks[16], (1, Vp), 0.02),
    }


def bigram_lm_forward(params, idx, cfg: Config, targets=None):
    """Pallas forward of BigramLanguageModel.  Returns (logits, loss)."""
    B, T = idx.shape
    C, nh, L = cfg.n_embed, cfg.n_head, cfg.n_layer
    hd = C // nh
    V = cfg.vocab_size
    Vp = _round_up(V, 128)
    BT = B * T
    assert T <= cfg.block_size
    # NOTE: the reference module scales by n_embed**-0.5 (C of the *input*), not
    # head_size**-0.5 -- kept as-is, folded onto q.
    scale = float(C) ** -0.5

    idx_flat = idx.reshape(BT, 1).astype(jnp.int32)
    tril = jnp.tril(jnp.ones((T, T), dtype=bool))
    # Additive causal mask, hoisted out of the kernel body (DMA'd once).
    causal_mask = jnp.where(tril, 0.0, -1e30).astype(jnp.float32)

    def kernel(idx_ref, mask_ref, tok_ref, pos_ref,
               ln1g_ref, ln1b_ref, wqkv_ref, wo_ref, bo_ref,
               ln2g_ref, ln2b_ref, w1_ref, b1_ref, w2_ref, b2_ref,
               lnfg_ref, lnfb_ref, wlm_ref, blm_ref,
               logits_ref, x_ref):
        l = pl.program_id(0)

        def layer_norm(z, g, b):
            mu = jnp.mean(z, axis=-1, keepdims=True)
            var = jnp.mean(jnp.square(z - mu), axis=-1, keepdims=True)
            return (z - mu) * jax.lax.rsqrt(var + 1e-5) * g + b

        # ---- prologue (grid step 0): token + position embeddings -> residual ----
        @pl.when(l == 0)
        def _():
            ids = idx_ref[...]                                             # (BT, 1) i32
            onehot = jax.lax.broadcasted_iota(jnp.int32, (BT, Vp), 1) == ids
            tok = jnp.dot(onehot.astype(jnp.bfloat16), tok_ref[...],
                          preferred_element_type=jnp.float32)              # (BT, C)
            pos = pos_ref[...].astype(jnp.float32)                         # (T, C)
            x0 = tok.reshape(B, T, C) + pos[None, :, :]
            x_ref[...] = x0.reshape(BT, C)

        # ---- transformer block `l` (weights for layer l streamed into VMEM) ----
        x = x_ref[...]                                                     # (BT, C) f32

        h = layer_norm(x, ln1g_ref[l], ln1b_ref[l])
        qkv = jnp.dot(h.astype(jnp.bfloat16), wqkv_ref[0],
                      preferred_element_type=jnp.float32)                  # (BT, 3C)
        q = (qkv[:, 0:C] * scale).reshape(B, T, C)                         # scale folded onto q
        k = qkv[:, C:2 * C].reshape(B, T, C)
        v = qkv[:, 2 * C:3 * C].reshape(B, T, C)
        causal = mask_ref[...]                                             # (T, T) additive

        heads = []
        for hh in range(nh):
            sl = slice(hh * hd, (hh + 1) * hd)
            qh = q[:, :, sl].astype(jnp.bfloat16)
            kh = k[:, :, sl].astype(jnp.bfloat16)
            vh = v[:, :, sl].astype(jnp.bfloat16)
            s = jnp.einsum("btd,bsd->bts", qh, kh,
                           preferred_element_type=jnp.float32)             # (B, T, T)
            s = s + causal[None, :, :]
            m = jnp.max(s, axis=-1, keepdims=True)
            p = jnp.exp(s - m)
            denom = jnp.sum(p, axis=-1, keepdims=True)
            attn = p * pl.reciprocal(denom, approx=True)
            # TODO(synk): training-mode dropout (p=0.2) on `attn` not implemented.
            heads.append(jnp.einsum("bts,bsd->btd", attn.astype(jnp.bfloat16), vh,
                                    preferred_element_type=jnp.float32))
        att = jnp.concatenate(heads, axis=-1).reshape(BT, C)               # (BT, C) f32
        att = jnp.dot(att.astype(jnp.bfloat16), wo_ref[0],
                      preferred_element_type=jnp.float32) + bo_ref[l]
        # TODO(synk): training-mode dropout after the projection not implemented.
        x = x + att                                                        # residual 1

        h2 = layer_norm(x, ln2g_ref[l], ln2b_ref[l])
        f = jnp.dot(h2.astype(jnp.bfloat16), w1_ref[0],
                    preferred_element_type=jnp.float32) + b1_ref[l]
        f = jnp.maximum(f, 0.0)
        f = jnp.dot(f.astype(jnp.bfloat16), w2_ref[0],
                    preferred_element_type=jnp.float32) + b2_ref[l]
        x = x + f                                                          # residual 2
        x_ref[...] = x

        # ---- epilogue (last grid step): final LayerNorm + lm_head ----
        @pl.when(l == pl.num_programs(0) - 1)
        def _():
            hf = layer_norm(x, lnfg_ref[0], lnfb_ref[0])
            logits_ref[...] = jnp.dot(hf.astype(jnp.bfloat16), wlm_ref[...],
                                      preferred_element_type=jnp.float32) + blm_ref[0]

    grid_spec = pltpu.PrefetchScalarGridSpec(
        num_scalar_prefetch=0,
        grid=(L,),
        in_specs=[
            pl.BlockSpec((BT, 1), lambda l: (0, 0)),            # token ids (flattened)
            pl.BlockSpec((T, T), lambda l: (0, 0)),             # additive causal mask
            pl.BlockSpec((Vp, C), lambda l: (0, 0)),            # token embedding table
            pl.BlockSpec((T, C), lambda l: (0, 0)),             # first T rows of pos table
            pl.BlockSpec((L, C), lambda l: (0, 0)),             # ln1 gamma (resident)
            pl.BlockSpec((L, C), lambda l: (0, 0)),             # ln1 beta
            pl.BlockSpec((1, C, 3 * C), lambda l: (l, 0, 0)),   # fused Wq|Wk|Wv (streamed)
            pl.BlockSpec((1, C, C), lambda l: (l, 0, 0)),       # attn out proj (streamed)
            pl.BlockSpec((L, C), lambda l: (0, 0)),             # attn out bias
            pl.BlockSpec((L, C), lambda l: (0, 0)),             # ln2 gamma
            pl.BlockSpec((L, C), lambda l: (0, 0)),             # ln2 beta
            pl.BlockSpec((1, C, C), lambda l: (l, 0, 0)),       # ffn W1 (streamed)
            pl.BlockSpec((L, C), lambda l: (0, 0)),             # ffn b1
            pl.BlockSpec((1, C, C), lambda l: (l, 0, 0)),       # ffn W2 (streamed)
            pl.BlockSpec((L, C), lambda l: (0, 0)),             # ffn b2
            pl.BlockSpec((1, C), lambda l: (0, 0)),             # final ln gamma
            pl.BlockSpec((1, C), lambda l: (0, 0)),             # final ln beta
            pl.BlockSpec((C, Vp), lambda l: (0, 0)),            # lm_head weight (lane-dense pad)
            pl.BlockSpec((1, Vp), lambda l: (0, 0)),            # lm_head bias
        ],
        out_specs=pl.BlockSpec((BT, Vp), lambda l: (0, 0)),
        scratch_shapes=[pltpu.VMEM((BT, C), jnp.float32)],       # residual stream
    )

    logits_pad = pl.pallas_call(
        kernel,
        out_shape=jax.ShapeDtypeStruct((BT, Vp), jnp.float32),
        grid_spec=grid_spec,
        compiler_params=pltpu.CompilerParams(
            # Layers are strictly sequential (residual carried in VMEM scratch).
            dimension_semantics=("arbitrary",),
        ),
    )(idx_flat, causal_mask, params["tok_tab"], params["pos_tab"],
      params["ln1_g"], params["ln1_b"], params["wqkv"], params["wo"], params["bo"],
      params["ln2_g"], params["ln2_b"], params["w1"], params["b1"],
      params["w2"], params["b2"],
      params["lnf_g"], params["lnf_b"], params["wlm"], params["blm"])

    logits = logits_pad[:, :V].reshape(B, T, V)
    if targets is None:
        return logits, None
    return logits, _cross_entropy(logits, targets)


def reference_forward(params, idx, cfg: Config, targets=None):
    """Pure-JAX mixed-precision port of the PyTorch forward (same bf16 MXU operands,
    f32 accumulation / LN / softmax as the kernel; exact division in softmax)."""
    B, T = idx.shape
    C, nh, L = cfg.n_embed, cfg.n_head, cfg.n_layer
    hd = C // nh
    V = cfg.vocab_size
    scale = float(C) ** -0.5
    tril = jnp.tril(jnp.ones((T, T), dtype=bool))

    def ln(z, g, b):
        mu = jnp.mean(z, axis=-1, keepdims=True)
        var = jnp.mean(jnp.square(z - mu), axis=-1, keepdims=True)
        return (z - mu) * jax.lax.rsqrt(var + 1e-5) * g + b

    tok = jnp.take(params["tok_tab"], idx, axis=0).astype(jnp.float32)
    pos = params["pos_tab"][:T].astype(jnp.float32)
    x = tok + pos[None]

    for l in range(L):
        h = ln(x, params["ln1_g"][l], params["ln1_b"][l])
        qkv = jnp.einsum("btc,cd->btd", h.astype(jnp.bfloat16), params["wqkv"][l],
                         preferred_element_type=jnp.float32)
        q = qkv[..., :C] * scale
        k = qkv[..., C:2 * C]
        v = qkv[..., 2 * C:]
        heads = []
        for hh in range(nh):
            sl = slice(hh * hd, (hh + 1) * hd)
            qh = q[..., sl].astype(jnp.bfloat16)
            kh = k[..., sl].astype(jnp.bfloat16)
            vh = v[..., sl].astype(jnp.bfloat16)
            s = jnp.einsum("btd,bsd->bts", qh, kh, preferred_element_type=jnp.float32)
            s = jnp.where(tril[None], s, -jnp.inf)
            m = jnp.max(s, axis=-1, keepdims=True)
            p = jnp.exp(s - m)
            attn = p / jnp.sum(p, axis=-1, keepdims=True)
            heads.append(jnp.einsum("bts,bsd->btd", attn.astype(jnp.bfloat16), vh,
                                    preferred_element_type=jnp.float32))
        att = jnp.concatenate(heads, axis=-1)
        att = jnp.einsum("btc,cd->btd", att.astype(jnp.bfloat16), params["wo"][l],
                         preferred_element_type=jnp.float32) + params["bo"][l]
        x = x + att
        h2 = ln(x, params["ln2_g"][l], params["ln2_b"][l])
        f = jnp.einsum("btc,cd->btd", h2.astype(jnp.bfloat16), params["w1"][l],
                       preferred_element_type=jnp.float32) + params["b1"][l]
        f = jnp.maximum(f, 0.0)
        f = jnp.einsum("btc,cd->btd", f.astype(jnp.bfloat16), params["w2"][l],
                       preferred_element_type=jnp.float32) + params["b2"][l]
        x = x + f

    x = ln(x, params["lnf_g"][0], params["lnf_b"][0])
    logits = jnp.einsum("btc,cv->btv", x.astype(jnp.bfloat16), params["wlm"],
                        preferred_element_type=jnp.float32) + params["blm"][0]
    logits = logits[..., :V]
    if targets is None:
        return logits, None
    return logits, _cross_entropy(logits, targets)


if __name__ == "__main__":
    cfg = Config(vocab_size=65, n_embed=384, n_head=6, n_layer=6, block_size=256)
    B, T = 2, 32  # small batch / short sequence (T <= block_size)

    key = jax.random.PRNGKey(0)
    kp, ki, kt = jax.random.split(key, 3)
    params = init_params(kp, cfg)
    idx = jax.random.randint(ki, (B, T), 0, cfg.vocab_size, dtype=jnp.int32)
    targets = jax.random.randint(kt, (B, T), 0, cfg.vocab_size, dtype=jnp.int32)

    logits, loss = bigram_lm_forward(params, idx, cfg, targets=targets)
    logits = jax.block_until_ready(logits)
    loss = jax.block_until_ready(loss)

    ref_logits, ref_loss = reference_forward(params, idx, cfg, targets=targets)

    assert logits.shape == (B, T, cfg.vocab_size)
    max_err = float(jnp.max(jnp.abs(logits - ref_logits)))
    assert max_err < 2e-2, f"max abs logits err = {max_err}"
    assert abs(float(loss) - float(ref_loss)) < 2e-2, (
        f"loss mismatch: {float(loss)} vs {float(ref_loss)}"
    )

    print("KERNEL_OK")
</pallas_src>

<mosaic_0001>
module attributes {stable_mosaic.version = 11 : i64} {
  func.func @kernel(%arg0: i32, %arg1: memref<64x1xi32, #tpu.memory_space<vmem>>, %arg2: memref<32x32xf32, #tpu.memory_space<vmem>>, %arg3: memref<128x384xbf16, #tpu.memory_space<vmem>>, %arg4: memref<32x384xbf16, #tpu.memory_space<vmem>>, %arg5: memref<6x384xf32, #tpu.memory_space<vmem>>, %arg6: memref<6x384xf32, #tpu.memory_space<vmem>>, %arg7: memref<1x384x1152xbf16, #tpu.memory_space<vmem>>, %arg8: memref<1x384x384xbf16, #tpu.memory_space<vmem>>, %arg9: memref<6x384xf32, #tpu.memory_space<vmem>>, %arg10: memref<6x384xf32, #tpu.memory_space<vmem>>, %arg11: memref<6x384xf32, #tpu.memory_space<vmem>>, %arg12: memref<1x384x384xbf16, #tpu.memory_space<vmem>>, %arg13: memref<6x384xf32, #tpu.memory_space<vmem>>, %arg14: memref<1x384x384xbf16, #tpu.memory_space<vmem>>, %arg15: memref<6x384xf32, #tpu.memory_space<vmem>>, %arg16: memref<1x384xf32, #tpu.memory_space<vmem>>, %arg17: memref<1x384xf32, #tpu.memory_space<vmem>>, %arg18: memref<384x128xbf16, #tpu.memory_space<vmem>>, %arg19: memref<1x128xf32, #tpu.memory_space<vmem>>, %arg20: memref<64x128xf32, #tpu.memory_space<vmem>>, %arg21: memref<64x384xf32, #tpu.memory_space<vmem>>) attributes {dimension_semantics = [#tpu.dimension_semantics<arbitrary>], iteration_bounds = array<i64: 6>, scalar_prefetch = 0 : i64, scratch_operands = 1 : i64, tpu.core_type = #tpu.core_type<tc>, window_params = [{pipeline_mode = #tpu.pipeline_mode<synchronous>, transform_indices = @transform_0, window_bounds = array<i64: 64, 1>}, {pipeline_mode = #tpu.pipeline_mode<synchronous>, transform_indices = @transform_1, window_bounds = array<i64: 32, 32>}, {pipeline_mode = #tpu.pipeline_mode<synchronous>, transform_indices = @transform_2, window_bounds = array<i64: 128, 384>}, {transform_indices = @transform_3, window_bounds = array<i64: 32, 384>}, {pipeline_mode = #tpu.pipeline_mode<synchronous>, transform_indices = @transform_4, window_bounds = array<i64: 6, 384>}, {pipeline_mode = #tpu.pipeline_mode<synchronous>, transform_indices = @transform_5, window_bounds = array<i64: 6, 384>}, {transform_indices = @transform_6, window_bounds = array<i64: 1, 384, 1152>}, {transform_indices = @transform_7, window_bounds = array<i64: 1, 384, 384>}, {pipeline_mode = #tpu.pipeline_mode<synchronous>, transform_indices = @transform_8, window_bounds = array<i64: 6, 384>}, {pipeline_mode = #tpu.pipeline_mode<synchronous>, transform_indices = @transform_9, window_bounds = array<i64: 6, 384>}, {pipeline_mode = #tpu.pipeline_mode<synchronous>, transform_indices = @transform_10, window_bounds = array<i64: 6, 384>}, {transform_indices = @transform_11, window_bounds = array<i64: 1, 384, 384>}, {pipeline_mode = #tpu.pipeline_mode<synchronous>, transform_indices = @transform_12, window_bounds = array<i64: 6, 384>}, {transform_indices = @transform_13, window_bounds = array<i64: 1, 384, 384>}, {pipeline_mode = #tpu.pipeline_mode<synchronous>, transform_indices = @transform_14, window_bounds = array<i64: 6, 384>}, {pipeline_mode = #tpu.pipeline_mode<synchronous>, transform_indices = @transform_15, window_bounds = array<i64: 1, 384>}, {pipeline_mode = #tpu.pipeline_mode<synchronous>, transform_indices = @transform_16, window_bounds = array<i64: 1, 384>}, {pipeline_mode = #tpu.pipeline_mode<synchronous>, transform_indices = @transform_17, window_bounds = array<i64: 384, 128>}, {pipeline_mode = #tpu.pipeline_mode<synchronous>, transform_indices = @transform_18, window_bounds = array<i64: 1, 128>}, {pipeline_mode = #tpu.pipeline_mode<synchronous>, transform_indices = @transform_19, window_bounds = array<i64: 64, 128>}]} {
    %c0_i32 = arith.constant 0 : i32
    %0 = arith.cmpi eq, %arg0, %c0_i32 : i32
    %1 = arith.extui %0 : i1 to i32
    %c0_i32_0 = arith.constant 0 : i32
    %2 = arith.cmpi ne, %1, %c0_i32_0 : i32
    scf.if %2 {
      %c0_65 = arith.constant 0 : index
      %c0_66 = arith.constant 0 : index
      %249 = vector.load %arg1[%c0_65, %c0_66] : memref<64x1xi32, #tpu.memory_space<vmem>>, vector<64x1xi32>
      %250 = tpu.iota {dimensions = array<i32: 1>} : vector<64x128xi32>
      %251 = vector.broadcast %249 : vector<64x1xi32> to vector<64x128xi32>
      %252 = arith.cmpi eq, %250, %251 : vector<64x128xi32>
      %253 = arith.extui %252 : vector<64x128xi1> to vector<64x128xi32>
      %254 = arith.sitofp %253 : vector<64x128xi32> to vector<64x128xf32>
      %255 = arith.truncf %254 : vector<64x128xf32> to vector<64x128xbf16>
      %c0_67 = arith.constant 0 : index
      %c0_68 = arith.constant 0 : index
      %256 = vector.load %arg3[%c0_67, %c0_68] : memref<128x384xbf16, #tpu.memory_space<vmem>>, vector<128x384xbf16>
      %cst_69 = arith.constant dense<0.000000e+00> : vector<64x384xf32>
      %257 = tpu.matmul %255, %256, %cst_69 {dimension_numbers = #tpu.dot_dimension_numbers<[1], [0], [0], [1], [0, 0, 1, 1], [], []>} : vector<64x128xbf16>, vector<128x384xbf16>, vector<64x384xf32> -> vector<64x384xf32>
      %c0_70 = arith.constant 0 : index
      %c0_71 = arith.constant 0 : index
      %258 = vector.load %arg4[%c0_70, %c0_71] : memref<32x384xbf16, #tpu.memory_space<vmem>>, vector<32x384xbf16>
      %259 = arith.extf %258 : vector<32x384xbf16> to vector<32x384xf32>
      %260 = vector.shape_cast %257 : vector<64x384xf32> to vector<2x32x384xf32>
      %261 = vector.shape_cast %259 : vector<32x384xf32> to vector<1x32x384xf32>
      %262 = vector.broadcast %261 : vector<1x32x384xf32> to vector<2x32x384xf32>
      %263 = arith.addf %260, %262 : vector<2x32x384xf32>
      %264 = vector.shape_cast %263 : vector<2x32x384xf32> to vector<64x384xf32>
      %c0_72 = arith.constant 0 : index
      %c0_73 = arith.constant 0 : index
      %265 = vector.load %arg21[%c0_72, %c0_73] : memref<64x384xf32, #tpu.memory_space<vmem>>, vector<64x384xf32>
      tpu.vector_store %arg21[%c0_72, %c0_73], %264 {strides = array<i32>} : memref<64x384xf32, #tpu.memory_space<vmem>>, vector<64x384xf32>,
    } else {
    }
    %c0 = arith.constant 0 : index
    %c0_1 = arith.constant 0 : index
    %3 = vector.load %arg21[%c0, %c0_1] : memref<64x384xf32, #tpu.memory_space<vmem>>, vector<64x384xf32>
    %4 = arith.index_cast %arg0 : i32 to index
    %c0_2 = arith.constant 0 : index
    %5 = vector.load %arg5[%4, %c0_2] : memref<6x384xf32, #tpu.memory_space<vmem>>, vector<1x384xf32>
    %6 = vector.shape_cast %5 : vector<1x384xf32> to vector<384xf32>
    %7 = arith.index_cast %arg0 : i32 to index
    %c0_3 = arith.constant 0 : index
    %8 = vector.load %arg6[%7, %c0_3] : memref<6x384xf32, #tpu.memory_space<vmem>>, vector<1x384xf32>
    %9 = vector.shape_cast %8 : vector<1x384xf32> to vector<384xf32>
    %cst = arith.constant dense<0.000000e+00> : vector<64xf32>
    %10 = vector.multi_reduction <add>, %3, %cst [1] : vector<64x384xf32> to vector<64xf32>
    %11 = vector.shape_cast %10 : vector<64xf32> to vector<64x1xf32>
    %cst_4 = arith.constant 3.840000e+02 : f32
    %12 = vector.broadcast %cst_4 : f32 to vector<64x1xf32>
    %13 = arith.divf %11, %12 : vector<64x1xf32>
    %14 = vector.broadcast %13 : vector<64x1xf32> to vector<64x384xf32>
    %15 = arith.subf %3, %14 : vector<64x384xf32>
    %16 = arith.mulf %15, %15 : vector<64x384xf32>
    %cst_5 = arith.constant dense<0.000000e+00> : vector<64xf32>
    %17 = vector.multi_reduction <add>, %16, %cst_5 [1] : vector<64x384xf32> to vector<64xf32>
    %18 = vector.shape_cast %17 : vector<64xf32> to vector<64x1xf32>
    %cst_6 = arith.constant 3.840000e+02 : f32
    %19 = vector.broadcast %cst_6 : f32 to vector<64x1xf32>
    %20 = arith.divf %18, %19 : vector<64x1xf32>
    %21 = vector.broadcast %13 : vector<64x1xf32> to vector<64x384xf32>
    %22 = arith.subf %3, %21 : vector<64x384xf32>
    %cst_7 = arith.constant 9.99999974E-6 : f32
    %23 = vector.broadcast %cst_7 : f32 to vector<64x1xf32>
    %24 = arith.addf %20, %23 : vector<64x1xf32>
    %25 = math.rsqrt %24 : vector<64x1xf32>
    %26 = vector.broadcast %25 : vector<64x1xf32> to vector<64x384xf32>
    %27 = arith.mulf %22, %26 : vector<64x384xf32>
    %28 = vector.shape_cast %6 : vector<384xf32> to vector<1x384xf32>
    %29 = vector.broadcast %28 : vector<1x384xf32> to vector<64x384xf32>
    %30 = arith.mulf %27, %29 : vector<64x384xf32>
    %31 = vector.shape_cast %9 : vector<384xf32> to vector<1x384xf32>
    %32 = vector.broadcast %31 : vector<1x384xf32> to vector<64x384xf32>
    %33 = arith.addf %30, %32 : vector<64x384xf32>
    %34 = arith.truncf %33 : vector<64x384xf32> to vector<64x384xbf16>
    %c0_8 = arith.constant 0 : index
    %c0_9 = arith.constant 0 : index
    %c0_10 = arith.constant 0 : index
    %35 = vector.load %arg7[%c0_8, %c0_9, %c0_10] : memref<1x384x1152xbf16, #tpu.memory_space<vmem>>, vector<1x384x1152xbf16>
    %36 = vector.shape_cast %35 : vector<1x384x1152xbf16> to vector<384x1152xbf16>
    %cst_11 = arith.constant dense<0.000000e+00> : vector<64x1152xf32>
    %37 = tpu.matmul %34, %36, %cst_11 {dimension_numbers = #tpu.dot_dimension_numbers<[1], [0], [0], [1], [0, 0, 1, 1], [], []>} : vector<64x384xbf16>, vector<384x1152xbf16>, vector<64x1152xf32> -> vector<64x1152xf32>
    %38 = vector.extract_strided_slice %37 {offsets = [0, 0], sizes = [64, 384], strides = [1, 1]} : vector<64x1152xf32> to vector<64x384xf32>
    %cst_12 = arith.constant 0.0510310382 : f32
    %39 = vector.broadcast %cst_12 : f32 to vector<64x384xf32>
    %40 = arith.mulf %38, %39 : vector<64x384xf32>
    %41 = vector.shape_cast %40 : vector<64x384xf32> to vector<2x32x384xf32>
    %42 = vector.extract_strided_slice %37 {offsets = [0, 384], sizes = [64, 384], strides = [1, 1]} : vector<64x1152xf32> to vector<64x384xf32>
    %43 = vector.shape_cast %42 : vector<64x384xf32> to vector<2x32x384xf32>
    %44 = vector.extract_strided_slice %37 {offsets = [0, 768], sizes = [64, 384], strides = [1, 1]} : vector<64x1152xf32> to vector<64x384xf32>
    %45 = vector.shape_cast %44 : vector<64x384xf32> to vector<2x32x384xf32>
    %c0_13 = arith.constant 0 : index
    %c0_14 = arith.constant 0 : index
    %46 = vector.load %arg2[%c0_13, %c0_14] : memref<32x32xf32, #tpu.memory_space<vmem>>, vector<32x32xf32>
    %47 = vector.extract_strided_slice %41 {offsets = [0, 0, 0], sizes = [2, 32, 64], strides = [1, 1, 1]} : vector<2x32x384xf32> to vector<2x32x64xf32>
    %48 = arith.truncf %47 : vector<2x32x64xf32> to vector<2x32x64xbf16>
    %49 = vector.extract_strided_slice %43 {offsets = [0, 0, 0], sizes = [2, 32, 64], strides = [1, 1, 1]} : vector<2x32x384xf32> to vector<2x32x64xf32>
    %50 = arith.truncf %49 : vector<2x32x64xf32> to vector<2x32x64xbf16>
    %51 = vector.extract_strided_slice %45 {offsets = [0, 0, 0], sizes = [2, 32, 64], strides = [1, 1, 1]} : vector<2x32x384xf32> to vector<2x32x64xf32>
    %52 = arith.truncf %51 : vector<2x32x64xf32> to vector<2x32x64xbf16>
    "tpu.trace_start"() <{level = 10 : i32, message = "btd,bsd->bts"}> : () -> ()
    %cst_15 = arith.constant dense<0.000000e+00> : vector<2x32x32xf32>
    %53 = tpu.matmul %48, %50, %cst_15 {dimension_numbers = #tpu.dot_dimension_numbers<[2], [2], [1], [1], [0, 0, 0, 1, 1, 1], [0], [0]>} : vector<2x32x64xbf16>, vector<2x32x64xbf16>, vector<2x32x32xf32> -> vector<2x32x32xf32>
    "tpu.trace_stop"() : () -> ()
    %54 = vector.shape_cast %46 : vector<32x32xf32> to vector<1x32x32xf32>
    %55 = vector.broadcast %54 : vector<1x32x32xf32> to vector<2x32x32xf32>
    %56 = arith.addf %53, %55 : vector<2x32x32xf32>
    %cst_16 = arith.constant dense<0xFF800000> : vector<2x32xf32>
    %57 = vector.multi_reduction <maximumf>, %56, %cst_16 [2] : vector<2x32x32xf32> to vector<2x32xf32>
    %58 = vector.shape_cast %57 : vector<2x32xf32> to vector<2x32x1xf32>
    %59 = vector.broadcast %58 : vector<2x32x1xf32> to vector<2x32x32xf32>
    %60 = arith.subf %56, %59 : vector<2x32x32xf32>
    %61 = math.exp %60 : vector<2x32x32xf32>
    %cst_17 = arith.constant dense<0.000000e+00> : vector<2x32xf32>
    %62 = vector.multi_reduction <add>, %61, %cst_17 [2] : vector<2x32x32xf32> to vector<2x32xf32>
    %63 = vector.shape_cast %62 : vector<2x32xf32> to vector<2x32x1xf32>
    %64 = tpu.reciprocal %63 {approx = true} : vector<2x32x1xf32> -> vector<2x32x1xf32>
    %65 = vector.broadcast %64 : vector<2x32x1xf32> to vector<2x32x32xf32>
    %66 = arith.mulf %61, %65 : vector<2x32x32xf32>
    %67 = arith.truncf %66 : vector<2x32x32xf32> to vector<2x32x32xbf16>
    "tpu.trace_start"() <{level = 10 : i32, message = "bts,bsd->btd"}> : () -> ()
    %cst_18 = arith.constant dense<0.000000e+00> : vector<2x32x64xf32>
    %68 = tpu.matmul %67, %52, %cst_18 {dimension_numbers = #tpu.dot_dimension_numbers<[2], [1], [1], [2], [0, 0, 0, 1, 1, 2], [0], [0]>} : vector<2x32x32xbf16>, vector<2x32x64xbf16>, vector<2x32x64xf32> -> vector<2x32x64xf32>
    "tpu.trace_stop"() : () -> ()
    %69 = vector.extract_strided_slice %41 {offsets = [0, 0, 64], sizes = [2, 32, 64], strides = [1, 1, 1]} : vector<2x32x384xf32> to vector<2x32x64xf32>
    %70 = arith.truncf %69 : vector<2x32x64xf32> to vector<2x32x64xbf16>
    %71 = vector.extract_strided_slice %43 {offsets = [0, 0, 64], sizes = [2, 32, 64], strides = [1, 1, 1]} : vector<2x32x384xf32> to vector<2x32x64xf32>
    %72 = arith.truncf %71 : vector<2x32x64xf32> to vector<2x32x64xbf16>
    %73 = vector.extract_strided_slice %45 {offsets = [0, 0, 64], sizes = [2, 32, 64], strides = [1, 1, 1]} : vector<2x32x384xf32> to vector<2x32x64xf32>
    %74 = arith.truncf %73 : vector<2x32x64xf32> to vector<2x32x64xbf16>
    "tpu.trace_start"() <{level = 10 : i32, message = "btd,bsd->bts"}> : () -> ()
    %cst_19 = arith.constant dense<0.000000e+00> : vector<2x32x32xf32>
    %75 = tpu.matmul %70, %72, %cst_19 {dimension_numbers = #tpu.dot_dimension_numbers<[2], [2], [1], [1], [0, 0, 0, 1, 1, 1], [0], [0]>} : vector<2x32x64xbf16>, vector<2x32x64xbf16>, vector<2x32x32xf32> -> vector<2x32x32xf32>
    "tpu.trace_stop"() : () -> ()
    %76 = vector.shape_cast %46 : vector<32x32xf32> to vector<1x32x32xf32>
    %77 = vector.broadcast %76 : vector<1x32x32xf32> to vector<2x32x32xf32>
    %78 = arith.addf %75, %77 : vector<2x32x32xf32>
    %cst_20 = arith.constant dense<0xFF800000> : vector<2x32xf32>
    %79 = vector.multi_reduction <maximumf>, %78, %cst_20 [2] : vector<2x32x32xf32> to vector<2x32xf32>
    %80 = vector.shape_cast %79 : vector<2x32xf32> to vector<2x32x1xf32>
    %81 = vector.broadcast %80 : vector<2x32x1xf32> to vector<2x32x32xf32>
    %82 = arith.subf %78, %81 : vector<2x32x32xf32>
    %83 = math.exp %82 : vector<2x32x32xf32>
    %cst_21 = arith.constant dense<0.000000e+00> : vector<2x32xf32>
    %84 = vector.multi_reduction <add>, %83, %cst_21 [2] : vector<2x32x32xf32> to vector<2x32xf32>
    %85 = vector.shape_cast %84 : vector<2x32xf32> to vector<2x32x1xf32>
    %86 = tpu.reciprocal %85 {approx = true} : vector<2x32x1xf32> -> vector<2x32x1xf32>
    %87 = vector.broadcast %86 : vector<2x32x1xf32> to vector<2x32x32xf32>
    %88 = arith.mulf %83, %87 : vector<2x32x32xf32>
    %89 = arith.truncf %88 : vector<2x32x32xf32> to vector<2x32x32xbf16>
    "tpu.trace_start"() <{level = 10 : i32, message = "bts,bsd->btd"}> : () -> ()
    %cst_22 = arith.constant dense<0.000000e+00> : vector<2x32x64xf32>
    %90 = tpu.matmul %89, %74, %cst_22 {dimension_numbers = #tpu.dot_dimension_numbers<[2], [1], [1], [2], [0, 0, 0, 1, 1, 2], [0], [0]>} : vector<2x32x32xbf16>, vector<2x32x64xbf16>, vector<2x32x64xf32> -> vector<2x32x64xf32>
    "tpu.trace_stop"() : () -> ()
    %91 = vector.extract_strided_slice %41 {offsets = [0, 0, 128], sizes = [2, 32, 64], strides = [1, 1, 1]} : vector<2x32x384xf32> to vector<2x32x64xf32>
    %92 = arith.truncf %91 : vector<2x32x64xf32> to vector<2x32x64xbf16>
    %93 = vector.extract_strided_slice %43 {offsets = [0, 0, 128], sizes = [2, 32, 64], strides = [1, 1, 1]} : vector<2x32x384xf32> to vector<2x32x64xf32>
    %94 = arith.truncf %93 : vector<2x32x64xf32> to vector<2x32x64xbf16>
    %95 = vector.extract_strided_slice %45 {offsets = [0, 0, 128], sizes = [2, 32, 64], strides = [1, 1, 1]} : vector<2x32x384xf32> to vector<2x32x64xf32>
    %96 = arith.truncf %95 : vector<2x32x64xf32> to vector<2x32x64xbf16>
    "tpu.trace_start"() <{level = 10 : i32, message = "btd,bsd->bts"}> : () -> ()
    %cst_23 = arith.constant dense<0.000000e+00> : vector<2x32x32xf32>
    %97 = tpu.matmul %92, %94, %cst_23 {dimension_numbers = #tpu.dot_dimension_numbers<[2], [2], [1], [1], [0, 0, 0, 1, 1, 1], [0], [0]>} : vector<2x32x64xbf16>, vector<2x32x64xbf16>, vector<2x32x32xf32> -> vector<2x32x32xf32>
    "tpu.trace_stop"() : () -> ()
    %98 = vector.shape_cast %46 : vector<32x32xf32> to vector<1x32x32xf32>
    %99 = vector.broadcast %98 : vector<1x32x32xf32> to vector<2x32x32xf32>
    %100 = arith.addf %97, %99 : vector<2x32x32xf32>
    %cst_24 = arith.constant dense<0xFF800000> : vector<2x32xf32>
    %101 = vector.multi_reduction <maximumf>, %100, %cst_24 [2] : vector<2x32x32xf32> to vector<2x32xf32>
    %102 = vector.shape_cast %101 : vector<2x32xf32> to vector<2x32x1xf32>
    %103 = vector.broadcast %102 : vector<2x32x1xf32> to vector<2x32x32xf32>
    %104 = arith.subf %100, %103 : vector<2x32x32xf32>
    %105 = math.exp %104 : vector<2x32x32xf32>
    %cst_25 = arith.constant dense<0.000000e+00> : vector<2x32xf32>
    %106 = vector.multi_reduction <add>, %105, %cst_25 [2] : vector<2x32x32xf32> to vector<2x32xf32>
    %107 = vector.shape_cast %106 : vector<2x32xf32> to vector<2x32x1xf32>
    %108 = tpu.reciprocal %107 {approx = true} : vector<2x32x1xf32> -> vector<2x32x1xf32>
    %109 = vector.broadcast %108 : vector<2x32x1xf32> to vector<2x32x32xf32>
    %110 = arith.mulf %105, %109 : vector<2x32x32xf32>
    %111 = arith.truncf %110 : vector<2x32x32xf32> to vector<2x32x32xbf16>
    "tpu.trace_start"() <{level = 10 : i32, message = "bts,bsd->btd"}> : () -> ()
    %cst_26 = arith.constant dense<0.000000e+00> : vector<2x32x64xf32>
    %112 = tpu.matmul %111, %96, %cst_26 {dimension_numbers = #tpu.dot_dimension_numbers<[2], [1], [1], [2], [0, 0, 0, 1, 1, 2], [0], [0]>} : vector<2x32x32xbf16>, vector<2x32x64xbf16>, vector<2x32x64xf32> -> vector<2x32x64xf32>
    "tpu.trace_stop"() : () -> ()
    %113 = vector.extract_strided_slice %41 {offsets = [0, 0, 192], sizes = [2, 32, 64], strides = [1, 1, 1]} : vector<2x32x384xf32> to vector<2x32x64xf32>
    %114 = arith.truncf %113 : vector<2x32x64xf32> to vector<2x32x64xbf16>
    %115 = vector.extract_strided_slice %43 {offsets = [0, 0, 192], sizes = [2, 32, 64], strides = [1, 1, 1]} : vector<2x32x384xf32> to vector<2x32x64xf32>
    %116 = arith.truncf %115 : vector<2x32x64xf32> to vector<2x32x64xbf16>
    %117 = vector.extract_strided_slice %45 {offsets = [0, 0, 192], sizes = [2, 32, 64], strides = [1, 1, 1]} : vector<2x32x384xf32> to vector<2x32x64xf32>
    %118 = arith.truncf %117 : vector<2x32x64xf32> to vector<2x32x64xbf16>
    "tpu.trace_start"() <{level = 10 : i32, message = "btd,bsd->bts"}> : () -> ()
    %cst_27 = arith.constant dense<0.000000e+00> : vector<2x32x32xf32>
    %119 = tpu.matmul %114, %116, %cst_27 {dimension_numbers = #tpu.dot_dimension_numbers<[2], [2], [1], [1], [0, 0, 0, 1, 1, 1], [0], [0]>} : vector<2x32x64xbf16>, vector<2x32x64xbf16>, vector<2x32x32xf32> -> vector<2x32x32xf32>
    "tpu.trace_stop"() : () -> ()
    %120 = vector.shape_cast %46 : vector<32x32xf32> to vector<1x32x32xf32>
    %121 = vector.broadcast %120 : vector<1x32x32xf32> to vector<2x32x32xf32>
    %122 = arith.addf %119, %121 : vector<2x32x32xf32>
    %cst_28 = arith.constant dense<0xFF800000> : vector<2x32xf32>
    %123 = vector.multi_reduction <maximumf>, %122, %cst_28 [2] : vector<2x32x32xf32> to vector<2x32xf32>
    %124 = vector.shape_cast %123 : vector<2x32xf32> to vector<2x32x1xf32>
    %125 = vector.broadcast %124 : vector<2x32x1xf32> to vector<2x32x32xf32>
    %126 = arith.subf %122, %125 : vector<2x32x32xf32>
    %127 = math.exp %126 : vector<2x32x32xf32>
    %cst_29 = arith.constant dense<0.000000e+00> : vector<2x32xf32>
    %128 = vector.multi_reduction <add>, %127, %cst_29 [2] : vector<2x32x32xf32> to vector<2x32xf32>
    %129 = vector.shape_cast %128 : vector<2x32xf32> to vector<2x32x1xf32>
    %130 = tpu.reciprocal %129 {approx = true} : vector<2x32x1xf32> -> vector<2x32x1xf32>
    %131 = vector.broadcast %130 : vector<2x32x1xf32> to vector<2x32x32xf32>
    %132 = arith.mulf %127, %131 : vector<2x32x32xf32>
    %133 = arith.truncf %132 : vector<2x32x32xf32> to vector<2x32x32xbf16>
    "tpu.trace_start"() <{level = 10 : i32, message = "bts,bsd->btd"}> : () -> ()
    %cst_30 = arith.constant dense<0.000000e+00> : vector<2x32x64xf32>
    %134 = tpu.matmul %133, %118, %cst_30 {dimension_numbers = #tpu.dot_dimension_numbers<[2], [1], [1], [2], [0, 0, 0, 1, 1, 2], [0], [0]>} : vector<2x32x32xbf16>, vector<2x32x64xbf16>, vector<2x32x64xf32> -> vector<2x32x64xf32>
    "tpu.trace_stop"() : () -> ()
    %135 = vector.extract_strided_slice %41 {offsets = [0, 0, 256], sizes = [2, 32, 64], strides = [1, 1, 1]} : vector<2x32x384xf32> to vector<2x32x64xf32>
    %136 = arith.truncf %135 : vector<2x32x64xf32> to vector<2x32x64xbf16>
    %137 = vector.extract_strided_slice %43 {offsets = [0, 0, 256], sizes = [2, 32, 64], strides = [1, 1, 1]} : vector<2x32x384xf32> to vector<2x32x64xf32>
    %138 = arith.truncf %137 : vector<2x32x64xf32> to vector<2x32x64xbf16>
    %139 = vector.extract_strided_slice %45 {offsets = [0, 0, 256], sizes = [2, 32, 64], strides = [1, 1, 1]} : vector<2x32x384xf32> to vector<2x32x64xf32>
    %140 = arith.truncf %139 : vector<2x32x64xf32> to vector<2x32x64xbf16>
    "tpu.trace_start"() <{level = 10 : i32, message = "btd,bsd->bts"}> : () -> ()
    %cst_31 = arith.constant dense<0.000000e+00> : vector<2x32x32xf32>
    %141 = tpu.matmul %136, %138, %cst_31 {dimension_numbers = #tpu.dot_dimension_numbers<[2], [2], [1], [1], [0, 0, 0, 1, 1, 1], [0], [0]>} : vector<2x32x64xbf16>, vector<2x32x64xbf16>, vector<2x32x32xf32> -> vector<2x32x32xf32>
    "tpu.trace_stop"() : () -> ()
    %142 = vector.shape_cast %46 : vector<32x32xf32> to vector<1x32x32xf32>
    %143 = vector.broadcast %142 : vector<1x32x32xf32> to vector<2x32x32xf32>
    %144 = arith.addf %141, %143 : vector<2x32x32xf32>
    %cst_32 = arith.constant dense<0xFF800000> : vector<2x32xf32>
    %145 = vector.multi_reduction <maximumf>, %144, %cst_32 [2] : vector<2x32x32xf32> to vector<2x32xf32>
    %146 = vector.shape_cast %145 : vector<2x32xf32> to vector<2x32x1xf32>
    %147 = vector.broadcast %146 : vector<2x32x1xf32> to vector<2x32x32xf32>
    %148 = arith.subf %144, %147 : vector<2x32x32xf32>
    %149 = math.exp %148 : vector<2x32x32xf32>
    %cst_33 = arith.constant dense<0.000000e+00> : vector<2x32xf32>
    %150 = vector.multi_reduction <add>, %149, %cst_33 [2] : vector<2x32x32xf32> to vector<2x32xf32>
    %151 = vector.shape_cast %150 : vector<2x32xf32> to vector<2x32x1xf32>
    %152 = tpu.reciprocal %151 {approx = true} : vector<2x32x1xf32> -> vector<2x32x1xf32>
    %153 = vector.broadcast %152 : vector<2x32x1xf32> to vector<2x32x32xf32>
    %154 = arith.mulf %149, %153 : vector<2x32x32xf32>
    %155 = arith.truncf %154 : vector<2x32x32xf32> to vector<2x32x32xbf16>
    "tpu.trace_start"() <{level = 10 : i32, message = "bts,bsd->btd"}> : () -> ()
    %cst_34 = arith.constant dense<0.000000e+00> : vector<2x32x64xf32>
    %156 = tpu.matmul %155, %140, %cst_34 {dimension_numbers = #tpu.dot_dimension_numbers<[2], [1], [1], [2], [0, 0, 0, 1, 1, 2], [0], [0]>} : vector<2x32x32xbf16>, vector<2x32x64xbf16>, vector<2x32x64xf32> -> vector<2x32x64xf32>
    "tpu.trace_stop"() : () -> ()
    %157 = vector.extract_strided_slice %41 {offsets = [0, 0, 320], sizes = [2, 32, 64], strides = [1, 1, 1]} : vector<2x32x384xf32> to vector<2x32x64xf32>
    %158 = arith.truncf %157 : vector<2x32x64xf32> to vector<2x32x64xbf16>
    %159 = vector.extract_strided_slice %43 {offsets = [0, 0, 320], sizes = [2, 32, 64], strides = [1, 1, 1]} : vector<2x32x384xf32> to vector<2x32x64xf32>
    %160 = arith.truncf %159 : vector<2x32x64xf32> to vector<2x32x64xbf16>
    %161 = vector.extract_strided_slice %45 {offsets = [0, 0, 320], sizes = [2, 32, 64], strides = [1, 1, 1]} : vector<2x32x384xf32> to vector<2x32x64xf32>
    %162 = arith.truncf %161 : vector<2x32x64xf32> to vector<2x32x64xbf16>
    "tpu.trace_start"() <{level = 10 : i32, message = "btd,bsd->bts"}> : () -> ()
    %cst_35 = arith.constant dense<0.000000e+00> : vector<2x32x32xf32>
    %163 = tpu.matmul %158, %160, %cst_35 {dimension_numbers = #tpu.dot_dimension_numbers<[2], [2], [1], [1], [0, 0, 0, 1, 1, 1], [0], [0]>} : vector<2x32x64xbf16>, vector<2x32x64xbf16>, vector<2x32x32xf32> -> vector<2x32x32xf32>
    "tpu.trace_stop"() : () -> ()
    %164 = vector.shape_cast %46 : vector<32x32xf32> to vector<1x32x32xf32>
    %165 = vector.broadcast %164 : vector<1x32x32xf32> to vector<2x32x32xf32>
    %166 = arith.addf %163, %165 : vector<2x32x32xf32>
    %cst_36 = arith.constant dense<0xFF800000> : vector<2x32xf32>
    %167 = vector.multi_reduction <maximumf>, %166, %cst_36 [2] : vector<2x32x32xf32> to vector<2x32xf32>
    %168 = vector.shape_cast %167 : vector<2x32xf32> to vector<2x32x1xf32>
    %169 = vector.broadcast %168 : vector<2x32x1xf32> to vector<2x32x32xf32>
    %170 = arith.subf %166, %169 : vector<2x32x32xf32>
    %171 = math.exp %170 : vector<2x32x32xf32>
    %cst_37 = arith.constant dense<0.000000e+00> : vector<2x32xf32>
    %172 = vector.multi_reduction <add>, %171, %cst_37 [2] : vector<2x32x32xf32> to vector<2x32xf32>
    %173 = vector.shape_cast %172 : vector<2x32xf32> to vector<2x32x1xf32>
    %174 = tpu.reciprocal %173 {approx = true} : vector<2x32x1xf32> -> vector<2x32x1xf32>
    %175 = vector.broadcast %174 : vector<2x32x1xf32> to vector<2x32x32xf32>
    %176 = arith.mulf %171, %175 : vector<2x32x32xf32>
    %177 = arith.truncf %176 : vector<2x32x32xf32> to vector<2x32x32xbf16>
    "tpu.trace_start"() <{level = 10 : i32, message = "bts,bsd->btd"}> : () -> ()
    %cst_38 = arith.constant dense<0.000000e+00> : vector<2x32x64xf32>
    %178 = tpu.matmul %177, %162, %cst_38 {dimension_numbers = #tpu.dot_dimension_numbers<[2], [1], [1], [2], [0, 0, 0, 1, 1, 2], [0], [0]>} : vector<2x32x32xbf16>, vector<2x32x64xbf16>, vector<2x32x64xf32> -> vector<2x32x64xf32>
    "tpu.trace_stop"() : () -> ()
    %179 = tpu.concatenate %68, %90, %112, %134, %156, %178 in 2 : vector<2x32x64xf32>, vector<2x32x64xf32>, vector<2x32x64xf32>, vector<2x32x64xf32>, vector<2x32x64xf32>, vector<2x32x64xf32> -> vector<2x32x384xf32>
    %180 = vector.shape_cast %179 : vector<2x32x384xf32> to vector<64x384xf32>
    %181 = arith.truncf %180 : vector<64x384xf32> to vector<64x384xbf16>
    %c0_39 = arith.constant 0 : index
    %c0_40 = arith.constant 0 : index
    %c0_41 = arith.constant 0 : index
    %182 = vector.load %arg8[%c0_39, %c0_40, %c0_41] : memref<1x384x384xbf16, #tpu.memory_space<vmem>>, vector<1x384x384xbf16>
    %183 = vector.shape_cast %182 : vector<1x384x384xbf16> to vector<384x384xbf16>
    %cst_42 = arith.constant dense<0.000000e+00> : vector<64x384xf32>
    %184 = tpu.matmul %181, %183, %cst_42 {dimension_numbers = #tpu.dot_dimension_numbers<[1], [0], [0], [1], [0, 0, 1, 1], [], []>} : vector<64x384xbf16>, vector<384x384xbf16>, vector<64x384xf32> -> vector<64x384xf32>
    %185 = arith.index_cast %arg0 : i32 to index
    %c0_43 = arith.constant 0 : index
    %186 = vector.load %arg9[%185, %c0_43] : memref<6x384xf32, #tpu.memory_space<vmem>>, vector<1x384xf32>
    %187 = vector.shape_cast %186 : vector<1x384xf32> to vector<384xf32>
    %188 = vector.shape_cast %187 : vector<384xf32> to vector<1x384xf32>
    %189 = vector.broadcast %188 : vector<1x384xf32> to vector<64x384xf32>
    %190 = arith.addf %184, %189 : vector<64x384xf32>
    %191 = arith.addf %3, %190 : vector<64x384xf32>
    %192 = arith.index_cast %arg0 : i32 to index
    %c0_44 = arith.constant 0 : index
    %193 = vector.load %arg10[%192, %c0_44] : memref<6x384xf32, #tpu.memory_space<vmem>>, vector<1x384xf32>
    %194 = vector.shape_cast %193 : vector<1x384xf32> to vector<384xf32>
    %195 = arith.index_cast %arg0 : i32 to index
    %c0_45 = arith.constant 0 : index
    %196 = vector.load %arg11[%195, %c0_45] : memref<6x384xf32, #tpu.memory_space<vmem>>, vector<1x384xf32>
    %197 = vector.shape_cast %196 : vector<1x384xf32> to vector<384xf32>
    %cst_46 = arith.constant dense<0.000000e+00> : vector<64xf32>
    %198 = vector.multi_reduction <add>, %191, %cst_46 [1] : vector<64x384xf32> to vector<64xf32>
    %199 = vector.shape_cast %198 : vector<64xf32> to vector<64x1xf32>
    %cst_47 = arith.constant 3.840000e+02 : f32
    %200 = vector.broadcast %cst_47 : f32 to vector<64x1xf32>
    %201 = arith.divf %199, %200 : vector<64x1xf32>
    %202 = vector.broadcast %201 : vector<64x1xf32> to vector<64x384xf32>
    %203 = arith.subf %191, %202 : vector<64x384xf32>
    %204 = arith.mulf %203, %203 : vector<64x384xf32>
    %cst_48 = arith.constant dense<0.000000e+00> : vector<64xf32>
    %205 = vector.multi_reduction <add>, %204, %cst_48 [1] : vector<64x384xf32> to vector<64xf32>
    %206 = vector.shape_cast %205 : vector<64xf32> to vector<64x1xf32>
    %cst_49 = arith.constant 3.840000e+02 : f32
    %207 = vector.broadcast %cst_49 : f32 to vector<64x1xf32>
    %208 = arith.divf %206, %207 : vector<64x1xf32>
    %209 = vector.broadcast %201 : vector<64x1xf32> to vector<64x384xf32>
    %210 = arith.subf %191, %209 : vector<64x384xf32>
    %cst_50 = arith.constant 9.99999974E-6 : f32
    %211 = vector.broadcast %cst_50 : f32 to vector<64x1xf32>
    %212 = arith.addf %208, %211 : vector<64x1xf32>
    %213 = math.rsqrt %212 : vector<64x1xf32>
    %214 = vector.broadcast %213 : vector<64x1xf32> to vector<64x384xf32>
    %215 = arith.mulf %210, %214 : vector<64x384xf32>
    %216 = vector.shape_cast %194 : vector<384xf32> to vector<1x384xf32>
    %217 = vector.broadcast %216 : vector<1x384xf32> to vector<64x384xf32>
    %218 = arith.mulf %215, %217 : vector<64x384xf32>
    %219 = vector.shape_cast %197 : vector<384xf32> to vector<1x384xf32>
    %220 = vector.broadcast %219 : vector<1x384xf32> to vector<64x384xf32>
    %221 = arith.addf %218, %220 : vector<64x384xf32>
    %222 = arith.truncf %221 : vector<64x384xf32> to vector<64x384xbf16>
    %c0_51 = arith.constant 0 : index
    %c0_52 = arith.constant 0 : index
    %c0_53 = arith.constant 0 : index
    %223 = vector.load %arg12[%c0_51, %c0_52, %c0_53] : memref<1x384x384xbf16, #tpu.memory_space<vmem>>, vector<1x384x384xbf16>
    %224 = vector.shape_cast %223 : vector<1x384x384xbf16> to vector<384x384xbf16>
    %cst_54 = arith.constant dense<0.000000e+00> : vector<64x384xf32>
    %225 = tpu.matmul %222, %224, %cst_54 {dimension_numbers = #tpu.dot_dimension_numbers<[1], [0], [0], [1], [0, 0, 1, 1], [], []>} : vector<64x384xbf16>, vector<384x384xbf16>, vector<64x384xf32> -> vector<64x384xf32>
    %226 = arith.index_cast %arg0 : i32 to index
    %c0_55 = arith.constant 0 : index
    %227 = vector.load %arg13[%226, %c0_55] : memref<6x384xf32, #tpu.memory_space<vmem>>, vector<1x384xf32>
    %228 = vector.shape_cast %227 : vector<1x384xf32> to vector<384xf32>
    %229 = vector.shape_cast %228 : vector<384xf32> to vector<1x384xf32>
    %230 = vector.broadcast %229 : vector<1x384xf32> to vector<64x384xf32>
    %231 = arith.addf %225, %230 : vector<64x384xf32>
    %cst_56 = arith.constant 0.000000e+00 : f32
    %232 = vector.broadcast %cst_56 : f32 to vector<64x384xf32>
    %233 = arith.maximumf %231, %232 : vector<64x384xf32>
    %234 = arith.truncf %233 : vector<64x384xf32> to vector<64x384xbf16>
    %c0_57 = arith.constant 0 : index
    %c0_58 = arith.constant 0 : index
    %c0_59 = arith.constant 0 : index
    %235 = vector.load %arg14[%c0_57, %c0_58, %c0_59] : memref<1x384x384xbf16, #tpu.memory_space<vmem>>, vector<1x384x384xbf16>
    %236 = vector.shape_cast %235 : vector<1x384x384xbf16> to vector<384x384xbf16>
    %cst_60 = arith.constant dense<0.000000e+00> : vector<64x384xf32>
    %237 = tpu.matmul %234, %236, %cst_60 {dimension_numbers = #tpu.dot_dimension_numbers<[1], [0], [0], [1], [0, 0, 1, 1], [], []>} : vector<64x384xbf16>, vector<384x384xbf16>, vector<64x384xf32> -> vector<64x384xf32>
    %238 = arith.index_cast %arg0 : i32 to index
    %c0_61 = arith.constant 0 : index
    %239 = vector.load %arg15[%238, %c0_61] : memref<6x384xf32, #tpu.memory_space<vmem>>, vector<1x384xf32>
    %240 = vector.shape_cast %239 : vector<1x384xf32> to vector<384xf32>
    %241 = vector.shape_cast %240 : vector<384xf32> to vector<1x384xf32>
    %242 = vector.broadcast %241 : vector<1x384xf32> to vector<64x384xf32>
    %243 = arith.addf %237, %242 : vector<64x384xf32>
    %244 = arith.addf %191, %243 : vector<64x384xf32>
    %c0_62 = arith.constant 0 : index
    %c0_63 = arith.constant 0 : index
    %245 = vector.load %arg21[%c0_62, %c0_63] : memref<64x384xf32, #tpu.memory_space<vmem>>, vector<64x384xf32>
    tpu.vector_store %arg21[%c0_62, %c0_63], %244 {strides = array<i32>} : memref<64x384xf32, #tpu.memory_space<vmem>>, vector<64x384xf32>,
    %c5_i32 = arith.constant 5 : i32
    %246 = arith.cmpi eq, %arg0, %c5_i32 : i32
    %247 = arith.extui %246 : i1 to i32
    %c0_i32_64 = arith.constant 0 : i32
    %248 = arith.cmpi ne, %247, %c0_i32_64 : i32
    scf.if %248 {
      %c0_65 = arith.constant 0 : index
      %c0_66 = arith.constant 0 : index
      %249 = vector.load %arg16[%c0_65, %c0_66] : memref<1x384xf32, #tpu.memory_space<vmem>>, vector<1x384xf32>
      %250 = vector.shape_cast %249 : vector<1x384xf32> to vector<384xf32>
      %c0_67 = arith.constant 0 : index
      %c0_68 = arith.constant 0 : index
      %251 = vector.load %arg17[%c0_67, %c0_68] : memref<1x384xf32, #tpu.memory_space<vmem>>, vector<1x384xf32>
      %252 = vector.shape_cast %251 : vector<1x384xf32> to vector<384xf32>
      %cst_69 = arith.constant dense<0.000000e+00> : vector<64xf32>
      %253 = vector.multi_reduction <add>, %244, %cst_69 [1] : vector<64x384xf32> to vector<64xf32>
      %254 = vector.shape_cast %253 : vector<64xf32> to vector<64x1xf32>
      %cst_70 = arith.constant 3.840000e+02 : f32
      %255 = vector.broadcast %cst_70 : f32 to vector<64x1xf32>
      %256 = arith.divf %254, %255 : vector<64x1xf32>
      %257 = vector.broadcast %256 : vector<64x1xf32> to vector<64x384xf32>
      %258 = arith.subf %244, %257 : vector<64x384xf32>
      %259 = arith.mulf %258, %258 : vector<64x384xf32>
      %cst_71 = arith.constant dense<0.000000e+00> : vector<64xf32>
      %260 = vector.multi_reduction <add>, %259, %cst_71 [1] : vector<64x384xf32> to vector<64xf32>
      %261 = vector.shape_cast %260 : vector<64xf32> to vector<64x1xf32>
      %cst_72 = arith.constant 3.840000e+02 : f32
      %262 = vector.broadcast %cst_72 : f32 to vector<64x1xf32>
      %263 = arith.divf %261, %262 : vector<64x1xf32>
      %264 = vector.broadcast %256 : vector<64x1xf32> to vector<64x384xf32>
      %265 = arith.subf %244, %264 : vector<64x384xf32>
      %cst_73 = arith.constant 9.99999974E-6 : f32
      %266 = vector.broadcast %cst_73 : f32 to vector<64x1xf32>
      %267 = arith.addf %263, %266 : vector<64x1xf32>
      %268 = math.rsqrt %267 : vector<64x1xf32>
      %269 = vector.broadcast %268 : vector<64x1xf32> to vector<64x384xf32>
      %270 = arith.mulf %265, %269 : vector<64x384xf32>
      %271 = vector.shape_cast %250 : vector<384xf32> to vector<1x384xf32>
      %272 = vector.broadcast %271 : vector<1x384xf32> to vector<64x384xf32>
      %273 = arith.mulf %270, %272 : vector<64x384xf32>
      %274 = vector.shape_cast %252 : vector<384xf32> to vector<1x384xf32>
      %275 = vector.broadcast %274 : vector<1x384xf32> to vector<64x384xf32>
      %276 = arith.addf %273, %275 : vector<64x384xf32>
      %277 = arith.truncf %276 : vector<64x384xf32> to vector<64x384xbf16>
      %c0_74 = arith.constant 0 : index
      %c0_75 = arith.constant 0 : index
      %278 = vector.load %arg18[%c0_74, %c0_75] : memref<384x128xbf16, #tpu.memory_space<vmem>>, vector<384x128xbf16>
      %cst_76 = arith.constant dense<0.000000e+00> : vector<64x128xf32>
      %279 = tpu.matmul %277, %278, %cst_76 {dimension_numbers = #tpu.dot_dimension_numbers<[1], [0], [0], [1], [0, 0, 1, 1], [], []>} : vector<64x384xbf16>, vector<384x128xbf16>, vector<64x128xf32> -> vector<64x128xf32>
      %c0_77 = arith.constant 0 : index
      %c0_78 = arith.constant 0 : index
      %280 = vector.load %arg19[%c0_77, %c0_78] : memref<1x128xf32, #tpu.memory_space<vmem>>, vector<1x128xf32>
      %281 = vector.shape_cast %280 : vector<1x128xf32> to vector<128xf32>
      %282 = vector.shape_cast %281 : vector<128xf32> to vector<1x128xf32>
      %283 = vector.broadcast %282 : vector<1x128xf32> to vector<64x128xf32>
      %284 = arith.addf %279, %283 : vector<64x128xf32>
      %c0_79 = arith.constant 0 : index
      %c0_80 = arith.constant 0 : index
      %285 = vector.load %arg20[%c0_79, %c0_80] : memref<64x128xf32, #tpu.memory_space<vmem>>, vector<64x128xf32>
      tpu.vector_store %arg20[%c0_79, %c0_80], %284 {strides = array<i32>} : memref<64x128xf32, #tpu.memory_space<vmem>>, vector<64x128xf32>,
    } else {
    }
    return
  }
  func.func @transform_0(%arg0: i32) -> (i32, i32) {
    %c0_i32 = arith.constant 0 : i32
    %c0_i32_0 = arith.constant 0 : i32
    %c0_i32_1 = arith.constant 0 : i32
    return %c0_i32, %c0_i32_0 : i32, i32
  }
  func.func @transform_1(%arg0: i32) -> (i32, i32) {
    %c0_i32 = arith.constant 0 : i32
    %c0_i32_0 = arith.constant 0 : i32
    %c0_i32_1 = arith.constant 0 : i32
    return %c0_i32, %c0_i32_0 : i32, i32
  }
  func.func @transform_2(%arg0: i32) -> (i32, i32) {
    %c0_i32 = arith.constant 0 : i32
    %c0_i32_0 = arith.constant 0 : i32
    %c0_i32_1 = arith.constant 0 : i32
    return %c0_i32, %c0_i32_0 : i32, i32
  }
  func.func @transform_3(%arg0: i32) -> (i32, i32) {
    %c0_i32 = arith.constant 0 : i32
    %c0_i32_0 = arith.constant 0 : i32
    %c0_i32_1 = arith.constant 0 : i32
    return %c0_i32, %c0_i32_0 : i32, i32
  }
  func.func @transform_4(%arg0: i32) -> (i32, i32) {
    %c0_i32 = arith.constant 0 : i32
    %c0_i32_0 = arith.constant 0 : i32
    %c0_i32_1 = arith.constant 0 : i32
    return %c0_i32, %c0_i32_0 : i32, i32
  }
  func.func @transform_5(%arg0: i32) -> (i32, i32) {
    %c0_i32 = arith.constant 0 : i32
    %c0_i32_0 = arith.constant 0 : i32
    %c0_i32_1 = arith.constant 0 : i32
    return %c0_i32, %c0_i32_0 : i32, i32
  }
  func.func @transform_6(%arg0: i32) -> (i32, i32, i32) {
    %c0_i32 = arith.constant 0 : i32
    %c0_i32_0 = arith.constant 0 : i32
    %c0_i32_1 = arith.constant 0 : i32
    return %arg0, %c0_i32, %c0_i32_0 : i32, i32, i32
  }
  func.func @transform_7(%arg0: i32) -> (i32, i32, i32) {
    %c0_i32 = arith.constant 0 : i32
    %c0_i32_0 = arith.constant 0 : i32
    %c0_i32_1 = arith.constant 0 : i32
    return %arg0, %c0_i32, %c0_i32_0 : i32, i32, i32
  }
  func.func @transform_8(%arg0: i32) -> (i32, i32) {
    %c0_i32 = arith.constant 0 : i32
    %c0_i32_0 = arith.constant 0 : i32
    %c0_i32_1 = arith.constant 0 : i32
    return %c0_i32, %c0_i32_0 : i32, i32
  }
  func.func @transform_9(%arg0: i32) -> (i32, i32) {
    %c0_i32 = arith.constant 0 : i32
    %c0_i32_0 = arith.constant 0 : i32
    %c0_i32_1 = arith.constant 0 : i32
    return %c0_i32, %c0_i32_0 : i32, i32
  }
  func.func @transform_10(%arg0: i32) -> (i32, i32) {
    %c0_i32 = arith.constant 0 : i32
    %c0_i32_0 = arith.constant 0 : i32
    %c0_i32_1 = arith.constant 0 : i32
    return %c0_i32, %c0_i32_0 : i32, i32
  }
  func.func @transform_11(%arg0: i32) -> (i32, i32, i32) {
    %c0_i32 = arith.constant 0 : i32
    %c0_i32_0 = arith.constant 0 : i32
    %c0_i32_1 = arith.constant 0 : i32
    return %arg0, %c0_i32, %c0_i32_0 : i32, i32, i32
  }
  func.func @transform_12(%arg0: i32) -> (i32, i32) {
    %c0_i32 = arith.constant 0 : i32
    %c0_i32_0 = arith.constant 0 : i32
    %c0_i32_1 = arith.constant 0 : i32
    return %c0_i32, %c0_i32_0 : i32, i32
  }
  func.func @transform_13(%arg0: i32) -> (i32, i32, i32) {
    %c0_i32 = arith.constant 0 : i32
    %c0_i32_0 = arith.constant 0 : i32
    %c0_i32_1 = arith.constant 0 : i32
    return %arg0, %c0_i32, %c0_i32_0 : i32, i32, i32
  }
  func.func @transform_14(%arg0: i32) -> (i32, i32) {
    %c0_i32 = arith.constant 0 : i32
    %c0_i32_0 = arith.constant 0 : i32
    %c0_i32_1 = arith.constant 0 : i32
    return %c0_i32, %c0_i32_0 : i32, i32
  }
  func.func @transform_15(%arg0: i32) -> (i32, i32) {
    %c0_i32 = arith.constant 0 : i32
    %c0_i32_0 = arith.constant 0 : i32
    %c0_i32_1 = arith.constant 0 : i32
    return %c0_i32, %c0_i32_0 : i32, i32
  }
  func.func @transform_16(%arg0: i32) -> (i32, i32) {
    %c0_i32 = arith.constant 0 : i32
    %c0_i32_0 = arith.constant 0 : i32
    %c0_i32_1 = arith.constant 0 : i32
    return %c0_i32, %c0_i32_0 : i32, i32
  }
  func.func @transform_17(%arg0: i32) -> (i32, i32) {
    %c0_i32 = arith.constant 0 : i32
    %c0_i32_0 = arith.constant 0 : i32
    %c0_i32_1 = arith.constant 0 : i32
    return %c0_i32, %c0_i32_0 : i32, i32
  }
  func.func @transform_18(%arg0: i32) -> (i32, i32) {
    %c0_i32 = arith.constant 0 : i32
    %c0_i32_0 = arith.constant 0 : i32
    %c0_i32_1 = arith.constant 0 : i32
    return %c0_i32, %c0_i32_0 : i32, i32
  }
  func.func @transform_19(%arg0: i32) -> (i32, i32) {
    %c0_i32 = arith.constant 0 : i32
    %c0_i32_0 = arith.constant 0 : i32
    %c0_i32_1 = arith.constant 0 : i32
    return %c0_i32, %c0_i32_0 : i32, i32
  }
}

</mosaic_0001>

<llo_original>
// kernel: tpu_custom_call.1
$region0: #{tpu_custom_call.1}
  #allocation0 [shape = 'u32[]', space=smem, size = 0x4, offset = 0x4, fixed_abs, tag = 'smem constant byte address 0x4 - core index']
  #allocation1 [shape = 'u32[144,128]{1,0:T(1,128)}', space=vmem, size = 0x12000, scoped, tag = 'internal scratch']
  #allocation2 [shape = 'f32[64,384]{1,0:T(8,128)}', space=vmem, size = 0x18000, scoped, tag = 'scratch operand']
  %s0 = inlined_call_operand.vmem [shape: s32[64,1], index: 0, kind: input, shape index: {}]
  %s1 = inlined_call_operand.hbm [shape: f32[32,32], index: 1, kind: input, shape index: {}]
  %s2 = inlined_call_operand.hbm [shape: bf16[128,384], index: 2, kind: input, shape index: {}]
  %s3 = inlined_call_operand.hbm [shape: bf16[256,384], index: 3, kind: input, shape index: {}]
  %s4 = inlined_call_operand.hbm [shape: f32[6,384], index: 4, kind: input, shape index: {}]
  %s5 = inlined_call_operand.hbm [shape: f32[6,384], index: 5, kind: input, shape index: {}]
  %s6 = inlined_call_operand.hbm [shape: bf16[6,384,1152], index: 6, kind: input, shape index: {}]
  %s7 = inlined_call_operand.hbm [shape: bf16[6,384,384], index: 7, kind: input, shape index: {}]
  %s8 = inlined_call_operand.hbm [shape: f32[6,384], index: 8, kind: input, shape index: {}]
  %s9 = inlined_call_operand.hbm [shape: f32[6,384], index: 9, kind: input, shape index: {}]
  %s10 = inlined_call_operand.hbm [shape: f32[6,384], index: 10, kind: input, shape index: {}]
  %s11 = inlined_call_operand.hbm [shape: bf16[6,384,384], index: 11, kind: input, shape index: {}]
  %s12 = inlined_call_operand.hbm [shape: f32[6,384], index: 12, kind: input, shape index: {}]
  %s13 = inlined_call_operand.hbm [shape: bf16[6,384,384], index: 13, kind: input, shape index: {}]
  %s14 = inlined_call_operand.hbm [shape: f32[6,384], index: 14, kind: input, shape index: {}]
  %s15 = inlined_call_operand.hbm [shape: f32[1,384], index: 15, kind: input, shape index: {}]
  %s16 = inlined_call_operand.hbm [shape: f32[1,384], index: 16, kind: input, shape index: {}]
  %s17 = inlined_call_operand.hbm [shape: bf16[384,128], index: 17, kind: input, shape index: {}]
  %s18 = inlined_call_operand.hbm [shape: f32[1,128], index: 18, kind: input, shape index: {}]
  %s19 = inlined_call_operand.hbm [shape: f32[64,128], index: 19, kind: output, shape index: {}]
  %s20 = sld [smem:[#allocation0]]
  $region189: #{tpu_custom_call.1} parent=0
    _
  %s22 = ssub.s32 1, %s20
  %s23 = scalar_select 0, %s22, %s20
  $region1: #{tpu_custom_call.1} parent=0
    #allocation3 [shape = 'u8[16384]{0}', space=vmem, size = 0x4000, scoped, tag = 'input window, operand 1, single buffered']
    #allocation4 [shape = 's32[2]{0}', space=sflag, size = 0x8, scoped, tag = 'scoped memory for tpu_custom_call.1']
    #allocation5 [shape = 's32[2]{0}', space=sflag, size = 0x8, scoped, tag = 'scoped memory for tpu_custom_call.1']
    #allocation6 [shape = 'u8[98304]{0}', space=vmem, size = 0x18000, scoped, tag = 'input window, operand 2, single buffered']
    #allocation7 [shape = 's32[1]{0}', space=sflag, size = 0x4, scoped, tag = 'scoped memory for tpu_custom_call.1']
    #allocation8 [shape = 'u8[24576]{0}', space=vmem, size = 0x6000, scoped, tag = 'input window, operand 3, single buffered']
    #allocation9 [shape = 'u8[12288]{0}', space=vmem, size = 0x3000, scoped, tag = 'input window, operand 4, single buffered']
    #allocation10 [shape = 's32[1]{0}', space=sflag, size = 0x4, scoped, tag = 'scoped memory for tpu_custom_call.1']
    #allocation11 [shape = 'u8[12288]{0}', space=vmem, size = 0x3000, scoped, tag = 'input window, operand 5, single buffered']
    #allocation12 [shape = 'u8[1769472]{0}', space=vmem, size = 0x1b0000, scoped, tag = 'input window, operand 6']
    #allocation13 [shape = 's32[2]{0}', space=sflag, size = 0x8, scoped, tag = 'scoped memory for tpu_custom_call.1']
    #allocation14 [shape = 'u8[589824]{0}', space=vmem, size = 0x90000, scoped, tag = 'input window, operand 7']
    #allocation15 [shape = 'u8[12288]{0}', space=vmem, size = 0x3000, scoped, tag = 'input window, operand 8, single buffered']
    #allocation16 [shape = 's32[1]{0}', space=sflag, size = 0x4, scoped, tag = 'scoped memory for tpu_custom_call.1']
    #allocation17 [shape = 'u8[12288]{0}', space=vmem, size = 0x3000, scoped, tag = 'input window, operand 9, single buffered']
    #allocation18 [shape = 'u8[12288]{0}', space=vmem, size = 0x3000, scoped, tag = 'input window, operand 10, single buffered']
    #allocation19 [shape = 's32[1]{0}', space=sflag, size = 0x4, scoped, tag = 'scoped memory for tpu_custom_call.1']
    #allocation20 [shape = 'u8[589824]{0}', space=vmem, size = 0x90000, scoped, tag = 'input window, operand 11']
    #allocation21 [shape = 'u8[12288]{0}', space=vmem, size = 0x3000, scoped, tag = 'input window, operand 12, single buffered']
    #allocation22 [shape = 'u8[589824]{0}', space=vmem, size = 0x90000, scoped, tag = 'input window, operand 13']
    #allocation23 [shape = 'u8[12288]{0}', space=vmem, size = 0x3000, scoped, tag = 'input window, operand 14, single buffered']
    #allocation24 [shape = 'u8[1536]{0}', space=vmem, size = 0x800, scoped, tag = 'input window, operand 15, single buffered']
    #allocation25 [shape = 'u8[1536]{0}', space=vmem, size = 0x800, scoped, tag = 'input window, operand 16, single buffered']
    #allocation26 [shape = 's32[1]{0}', space=sflag, size = 0x4, scoped, tag = 'scoped memory for tpu_custom_call.1']
    #allocation27 [shape = 'u8[98304]{0}', space=vmem, size = 0x18000, scoped, tag = 'input window, operand 17, single buffered']
    #allocation28 [shape = 'u8[512]{0}', space=vmem, size = 0x400, scoped, tag = 'input window, operand 18, single buffered']
    #allocation29 [shape = 's32[1]{0}', space=sflag, size = 0x4, scoped, tag = 'scoped memory for tpu_custom_call.1']
    #allocation30 [shape = 'u8[32768]{0}', space=vmem, size = 0x8000, scoped, tag = 'output window, operand 0, single buffered']
    %24 = vsyncpa [#allocation4], 0
    %25 = vsyncpa [#allocation7], 0
    %26 = vsyncpa [#allocation10], 0
    %27 = vsyncpa [#allocation13], 0
    %s28 = scalar_lea.sflag [#allocation13], 1
    %29 = vsyncpa %s28, 0
    %30 = vsyncpa [#allocation16], 0
    %31 = vsyncpa [#allocation19], 0
    %32 = vsyncpa [#allocation26], 0
    %33 = vsyncpa [#allocation29], 0
    %34 = vsyncpa [#allocation5], 0
    loop: start=0, step=1, limit=8
    $region2: #{tpu_custom_call.1} parent=1 // loop_pre_header
      _
    $region3: #{tpu_custom_call.1} parent=1 // loop_header
      %s36 = sphi 0, %s40
      %p37 = scmp.ge.s32.totalorder %s36, 8
      %s44 = sphi 0, %s44
      %s46 = sphi 0, %s44
      %s47 = sphi 0, %s46
      %s61 = sphi 0, %s47
      %s65 = sphi 0, %s65
      %s67 = sphi 0, %s65
      %s68 = sphi 0, %s67
      %s82 = sphi 0, %s68
      %s86 = sphi 0, %s86
      %s88 = sphi 0, %s86
      %s89 = sphi 0, %s88
      %s103 = sphi 0, %s89
      %s107 = sphi 0, %s107
      %s109 = sphi 0, %s107
      %s110 = sphi 0, %s109
      %s124 = sphi 0, %s110
      %s128 = sphi 0, %s128
      %s130 = sphi 0, %s128
      %s131 = sphi 0, %s130
      %s145 = sphi 0, %s131
      %s149 = sphi 0, %s149
      %s151 = sphi 0, %s149
      %s152 = sphi 0, %s151
      %s166 = sphi 0, %s152
      %s172 = sphi 0, %s174
      %s175 = sphi 0, %s172
      %s176 = sphi 0, %s175
      %s192 = sphi 0, %s176
      %s198 = sphi 0, %s200
      %s201 = sphi 0, %s198
      %s202 = sphi 0, %s201
      %s218 = sphi 0, %s202
      %s222 = sphi 0, %s222
      %s224 = sphi 0, %s222
      %s225 = sphi 0, %s224
      %s239 = sphi 0, %s225
      %s243 = sphi 0, %s243
      %s245 = sphi 0, %s243
      %s246 = sphi 0, %s245
      %s260 = sphi 0, %s246
      %s264 = sphi 0, %s264
      %s266 = sphi 0, %s264
      %s267 = sphi 0, %s266
      %s281 = sphi 0, %s267
      %s287 = sphi 0, %s289
      %s290 = sphi 0, %s287
      %s291 = sphi 0, %s290
      %s307 = sphi 0, %s291
      %s311 = sphi 0, %s311
      %s313 = sphi 0, %s311
      %s314 = sphi 0, %s313
      %s328 = sphi 0, %s314
      %s334 = sphi 0, %s336
      %s337 = sphi 0, %s334
      %s338 = sphi 0, %s337
      %s354 = sphi 0, %s338
      %s358 = sphi 0, %s358
      %s360 = sphi 0, %s358
      %s361 = sphi 0, %s360
      %s375 = sphi 0, %s361
      %s379 = sphi 0, %s379
      %s381 = sphi 0, %s379
      %s382 = sphi 0, %s381
      %s396 = sphi 0, %s382
      %s400 = sphi 0, %s400
      %s402 = sphi 0, %s400
      %s403 = sphi 0, %s402
      %s417 = sphi 0, %s403
      %s421 = sphi 0, %s421
      %s423 = sphi 0, %s421
      %s424 = sphi 0, %s423
      %s438 = sphi 0, %s424
      %s442 = sphi 0, %s442
      %s444 = sphi 0, %s442
      %s445 = sphi 0, %s444
      %s459 = sphi 0, %s445
      %s463 = sphi 0, %s463
      %s465 = sphi 0, %s463
      %s466 = sphi 0, %s465
      %s480 = sphi 0, %s466
    $region4: #{tpu_custom_call.1} parent=1 // loop_header_branch
      %39 = sbr.rel (%p37) target = $region8
    $region5: #{tpu_custom_call.1} parent=1 // loop_body
      %s41 = ssub.s32 %s36, 1
      %s42 = ssub.s32 %s36, 2
      %s43 = sadd.s32 %s36, 1
      %s45 = sadd.s32 %s44, 1
      %p48 = scmp.eq.s32.totalorder %s36, 5
      %p49 = scmp.ne.s32.totalorder %s44, %s46
      %p50 = scmp.eq.s32.totalorder %s36, 0
      %p51 = por %p49, %p50
      %p52 = scmp.ne.s32.totalorder %s44, %s46
      %p53 = scmp.eq.s32.totalorder %s41, 5
      %p54 = por %p52, %p53
      %p55 = scmp.ne.s32.totalorder %s46, %s47
      %p56 = scmp.eq.s32.totalorder %s41, 0
      %p57 = por %p55, %p56
      %p58 = scmp.ne.s32.totalorder %s46, %s47
      %p59 = scmp.eq.s32.totalorder %s42, 5
      %p60 = por %p58, %p59
      %p62 = scmp.ne.s32.totalorder %s47, %s61
      %p63 = scmp.eq.s32.totalorder %s42, 0
      %p64 = por %p62, %p63
      %s66 = sadd.s32 %s65, 1
      %p69 = scmp.eq.s32.totalorder %s36, 5
      %p70 = scmp.ne.s32.totalorder %s65, %s67
      %p71 = scmp.eq.s32.totalorder %s36, 0
      %p72 = por %p70, %p71
      %p73 = scmp.ne.s32.totalorder %s65, %s67
      %p74 = scmp.eq.s32.totalorder %s41, 5
      %p75 = por %p73, %p74
      %p76 = scmp.ne.s32.totalorder %s67, %s68
      %p77 = scmp.eq.s32.totalorder %s41, 0
      %p78 = por %p76, %p77
      %p79 = scmp.ne.s32.totalorder %s67, %s68
      %p80 = scmp.eq.s32.totalorder %s42, 5
      %p81 = por %p79, %p80
      %p83 = scmp.ne.s32.totalorder %s68, %s82
      %p84 = scmp.eq.s32.totalorder %s42, 0
      %p85 = por %p83, %p84
      %s87 = sadd.s32 %s86, 1
      %p90 = scmp.eq.s32.totalorder %s36, 5
      %p91 = scmp.ne.s32.totalorder %s86, %s88
      %p92 = scmp.eq.s32.totalorder %s36, 0
      %p93 = por %p91, %p92
      %p94 = scmp.ne.s32.totalorder %s86, %s88
      %p95 = scmp.eq.s32.totalorder %s41, 5
      %p96 = por %p94, %p95
      %p97 = scmp.ne.s32.totalorder %s88, %s89
      %p98 = scmp.eq.s32.totalorder %s41, 0
      %p99 = por %p97, %p98
      %p100 = scmp.ne.s32.totalorder %s88, %s89
      %p101 = scmp.eq.s32.totalorder %s42, 5
      %p102 = por %p100, %p101
      %p104 = scmp.ne.s32.totalorder %s89, %s103
      %p105 = scmp.eq.s32.totalorder %s42, 0
      %p106 = por %p104, %p105
      %s108 = sadd.s32 %s107, 1
      %p111 = scmp.eq.s32.totalorder %s36, 5
      %p112 = scmp.ne.s32.totalorder %s107, %s109
      %p113 = scmp.eq.s32.totalorder %s36, 0
      %p114 = por %p112, %p113
      %p115 = scmp.ne.s32.totalorder %s107, %s109
      %p116 = scmp.eq.s32.totalorder %s41, 5
      %p117 = por %p115, %p116
      %p118 = scmp.ne.s32.totalorder %s109, %s110
      %p119 = scmp.eq.s32.totalorder %s41, 0
      %p120 = por %p118, %p119
      %p121 = scmp.ne.s32.totalorder %s109, %s110
      %p122 = scmp.eq.s32.totalorder %s42, 5
      %p123 = por %p121, %p122
      %p125 = scmp.ne.s32.totalorder %s110, %s124
      %p126 = scmp.eq.s32.totalorder %s42, 0
      %p127 = por %p125, %p126
      %s129 = sadd.s32 %s128, 1
      %p132 = scmp.eq.s32.totalorder %s36, 5
      %p133 = scmp.ne.s32.totalorder %s128, %s130
      %p134 = scmp.eq.s32.totalorder %s36, 0
      %p135 = por %p133, %p134
      %p136 = scmp.ne.s32.totalorder %s128, %s130
      %p137 = scmp.eq.s32.totalorder %s41, 5
      %p138 = por %p136, %p137
      %p139 = scmp.ne.s32.totalorder %s130, %s131
      %p140 = scmp.eq.s32.totalorder %s41, 0
      %p141 = por %p139, %p140
      %p142 = scmp.ne.s32.totalorder %s130, %s131
      %p143 = scmp.eq.s32.totalorder %s42, 5
      %p144 = por %p142, %p143
      %p146 = scmp.ne.s32.totalorder %s131, %s145
      %p147 = scmp.eq.s32.totalorder %s42, 0
      %p148 = por %p146, %p147
      %s150 = sadd.s32 %s149, 1
      %p153 = scmp.eq.s32.totalorder %s36, 5
      %p154 = scmp.ne.s32.totalorder %s149, %s151
      %p155 = scmp.eq.s32.totalorder %s36, 0
      %p156 = por %p154, %p155
      %p157 = scmp.ne.s32.totalorder %s149, %s151
      %p158 = scmp.eq.s32.totalorder %s41, 5
      %p159 = por %p157, %p158
      %p160 = scmp.ne.s32.totalorder %s151, %s152
      %p161 = scmp.eq.s32.totalorder %s41, 0
      %p162 = por %p160, %p161
      %p163 = scmp.ne.s32.totalorder %s151, %s152
      %p164 = scmp.eq.s32.totalorder %s42, 5
      %p165 = por %p163, %p164
      %p167 = scmp.ne.s32.totalorder %s152, %s166
      %p168 = scmp.eq.s32.totalorder %s42, 0
      %p169 = por %p167, %p168
      %s170 = ssub.s32 %s36, %s43
      %p171 = scmp.eq.s32.totalorder %s170, 0
      %s173 = sadd.s32 %s172, 1
      %s174 = scalar_select %p171, %s172, %s173
      %p177 = pneg %p171
      %p178 = scmp.eq.s32.totalorder %s36, 5
      %p179 = por %p177, %p178
      %p180 = scmp.ne.s32.totalorder %s172, %s175
      %p181 = scmp.eq.s32.totalorder %s36, 0
      %p182 = por %p180, %p181
      %p183 = scmp.ne.s32.totalorder %s172, %s175
      %p184 = scmp.eq.s32.totalorder %s41, 5
      %p185 = por %p183, %p184
      %p186 = scmp.ne.s32.totalorder %s175, %s176
      %p187 = scmp.eq.s32.totalorder %s41, 0
      %p188 = por %p186, %p187
      %p189 = scmp.ne.s32.totalorder %s175, %s176
      %p190 = scmp.eq.s32.totalorder %s42, 5
      %p191 = por %p189, %p190
      %p193 = scmp.ne.s32.totalorder %s176, %s192
      %p194 = scmp.eq.s32.totalorder %s42, 0
      %p195 = por %p193, %p194
      %s196 = ssub.s32 %s36, %s43
      %p197 = scmp.eq.s32.totalorder %s196, 0
      %s199 = sadd.s32 %s198, 1
      %s200 = scalar_select %p197, %s198, %s199
      %p203 = pneg %p197
      %p204 = scmp.eq.s32.totalorder %s36, 5
      %p205 = por %p203, %p204
      %p206 = scmp.ne.s32.totalorder %s198, %s201
      %p207 = scmp.eq.s32.totalorder %s36, 0
      %p208 = por %p206, %p207
      %p209 = scmp.ne.s32.totalorder %s198, %s201
      %p210 = scmp.eq.s32.totalorder %s41, 5
      %p211 = por %p209, %p210
      %p212 = scmp.ne.s32.totalorder %s201, %s202
      %p213 = scmp.eq.s32.totalorder %s41, 0
      %p214 = por %p212, %p213
      %p215 = scmp.ne.s32.totalorder %s201, %s202
      %p216 = scmp.eq.s32.totalorder %s42, 5
      %p217 = por %p215, %p216
      %p219 = scmp.ne.s32.totalorder %s202, %s218
      %p220 = scmp.eq.s32.totalorder %s42, 0
      %p221 = por %p219, %p220
      %s223 = sadd.s32 %s222, 1
      %p226 = scmp.eq.s32.totalorder %s36, 5
      %p227 = scmp.ne.s32.totalorder %s222, %s224
      %p228 = scmp.eq.s32.totalorder %s36, 0
      %p229 = por %p227, %p228
      %p230 = scmp.ne.s32.totalorder %s222, %s224
      %p231 = scmp.eq.s32.totalorder %s41, 5
      %p232 = por %p230, %p231
      %p233 = scmp.ne.s32.totalorder %s224, %s225
      %p234 = scmp.eq.s32.totalorder %s41, 0
      %p235 = por %p233, %p234
      %p236 = scmp.ne.s32.totalorder %s224, %s225
      %p237 = scmp.eq.s32.totalorder %s42, 5
      %p238 = por %p236, %p237
      %p240 = scmp.ne.s32.totalorder %s225, %s239
      %p241 = scmp.eq.s32.totalorder %s42, 0
      %p242 = por %p240, %p241
      %s244 = sadd.s32 %s243, 1
      %p247 = scmp.eq.s32.totalorder %s36, 5
      %p248 = scmp.ne.s32.totalorder %s243, %s245
      %p249 = scmp.eq.s32.totalorder %s36, 0
      %p250 = por %p248, %p249
      %p251 = scmp.ne.s32.totalorder %s243, %s245
      %p252 = scmp.eq.s32.totalorder %s41, 5
      %p253 = por %p251, %p252
      %p254 = scmp.ne.s32.totalorder %s245, %s246
      %p255 = scmp.eq.s32.totalorder %s41, 0
      %p256 = por %p254, %p255
      %p257 = scmp.ne.s32.totalorder %s245, %s246
      %p258 = scmp.eq.s32.totalorder %s42, 5
      %p259 = por %p257, %p258
      %p261 = scmp.ne.s32.totalorder %s246, %s260
      %p262 = scmp.eq.s32.totalorder %s42, 0
      %p263 = por %p261, %p262
      %s265 = sadd.s32 %s264, 1
      %p268 = scmp.eq.s32.totalorder %s36, 5
      %p269 = scmp.ne.s32.totalorder %s264, %s266
      %p270 = scmp.eq.s32.totalorder %s36, 0
      %p271 = por %p269, %p270
      %p272 = scmp.ne.s32.totalorder %s264, %s266
      %p273 = scmp.eq.s32.totalorder %s41, 5
      %p274 = por %p272, %p273
      %p275 = scmp.ne.s32.totalorder %s266, %s267
      %p276 = scmp.eq.s32.totalorder %s41, 0
      %p277 = por %p275, %p276
      %p278 = scmp.ne.s32.totalorder %s266, %s267
      %p279 = scmp.eq.s32.totalorder %s42, 5
      %p280 = por %p278, %p279
      %p282 = scmp.ne.s32.totalorder %s267, %s281
      %p283 = scmp.eq.s32.totalorder %s42, 0
      %p284 = por %p282, %p283
      %s285 = ssub.s32 %s36, %s43
      %p286 = scmp.eq.s32.totalorder %s285, 0
      %s288 = sadd.s32 %s287, 1
      %s289 = scalar_select %p286, %s287, %s288
      %p292 = pneg %p286
      %p293 = scmp.eq.s32.totalorder %s36, 5
      %p294 = por %p292, %p293
      %p295 = scmp.ne.s32.totalorder %s287, %s290
      %p296 = scmp.eq.s32.totalorder %s36, 0
      %p297 = por %p295, %p296
      %p298 = scmp.ne.s32.totalorder %s287, %s290
      %p299 = scmp.eq.s32.totalorder %s41, 5
      %p300 = por %p298, %p299
      %p301 = scmp.ne.s32.totalorder %s290, %s291
      %p302 = scmp.eq.s32.totalorder %s41, 0
      %p303 = por %p301, %p302
      %p304 = scmp.ne.s32.totalorder %s290, %s291
      %p305 = scmp.eq.s32.totalorder %s42, 5
      %p306 = por %p304, %p305
      %p308 = scmp.ne.s32.totalorder %s291, %s307
      %p309 = scmp.eq.s32.totalorder %s42, 0
      %p310 = por %p308, %p309
      %s312 = sadd.s32 %s311, 1
      %p315 = scmp.eq.s32.totalorder %s36, 5
      %p316 = scmp.ne.s32.totalorder %s311, %s313
      %p317 = scmp.eq.s32.totalorder %s36, 0
      %p318 = por %p316, %p317
      %p319 = scmp.ne.s32.totalorder %s311, %s313
      %p320 = scmp.eq.s32.totalorder %s41, 5
      %p321 = por %p319, %p320
      %p322 = scmp.ne.s32.totalorder %s313, %s314
      %p323 = scmp.eq.s32.totalorder %s41, 0
      %p324 = por %p322, %p323
      %p325 = scmp.ne.s32.totalorder %s313, %s314
      %p326 = scmp.eq.s32.totalorder %s42, 5
      %p327 = por %p325, %p326
      %p329 = scmp.ne.s32.totalorder %s314, %s328
      %p330 = scmp.eq.s32.totalorder %s42, 0
      %p331 = por %p329, %p330
      %s332 = ssub.s32 %s36, %s43
      %p333 = scmp.eq.s32.totalorder %s332, 0
      %s335 = sadd.s32 %s334, 1
      %s336 = scalar_select %p333, %s334, %s335
      %p339 = pneg %p333
      %p340 = scmp.eq.s32.totalorder %s36, 5
      %p341 = por %p339, %p340
      %p342 = scmp.ne.s32.totalorder %s334, %s337
      %p343 = scmp.eq.s32.totalorder %s36, 0
      %p344 = por %p342, %p343
      %p345 = scmp.ne.s32.totalorder %s334, %s337
      %p346 = scmp.eq.s32.totalorder %s41, 5
      %p347 = por %p345, %p346
      %p348 = scmp.ne.s32.totalorder %s337, %s338
      %p349 = scmp.eq.s32.totalorder %s41, 0
      %p350 = por %p348, %p349
      %p351 = scmp.ne.s32.totalorder %s337, %s338
      %p352 = scmp.eq.s32.totalorder %s42, 5
      %p353 = por %p351, %p352
      %p355 = scmp.ne.s32.totalorder %s338, %s354
      %p356 = scmp.eq.s32.totalorder %s42, 0
      %p357 = por %p355, %p356
      %s359 = sadd.s32 %s358, 1
      %p362 = scmp.eq.s32.totalorder %s36, 5
      %p363 = scmp.ne.s32.totalorder %s358, %s360
      %p364 = scmp.eq.s32.totalorder %s36, 0
      %p365 = por %p363, %p364
      %p366 = scmp.ne.s32.totalorder %s358, %s360
      %p367 = scmp.eq.s32.totalorder %s41, 5
      %p368 = por %p366, %p367
      %p369 = scmp.ne.s32.totalorder %s360, %s361
      %p370 = scmp.eq.s32.totalorder %s41, 0
      %p371 = por %p369, %p370
      %p372 = scmp.ne.s32.totalorder %s360, %s361
      %p373 = scmp.eq.s32.totalorder %s42, 5
      %p374 = por %p372, %p373
      %p376 = scmp.ne.s32.totalorder %s361, %s375
      %p377 = scmp.eq.s32.totalorder %s42, 0
      %p378 = por %p376, %p377
      %s380 = sadd.s32 %s379, 1
      %p383 = scmp.eq.s32.totalorder %s36, 5
      %p384 = scmp.ne.s32.totalorder %s379, %s381
      %p385 = scmp.eq.s32.totalorder %s36, 0
      %p386 = por %p384, %p385
      %p387 = scmp.ne.s32.totalorder %s379, %s381
      %p388 = scmp.eq.s32.totalorder %s41, 5
      %p389 = por %p387, %p388
      %p390 = scmp.ne.s32.totalorder %s381, %s382
      %p391 = scmp.eq.s32.totalorder %s41, 0
      %p392 = por %p390, %p391
      %p393 = scmp.ne.s32.totalorder %s381, %s382
      %p394 = scmp.eq.s32.totalorder %s42, 5
      %p395 = por %p393, %p394
      %p397 = scmp.ne.s32.totalorder %s382, %s396
      %p398 = scmp.eq.s32.totalorder %s42, 0
      %p399 = por %p397, %p398
      %s401 = sadd.s32 %s400, 1
      %p404 = scmp.eq.s32.totalorder %s36, 5
      %p405 = scmp.ne.s32.totalorder %s400, %s402
      %p406 = scmp.eq.s32.totalorder %s36, 0
      %p407 = por %p405, %p406
      %p408 = scmp.ne.s32.totalorder %s400, %s402
      %p409 = scmp.eq.s32.totalorder %s41, 5
      %p410 = por %p408, %p409
      %p411 = scmp.ne.s32.totalorder %s402, %s403
      %p412 = scmp.eq.s32.totalorder %s41, 0
      %p413 = por %p411, %p412
      %p414 = scmp.ne.s32.totalorder %s402, %s403
      %p415 = scmp.eq.s32.totalorder %s42, 5
      %p416 = por %p414, %p415
      %p418 = scmp.ne.s32.totalorder %s403, %s417
      %p419 = scmp.eq.s32.totalorder %s42, 0
      %p420 = por %p418, %p419
      %s422 = sadd.s32 %s421, 1
      %p425 = scmp.eq.s32.totalorder %s36, 5
      %p426 = scmp.ne.s32.totalorder %s421, %s423
      %p427 = scmp.eq.s32.totalorder %s36, 0
      %p428 = por %p426, %p427
      %p429 = scmp.ne.s32.totalorder %s421, %s423
      %p430 = scmp.eq.s32.totalorder %s41, 5
      %p431 = por %p429, %p430
      %p432 = scmp.ne.s32.totalorder %s423, %s424
      %p433 = scmp.eq.s32.totalorder %s41, 0
      %p434 = por %p432, %p433
      %p435 = scmp.ne.s32.totalorder %s423, %s424
      %p436 = scmp.eq.s32.totalorder %s42, 5
      %p437 = por %p435, %p436
      %p439 = scmp.ne.s32.totalorder %s424, %s438
      %p440 = scmp.eq.s32.totalorder %s42, 0
      %p441 = por %p439, %p440
      %s443 = sadd.s32 %s442, 1
      %p446 = scmp.eq.s32.totalorder %s36, 5
      %p447 = scmp.ne.s32.totalorder %s442, %s444
      %p448 = scmp.eq.s32.totalorder %s36, 0
      %p449 = por %p447, %p448
      %p450 = scmp.ne.s32.totalorder %s442, %s444
      %p451 = scmp.eq.s32.totalorder %s41, 5
      %p452 = por %p450, %p451
      %p453 = scmp.ne.s32.totalorder %s444, %s445
      %p454 = scmp.eq.s32.totalorder %s41, 0
      %p455 = por %p453, %p454
      %p456 = scmp.ne.s32.totalorder %s444, %s445
      %p457 = scmp.eq.s32.totalorder %s42, 5
      %p458 = por %p456, %p457
      %p460 = scmp.ne.s32.totalorder %s445, %s459
      %p461 = scmp.eq.s32.totalorder %s42, 0
      %p462 = por %p460, %p461
      %s464 = sadd.s32 %s463, 1
      %p467 = scmp.eq.s32.totalorder %s36, 5
      %p468 = scmp.ne.s32.totalorder %s463, %s465
      %p469 = scmp.eq.s32.totalorder %s36, 0
      %p470 = por %p468, %p469
      %p471 = scmp.ne.s32.totalorder %s463, %s465
      %p472 = scmp.eq.s32.totalorder %s41, 5
      %p473 = por %p471, %p472
      %p474 = scmp.ne.s32.totalorder %s465, %s466
      %p475 = scmp.eq.s32.totalorder %s41, 0
      %p476 = por %p474, %p475
      %p477 = scmp.ne.s32.totalorder %s465, %s466
      %p478 = scmp.eq.s32.totalorder %s42, 5
      %p479 = por %p477, %p478
      %p481 = scmp.ne.s32.totalorder %s466, %s480
      %p482 = scmp.eq.s32.totalorder %s42, 0
      %p483 = por %p481, %p482
      %p484 = scmp.le.s32.totalorder 1, %s36
      %p485 = scmp.lt.s32.totalorder %s36, 7
      %p486 = pnand %p484, %p485
      %p487 = pneg %p486
      // Predicated region
      $region9: #{tpu_custom_call.1} parent=5 // pred_check
        _
      $region10: #{tpu_custom_call.1} parent=5 // pred_check_branch
        %489 = sbr.rel (%p486) target = $region12
      $region11: #{tpu_custom_call.1} parent=5 // pred_region
        %s490 = ssub.s32 %s36, 1
        // Predicated region
        $region13: #{tpu_custom_call.1} parent=11 // pred_check
          %p491 = pneg %p57
        $region14: #{tpu_custom_call.1} parent=11 // pred_check_branch
          %493 = sbr.rel (%p491) target = $region16
        $region15: #{tpu_custom_call.1} parent=11 // pred_region
          _
        $region16: #{tpu_custom_call.1} parent=11 // pred_fallthru
          _
        // Predicated region
        $region17: #{tpu_custom_call.1} parent=11 // pred_check
          %p494 = pneg %p78
        $region18: #{tpu_custom_call.1} parent=11 // pred_check_branch
          %496 = sbr.rel (%p494) target = $region20
        $region19: #{tpu_custom_call.1} parent=11 // pred_region
          %s498 = ssub.s32 512, 512
          %499 = vsyncadd [#allocation4], %s498
          %s500 = sshll.u32 [#allocation3], 4
          %s501 = int_to_ptr.vmem [resolvable:$true] %s500
          %506 = dma.hbm_to_vmem [thread:$0]  %s1, 512, %s501, [#allocation4], 128, 128, 8
        $region20: #{tpu_custom_call.1} parent=11 // pred_fallthru
          _
        // Predicated region
        $region21: #{tpu_custom_call.1} parent=11 // pred_check
          %p507 = pneg %p99
        $region22: #{tpu_custom_call.1} parent=11 // pred_check_branch
          %509 = sbr.rel (%p507) target = $region24
        $region23: #{tpu_custom_call.1} parent=11 // pred_region
          %s511 = ssub.s32 3072, 3072
          %512 = vsyncadd [#allocation7], %s511
          %s513 = sshll.u32 [#allocation6], 4
          %s514 = int_to_ptr.vmem [resolvable:$true] %s513
          %519 = dma.hbm_to_vmem [thread:$0]  %s2, 3072, %s514, [#allocation7], 192, 192, 12
        $region24: #{tpu_custom_call.1} parent=11 // pred_fallthru
          _
        // Predicated region
        $region25: #{tpu_custom_call.1} parent=11 // pred_check
          %p520 = pneg %p120
        $region26: #{tpu_custom_call.1} parent=11 // pred_check_branch
          %522 = sbr.rel (%p520) target = $region28
        $region27: #{tpu_custom_call.1} parent=11 // pred_region
          %s524 = ssub.s32 768, 768
          %525 = vsyncadd [#allocation7], %s524
          %s526 = sshll.u32 [#allocation8], 4
          %s527 = int_to_ptr.vmem [resolvable:$true] %s526
          %532 = dma.hbm_to_vmem [thread:$0]  %s3, 768, %s527, [#allocation7], 192, 192, 12
        $region28: #{tpu_custom_call.1} parent=11 // pred_fallthru
          _
        // Predicated region
        $region29: #{tpu_custom_call.1} parent=11 // pred_check
          %p533 = pneg %p141
        $region30: #{tpu_custom_call.1} parent=11 // pred_check_branch
          %535 = sbr.rel (%p533) target = $region32
        $region31: #{tpu_custom_call.1} parent=11 // pred_region
          %s537 = ssub.s32 384, 384
          %538 = vsyncadd [#allocation10], %s537
          %s540 = sshll.u32 [#allocation9], 4
          %s541 = int_to_ptr.vmem [resolvable:$true] %s540
          %543 = dma.hbm_to_vmem [thread:$0]  %s4, 384, %s541, [#allocation10]
        $region32: #{tpu_custom_call.1} parent=11 // pred_fallthru
          _
        // Predicated region
        $region33: #{tpu_custom_call.1} parent=11 // pred_check
          %p544 = pneg %p162
        $region34: #{tpu_custom_call.1} parent=11 // pred_check_branch
          %546 = sbr.rel (%p544) target = $region36
        $region35: #{tpu_custom_call.1} parent=11 // pred_region
          %s548 = ssub.s32 384, 384
          %549 = vsyncadd [#allocation10], %s548
          %s551 = sshll.u32 [#allocation11], 4
          %s552 = int_to_ptr.vmem [resolvable:$true] %s551
          %554 = dma.hbm_to_vmem [thread:$0]  %s5, 384, %s552, [#allocation10]
        $region36: #{tpu_custom_call.1} parent=11 // pred_fallthru
          _
        // Predicated region
        $region37: #{tpu_custom_call.1} parent=11 // pred_check
          %p555 = pneg %p235
        $region38: #{tpu_custom_call.1} parent=11 // pred_check_branch
          %557 = sbr.rel (%p555) target = $region40
        $region39: #{tpu_custom_call.1} parent=11 // pred_region
          %s559 = ssub.s32 384, 384
          %560 = vsyncadd [#allocation16], %s559
          %s562 = sshll.u32 [#allocation15], 4
          %s563 = int_to_ptr.vmem [resolvable:$true] %s562
          %565 = dma.hbm_to_vmem [thread:$0]  %s8, 384, %s563, [#allocation16]
        $region40: #{tpu_custom_call.1} parent=11 // pred_fallthru
          _
        // Predicated region
        $region41: #{tpu_custom_call.1} parent=11 // pred_check
          %p566 = pneg %p256
        $region42: #{tpu_custom_call.1} parent=11 // pred_check_branch
          %568 = sbr.rel (%p566) target = $region44
        $region43: #{tpu_custom_call.1} parent=11 // pred_region
          %s570 = ssub.s32 384, 384
          %571 = vsyncadd [#allocation16], %s570
          %s573 = sshll.u32 [#allocation17], 4
          %s574 = int_to_ptr.vmem [resolvable:$true] %s573
          %576 = dma.hbm_to_vmem [thread:$0]  %s9, 384, %s574, [#allocation16]
        $region44: #{tpu_custom_call.1} parent=11 // pred_fallthru
          _
        // Predicated region
        $region45: #{tpu_custom_call.1} parent=11 // pred_check
          %p577 = pneg %p277
        $region46: #{tpu_custom_call.1} parent=11 // pred_check_branch
          %579 = sbr.rel (%p577) target = $region48
        $region47: #{tpu_custom_call.1} parent=11 // pred_region
          %s581 = ssub.s32 384, 384
          %582 = vsyncadd [#allocation19], %s581
          %s584 = sshll.u32 [#allocation18], 4
          %s585 = int_to_ptr.vmem [resolvable:$true] %s584
          %587 = dma.hbm_to_vmem [thread:$0]  %s10, 384, %s585, [#allocation19]
        $region48: #{tpu_custom_call.1} parent=11 // pred_fallthru
          _
        // Predicated region
        $region49: #{tpu_custom_call.1} parent=11 // pred_check
          %p588 = pneg %p324
        $region50: #{tpu_custom_call.1} parent=11 // pred_check_branch
          %590 = sbr.rel (%p588) target = $region52
        $region51: #{tpu_custom_call.1} parent=11 // pred_region
          %s592 = ssub.s32 384, 384
          %593 = vsyncadd [#allocation7], %s592
          %s595 = sshll.u32 [#allocation21], 4
          %s596 = int_to_ptr.vmem [resolvable:$true] %s595
          %598 = dma.hbm_to_vmem [thread:$0]  %s12, 384, %s596, [#allocation7]
        $region52: #{tpu_custom_call.1} parent=11 // pred_fallthru
          _
        // Predicated region
        $region53: #{tpu_custom_call.1} parent=11 // pred_check
          %p599 = pneg %p371
        $region54: #{tpu_custom_call.1} parent=11 // pred_check_branch
          %601 = sbr.rel (%p599) target = $region56
        $region55: #{tpu_custom_call.1} parent=11 // pred_region
          %s603 = ssub.s32 384, 384
          %604 = vsyncadd [#allocation16], %s603
          %s606 = sshll.u32 [#allocation23], 4
          %s607 = int_to_ptr.vmem [resolvable:$true] %s606
          %609 = dma.hbm_to_vmem [thread:$0]  %s14, 384, %s607, [#allocation16]
        $region56: #{tpu_custom_call.1} parent=11 // pred_fallthru
          _
        // Predicated region
        $region57: #{tpu_custom_call.1} parent=11 // pred_check
          %p610 = pneg %p392
        $region58: #{tpu_custom_call.1} parent=11 // pred_check_branch
          %612 = sbr.rel (%p610) target = $region60
        $region59: #{tpu_custom_call.1} parent=11 // pred_region
          %s614 = ssub.s32 48, 48
          %615 = vsyncadd [#allocation19], %s614
          %s617 = sshll.u32 [#allocation24], 4
          %s618 = int_to_ptr.vmem [resolvable:$true] %s617
          %620 = dma.hbm_to_vmem [thread:$0]  %s15, 48, %s618, [#allocation19]
        $region60: #{tpu_custom_call.1} parent=11 // pred_fallthru
          _
        // Predicated region
        $region61: #{tpu_custom_call.1} parent=11 // pred_check
          %p621 = pneg %p413
        $region62: #{tpu_custom_call.1} parent=11 // pred_check_branch
          %623 = sbr.rel (%p621) target = $region64
        $region63: #{tpu_custom_call.1} parent=11 // pred_region
          %s625 = ssub.s32 48, 48
          %626 = vsyncadd [#allocation26], %s625
          %s628 = sshll.u32 [#allocation25], 4
          %s629 = int_to_ptr.vmem [resolvable:$true] %s628
          %631 = dma.hbm_to_vmem [thread:$0]  %s16, 48, %s629, [#allocation26]
        $region64: #{tpu_custom_call.1} parent=11 // pred_fallthru
          _
        // Predicated region
        $region65: #{tpu_custom_call.1} parent=11 // pred_check
          %p632 = pneg %p434
        $region66: #{tpu_custom_call.1} parent=11 // pred_check_branch
          %634 = sbr.rel (%p632) target = $region68
        $region67: #{tpu_custom_call.1} parent=11 // pred_region
          %s636 = ssub.s32 3072, 3072
          %637 = vsyncadd [#allocation26], %s636
          %s638 = sshll.u32 [#allocation27], 4
          %s639 = int_to_ptr.vmem [resolvable:$true] %s638
          %644 = dma.hbm_to_vmem [thread:$0]  %s17, 3072, %s639, [#allocation26], 64, 64, 4
        $region68: #{tpu_custom_call.1} parent=11 // pred_fallthru
          _
        // Predicated region
        $region69: #{tpu_custom_call.1} parent=11 // pred_check
          %p645 = pneg %p455
        $region70: #{tpu_custom_call.1} parent=11 // pred_check_branch
          %647 = sbr.rel (%p645) target = $region72
        $region71: #{tpu_custom_call.1} parent=11 // pred_region
          %s649 = ssub.s32 16, 16
          %650 = vsyncadd [#allocation29], %s649
          %s652 = sshll.u32 [#allocation28], 4
          %s653 = int_to_ptr.vmem [resolvable:$true] %s652
          %655 = dma.hbm_to_vmem [thread:$0]  %s18, 16, %s653, [#allocation29]
        $region72: #{tpu_custom_call.1} parent=11 // pred_fallthru
          _
      $region12: #{tpu_custom_call.1} parent=5 // pred_fallthru
        _
      %p656 = scmp.lt.s32.totalorder %s36, 6
      // Predicated region
      $region73: #{tpu_custom_call.1} parent=5 // pred_check
        %p657 = pneg %p656
      $region74: #{tpu_custom_call.1} parent=5 // pred_check_branch
        %659 = sbr.rel (%p657) target = $region76
      $region75: #{tpu_custom_call.1} parent=5 // pred_region
        // Predicated region
        $region77: #{tpu_custom_call.1} parent=75 // pred_check
          %p660 = pneg %p182
        $region78: #{tpu_custom_call.1} parent=75 // pred_check_branch
          %662 = sbr.rel (%p660) target = $region80
        $region79: #{tpu_custom_call.1} parent=75 // pred_region
          %s663 = sand.u32 %s36, 1
          %s664 = scalar_lea.sflag [#allocation13], %s663
          %s665 = sand.u32 %s172, 1
          %s666 = smul.addr %s665, 1728
          %s667 = scalar_lea.vmem [#allocation12], %s666
          %s669 = ssub.s32 27648, 27648
          %670 = vsyncadd %s664, %s669
          %s671 = smul.addr %s36, 432
          %s672 = smul.addr %s671, 64
          %s673 = scalar_lea.hbm %s6, %s672
          %s674 = sshll.u32 %s667, 4
          %s675 = int_to_ptr.vmem [resolvable:$true] %s674
          %680 = dma.hbm_to_vmem [thread:$0]  %s673, 27648, %s675, %s664, 576, 576, 36
        $region80: #{tpu_custom_call.1} parent=75 // pred_fallthru
          _
        // Predicated region
        $region81: #{tpu_custom_call.1} parent=75 // pred_check
          %p681 = pneg %p208
        $region82: #{tpu_custom_call.1} parent=75 // pred_check_branch
          %683 = sbr.rel (%p681) target = $region84
        $region83: #{tpu_custom_call.1} parent=75 // pred_region
          %s684 = sand.u32 %s36, 1
          %s685 = scalar_lea.sflag [#allocation13], %s684
          %s686 = sand.u32 %s198, 1
          %s687 = smul.addr %s686, 576
          %s688 = scalar_lea.vmem [#allocation14], %s687
          %s690 = ssub.s32 9216, 9216
          %691 = vsyncadd %s685, %s690
          %s692 = smul.addr %s36, 144
          %s693 = smul.addr %s692, 64
          %s694 = scalar_lea.hbm %s7, %s693
          %s695 = sshll.u32 %s688, 4
          %s696 = int_to_ptr.vmem [resolvable:$true] %s695
          %701 = dma.hbm_to_vmem [thread:$0]  %s694, 9216, %s696, %s685, 192, 192, 12
        $region84: #{tpu_custom_call.1} parent=75 // pred_fallthru
          _
        // Predicated region
        $region85: #{tpu_custom_call.1} parent=75 // pred_check
          %p702 = pneg %p297
        $region86: #{tpu_custom_call.1} parent=75 // pred_check_branch
          %704 = sbr.rel (%p702) target = $region88
        $region87: #{tpu_custom_call.1} parent=75 // pred_region
          %s705 = sand.u32 %s36, 1
          %s706 = scalar_lea.sflag [#allocation4], %s705
          %s707 = sand.u32 %s287, 1
          %s708 = smul.addr %s707, 576
          %s709 = scalar_lea.vmem [#allocation20], %s708
          %s711 = ssub.s32 9216, 9216
          %712 = vsyncadd %s706, %s711
          %s713 = smul.addr %s36, 144
          %s714 = smul.addr %s713, 64
          %s715 = scalar_lea.hbm %s11, %s714
          %s716 = sshll.u32 %s709, 4
          %s717 = int_to_ptr.vmem [resolvable:$true] %s716
          %722 = dma.hbm_to_vmem [thread:$0]  %s715, 9216, %s717, %s706, 192, 192, 12
        $region88: #{tpu_custom_call.1} parent=75 // pred_fallthru
          _
        // Predicated region
        $region89: #{tpu_custom_call.1} parent=75 // pred_check
          %p723 = pneg %p344
        $region90: #{tpu_custom_call.1} parent=75 // pred_check_branch
          %725 = sbr.rel (%p723) target = $region92
        $region91: #{tpu_custom_call.1} parent=75 // pred_region
          %s726 = sand.u32 %s36, 1
          %s727 = scalar_lea.sflag [#allocation13], %s726
          %s728 = sand.u32 %s334, 1
          %s729 = smul.addr %s728, 576
          %s730 = scalar_lea.vmem [#allocation22], %s729
          %s732 = ssub.s32 9216, 9216
          %733 = vsyncadd %s727, %s732
          %s734 = smul.addr %s36, 144
          %s735 = smul.addr %s734, 64
          %s736 = scalar_lea.hbm %s13, %s735
          %s737 = sshll.u32 %s730, 4
          %s738 = int_to_ptr.vmem [resolvable:$true] %s737
          %743 = dma.hbm_to_vmem [thread:$0]  %s736, 9216, %s738, %s727, 192, 192, 12
        $region92: #{tpu_custom_call.1} parent=75 // pred_fallthru
          _
      $region76: #{tpu_custom_call.1} parent=5 // pred_fallthru
        _
      %p744 = scmp.le.s32.totalorder 1, %s36
      %p745 = scmp.lt.s32.totalorder %s36, 7
      %p746 = pnand %p744, %p745
      %p747 = pneg %p746
      // Predicated region
      $region93: #{tpu_custom_call.1} parent=5 // pred_check
        _
      $region94: #{tpu_custom_call.1} parent=5 // pred_check_branch
        %749 = sbr.rel (%p746) target = $region96
      $region95: #{tpu_custom_call.1} parent=5 // pred_region
        %s750 = ssub.s32 %s36, 1
        // Predicated region
        $region97: #{tpu_custom_call.1} parent=95 // pred_check
          %p751 = pneg %p78
        $region98: #{tpu_custom_call.1} parent=95 // pred_check_branch
          %753 = sbr.rel (%p751) target = $region100
        $region99: #{tpu_custom_call.1} parent=95 // pred_region
          %754 = dma.done [#allocation4], 512
        $region100: #{tpu_custom_call.1} parent=95 // pred_fallthru
          _
        // Predicated region
        $region101: #{tpu_custom_call.1} parent=95 // pred_check
          %p755 = pneg %p99
        $region102: #{tpu_custom_call.1} parent=95 // pred_check_branch
          %757 = sbr.rel (%p755) target = $region104
        $region103: #{tpu_custom_call.1} parent=95 // pred_region
          %758 = dma.done [#allocation7], 3072
        $region104: #{tpu_custom_call.1} parent=95 // pred_fallthru
          _
        // Predicated region
        $region105: #{tpu_custom_call.1} parent=95 // pred_check
          %p759 = pneg %p120
        $region106: #{tpu_custom_call.1} parent=95 // pred_check_branch
          %761 = sbr.rel (%p759) target = $region108
        $region107: #{tpu_custom_call.1} parent=95 // pred_region
          %762 = dma.done [#allocation7], 768
        $region108: #{tpu_custom_call.1} parent=95 // pred_fallthru
          _
        // Predicated region
        $region109: #{tpu_custom_call.1} parent=95 // pred_check
          %p763 = pneg %p141
        $region110: #{tpu_custom_call.1} parent=95 // pred_check_branch
          %765 = sbr.rel (%p763) target = $region112
        $region111: #{tpu_custom_call.1} parent=95 // pred_region
          %766 = dma.done [#allocation10], 384
        $region112: #{tpu_custom_call.1} parent=95 // pred_fallthru
          _
        // Predicated region
        $region113: #{tpu_custom_call.1} parent=95 // pred_check
          %p767 = pneg %p162
        $region114: #{tpu_custom_call.1} parent=95 // pred_check_branch
          %769 = sbr.rel (%p767) target = $region116
        $region115: #{tpu_custom_call.1} parent=95 // pred_region
          %770 = dma.done [#allocation10], 384
        $region116: #{tpu_custom_call.1} parent=95 // pred_fallthru
          _
        %s771 = sand.u32 %s41, 1
        %s772 = scalar_lea.sflag [#allocation13], %s771
        %s773 = sand.u32 %s175, 1
        %s774 = smul.addr %s773, 1728
        %s775 = scalar_lea.vmem [#allocation12], %s774
        // Predicated region
        $region117: #{tpu_custom_call.1} parent=95 // pred_check
          %p776 = pneg %p188
        $region118: #{tpu_custom_call.1} parent=95 // pred_check_branch
          %778 = sbr.rel (%p776) target = $region120
        $region119: #{tpu_custom_call.1} parent=95 // pred_region
          %779 = dma.done %s772, 27648
        $region120: #{tpu_custom_call.1} parent=95 // pred_fallthru
          _
        %s780 = sand.u32 %s41, 1
        %s781 = scalar_lea.sflag [#allocation13], %s780
        %s782 = sand.u32 %s201, 1
        %s783 = smul.addr %s782, 576
        %s784 = scalar_lea.vmem [#allocation14], %s783
        // Predicated region
        $region121: #{tpu_custom_call.1} parent=95 // pred_check
          %p785 = pneg %p214
        $region122: #{tpu_custom_call.1} parent=95 // pred_check_branch
          %787 = sbr.rel (%p785) target = $region124
        $region123: #{tpu_custom_call.1} parent=95 // pred_region
          %788 = dma.done %s781, 9216
        $region124: #{tpu_custom_call.1} parent=95 // pred_fallthru
          _
        // Predicated region
        $region125: #{tpu_custom_call.1} parent=95 // pred_check
          %p789 = pneg %p235
        $region126: #{tpu_custom_call.1} parent=95 // pred_check_branch
          %791 = sbr.rel (%p789) target = $region128
        $region127: #{tpu_custom_call.1} parent=95 // pred_region
          %792 = dma.done [#allocation16], 384
        $region128: #{tpu_custom_call.1} parent=95 // pred_fallthru
          _
        // Predicated region
        $region129: #{tpu_custom_call.1} parent=95 // pred_check
          %p793 = pneg %p256
        $region130: #{tpu_custom_call.1} parent=95 // pred_check_branch
          %795 = sbr.rel (%p793) target = $region132
        $region131: #{tpu_custom_call.1} parent=95 // pred_region
          %796 = dma.done [#allocation16], 384
        $region132: #{tpu_custom_call.1} parent=95 // pred_fallthru
          _
        // Predicated region
        $region133: #{tpu_custom_call.1} parent=95 // pred_check
          %p797 = pneg %p277
        $region134: #{tpu_custom_call.1} parent=95 // pred_check_branch
          %799 = sbr.rel (%p797) target = $region136
        $region135: #{tpu_custom_call.1} parent=95 // pred_region
          %800 = dma.done [#allocation19], 384
        $region136: #{tpu_custom_call.1} parent=95 // pred_fallthru
          _
        %s801 = sand.u32 %s41, 1
        %s802 = scalar_lea.sflag [#allocation4], %s801
        %s803 = sand.u32 %s290, 1
        %s804 = smul.addr %s803, 576
        %s805 = scalar_lea.vmem [#allocation20], %s804
        // Predicated region
        $region137: #{tpu_custom_call.1} parent=95 // pred_check
          %p806 = pneg %p303
        $region138: #{tpu_custom_call.1} parent=95 // pred_check_branch
          %808 = sbr.rel (%p806) target = $region140
        $region139: #{tpu_custom_call.1} parent=95 // pred_region
          %809 = dma.done %s802, 9216
        $region140: #{tpu_custom_call.1} parent=95 // pred_fallthru
          _
        // Predicated region
        $region141: #{tpu_custom_call.1} parent=95 // pred_check
          %p810 = pneg %p324
        $region142: #{tpu_custom_call.1} parent=95 // pred_check_branch
          %812 = sbr.rel (%p810) target = $region144
        $region143: #{tpu_custom_call.1} parent=95 // pred_region
          %813 = dma.done [#allocation7], 384
        $region144: #{tpu_custom_call.1} parent=95 // pred_fallthru
          _
        %s814 = sand.u32 %s41, 1
        %s815 = scalar_lea.sflag [#allocation13], %s814
        %s816 = sand.u32 %s337, 1
        %s817 = smul.addr %s816, 576
        %s818 = scalar_lea.vmem [#allocation22], %s817
        // Predicated region
        $region145: #{tpu_custom_call.1} parent=95 // pred_check
          %p819 = pneg %p350
        $region146: #{tpu_custom_call.1} parent=95 // pred_check_branch
          %821 = sbr.rel (%p819) target = $region148
        $region147: #{tpu_custom_call.1} parent=95 // pred_region
          %822 = dma.done %s815, 9216
        $region148: #{tpu_custom_call.1} parent=95 // pred_fallthru
          _
        // Predicated region
        $region149: #{tpu_custom_call.1} parent=95 // pred_check
          %p823 = pneg %p371
        $region150: #{tpu_custom_call.1} parent=95 // pred_check_branch
          %825 = sbr.rel (%p823) target = $region152
        $region151: #{tpu_custom_call.1} parent=95 // pred_region
          %826 = dma.done [#allocation16], 384
        $region152: #{tpu_custom_call.1} parent=95 // pred_fallthru
          _
        // Predicated region
        $region153: #{tpu_custom_call.1} parent=95 // pred_check
          %p827 = pneg %p392
        $region154: #{tpu_custom_call.1} parent=95 // pred_check_branch
          %829 = sbr.rel (%p827) target = $region156
        $region155: #{tpu_custom_call.1} parent=95 // pred_region
          %830 = dma.done [#allocation19], 48
        $region156: #{tpu_custom_call.1} parent=95 // pred_fallthru
          _
        // Predicated region
        $region157: #{tpu_custom_call.1} parent=95 // pred_check
          %p831 = pneg %p413
        $region158: #{tpu_custom_call.1} parent=95 // pred_check_branch
          %833 = sbr.rel (%p831) target = $region160
        $region159: #{tpu_custom_call.1} parent=95 // pred_region
          %834 = dma.done [#allocation26], 48
        $region160: #{tpu_custom_call.1} parent=95 // pred_fallthru
          _
        // Predicated region
        $region161: #{tpu_custom_call.1} parent=95 // pred_check
          %p835 = pneg %p434
        $region162: #{tpu_custom_call.1} parent=95 // pred_check_branch
          %837 = sbr.rel (%p835) target = $region164
        $region163: #{tpu_custom_call.1} parent=95 // pred_region
          %838 = dma.done [#allocation26], 3072
        $region164: #{tpu_custom_call.1} parent=95 // pred_fallthru
          _
        // Predicated region
        $region165: #{tpu_custom_call.1} parent=95 // pred_check
          %p839 = pneg %p455
        $region166: #{tpu_custom_call.1} parent=95 // pred_check_branch
          %841 = sbr.rel (%p839) target = $region168
        $region167: #{tpu_custom_call.1} parent=95 // pred_region
          %842 = dma.done [#allocation29], 16
        $region168: #{tpu_custom_call.1} parent=95 // pred_fallthru
          _
        %p843 = pneg %p57
        %p844 = pneg %p54
        %p845 = pneg %p78
        %p846 = pneg %p75
        %p847 = pneg %p99
        %p848 = pneg %p96
        %p849 = pneg %p120
        %p850 = pneg %p117
        %p851 = pneg %p141
        %p852 = pneg %p138
        %p853 = pneg %p162
        %p854 = pneg %p159
        %s855 = sand.u32 %s41, 1
        %s856 = scalar_lea.sflag [#allocation13], %s855
        %s857 = sand.u32 %s175, 1
        %s858 = smul.addr %s857, 1728
        %s859 = scalar_lea.vmem [#allocation12], %s858
        %p860 = pneg %p188
        %p861 = pneg %p185
        %s862 = sand.u32 %s41, 1
        %s863 = scalar_lea.sflag [#allocation13], %s862
        %s864 = sand.u32 %s201, 1
        %s865 = smul.addr %s864, 576
        %s866 = scalar_lea.vmem [#allocation14], %s865
        %p867 = pneg %p214
        %p868 = pneg %p211
        %p869 = pneg %p235
        %p870 = pneg %p232
        %p871 = pneg %p256
        %p872 = pneg %p253
        %p873 = pneg %p277
        %p874 = pneg %p274
        %s875 = sand.u32 %s41, 1
        %s876 = scalar_lea.sflag [#allocation4], %s875
        %s877 = sand.u32 %s290, 1
        %s878 = smul.addr %s877, 576
        %s879 = scalar_lea.vmem [#allocation20], %s878
        %p880 = pneg %p303
        %p881 = pneg %p300
        %p882 = pneg %p324
        %p883 = pneg %p321
        %s884 = sand.u32 %s41, 1
        %s885 = scalar_lea.sflag [#allocation13], %s884
        %s886 = sand.u32 %s337, 1
        %s887 = smul.addr %s886, 576
        %s888 = scalar_lea.vmem [#allocation22], %s887
        %p889 = pneg %p350
        %p890 = pneg %p347
        %p891 = pneg %p371
        %p892 = pneg %p368
        %p893 = pneg %p392
        %p894 = pneg %p389
        %p895 = pneg %p413
        %p896 = pneg %p410
        %p897 = pneg %p434
        %p898 = pneg %p431
        %p899 = pneg %p455
        %p900 = pneg %p452
        %p901 = pneg %p476
        %p902 = pneg %p473
        %p904 = scmp.eq.s32.totalorder %s41, 0
        // Predicated region
        $region169: #{tpu_custom_call.1} parent=95 // pred_check
          %p905 = pneg %p904
        $region170: #{tpu_custom_call.1} parent=95 // pred_check_branch
          %907 = sbr.rel (%p905) target = $region172
        $region171: #{tpu_custom_call.1} parent=95 // pred_region
          %v908 = vld [vmem:[%s0] sm:$0xff]
          %v909 = vld [vmem:[%s0 + $0x8] sm:$0xff]
          %v910 = vld [vmem:[%s0 + $0x10] sm:$0xff]
          %v911 = vld [vmem:[%s0 + $0x18] sm:$0xff]
          %v912 = vld [vmem:[%s0 + $0x20] sm:$0xff]
          %v913 = vld [vmem:[%s0 + $0x28] sm:$0xff]
          %v914 = vld [vmem:[%s0 + $0x30] sm:$0xff]
          %v915 = vld [vmem:[%s0 + $0x38] sm:$0xff]
          %v916 = vlaneseq
          %v917 = vand.u32 %v916, 127
          %918 = vset.pattern.permute.xlu0 0
          %919 = vperm.xlu0 %918, %v908
          %v920 = vpop.permute.xlu0 %919
          %921 = vset.pattern.permute.xlu0 0
          %922 = vperm.xlu0 %921, %v909
          %v923 = vpop.permute.xlu0 %922
          %924 = vset.pattern.permute.xlu0 0
          %925 = vperm.xlu0 %924, %v910
          %v926 = vpop.permute.xlu0 %925
          %927 = vset.pattern.permute.xlu0 0
          %928 = vperm.xlu0 %927, %v911
          %v929 = vpop.permute.xlu0 %928
          %930 = vset.pattern.permute.xlu0 0
          %931 = vperm.xlu0 %930, %v912
          %v932 = vpop.permute.xlu0 %931
          %933 = vset.pattern.permute.xlu0 0
          %934 = vperm.xlu0 %933, %v913
          %v935 = vpop.permute.xlu0 %934
          %936 = vset.pattern.permute.xlu0 0
          %937 = vperm.xlu0 %936, %v914
          %v938 = vpop.permute.xlu0 %937
          %939 = vset.pattern.permute.xlu0 0
          %940 = vperm.xlu0 %939, %v915
          %v941 = vpop.permute.xlu0 %940
          %vm942 = vcmp.eq.s32.totalorder %v917, %v920
          %vm943 = vcmp.eq.s32.totalorder %v917, %v923
          %vm944 = vcmp.eq.s32.totalorder %v917, %v926
          %vm945 = vcmp.eq.s32.totalorder %v917, %v929
          %vm946 = vcmp.eq.s32.totalorder %v917, %v932
          %vm947 = vcmp.eq.s32.totalorder %v917, %v935
          %vm948 = vcmp.eq.s32.totalorder %v917, %v938
          %vm949 = vcmp.eq.s32.totalorder %v917, %v941
          %v950 = vsel %vm942, 1, 0
          %v951 = vsel %vm943, 1, 0
          %v952 = vsel %vm944, 1, 0
          %v953 = vsel %vm945, 1, 0
          %v954 = vsel %vm946, 1, 0
          %v955 = vsel %vm947, 1, 0
          %v956 = vsel %vm948, 1, 0
          %v957 = vsel %vm949, 1, 0
          %v958 = vcvt.s32.f32 %v950
          %v959 = vcvt.s32.f32 %v951
          %v960 = vcvt.s32.f32 %v952
          %v961 = vcvt.s32.f32 %v953
          %v962 = vcvt.s32.f32 %v954
          %v963 = vcvt.s32.f32 %v955
          %v964 = vcvt.s32.f32 %v956
          %v965 = vcvt.s32.f32 %v957
          %v966 = vpack.c.bf16 %v959, %v958
          %v967 = vpack.c.bf16 %v961, %v960
          %v968 = vpack.c.bf16 %v963, %v962
          %v969 = vpack.c.bf16 %v965, %v964
          %v970 = vld [vmem:[#allocation6] sm:$0xff]
          %v971 = vld [vmem:[#allocation6 + $0x8] sm:$0xf]
          %v972 = vld [vmem:[#allocation6 + $0xc] sm:$0xff]
          %v973 = vld [vmem:[#allocation6 + $0x14] sm:$0xf]
          %v974 = vld [vmem:[#allocation6 + $0x18] sm:$0xff]
          %v975 = vld [vmem:[#allocation6 + $0x20] sm:$0xf]
          %v976 = vld [vmem:[#allocation6 + $0x24] sm:$0xff]
          %v977 = vld [vmem:[#allocation6 + $0x2c] sm:$0xf]
          %v978 = vld [vmem:[#allocation6 + $0x30] sm:$0xff]
          %v979 = vld [vmem:[#allocation6 + $0x38] sm:$0xf]
          %v980 = vld [vmem:[#allocation6 + $0x3c] sm:$0xff]
          %v981 = vld [vmem:[#allocation6 + $0x44] sm:$0xf]
          %v982 = vld [vmem:[#allocation6 + $0x48] sm:$0xff]
          %v983 = vld [vmem:[#allocation6 + $0x50] sm:$0xf]
          %v984 = vld [vmem:[#allocation6 + $0x54] sm:$0xff]
          %v985 = vld [vmem:[#allocation6 + $0x5c] sm:$0xf]
          %v986 = vld [vmem:[#allocation6 + $0x60] sm:$0xff]
          %v987 = vld [vmem:[#allocation6 + $0x68] sm:$0xf]
          %v988 = vld [vmem:[#allocation6 + $0x6c] sm:$0xff]
          %v989 = vld [vmem:[#allocation6 + $0x74] sm:$0xf]
          %v990 = vld [vmem:[#allocation6 + $0x78] sm:$0xff]
          %v991 = vld [vmem:[#allocation6 + $0x80] sm:$0xf]
          %v992 = vld [vmem:[#allocation6 + $0x84] sm:$0xff]
          %v993 = vld [vmem:[#allocation6 + $0x8c] sm:$0xf]
          %v994 = vld [vmem:[#allocation6 + $0x90] sm:$0xff]
          %v995 = vld [vmem:[#allocation6 + $0x98] sm:$0xf]
          %v996 = vld [vmem:[#allocation6 + $0x9c] sm:$0xff]
          %v997 = vld [vmem:[#allocation6 + $0xa4] sm:$0xf]
          %v998 = vld [vmem:[#allocation6 + $0xa8] sm:$0xff]
          %v999 = vld [vmem:[#allocation6 + $0xb0] sm:$0xf]
          %v1000 = vld [vmem:[#allocation6 + $0xb4] sm:$0xff]
          %v1001 = vld [vmem:[#allocation6 + $0xbc] sm:$0xf]
          %v1034 = vunpack.c.l.b16 %v970
          %v1035 = vunpack.c.h.b16 %v970
          %v1036 = vunpack.c.l.b16 %v971
          %v1037 = vunpack.c.l.b16 %v972
          %v1038 = vunpack.c.h.b16 %v972
          %v1039 = vunpack.c.l.b16 %v973
          %v1040 = vunpack.c.l.b16 %v974
          %v1041 = vunpack.c.h.b16 %v974
          %v1042 = vunpack.c.l.b16 %v975
          %v1043 = vunpack.c.l.b16 %v976
          %v1044 = vunpack.c.h.b16 %v976
          %v1045 = vunpack.c.l.b16 %v977
          %v1046 = vunpack.c.l.b16 %v978
          %v1047 = vunpack.c.h.b16 %v978
          %v1048 = vunpack.c.l.b16 %v979
          %v1049 = vunpack.c.l.b16 %v980
          %v1050 = vunpack.c.h.b16 %v980
          %v1051 = vunpack.c.l.b16 %v981
          %v1052 = vunpack.c.l.b16 %v982
          %v1053 = vunpack.c.h.b16 %v982
          %v1054 = vunpack.c.l.b16 %v983
          %v1055 = vunpack.c.l.b16 %v984
          %v1056 = vunpack.c.h.b16 %v984
          %v1057 = vunpack.c.l.b16 %v985
          %v1058 = vunpack.c.l.b16 %v986
          %v1059 = vunpack.c.h.b16 %v986
          %v1060 = vunpack.c.l.b16 %v987
          %v1061 = vunpack.c.l.b16 %v988
          %v1062 = vunpack.c.h.b16 %v988
          %v1063 = vunpack.c.l.b16 %v989
          %v1064 = vunpack.c.l.b16 %v990
          %v1065 = vunpack.c.h.b16 %v990
          %v1066 = vunpack.c.l.b16 %v991
          %v1067 = vunpack.c.l.b16 %v992
          %v1068 = vunpack.c.h.b16 %v992
          %v1069 = vunpack.c.l.b16 %v993
          %v1070 = vunpack.c.l.b16 %v994
          %v1071 = vunpack.c.h.b16 %v994
          %v1072 = vunpack.c.l.b16 %v995
          %v1073 = vunpack.c.l.b16 %v996
          %v1074 = vunpack.c.h.b16 %v996
          %v1075 = vunpack.c.l.b16 %v997
          %v1076 = vunpack.c.l.b16 %v998
          %v1077 = vunpack.c.h.b16 %v998
          %v1078 = vunpack.c.l.b16 %v999
          %v1079 = vunpack.c.l.b16 %v1000
          %v1080 = vunpack.c.h.b16 %v1000
          %v1081 = vunpack.c.l.b16 %v1001
          %v1082 = vpack.c.b16 %v1037, %v1034
          %v1083 = vpack.c.b16 %v1038, %v1035
          %v1084 = vpack.c.b16 %v1039, %v1036
          %v1085 = vpack.c.b16 %v1043, %v1040
          %v1086 = vpack.c.b16 %v1044, %v1041
          %v1087 = vpack.c.b16 %v1045, %v1042
          %v1088 = vpack.c.b16 %v1049, %v1046
          %v1089 = vpack.c.b16 %v1050, %v1047
          %v1090 = vpack.c.b16 %v1051, %v1048
          %v1091 = vpack.c.b16 %v1055, %v1052
          %v1092 = vpack.c.b16 %v1056, %v1053
          %v1093 = vpack.c.b16 %v1057, %v1054
          %v1094 = vpack.c.b16 %v1061, %v1058
          %v1095 = vpack.c.b16 %v1062, %v1059
          %v1096 = vpack.c.b16 %v1063, %v1060
          %v1097 = vpack.c.b16 %v1067, %v1064
          %v1098 = vpack.c.b16 %v1068, %v1065
          %v1099 = vpack.c.b16 %v1069, %v1066
          %v1100 = vpack.c.b16 %v1073, %v1070
          %v1101 = vpack.c.b16 %v1074, %v1071
          %v1102 = vpack.c.b16 %v1075, %v1072
          %v1103 = vpack.c.b16 %v1079, %v1076
          %v1104 = vpack.c.b16 %v1080, %v1077
          %v1105 = vpack.c.b16 %v1081, %v1078
          %1130 = vmatprep.subr.bf16.mxu0 %v1083
          %1131 = vmatpush1.bf16.msra.mxu0 %v1082
          %1132 = vmatprep.subr.bf16.mxu0 %v1086
          %1133 = vmatpush1.bf16.msra.mxu0 %v1085
          %1134 = vmatprep.subr.bf16.mxu0 %v1089
          %1135 = vmatpush1.bf16.msra.mxu0 %v1088
          %1136 = vmatprep.subr.bf16.mxu0 %v1092
          %1137 = vmatpush1.bf16.msra.mxu0 %v1091
          %1138 = vmatprep.subr.bf16.mxu0 %v1095
          %1139 = vmatpush1.bf16.msra.mxu0 %v1094
          %1140 = vmatprep.subr.bf16.mxu0 %v1098
          %1141 = vmatpush1.bf16.msra.mxu0 %v1097
          %1142 = vmatprep.subr.bf16.mxu0 %v1101
          %1143 = vmatpush1.bf16.msra.mxu0 %v1100
          %1144 = vmatprep.subr.bf16.mxu0 %v1104
          %1145 = vmatpush1.bf16.msra.mxu0 %v1103
          %1146 = vmatprep.subr.bf16.mxu0 0
          %1147 = vmatpush1.bf16.msra.mxu0 0
          %1148 = vmatprep.subr.bf16.mxu0 0
          %1149 = vmatpush1.bf16.msra.mxu0 0
          %1150 = vmatprep.subr.bf16.mxu0 0
          %1151 = vmatpush1.bf16.msra.mxu0 0
          %1152 = vmatprep.subr.bf16.mxu0 0
          %1153 = vmatpush1.bf16.msra.mxu0 0
          %1154 = vmatprep.subr.bf16.mxu0 0
          %1155 = vmatpush1.bf16.msra.mxu0 0
          %1156 = vmatprep.subr.bf16.mxu0 0
          %1157 = vmatpush1.bf16.msra.mxu0 0
          %1158 = vmatprep.subr.bf16.mxu0 0
          %1159 = vmatpush1.bf16.msra.mxu0 0
          %1160 = vmatprep.subr.bf16.mxu0 0
          %1161 = vmatpush1.bf16.msra.mxu0 0
          %1162 = vmatprep.mubr.bf16.mxu0 0
          %1163 = vmatmul.mubr.bf16.gmra.mrb[0].mxu0 %v966
          %v1164 = vpop.f32.mrb[0].mxu0
          %v1165 = vadd.f32 0.0, %v1164
          %v1166 = vpop.f32.mrb[0].mxu0
          %v1167 = vadd.f32 0.0, %v1166
          %v1168 = vpop.f32.mrb[0].mxu0
          %v1169 = vadd.f32 0.0, %v1168
          %v1170 = vpop.f32.mrb[0].mxu0
          %v1171 = vadd.f32 0.0, %v1170
          %1172 = vmatprep.mubr.bf16.mxu0 0
          %1173 = vmatmul.mubr.bf16.gmra.mrb[0].mxu0 %v967
          %v1174 = vpop.f32.mrb[0].mxu0
          %v1175 = vadd.f32 0.0, %v1174
          %v1176 = vpop.f32.mrb[0].mxu0
          %v1177 = vadd.f32 0.0, %v1176
          %v1178 = vpop.f32.mrb[0].mxu0
          %v1179 = vadd.f32 0.0, %v1178
          %v1180 = vpop.f32.mrb[0].mxu0
          %v1181 = vadd.f32 0.0, %v1180
          %1182 = vmatprep.mubr.bf16.mxu0 0
          %1183 = vmatmul.mubr.bf16.gmra.mrb[0].mxu0 %v968
          %v1184 = vpop.f32.mrb[0].mxu0
          %v1185 = vadd.f32 0.0, %v1184
          %v1186 = vpop.f32.mrb[0].mxu0
          %v1187 = vadd.f32 0.0, %v1186
          %v1188 = vpop.f32.mrb[0].mxu0
          %v1189 = vadd.f32 0.0, %v1188
          %v1190 = vpop.f32.mrb[0].mxu0
          %v1191 = vadd.f32 0.0, %v1190
          %1192 = vmatprep.mubr.bf16.mxu0 0
          %1193 = vmatmul.mubr.bf16.gmra.mrb[0].mxu0 %v969
          %v1194 = vpop.f32.mrb[0].mxu0
          %v1195 = vadd.f32 0.0, %v1194
          %v1196 = vpop.f32.mrb[0].mxu0
          %v1197 = vadd.f32 0.0, %v1196
          %v1198 = vpop.f32.mrb[0].mxu0
          %v1199 = vadd.f32 0.0, %v1198
          %v1200 = vpop.f32.mrb[0].mxu0
          %v1201 = vadd.f32 0.0, %v1200
          %1202 = vdwg.mxu0
          %1203 = vmatprep.subr.bf16.mxu0 0
          %1204 = vmatpush1.bf16.msra.mxu0 %v1084
          %1205 = vmatprep.subr.bf16.mxu0 0
          %1206 = vmatpush1.bf16.msra.mxu0 %v1087
          %1207 = vmatprep.subr.bf16.mxu0 0
          %1208 = vmatpush1.bf16.msra.mxu0 %v1090
          %1209 = vmatprep.subr.bf16.mxu0 0
          %1210 = vmatpush1.bf16.msra.mxu0 %v1093
          %1211 = vmatprep.subr.bf16.mxu0 0
          %1212 = vmatpush1.bf16.msra.mxu0 %v1096
          %1213 = vmatprep.subr.bf16.mxu0 0
          %1214 = vmatpush1.bf16.msra.mxu0 %v1099
          %1215 = vmatprep.subr.bf16.mxu0 0
          %1216 = vmatpush1.bf16.msra.mxu0 %v1102
          %1217 = vmatprep.subr.bf16.mxu0 0
          %1218 = vmatpush1.bf16.msra.mxu0 %v1105
          %1219 = vmatprep.subr.bf16.mxu0 0
          %1220 = vmatpush1.bf16.msra.mxu0 0
          %1221 = vmatprep.subr.bf16.mxu0 0
          %1222 = vmatpush1.bf16.msra.mxu0 0
          %1223 = vmatprep.subr.bf16.mxu0 0
          %1224 = vmatpush1.bf16.msra.mxu0 0
          %1225 = vmatprep.subr.bf16.mxu0 0
          %1226 = vmatpush1.bf16.msra.mxu0 0
          %1227 = vmatprep.subr.bf16.mxu0 0
          %1228 = vmatpush1.bf16.msra.mxu0 0
          %1229 = vmatprep.subr.bf16.mxu0 0
          %1230 = vmatpush1.bf16.msra.mxu0 0
          %1231 = vmatprep.subr.bf16.mxu0 0
          %1232 = vmatpush1.bf16.msra.mxu0 0
          %1233 = vmatprep.subr.bf16.mxu0 0
          %1234 = vmatpush1.bf16.msra.mxu0 0
          %1235 = vmatprep.mubr.bf16.mxu0 0
          %1236 = vmatmul.mubr.bf16.gmra.mrb[0].mxu0 %v966
          %v1237 = vpop.f32.mrb[0].mxu0
          %v1238 = vadd.f32 0.0, %v1237
          %v1239 = vpop.f32.mrb[0].mxu0
          %v1240 = vpop.f32.mrb[0].mxu0
          %v1241 = vadd.f32 0.0, %v1240
          %v1242 = vpop.f32.mrb[0].mxu0
          %1243 = vmatprep.mubr.bf16.mxu0 0
          %1244 = vmatmul.mubr.bf16.gmra.mrb[0].mxu0 %v967
          %v1245 = vpop.f32.mrb[0].mxu0
          %v1246 = vadd.f32 0.0, %v1245
          %v1247 = vpop.f32.mrb[0].mxu0
          %v1248 = vpop.f32.mrb[0].mxu0
          %v1249 = vadd.f32 0.0, %v1248
          %v1250 = vpop.f32.mrb[0].mxu0
          %1251 = vmatprep.mubr.bf16.mxu0 0
          %1252 = vmatmul.mubr.bf16.gmra.mrb[0].mxu0 %v968
          %v1253 = vpop.f32.mrb[0].mxu0
          %v1254 = vadd.f32 0.0, %v1253
          %v1255 = vpop.f32.mrb[0].mxu0
          %v1256 = vpop.f32.mrb[0].mxu0
          %v1257 = vadd.f32 0.0, %v1256
          %v1258 = vpop.f32.mrb[0].mxu0
          %1259 = vmatprep.mubr.bf16.mxu0 0
          %1260 = vmatmul.mubr.bf16.gmra.mrb[0].mxu0 %v969
          %v1261 = vpop.f32.mrb[0].mxu0
          %v1262 = vadd.f32 0.0, %v1261
          %v1263 = vpop.f32.mrb[0].mxu0
          %v1264 = vpop.f32.mrb[0].mxu0
          %v1265 = vadd.f32 0.0, %v1264
          %v1266 = vpop.f32.mrb[0].mxu0
          %1267 = vdwg.mxu0
          %v1268 = vld [vmem:[#allocation8] sm:$0xff]
          %v1269 = vld [vmem:[#allocation8 + $0x8] sm:$0xf]
          %v1270 = vld [vmem:[#allocation8 + $0xc] sm:$0xff]
          %v1271 = vld [vmem:[#allocation8 + $0x14] sm:$0xf]
          %v1272 = vld [vmem:[#allocation8 + $0x18] sm:$0xff]
          %v1273 = vld [vmem:[#allocation8 + $0x20] sm:$0xf]
          %v1274 = vld [vmem:[#allocation8 + $0x24] sm:$0xff]
          %v1275 = vld [vmem:[#allocation8 + $0x2c] sm:$0xf]
          %v1276 = vunpack.c.l.bf16 %v1268
          %v1277 = vunpack.c.h.bf16 %v1268
          %v1278 = vunpack.c.l.bf16 %v1269
          %v1279 = vunpack.c.l.bf16 %v1270
          %v1280 = vunpack.c.h.bf16 %v1270
          %v1281 = vunpack.c.l.bf16 %v1271
          %v1282 = vunpack.c.l.bf16 %v1272
          %v1283 = vunpack.c.h.bf16 %v1272
          %v1284 = vunpack.c.l.bf16 %v1273
          %v1285 = vunpack.c.l.bf16 %v1274
          %v1286 = vunpack.c.h.bf16 %v1274
          %v1287 = vunpack.c.l.bf16 %v1275
          %v1288 = vadd.f32 %v1165, %v1276
          %v1289 = vadd.f32 %v1167, %v1277
          %v1290 = vadd.f32 %v1238, %v1278
          %v1291 = vadd.f32 %v1169, %v1279
          %v1292 = vadd.f32 %v1171, %v1280
          %v1293 = vadd.f32 %v1241, %v1281
          %v1294 = vadd.f32 %v1175, %v1282
          %v1295 = vadd.f32 %v1177, %v1283
          %v1296 = vadd.f32 %v1246, %v1284
          %v1297 = vadd.f32 %v1179, %v1285
          %v1298 = vadd.f32 %v1181, %v1286
          %v1299 = vadd.f32 %v1249, %v1287
          %v1300 = vadd.f32 %v1185, %v1276
          %v1301 = vadd.f32 %v1187, %v1277
          %v1302 = vadd.f32 %v1254, %v1278
          %v1303 = vadd.f32 %v1189, %v1279
          %v1304 = vadd.f32 %v1191, %v1280
          %v1305 = vadd.f32 %v1257, %v1281
          %v1306 = vadd.f32 %v1195, %v1282
          %v1307 = vadd.f32 %v1197, %v1283
          %v1308 = vadd.f32 %v1262, %v1284
          %v1309 = vadd.f32 %v1199, %v1285
          %v1310 = vadd.f32 %v1201, %v1286
          %v1311 = vadd.f32 %v1265, %v1287
          %1312 = vst [vmem:[#allocation2] sm:$0xff] %v1288
          %1313 = vst [vmem:[#allocation2 + $0x8] sm:$0xff] %v1289
          %1314 = vst [vmem:[#allocation2 + $0x10] sm:$0xff] %v1290
          %1315 = vst [vmem:[#allocation2 + $0x18] sm:$0xff] %v1291
          %1316 = vst [vmem:[#allocation2 + $0x20] sm:$0xff] %v1292
          %1317 = vst [vmem:[#allocation2 + $0x28] sm:$0xff] %v1293
          %1318 = vst [vmem:[#allocation2 + $0x30] sm:$0xff] %v1294
          %1319 = vst [vmem:[#allocation2 + $0x38] sm:$0xff] %v1295
          %1320 = vst [vmem:[#allocation2 + $0x40] sm:$0xff] %v1296
          %1321 = vst [vmem:[#allocation2 + $0x48] sm:$0xff] %v1297
          %1322 = vst [vmem:[#allocation2 + $0x50] sm:$0xff] %v1298
          %1323 = vst [vmem:[#allocation2 + $0x58] sm:$0xff] %v1299
          %1324 = vst [vmem:[#allocation2 + $0x60] sm:$0xff] %v1300
          %1325 = vst [vmem:[#allocation2 + $0x68] sm:$0xff] %v1301
          %1326 = vst [vmem:[#allocation2 + $0x70] sm:$0xff] %v1302
          %1327 = vst [vmem:[#allocation2 + $0x78] sm:$0xff] %v1303
          %1328 = vst [vmem:[#allocation2 + $0x80] sm:$0xff] %v1304
          %1329 = vst [vmem:[#allocation2 + $0x88] sm:$0xff] %v1305
          %1330 = vst [vmem:[#allocation2 + $0x90] sm:$0xff] %v1306
          %1331 = vst [vmem:[#allocation2 + $0x98] sm:$0xff] %v1307
          %1332 = vst [vmem:[#allocation2 + $0xa0] sm:$0xff] %v1308
          %1333 = vst [vmem:[#allocation2 + $0xa8] sm:$0xff] %v1309
          %1334 = vst [vmem:[#allocation2 + $0xb0] sm:$0xff] %v1310
          %1335 = vst [vmem:[#allocation2 + $0xb8] sm:$0xff] %v1311
        $region172: #{tpu_custom_call.1} parent=95 // pred_fallthru
          _
        %v1336 = vld [vmem:[#allocation2] sm:$0xff]
        %v1337 = vld [vmem:[#allocation2 + $0x8] sm:$0xff]
        %v1338 = vld [vmem:[#allocation2 + $0x10] sm:$0xff]
        %v1339 = vld [vmem:[#allocation2 + $0x18] sm:$0xff]
        %v1340 = vld [vmem:[#allocation2 + $0x20] sm:$0xff]
        %v1341 = vld [vmem:[#allocation2 + $0x28] sm:$0xff]
        %v1342 = vld [vmem:[#allocation2 + $0x30] sm:$0xff]
        %v1343 = vld [vmem:[#allocation2 + $0x38] sm:$0xff]
        %v1344 = vld [vmem:[#allocation2 + $0x40] sm:$0xff]
        %v1345 = vld [vmem:[#allocation2 + $0x48] sm:$0xff]
        %v1346 = vld [vmem:[#allocation2 + $0x50] sm:$0xff]
        %v1347 = vld [vmem:[#allocation2 + $0x58] sm:$0xff]
        %v1348 = vld [vmem:[#allocation2 + $0x60] sm:$0xff]
        %v1349 = vld [vmem:[#allocation2 + $0x68] sm:$0xff]
        %v1350 = vld [vmem:[#allocation2 + $0x70] sm:$0xff]
        %v1351 = vld [vmem:[#allocation2 + $0x78] sm:$0xff]
        %v1352 = vld [vmem:[#allocation2 + $0x80] sm:$0xff]
        %v1353 = vld [vmem:[#allocation2 + $0x88] sm:$0xff]
        %v1354 = vld [vmem:[#allocation2 + $0x90] sm:$0xff]
        %v1355 = vld [vmem:[#allocation2 + $0x98] sm:$0xff]
        %v1356 = vld [vmem:[#allocation2 + $0xa0] sm:$0xff]
        %v1357 = vld [vmem:[#allocation2 + $0xa8] sm:$0xff]
        %v1358 = vld [vmem:[#allocation2 + $0xb0] sm:$0xff]
        %v1359 = vld [vmem:[#allocation2 + $0xb8] sm:$0xff]
        %s1360 = sshra.s32 %s41, 3
        %s1361 = sand.u32 %s41, 7
        %s1362 = sshra.s32 %s41, 3
        %s1363 = sand.u32 %s41, 7
        %s1364 = smul.u32 %s1360, 3
        %s1365 = smul.u32 %s1364, 8
        %s1366 = sadd.s32 %s1365, %s1363
        %s1367 = scalar_lea.vmem [#allocation9], %s1366
        %v1368 = vld [vmem:[%s1367] ss:$8 sm:$0x7]
        %s1369 = scalar_lea.vmem [#allocation11], %s1366
        %v1370 = vld [vmem:[%s1369] ss:$8 sm:$0x7]
        %v1371 = vadd.f32 %v1336, %v1337
        %v1372 = vadd.f32 %v1371, %v1338
        %1373 = vadd.xlane.f32.xlu0 %v1372
        %v1374 = vpop.xlane.xlu0 %1373
        %v1375 = vadd.f32 %v1339, %v1340
        %v1376 = vadd.f32 %v1375, %v1341
        %1377 = vadd.xlane.f32.xlu0 %v1376
        %v1378 = vpop.xlane.xlu0 %1377
        %v1379 = vadd.f32 %v1342, %v1343
        %v1380 = vadd.f32 %v1379, %v1344
        %1381 = vadd.xlane.f32.xlu0 %v1380
        %v1382 = vpop.xlane.xlu0 %1381
        %v1383 = vadd.f32 %v1345, %v1346
        %v1384 = vadd.f32 %v1383, %v1347
        %1385 = vadd.xlane.f32.xlu0 %v1384
        %v1386 = vpop.xlane.xlu0 %1385
        %v1387 = vadd.f32 %v1348, %v1349
        %v1388 = vadd.f32 %v1387, %v1350
        %1389 = vadd.xlane.f32.xlu0 %v1388
        %v1390 = vpop.xlane.xlu0 %1389
        %v1391 = vadd.f32 %v1351, %v1352
        %v1392 = vadd.f32 %v1391, %v1353
        %1393 = vadd.xlane.f32.xlu0 %v1392
        %v1394 = vpop.xlane.xlu0 %1393
        %v1395 = vadd.f32 %v1354, %v1355
        %v1396 = vadd.f32 %v1395, %v1356
        %1397 = vadd.xlane.f32.xlu0 %v1396
        %v1398 = vpop.xlane.xlu0 %1397
        %v1399 = vadd.f32 %v1357, %v1358
        %v1400 = vadd.f32 %v1399, %v1359
        %1401 = vadd.xlane.f32.xlu0 %v1400
        %v1402 = vpop.xlane.xlu0 %1401
        %v1403 = vrcp.pop 384.0
        %v1404 = vmul.f32 %v1374, %v1403
        %v1405 = vmul.f32 %v1378, %v1403
        %v1406 = vmul.f32 %v1382, %v1403
        %v1407 = vmul.f32 %v1386, %v1403
        %v1408 = vmul.f32 %v1390, %v1403
        %v1409 = vmul.f32 %v1394, %v1403
        %v1410 = vmul.f32 %v1398, %v1403
        %v1411 = vmul.f32 %v1402, %v1403
        %v1412 = vsub.f32 %v1336, %v1404
        %v1413 = vsub.f32 %v1337, %v1404
        %v1414 = vsub.f32 %v1338, %v1404
        %v1415 = vsub.f32 %v1339, %v1405
        %v1416 = vsub.f32 %v1340, %v1405
        %v1417 = vsub.f32 %v1341, %v1405
        %v1418 = vsub.f32 %v1342, %v1406
        %v1419 = vsub.f32 %v1343, %v1406
        %v1420 = vsub.f32 %v1344, %v1406
        %v1421 = vsub.f32 %v1345, %v1407
        %v1422 = vsub.f32 %v1346, %v1407
        %v1423 = vsub.f32 %v1347, %v1407
        %v1424 = vsub.f32 %v1348, %v1408
        %v1425 = vsub.f32 %v1349, %v1408
        %v1426 = vsub.f32 %v1350, %v1408
        %v1427 = vsub.f32 %v1351, %v1409
        %v1428 = vsub.f32 %v1352, %v1409
        %v1429 = vsub.f32 %v1353, %v1409
        %v1430 = vsub.f32 %v1354, %v1410
        %v1431 = vsub.f32 %v1355, %v1410
        %v1432 = vsub.f32 %v1356, %v1410
        %v1433 = vsub.f32 %v1357, %v1411
        %v1434 = vsub.f32 %v1358, %v1411
        %v1435 = vsub.f32 %v1359, %v1411
        %v1436 = vmul.f32 %v1412, %v1412
        %v1437 = vmul.f32 %v1413, %v1413
        %v1438 = vmul.f32 %v1414, %v1414
        %v1439 = vmul.f32 %v1415, %v1415
        %v1440 = vmul.f32 %v1416, %v1416
        %v1441 = vmul.f32 %v1417, %v1417
        %v1442 = vmul.f32 %v1418, %v1418
        %v1443 = vmul.f32 %v1419, %v1419
        %v1444 = vmul.f32 %v1420, %v1420
        %v1445 = vmul.f32 %v1421, %v1421
        %v1446 = vmul.f32 %v1422, %v1422
        %v1447 = vmul.f32 %v1423, %v1423
        %v1448 = vmul.f32 %v1424, %v1424
        %v1449 = vmul.f32 %v1425, %v1425
        %v1450 = vmul.f32 %v1426, %v1426
        %v1451 = vmul.f32 %v1427, %v1427
        %v1452 = vmul.f32 %v1428, %v1428
        %v1453 = vmul.f32 %v1429, %v1429
        %v1454 = vmul.f32 %v1430, %v1430
        %v1455 = vmul.f32 %v1431, %v1431
        %v1456 = vmul.f32 %v1432, %v1432
        %v1457 = vmul.f32 %v1433, %v1433
        %v1458 = vmul.f32 %v1434, %v1434
        %v1459 = vmul.f32 %v1435, %v1435
        %v1460 = vadd.f32 %v1436, %v1437
        %v1461 = vadd.f32 %v1460, %v1438
        %1462 = vadd.xlane.f32.xlu0 %v1461
        %v1463 = vpop.xlane.xlu0 %1462
        %v1464 = vadd.f32 %v1439, %v1440
        %v1465 = vadd.f32 %v1464, %v1441
        %1466 = vadd.xlane.f32.xlu0 %v1465
        %v1467 = vpop.xlane.xlu0 %1466
        %v1468 = vadd.f32 %v1442, %v1443
        %v1469 = vadd.f32 %v1468, %v1444
        %1470 = vadd.xlane.f32.xlu0 %v1469
        %v1471 = vpop.xlane.xlu0 %1470
        %v1472 = vadd.f32 %v1445, %v1446
        %v1473 = vadd.f32 %v1472, %v1447
        %1474 = vadd.xlane.f32.xlu0 %v1473
        %v1475 = vpop.xlane.xlu0 %1474
        %v1476 = vadd.f32 %v1448, %v1449
        %v1477 = vadd.f32 %v1476, %v1450
        %1478 = vadd.xlane.f32.xlu0 %v1477
        %v1479 = vpop.xlane.xlu0 %1478
        %v1480 = vadd.f32 %v1451, %v1452
        %v1481 = vadd.f32 %v1480, %v1453
        %1482 = vadd.xlane.f32.xlu0 %v1481
        %v1483 = vpop.xlane.xlu0 %1482
        %v1484 = vadd.f32 %v1454, %v1455
        %v1485 = vadd.f32 %v1484, %v1456
        %1486 = vadd.xlane.f32.xlu0 %v1485
        %v1487 = vpop.xlane.xlu0 %1486
        %v1488 = vadd.f32 %v1457, %v1458
        %v1489 = vadd.f32 %v1488, %v1459
        %1490 = vadd.xlane.f32.xlu0 %v1489
        %v1491 = vpop.xlane.xlu0 %1490
        %v1492 = vmul.f32 %v1463, %v1403
        %v1493 = vmul.f32 %v1467, %v1403
        %v1494 = vmul.f32 %v1471, %v1403
        %v1495 = vmul.f32 %v1475, %v1403
        %v1496 = vmul.f32 %v1479, %v1403
        %v1497 = vmul.f32 %v1483, %v1403
        %v1498 = vmul.f32 %v1487, %v1403
        %v1499 = vmul.f32 %v1491, %v1403
        %v1500 = vadd.f32 %v1492, 1e-05
        %v1501 = vadd.f32 %v1493, 1e-05
        %v1502 = vadd.f32 %v1494, 1e-05
        %v1503 = vadd.f32 %v1495, 1e-05
        %v1504 = vadd.f32 %v1496, 1e-05
        %v1505 = vadd.f32 %v1497, 1e-05
        %v1506 = vadd.f32 %v1498, 1e-05
        %v1507 = vadd.f32 %v1499, 1e-05
        %v1508 = vrsqrt.pop %v1500
        %v1509 = vrsqrt.pop %v1501
        %v1510 = vrsqrt.pop %v1502
        %v1511 = vrsqrt.pop %v1503
        %v1512 = vrsqrt.pop %v1504
        %v1513 = vrsqrt.pop %v1505
        %v1514 = vrsqrt.pop %v1506
        %v1515 = vrsqrt.pop %v1507
        %v1516 = vmul.f32 %v1412, %v1508
        %v1517 = vmul.f32 %v1413, %v1508
        %v1518 = vmul.f32 %v1414, %v1508
        %v1519 = vmul.f32 %v1415, %v1509
        %v1520 = vmul.f32 %v1416, %v1509
        %v1521 = vmul.f32 %v1417, %v1509
        %v1522 = vmul.f32 %v1418, %v1510
        %v1523 = vmul.f32 %v1419, %v1510
        %v1524 = vmul.f32 %v1420, %v1510
        %v1525 = vmul.f32 %v1421, %v1511
        %v1526 = vmul.f32 %v1422, %v1511
        %v1527 = vmul.f32 %v1423, %v1511
        %v1528 = vmul.f32 %v1424, %v1512
        %v1529 = vmul.f32 %v1425, %v1512
        %v1530 = vmul.f32 %v1426, %v1512
        %v1531 = vmul.f32 %v1427, %v1513
        %v1532 = vmul.f32 %v1428, %v1513
        %v1533 = vmul.f32 %v1429, %v1513
        %v1534 = vmul.f32 %v1430, %v1514
        %v1535 = vmul.f32 %v1431, %v1514
        %v1536 = vmul.f32 %v1432, %v1514
        %v1537 = vmul.f32 %v1433, %v1515
        %v1538 = vmul.f32 %v1434, %v1515
        %v1539 = vmul.f32 %v1435, %v1515
        %v1541 = vlaneseq
        %v1542 = vshrl.u32 %v1541, 7
        %v1543 = vsub.s32 0, %v1542
        %v1544 = vrot.slane %v1368, %v1543
        %v1545 = vlaneseq
        %v1546 = vshrl.u32 %v1545, 7
        %v1547 = vsub.s32 1, %v1546
        %v1548 = vrot.slane %v1368, %v1547
        %v1549 = vlaneseq
        %v1550 = vshrl.u32 %v1549, 7
        %v1551 = vsub.s32 2, %v1550
        %v1552 = vrot.slane %v1368, %v1551
        %v1556 = vmul.f32 %v1516, %v1544
        %v1557 = vmul.f32 %v1517, %v1548
        %v1558 = vmul.f32 %v1518, %v1552
        %v1559 = vmul.f32 %v1519, %v1544
        %v1560 = vmul.f32 %v1520, %v1548
        %v1561 = vmul.f32 %v1521, %v1552
        %v1562 = vmul.f32 %v1522, %v1544
        %v1563 = vmul.f32 %v1523, %v1548
        %v1564 = vmul.f32 %v1524, %v1552
        %v1565 = vmul.f32 %v1525, %v1544
        %v1566 = vmul.f32 %v1526, %v1548
        %v1567 = vmul.f32 %v1527, %v1552
        %v1568 = vmul.f32 %v1528, %v1544
        %v1569 = vmul.f32 %v1529, %v1548
        %v1570 = vmul.f32 %v1530, %v1552
        %v1571 = vmul.f32 %v1531, %v1544
        %v1572 = vmul.f32 %v1532, %v1548
        %v1573 = vmul.f32 %v1533, %v1552
        %v1574 = vmul.f32 %v1534, %v1544
        %v1575 = vmul.f32 %v1535, %v1548
        %v1576 = vmul.f32 %v1536, %v1552
        %v1577 = vmul.f32 %v1537, %v1544
        %v1578 = vmul.f32 %v1538, %v1548
        %v1579 = vmul.f32 %v1539, %v1552
        %v1581 = vlaneseq
        %v1582 = vshrl.u32 %v1581, 7
        %v1583 = vsub.s32 0, %v1582
        %v1584 = vrot.slane %v1370, %v1583
        %v1585 = vlaneseq
        %v1586 = vshrl.u32 %v1585, 7
        %v1587 = vsub.s32 1, %v1586
        %v1588 = vrot.slane %v1370, %v1587
        %v1589 = vlaneseq
        %v1590 = vshrl.u32 %v1589, 7
        %v1591 = vsub.s32 2, %v1590
        %v1592 = vrot.slane %v1370, %v1591
        %v1596 = vadd.f32 %v1556, %v1584
        %v1597 = vadd.f32 %v1557, %v1588
        %v1598 = vadd.f32 %v1558, %v1592
        %v1599 = vadd.f32 %v1559, %v1584
        %v1600 = vadd.f32 %v1560, %v1588
        %v1601 = vadd.f32 %v1561, %v1592
        %v1602 = vadd.f32 %v1562, %v1584
        %v1603 = vadd.f32 %v1563, %v1588
        %v1604 = vadd.f32 %v1564, %v1592
        %v1605 = vadd.f32 %v1565, %v1584
        %v1606 = vadd.f32 %v1566, %v1588
        %v1607 = vadd.f32 %v1567, %v1592
        %v1608 = vadd.f32 %v1568, %v1584
        %v1609 = vadd.f32 %v1569, %v1588
        %v1610 = vadd.f32 %v1570, %v1592
        %v1611 = vadd.f32 %v1571, %v1584
        %v1612 = vadd.f32 %v1572, %v1588
        %v1613 = vadd.f32 %v1573, %v1592
        %v1614 = vadd.f32 %v1574, %v1584
        %v1615 = vadd.f32 %v1575, %v1588
        %v1616 = vadd.f32 %v1576, %v1592
        %v1617 = vadd.f32 %v1577, %v1584
        %v1618 = vadd.f32 %v1578, %v1588
        %v1619 = vadd.f32 %v1579, %v1592
        %v1620 = vpack.c.bf16 %v1599, %v1596
        %v1621 = vpack.c.bf16 %v1600, %v1597
        %v1622 = vpack.c.bf16 %v1601, %v1598
        %v1623 = vpack.c.bf16 %v1605, %v1602
        %v1624 = vpack.c.bf16 %v1606, %v1603
        %v1625 = vpack.c.bf16 %v1607, %v1604
        %v1626 = vpack.c.bf16 %v1611, %v1608
        %v1627 = vpack.c.bf16 %v1612, %v1609
        %v1628 = vpack.c.bf16 %v1613, %v1610
        %v1629 = vpack.c.bf16 %v1617, %v1614
        %v1630 = vpack.c.bf16 %v1618, %v1615
        %v1631 = vpack.c.bf16 %v1619, %v1616
        %v1632 = vld [vmem:[%s775] sm:$0xff]
        %v1633 = vld [vmem:[%s775 + $0x8] sm:$0xff]
        %v1634 = vld [vmem:[%s775 + $0x10] sm:$0xff]
        %v1635 = vld [vmem:[%s775 + $0x18] sm:$0xff]
        %v1636 = vld [vmem:[%s775 + $0x20] sm:$0xf]
        %v1637 = vld [vmem:[%s775 + $0x24] sm:$0xff]
        %v1638 = vld [vmem:[%s775 + $0x2c] sm:$0xff]
        %v1639 = vld [vmem:[%s775 + $0x34] sm:$0xff]
        %v1640 = vld [vmem:[%s775 + $0x3c] sm:$0xff]
        %v1641 = vld [vmem:[%s775 + $0x44] sm:$0xf]
        %v1642 = vld [vmem:[%s775 + $0x48] sm:$0xff]
        %v1643 = vld [vmem:[%s775 + $0x50] sm:$0xff]
        %v1644 = vld [vmem:[%s775 + $0x58] sm:$0xff]
        %v1645 = vld [vmem:[%s775 + $0x60] sm:$0xff]
        %v1646 = vld [vmem:[%s775 + $0x68] sm:$0xf]
        %v1647 = vld [vmem:[%s775 + $0x6c] sm:$0xff]
        %v1648 = vld [vmem:[%s775 + $0x74] sm:$0xff]
        %v1649 = vld [vmem:[%s775 + $0x7c] sm:$0xff]
        %v1650 = vld [vmem:[%s775 + $0x84] sm:$0xff]
        %v1651 = vld [vmem:[%s775 + $0x8c] sm:$0xf]
        %v1652 = vld [vmem:[%s775 + $0x90] sm:$0xff]
        %v1653 = vld [vmem:[%s775 + $0x98] sm:$0xff]
        %v1654 = vld [vmem:[%s775 + $0xa0] sm:$0xff]
        %v1655 = vld [vmem:[%s775 + $0xa8] sm:$0xff]
        %v1656 = vld [vmem:[%s775 + $0xb0] sm:$0xf]
        %v1657 = vld [vmem:[%s775 + $0xb4] sm:$0xff]
        %v1658 = vld [vmem:[%s775 + $0xbc] sm:$0xff]
        %v1659 = vld [vmem:[%s775 + $0xc4] sm:$0xff]
        %v1660 = vld [vmem:[%s775 + $0xcc] sm:$0xff]
        %v1661 = vld [vmem:[%s775 + $0xd4] sm:$0xf]
        %v1662 = vld [vmem:[%s775 + $0xd8] sm:$0xff]
        %v1663 = vld [vmem:[%s775 + $0xe0] sm:$0xff]
        %v1664 = vld [vmem:[%s775 + $0xe8] sm:$0xff]
        %v1665 = vld [vmem:[%s775 + $0xf0] sm:$0xff]
        %v1666 = vld [vmem:[%s775 + $0xf8] sm:$0xf]
        %v1667 = vld [vmem:[%s775 + $0xfc] sm:$0xff]
        %v1668 = vld [vmem:[%s775 + $0x104] sm:$0xff]
        %v1669 = vld [vmem:[%s775 + $0x10c] sm:$0xff]
        %v1670 = vld [vmem:[%s775 + $0x114] sm:$0xff]
        %v1671 = vld [vmem:[%s775 + $0x11c] sm:$0xf]
        %v1672 = vld [vmem:[%s775 + $0x120] sm:$0xff]
        %v1673 = vld [vmem:[%s775 + $0x128] sm:$0xff]
        %v1674 = vld [vmem:[%s775 + $0x130] sm:$0xff]
        %v1675 = vld [vmem:[%s775 + $0x138] sm:$0xff]
        %v1676 = vld [vmem:[%s775 + $0x140] sm:$0xf]
        %v1677 = vld [vmem:[%s775 + $0x144] sm:$0xff]
        %v1678 = vld [vmem:[%s775 + $0x14c] sm:$0xff]
        %v1679 = vld [vmem:[%s775 + $0x154] sm:$0xff]
        %v1680 = vld [vmem:[%s775 + $0x15c] sm:$0xff]
        %v1681 = vld [vmem:[%s775 + $0x164] sm:$0xf]
        %v1682 = vld [vmem:[%s775 + $0x168] sm:$0xff]
        %v1683 = vld [vmem:[%s775 + $0x170] sm:$0xff]
        %v1684 = vld [vmem:[%s775 + $0x178] sm:$0xff]
        %v1685 = vld [vmem:[%s775 + $0x180] sm:$0xff]
        %v1686 = vld [vmem:[%s775 + $0x188] sm:$0xf]
        %v1687 = vld [vmem:[%s775 + $0x18c] sm:$0xff]
        %v1688 = vld [vmem:[%s775 + $0x194] sm:$0xff]
        %v1689 = vld [vmem:[%s775 + $0x19c] sm:$0xff]
        %v1690 = vld [vmem:[%s775 + $0x1a4] sm:$0xff]
        %v1691 = vld [vmem:[%s775 + $0x1ac] sm:$0xf]
        %v1692 = vld [vmem:[%s775 + $0x1b0] sm:$0xff]
        %v1693 = vld [vmem:[%s775 + $0x1b8] sm:$0xff]
        %v1694 = vld [vmem:[%s775 + $0x1c0] sm:$0xff]
        %v1695 = vld [vmem:[%s775 + $0x1c8] sm:$0xff]
        %v1696 = vld [vmem:[%s775 + $0x1d0] sm:$0xf]
        %v1697 = vld [vmem:[%s775 + $0x1d4] sm:$0xff]
        %v1698 = vld [vmem:[%s775 + $0x1dc] sm:$0xff]
        %v1699 = vld [vmem:[%s775 + $0x1e4] sm:$0xff]
        %v1700 = vld [vmem:[%s775 + $0x1ec] sm:$0xff]
        %v1701 = vld [vmem:[%s775 + $0x1f4] sm:$0xf]
        %v1702 = vld [vmem:[%s775 + $0x1f8] sm:$0xff]
        %v1703 = vld [vmem:[%s775 + $0x200] sm:$0xff]
        %v1704 = vld [vmem:[%s775 + $0x208] sm:$0xff]
        %v1705 = vld [vmem:[%s775 + $0x210] sm:$0xff]
        %v1706 = vld [vmem:[%s775 + $0x218] sm:$0xf]
        %v1707 = vld [vmem:[%s775 + $0x21c] sm:$0xff]
        %v1708 = vld [vmem:[%s775 + $0x224] sm:$0xff]
        %v1709 = vld [vmem:[%s775 + $0x22c] sm:$0xff]
        %v1710 = vld [vmem:[%s775 + $0x234] sm:$0xff]
        %v1711 = vld [vmem:[%s775 + $0x23c] sm:$0xf]
        %v1712 = vld [vmem:[%s775 + $0x240] sm:$0xff]
        %v1713 = vld [vmem:[%s775 + $0x248] sm:$0xff]
        %v1714 = vld [vmem:[%s775 + $0x250] sm:$0xff]
        %v1715 = vld [vmem:[%s775 + $0x258] sm:$0xff]
        %v1716 = vld [vmem:[%s775 + $0x260] sm:$0xf]
        %v1717 = vld [vmem:[%s775 + $0x264] sm:$0xff]
        %v1718 = vld [vmem:[%s775 + $0x26c] sm:$0xff]
        %v1719 = vld [vmem:[%s775 + $0x274] sm:$0xff]
        %v1720 = vld [vmem:[%s775 + $0x27c] sm:$0xff]
        %v1721 = vld [vmem:[%s775 + $0x284] sm:$0xf]
        %v1722 = vld [vmem:[%s775 + $0x288] sm:$0xff]
        %v1723 = vld [vmem:[%s775 + $0x290] sm:$0xff]
        %v1724 = vld [vmem:[%s775 + $0x298] sm:$0xff]
        %v1725 = vld [vmem:[%s775 + $0x2a0] sm:$0xff]
        %v1726 = vld [vmem:[%s775 + $0x2a8] sm:$0xf]
        %v1727 = vld [vmem:[%s775 + $0x2ac] sm:$0xff]
        %v1728 = vld [vmem:[%s775 + $0x2b4] sm:$0xff]
        %v1729 = vld [vmem:[%s775 + $0x2bc] sm:$0xff]
        %v1730 = vld [vmem:[%s775 + $0x2c4] sm:$0xff]
        %v1731 = vld [vmem:[%s775 + $0x2cc] sm:$0xf]
        %v1732 = vld [vmem:[%s775 + $0x2d0] sm:$0xff]
        %v1733 = vld [vmem:[%s775 + $0x2d8] sm:$0xff]
        %v1734 = vld [vmem:[%s775 + $0x2e0] sm:$0xff]
        %v1735 = vld [vmem:[%s775 + $0x2e8] sm:$0xff]
        %v1736 = vld [vmem:[%s775 + $0x2f0] sm:$0xf]
        %v1737 = vld [vmem:[%s775 + $0x2f4] sm:$0xff]
        %v1738 = vld [vmem:[%s775 + $0x2fc] sm:$0xff]
        %v1739 = vld [vmem:[%s775 + $0x304] sm:$0xff]
        %v1740 = vld [vmem:[%s775 + $0x30c] sm:$0xff]
        %v1741 = vld [vmem:[%s775 + $0x314] sm:$0xf]
        %v1742 = vld [vmem:[%s775 + $0x318] sm:$0xff]
        %v1743 = vld [vmem:[%s775 + $0x320] sm:$0xff]
        %v1744 = vld [vmem:[%s775 + $0x328] sm:$0xff]
        %v1745 = vld [vmem:[%s775 + $0x330] sm:$0xff]
        %v1746 = vld [vmem:[%s775 + $0x338] sm:$0xf]
        %v1747 = vld [vmem:[%s775 + $0x33c] sm:$0xff]
        %v1748 = vld [vmem:[%s775 + $0x344] sm:$0xff]
        %v1749 = vld [vmem:[%s775 + $0x34c] sm:$0xff]
        %v1750 = vld [vmem:[%s775 + $0x354] sm:$0xff]
        %v1751 = vld [vmem:[%s775 + $0x35c] sm:$0xf]
        %v1752 = vld [vmem:[%s775 + $0x360] sm:$0xff]
        %v1753 = vld [vmem:[%s775 + $0x368] sm:$0xff]
        %v1754 = vld [vmem:[%s775 + $0x370] sm:$0xff]
        %v1755 = vld [vmem:[%s775 + $0x378] sm:$0xff]
        %v1756 = vld [vmem:[%s775 + $0x380] sm:$0xf]
        %v1757 = vld [vmem:[%s775 + $0x384] sm:$0xff]
        %v1758 = vld [vmem:[%s775 + $0x38c] sm:$0xff]
        %v1759 = vld [vmem:[%s775 + $0x394] sm:$0xff]
        %v1760 = vld [vmem:[%s775 + $0x39c] sm:$0xff]
        %v1761 = vld [vmem:[%s775 + $0x3a4] sm:$0xf]
        %v1762 = vld [vmem:[%s775 + $0x3a8] sm:$0xff]
        %v1763 = vld [vmem:[%s775 + $0x3b0] sm:$0xff]
        %v1764 = vld [vmem:[%s775 + $0x3b8] sm:$0xff]
        %v1765 = vld [vmem:[%s775 + $0x3c0] sm:$0xff]
        %v1766 = vld [vmem:[%s775 + $0x3c8] sm:$0xf]
        %v1767 = vld [vmem:[%s775 + $0x3cc] sm:$0xff]
        %v1768 = vld [vmem:[%s775 + $0x3d4] sm:$0xff]
        %v1769 = vld [vmem:[%s775 + $0x3dc] sm:$0xff]
        %v1770 = vld [vmem:[%s775 + $0x3e4] sm:$0xff]
        %v1771 = vld [vmem:[%s775 + $0x3ec] sm:$0xf]
        %v1772 = vld [vmem:[%s775 + $0x3f0] sm:$0xff]
        %v1773 = vld [vmem:[%s775 + $0x3f8] sm:$0xff]
        %v1774 = vld [vmem:[%s775 + $0x400] sm:$0xff]
        %v1775 = vld [vmem:[%s775 + $0x408] sm:$0xff]
        %v1776 = vld [vmem:[%s775 + $0x410] sm:$0xf]
        %v1777 = vld [vmem:[%s775 + $0x414] sm:$0xff]
        %v1778 = vld [vmem:[%s775 + $0x41c] sm:$0xff]
        %v1779 = vld [vmem:[%s775 + $0x424] sm:$0xff]
        %v1780 = vld [vmem:[%s775 + $0x42c] sm:$0xff]
        %v1781 = vld [vmem:[%s775 + $0x434] sm:$0xf]
        %v1782 = vld [vmem:[%s775 + $0x438] sm:$0xff]
        %v1783 = vld [vmem:[%s775 + $0x440] sm:$0xff]
        %v1784 = vld [vmem:[%s775 + $0x448] sm:$0xff]
        %v1785 = vld [vmem:[%s775 + $0x450] sm:$0xff]
        %v1786 = vld [vmem:[%s775 + $0x458] sm:$0xf]
        %v1787 = vld [vmem:[%s775 + $0x45c] sm:$0xff]
        %v1788 = vld [vmem:[%s775 + $0x464] sm:$0xff]
        %v1789 = vld [vmem:[%s775 + $0x46c] sm:$0xff]
        %v1790 = vld [vmem:[%s775 + $0x474] sm:$0xff]
        %v1791 = vld [vmem:[%s775 + $0x47c] sm:$0xf]
        %v1792 = vld [vmem:[%s775 + $0x480] sm:$0xff]
        %v1793 = vld [vmem:[%s775 + $0x488] sm:$0xff]
        %v1794 = vld [vmem:[%s775 + $0x490] sm:$0xff]
        %v1795 = vld [vmem:[%s775 + $0x498] sm:$0xff]
        %v1796 = vld [vmem:[%s775 + $0x4a0] sm:$0xf]
        %v1797 = vld [vmem:[%s775 + $0x4a4] sm:$0xff]
        %v1798 = vld [vmem:[%s775 + $0x4ac] sm:$0xff]
        %v1799 = vld [vmem:[%s775 + $0x4b4] sm:$0xff]
        %v1800 = vld [vmem:[%s775 + $0x4bc] sm:$0xff]
        %v1801 = vld [vmem:[%s775 + $0x4c4] sm:$0xf]
        %v1802 = vld [vmem:[%s775 + $0x4c8] sm:$0xff]
        %v1803 = vld [vmem:[%s775 + $0x4d0] sm:$0xff]
        %v1804 = vld [vmem:[%s775 + $0x4d8] sm:$0xff]
        %v1805 = vld [vmem:[%s775 + $0x4e0] sm:$0xff]
        %v1806 = vld [vmem:[%s775 + $0x4e8] sm:$0xf]
        %v1807 = vld [vmem:[%s775 + $0x4ec] sm:$0xff]
        %v1808 = vld [vmem:[%s775 + $0x4f4] sm:$0xff]
        %v1809 = vld [vmem:[%s775 + $0x4fc] sm:$0xff]
        %v1810 = vld [vmem:[%s775 + $0x504] sm:$0xff]
        %v1811 = vld [vmem:[%s775 + $0x50c] sm:$0xf]
        %v1812 = vld [vmem:[%s775 + $0x510] sm:$0xff]
        %v1813 = vld [vmem:[%s775 + $0x518] sm:$0xff]
        %v1814 = vld [vmem:[%s775 + $0x520] sm:$0xff]
        %v1815 = vld [vmem:[%s775 + $0x528] sm:$0xff]
        %v1816 = vld [vmem:[%s775 + $0x530] sm:$0xf]
        %v1817 = vld [vmem:[%s775 + $0x534] sm:$0xff]
        %v1818 = vld [vmem:[%s775 + $0x53c] sm:$0xff]
        %v1819 = vld [vmem:[%s775 + $0x544] sm:$0xff]
        %v1820 = vld [vmem:[%s775 + $0x54c] sm:$0xff]
        %v1821 = vld [vmem:[%s775 + $0x554] sm:$0xf]
        %v1822 = vld [vmem:[%s775 + $0x558] sm:$0xff]
        %v1823 = vld [vmem:[%s775 + $0x560] sm:$0xff]
        %v1824 = vld [vmem:[%s775 + $0x568] sm:$0xff]
        %v1825 = vld [vmem:[%s775 + $0x570] sm:$0xff]
        %v1826 = vld [vmem:[%s775 + $0x578] sm:$0xf]
        %v1827 = vld [vmem:[%s775 + $0x57c] sm:$0xff]
        %v1828 = vld [vmem:[%s775 + $0x584] sm:$0xff]
        %v1829 = vld [vmem:[%s775 + $0x58c] sm:$0xff]
        %v1830 = vld [vmem:[%s775 + $0x594] sm:$0xff]
        %v1831 = vld [vmem:[%s775 + $0x59c] sm:$0xf]
        %v1832 = vld [vmem:[%s775 + $0x5a0] sm:$0xff]
        %v1833 = vld [vmem:[%s775 + $0x5a8] sm:$0xff]
        %v1834 = vld [vmem:[%s775 + $0x5b0] sm:$0xff]
        %v1835 = vld [vmem:[%s775 + $0x5b8] sm:$0xff]
        %v1836 = vld [vmem:[%s775 + $0x5c0] sm:$0xf]
        %v1837 = vld [vmem:[%s775 + $0x5c4] sm:$0xff]
        %v1838 = vld [vmem:[%s775 + $0x5cc] sm:$0xff]
        %v1839 = vld [vmem:[%s775 + $0x5d4] sm:$0xff]
        %v1840 = vld [vmem:[%s775 + $0x5dc] sm:$0xff]
        %v1841 = vld [vmem:[%s775 + $0x5e4] sm:$0xf]
        %v1842 = vld [vmem:[%s775 + $0x5e8] sm:$0xff]
        %v1843 = vld [vmem:[%s775 + $0x5f0] sm:$0xff]
        %v1844 = vld [vmem:[%s775 + $0x5f8] sm:$0xff]
        %v1845 = vld [vmem:[%s775 + $0x600] sm:$0xff]
        %v1846 = vld [vmem:[%s775 + $0x608] sm:$0xf]
        %v1847 = vld [vmem:[%s775 + $0x60c] sm:$0xff]
        %v1848 = vld [vmem:[%s775 + $0x614] sm:$0xff]
        %v1849 = vld [vmem:[%s775 + $0x61c] sm:$0xff]
        %v1850 = vld [vmem:[%s775 + $0x624] sm:$0xff]
        %v1851 = vld [vmem:[%s775 + $0x62c] sm:$0xf]
        %v1852 = vld [vmem:[%s775 + $0x630] sm:$0xff]
        %v1853 = vld [vmem:[%s775 + $0x638] sm:$0xff]
        %v1854 = vld [vmem:[%s775 + $0x640] sm:$0xff]
        %v1855 = vld [vmem:[%s775 + $0x648] sm:$0xff]
        %v1856 = vld [vmem:[%s775 + $0x650] sm:$0xf]
        %v1857 = vld [vmem:[%s775 + $0x654] sm:$0xff]
        %v1858 = vld [vmem:[%s775 + $0x65c] sm:$0xff]
        %v1859 = vld [vmem:[%s775 + $0x664] sm:$0xff]
        %v1860 = vld [vmem:[%s775 + $0x66c] sm:$0xff]
        %v1861 = vld [vmem:[%s775 + $0x674] sm:$0xf]
        %v1862 = vld [vmem:[%s775 + $0x678] sm:$0xff]
        %v1863 = vld [vmem:[%s775 + $0x680] sm:$0xff]
        %v1864 = vld [vmem:[%s775 + $0x688] sm:$0xff]
        %v1865 = vld [vmem:[%s775 + $0x690] sm:$0xff]
        %v1866 = vld [vmem:[%s775 + $0x698] sm:$0xf]
        %v1867 = vld [vmem:[%s775 + $0x69c] sm:$0xff]
        %v1868 = vld [vmem:[%s775 + $0x6a4] sm:$0xff]
        %v1869 = vld [vmem:[%s775 + $0x6ac] sm:$0xff]
        %v1870 = vld [vmem:[%s775 + $0x6b4] sm:$0xff]
        %v1871 = vld [vmem:[%s775 + $0x6bc] sm:$0xf]
        %v2112 = vunpack.c.l.b16 %v1632
        %v2113 = vunpack.c.h.b16 %v1632
        %v2114 = vunpack.c.l.b16 %v1633
        %v2115 = vunpack.c.h.b16 %v1633
        %v2116 = vunpack.c.l.b16 %v1634
        %v2117 = vunpack.c.h.b16 %v1634
        %v2118 = vunpack.c.l.b16 %v1635
        %v2119 = vunpack.c.h.b16 %v1635
        %v2120 = vunpack.c.l.b16 %v1636
        %v2121 = vunpack.c.l.b16 %v1637
        %v2122 = vunpack.c.h.b16 %v1637
        %v2123 = vunpack.c.l.b16 %v1638
        %v2124 = vunpack.c.h.b16 %v1638
        %v2125 = vunpack.c.l.b16 %v1639
        %v2126 = vunpack.c.h.b16 %v1639
        %v2127 = vunpack.c.l.b16 %v1640
        %v2128 = vunpack.c.h.b16 %v1640
        %v2129 = vunpack.c.l.b16 %v1641
        %v2130 = vunpack.c.l.b16 %v1642
        %v2131 = vunpack.c.h.b16 %v1642
        %v2132 = vunpack.c.l.b16 %v1643
        %v2133 = vunpack.c.h.b16 %v1643
        %v2134 = vunpack.c.l.b16 %v1644
        %v2135 = vunpack.c.h.b16 %v1644
        %v2136 = vunpack.c.l.b16 %v1645
        %v2137 = vunpack.c.h.b16 %v1645
        %v2138 = vunpack.c.l.b16 %v1646
        %v2139 = vunpack.c.l.b16 %v1647
        %v2140 = vunpack.c.h.b16 %v1647
        %v2141 = vunpack.c.l.b16 %v1648
        %v2142 = vunpack.c.h.b16 %v1648
        %v2143 = vunpack.c.l.b16 %v1649
        %v2144 = vunpack.c.h.b16 %v1649
        %v2145 = vunpack.c.l.b16 %v1650
        %v2146 = vunpack.c.h.b16 %v1650
        %v2147 = vunpack.c.l.b16 %v1651
        %v2148 = vunpack.c.l.b16 %v1652
        %v2149 = vunpack.c.h.b16 %v1652
        %v2150 = vunpack.c.l.b16 %v1653
        %v2151 = vunpack.c.h.b16 %v1653
        %v2152 = vunpack.c.l.b16 %v1654
        %v2153 = vunpack.c.h.b16 %v1654
        %v2154 = vunpack.c.l.b16 %v1655
        %v2155 = vunpack.c.h.b16 %v1655
        %v2156 = vunpack.c.l.b16 %v1656
        %v2157 = vunpack.c.l.b16 %v1657
        %v2158 = vunpack.c.h.b16 %v1657
        %v2159 = vunpack.c.l.b16 %v1658
        %v2160 = vunpack.c.h.b16 %v1658
        %v2161 = vunpack.c.l.b16 %v1659
        %v2162 = vunpack.c.h.b16 %v1659
        %v2163 = vunpack.c.l.b16 %v1660
        %v2164 = vunpack.c.h.b16 %v1660
        %v2165 = vunpack.c.l.b16 %v1661
        %v2166 = vunpack.c.l.b16 %v1662
        %v2167 = vunpack.c.h.b16 %v1662
        %v2168 = vunpack.c.l.b16 %v1663
        %v2169 = vunpack.c.h.b16 %v1663
        %v2170 = vunpack.c.l.b16 %v1664
        %v2171 = vunpack.c.h.b16 %v1664
        %v2172 = vunpack.c.l.b16 %v1665
        %v2173 = vunpack.c.h.b16 %v1665
        %v2174 = vunpack.c.l.b16 %v1666
        %v2175 = vunpack.c.l.b16 %v1667
        %v2176 = vunpack.c.h.b16 %v1667
        %v2177 = vunpack.c.l.b16 %v1668
        %v2178 = vunpack.c.h.b16 %v1668
        %v2179 = vunpack.c.l.b16 %v1669
        %v2180 = vunpack.c.h.b16 %v1669
        %v2181 = vunpack.c.l.b16 %v1670
        %v2182 = vunpack.c.h.b16 %v1670
        %v2183 = vunpack.c.l.b16 %v1671
        %v2184 = vunpack.c.l.b16 %v1672
        %v2185 = vunpack.c.h.b16 %v1672
        %v2186 = vunpack.c.l.b16 %v1673
        %v2187 = vunpack.c.h.b16 %v1673
        %v2188 = vunpack.c.l.b16 %v1674
        %v2189 = vunpack.c.h.b16 %v1674
        %v2190 = vunpack.c.l.b16 %v1675
        %v2191 = vunpack.c.h.b16 %v1675
        %v2192 = vunpack.c.l.b16 %v1676
        %v2193 = vunpack.c.l.b16 %v1677
        %v2194 = vunpack.c.h.b16 %v1677
        %v2195 = vunpack.c.l.b16 %v1678
        %v2196 = vunpack.c.h.b16 %v1678
        %v2197 = vunpack.c.l.b16 %v1679
        %v2198 = vunpack.c.h.b16 %v1679
        %v2199 = vunpack.c.l.b16 %v1680
        %v2200 = vunpack.c.h.b16 %v1680
        %v2201 = vunpack.c.l.b16 %v1681
        %v2202 = vunpack.c.l.b16 %v1682
        %v2203 = vunpack.c.h.b16 %v1682
        %v2204 = vunpack.c.l.b16 %v1683
        %v2205 = vunpack.c.h.b16 %v1683
        %v2206 = vunpack.c.l.b16 %v1684
        %v2207 = vunpack.c.h.b16 %v1684
        %v2208 = vunpack.c.l.b16 %v1685
        %v2209 = vunpack.c.h.b16 %v1685
        %v2210 = vunpack.c.l.b16 %v1686
        %v2211 = vunpack.c.l.b16 %v1687
        %v2212 = vunpack.c.h.b16 %v1687
        %v2213 = vunpack.c.l.b16 %v1688
        %v2214 = vunpack.c.h.b16 %v1688
        %v2215 = vunpack.c.l.b16 %v1689
        %v2216 = vunpack.c.h.b16 %v1689
        %v2217 = vunpack.c.l.b16 %v1690
        %v2218 = vunpack.c.h.b16 %v1690
        %v2219 = vunpack.c.l.b16 %v1691
        %v2220 = vunpack.c.l.b16 %v1692
        %v2221 = vunpack.c.h.b16 %v1692
        %v2222 = vunpack.c.l.b16 %v1693
        %v2223 = vunpack.c.h.b16 %v1693
        %v2224 = vunpack.c.l.b16 %v1694
        %v2225 = vunpack.c.h.b16 %v1694
        %v2226 = vunpack.c.l.b16 %v1695
        %v2227 = vunpack.c.h.b16 %v1695
        %v2228 = vunpack.c.l.b16 %v1696
        %v2229 = vunpack.c.l.b16 %v1697
        %v2230 = vunpack.c.h.b16 %v1697
        %v2231 = vunpack.c.l.b16 %v1698
        %v2232 = vunpack.c.h.b16 %v1698
        %v2233 = vunpack.c.l.b16 %v1699
        %v2234 = vunpack.c.h.b16 %v1699
        %v2235 = vunpack.c.l.b16 %v1700
        %v2236 = vunpack.c.h.b16 %v1700
        %v2237 = vunpack.c.l.b16 %v1701
        %v2238 = vunpack.c.l.b16 %v1702
        %v2239 = vunpack.c.h.b16 %v1702
        %v2240 = vunpack.c.l.b16 %v1703
        %v2241 = vunpack.c.h.b16 %v1703
        %v2242 = vunpack.c.l.b16 %v1704
        %v2243 = vunpack.c.h.b16 %v1704
        %v2244 = vunpack.c.l.b16 %v1705
        %v2245 = vunpack.c.h.b16 %v1705
        %v2246 = vunpack.c.l.b16 %v1706
        %v2247 = vunpack.c.l.b16 %v1707
        %v2248 = vunpack.c.h.b16 %v1707
        %v2249 = vunpack.c.l.b16 %v1708
        %v2250 = vunpack.c.h.b16 %v1708
        %v2251 = vunpack.c.l.b16 %v1709
        %v2252 = vunpack.c.h.b16 %v1709
        %v2253 = vunpack.c.l.b16 %v1710
        %v2254 = vunpack.c.h.b16 %v1710
        %v2255 = vunpack.c.l.b16 %v1711
        %v2256 = vunpack.c.l.b16 %v1712
        %v2257 = vunpack.c.h.b16 %v1712
        %v2258 = vunpack.c.l.b16 %v1713
        %v2259 = vunpack.c.h.b16 %v1713
        %v2260 = vunpack.c.l.b16 %v1714
        %v2261 = vunpack.c.h.b16 %v1714
        %v2262 = vunpack.c.l.b16 %v1715
        %v2263 = vunpack.c.h.b16 %v1715
        %v2264 = vunpack.c.l.b16 %v1716
        %v2265 = vunpack.c.l.b16 %v1717
        %v2266 = vunpack.c.h.b16 %v1717
        %v2267 = vunpack.c.l.b16 %v1718
        %v2268 = vunpack.c.h.b16 %v1718
        %v2269 = vunpack.c.l.b16 %v1719
        %v2270 = vunpack.c.h.b16 %v1719
        %v2271 = vunpack.c.l.b16 %v1720
        %v2272 = vunpack.c.h.b16 %v1720
        %v2273 = vunpack.c.l.b16 %v1721
        %v2274 = vunpack.c.l.b16 %v1722
        %v2275 = vunpack.c.h.b16 %v1722
        %v2276 = vunpack.c.l.b16 %v1723
        %v2277 = vunpack.c.h.b16 %v1723
        %v2278 = vunpack.c.l.b16 %v1724
        %v2279 = vunpack.c.h.b16 %v1724
        %v2280 = vunpack.c.l.b16 %v1725
        %v2281 = vunpack.c.h.b16 %v1725
        %v2282 = vunpack.c.l.b16 %v1726
        %v2283 = vunpack.c.l.b16 %v1727
        %v2284 = vunpack.c.h.b16 %v1727
        %v2285 = vunpack.c.l.b16 %v1728
        %v2286 = vunpack.c.h.b16 %v1728
        %v2287 = vunpack.c.l.b16 %v1729
        %v2288 = vunpack.c.h.b16 %v1729
        %v2289 = vunpack.c.l.b16 %v1730
        %v2290 = vunpack.c.h.b16 %v1730
        %v2291 = vunpack.c.l.b16 %v1731
        %v2292 = vunpack.c.l.b16 %v1732
        %v2293 = vunpack.c.h.b16 %v1732
        %v2294 = vunpack.c.l.b16 %v1733
        %v2295 = vunpack.c.h.b16 %v1733
        %v2296 = vunpack.c.l.b16 %v1734
        %v2297 = vunpack.c.h.b16 %v1734
        %v2298 = vunpack.c.l.b16 %v1735
        %v2299 = vunpack.c.h.b16 %v1735
        %v2300 = vunpack.c.l.b16 %v1736
        %v2301 = vunpack.c.l.b16 %v1737
        %v2302 = vunpack.c.h.b16 %v1737
        %v2303 = vunpack.c.l.b16 %v1738
        %v2304 = vunpack.c.h.b16 %v1738
        %v2305 = vunpack.c.l.b16 %v1739
        %v2306 = vunpack.c.h.b16 %v1739
        %v2307 = vunpack.c.l.b16 %v1740
        %v2308 = vunpack.c.h.b16 %v1740
        %v2309 = vunpack.c.l.b16 %v1741
        %v2310 = vunpack.c.l.b16 %v1742
        %v2311 = vunpack.c.h.b16 %v1742
        %v2312 = vunpack.c.l.b16 %v1743
        %v2313 = vunpack.c.h.b16 %v1743
        %v2314 = vunpack.c.l.b16 %v1744
        %v2315 = vunpack.c.h.b16 %v1744
        %v2316 = vunpack.c.l.b16 %v1745
        %v2317 = vunpack.c.h.b16 %v1745
        %v2318 = vunpack.c.l.b16 %v1746
        %v2319 = vunpack.c.l.b16 %v1747
        %v2320 = vunpack.c.h.b16 %v1747
        %v2321 = vunpack.c.l.b16 %v1748
        %v2322 = vunpack.c.h.b16 %v1748
        %v2323 = vunpack.c.l.b16 %v1749
        %v2324 = vunpack.c.h.b16 %v1749
        %v2325 = vunpack.c.l.b16 %v1750
        %v2326 = vunpack.c.h.b16 %v1750
        %v2327 = vunpack.c.l.b16 %v1751
        %v2328 = vunpack.c.l.b16 %v1752
        %v2329 = vunpack.c.h.b16 %v1752
        %v2330 = vunpack.c.l.b16 %v1753
        %v2331 = vunpack.c.h.b16 %v1753
        %v2332 = vunpack.c.l.b16 %v1754
        %v2333 = vunpack.c.h.b16 %v1754
        %v2334 = vunpack.c.l.b16 %v1755
        %v2335 = vunpack.c.h.b16 %v1755
        %v2336 = vunpack.c.l.b16 %v1756
        %v2337 = vunpack.c.l.b16 %v1757
        %v2338 = vunpack.c.h.b16 %v1757
        %v2339 = vunpack.c.l.b16 %v1758
        %v2340 = vunpack.c.h.b16 %v1758
        %v2341 = vunpack.c.l.b16 %v1759
        %v2342 = vunpack.c.h.b16 %v1759
        %v2343 = vunpack.c.l.b16 %v1760
        %v2344 = vunpack.c.h.b16 %v1760
        %v2345 = vunpack.c.l.b16 %v1761
        %v2346 = vunpack.c.l.b16 %v1762
        %v2347 = vunpack.c.h.b16 %v1762
        %v2348 = vunpack.c.l.b16 %v1763
        %v2349 = vunpack.c.h.b16 %v1763
        %v2350 = vunpack.c.l.b16 %v1764
        %v2351 = vunpack.c.h.b16 %v1764
        %v2352 = vunpack.c.l.b16 %v1765
        %v2353 = vunpack.c.h.b16 %v1765
        %v2354 = vunpack.c.l.b16 %v1766
        %v2355 = vunpack.c.l.b16 %v1767
        %v2356 = vunpack.c.h.b16 %v1767
        %v2357 = vunpack.c.l.b16 %v1768
        %v2358 = vunpack.c.h.b16 %v1768
        %v2359 = vunpack.c.l.b16 %v1769
        %v2360 = vunpack.c.h.b16 %v1769
        %v2361 = vunpack.c.l.b16 %v1770
        %v2362 = vunpack.c.h.b16 %v1770
        %v2363 = vunpack.c.l.b16 %v1771
        %v2364 = vunpack.c.l.b16 %v1772
        %v2365 = vunpack.c.h.b16 %v1772
        %v2366 = vunpack.c.l.b16 %v1773
        %v2367 = vunpack.c.h.b16 %v1773
        %v2368 = vunpack.c.l.b16 %v1774
        %v2369 = vunpack.c.h.b16 %v1774
        %v2370 = vunpack.c.l.b16 %v1775
        %v2371 = vunpack.c.h.b16 %v1775
        %v2372 = vunpack.c.l.b16 %v1776
        %v2373 = vunpack.c.l.b16 %v1777
        %v2374 = vunpack.c.h.b16 %v1777
        %v2375 = vunpack.c.l.b16 %v1778
        %v2376 = vunpack.c.h.b16 %v1778
        %v2377 = vunpack.c.l.b16 %v1779
        %v2378 = vunpack.c.h.b16 %v1779
        %v2379 = vunpack.c.l.b16 %v1780
        %v2380 = vunpack.c.h.b16 %v1780
        %v2381 = vunpack.c.l.b16 %v1781
        %v2382 = vunpack.c.l.b16 %v1782
        %v2383 = vunpack.c.h.b16 %v1782
        %v2384 = vunpack.c.l.b16 %v1783
        %v2385 = vunpack.c.h.b16 %v1783
        %v2386 = vunpack.c.l.b16 %v1784
        %v2387 = vunpack.c.h.b16 %v1784
        %v2388 = vunpack.c.l.b16 %v1785
        %v2389 = vunpack.c.h.b16 %v1785
        %v2390 = vunpack.c.l.b16 %v1786
        %v2391 = vunpack.c.l.b16 %v1787
        %v2392 = vunpack.c.h.b16 %v1787
        %v2393 = vunpack.c.l.b16 %v1788
        %v2394 = vunpack.c.h.b16 %v1788
        %v2395 = vunpack.c.l.b16 %v1789
        %v2396 = vunpack.c.h.b16 %v1789
        %v2397 = vunpack.c.l.b16 %v1790
        %v2398 = vunpack.c.h.b16 %v1790
        %v2399 = vunpack.c.l.b16 %v1791
        %v2400 = vunpack.c.l.b16 %v1792
        %v2401 = vunpack.c.h.b16 %v1792
        %v2402 = vunpack.c.l.b16 %v1793
        %v2403 = vunpack.c.h.b16 %v1793
        %v2404 = vunpack.c.l.b16 %v1794
        %v2405 = vunpack.c.h.b16 %v1794
        %v2406 = vunpack.c.l.b16 %v1795
        %v2407 = vunpack.c.h.b16 %v1795
        %v2408 = vunpack.c.l.b16 %v1796
        %v2409 = vunpack.c.l.b16 %v1797
        %v2410 = vunpack.c.h.b16 %v1797
        %v2411 = vunpack.c.l.b16 %v1798
        %v2412 = vunpack.c.h.b16 %v1798
        %v2413 = vunpack.c.l.b16 %v1799
        %v2414 = vunpack.c.h.b16 %v1799
        %v2415 = vunpack.c.l.b16 %v1800
        %v2416 = vunpack.c.h.b16 %v1800
        %v2417 = vunpack.c.l.b16 %v1801
        %v2418 = vunpack.c.l.b16 %v1802
        %v2419 = vunpack.c.h.b16 %v1802
        %v2420 = vunpack.c.l.b16 %v1803
        %v2421 = vunpack.c.h.b16 %v1803
        %v2422 = vunpack.c.l.b16 %v1804
        %v2423 = vunpack.c.h.b16 %v1804
        %v2424 = vunpack.c.l.b16 %v1805
        %v2425 = vunpack.c.h.b16 %v1805
        %v2426 = vunpack.c.l.b16 %v1806
        %v2427 = vunpack.c.l.b16 %v1807
        %v2428 = vunpack.c.h.b16 %v1807
        %v2429 = vunpack.c.l.b16 %v1808
        %v2430 = vunpack.c.h.b16 %v1808
        %v2431 = vunpack.c.l.b16 %v1809
        %v2432 = vunpack.c.h.b16 %v1809
        %v2433 = vunpack.c.l.b16 %v1810
        %v2434 = vunpack.c.h.b16 %v1810
        %v2435 = vunpack.c.l.b16 %v1811
        %v2436 = vunpack.c.l.b16 %v1812
        %v2437 = vunpack.c.h.b16 %v1812
        %v2438 = vunpack.c.l.b16 %v1813
        %v2439 = vunpack.c.h.b16 %v1813
        %v2440 = vunpack.c.l.b16 %v1814
        %v2441 = vunpack.c.h.b16 %v1814
        %v2442 = vunpack.c.l.b16 %v1815
        %v2443 = vunpack.c.h.b16 %v1815
        %v2444 = vunpack.c.l.b16 %v1816
        %v2445 = vunpack.c.l.b16 %v1817
        %v2446 = vunpack.c.h.b16 %v1817
        %v2447 = vunpack.c.l.b16 %v1818
        %v2448 = vunpack.c.h.b16 %v1818
        %v2449 = vunpack.c.l.b16 %v1819
        %v2450 = vunpack.c.h.b16 %v1819
        %v2451 = vunpack.c.l.b16 %v1820
        %v2452 = vunpack.c.h.b16 %v1820
        %v2453 = vunpack.c.l.b16 %v1821
        %v2454 = vunpack.c.l.b16 %v1822
        %v2455 = vunpack.c.h.b16 %v1822
        %v2456 = vunpack.c.l.b16 %v1823
        %v2457 = vunpack.c.h.b16 %v1823
        %v2458 = vunpack.c.l.b16 %v1824
        %v2459 = vunpack.c.h.b16 %v1824
        %v2460 = vunpack.c.l.b16 %v1825
        %v2461 = vunpack.c.h.b16 %v1825
        %v2462 = vunpack.c.l.b16 %v1826
        %v2463 = vunpack.c.l.b16 %v1827
        %v2464 = vunpack.c.h.b16 %v1827
        %v2465 = vunpack.c.l.b16 %v1828
        %v2466 = vunpack.c.h.b16 %v1828
        %v2467 = vunpack.c.l.b16 %v1829
        %v2468 = vunpack.c.h.b16 %v1829
        %v2469 = vunpack.c.l.b16 %v1830
        %v2470 = vunpack.c.h.b16 %v1830
        %v2471 = vunpack.c.l.b16 %v1831
        %v2472 = vunpack.c.l.b16 %v1832
        %v2473 = vunpack.c.h.b16 %v1832
        %v2474 = vunpack.c.l.b16 %v1833
        %v2475 = vunpack.c.h.b16 %v1833
        %v2476 = vunpack.c.l.b16 %v1834
        %v2477 = vunpack.c.h.b16 %v1834
        %v2478 = vunpack.c.l.b16 %v1835
        %v2479 = vunpack.c.h.b16 %v1835
        %v2480 = vunpack.c.l.b16 %v1836
        %v2481 = vunpack.c.l.b16 %v1837
        %v2482 = vunpack.c.h.b16 %v1837
        %v2483 = vunpack.c.l.b16 %v1838
        %v2484 = vunpack.c.h.b16 %v1838
        %v2485 = vunpack.c.l.b16 %v1839
        %v2486 = vunpack.c.h.b16 %v1839
        %v2487 = vunpack.c.l.b16 %v1840
        %v2488 = vunpack.c.h.b16 %v1840
        %v2489 = vunpack.c.l.b16 %v1841
        %v2490 = vunpack.c.l.b16 %v1842
        %v2491 = vunpack.c.h.b16 %v1842
        %v2492 = vunpack.c.l.b16 %v1843
        %v2493 = vunpack.c.h.b16 %v1843
        %v2494 = vunpack.c.l.b16 %v1844
        %v2495 = vunpack.c.h.b16 %v1844
        %v2496 = vunpack.c.l.b16 %v1845
        %v2497 = vunpack.c.h.b16 %v1845
        %v2498 = vunpack.c.l.b16 %v1846
        %v2499 = vunpack.c.l.b16 %v1847
        %v2500 = vunpack.c.h.b16 %v1847
        %v2501 = vunpack.c.l.b16 %v1848
        %v2502 = vunpack.c.h.b16 %v1848
        %v2503 = vunpack.c.l.b16 %v1849
        %v2504 = vunpack.c.h.b16 %v1849
        %v2505 = vunpack.c.l.b16 %v1850
        %v2506 = vunpack.c.h.b16 %v1850
        %v2507 = vunpack.c.l.b16 %v1851
        %v2508 = vunpack.c.l.b16 %v1852
        %v2509 = vunpack.c.h.b16 %v1852
        %v2510 = vunpack.c.l.b16 %v1853
        %v2511 = vunpack.c.h.b16 %v1853
        %v2512 = vunpack.c.l.b16 %v1854
        %v2513 = vunpack.c.h.b16 %v1854
        %v2514 = vunpack.c.l.b16 %v1855
        %v2515 = vunpack.c.h.b16 %v1855
        %v2516 = vunpack.c.l.b16 %v1856
        %v2517 = vunpack.c.l.b16 %v1857
        %v2518 = vunpack.c.h.b16 %v1857
        %v2519 = vunpack.c.l.b16 %v1858
        %v2520 = vunpack.c.h.b16 %v1858
        %v2521 = vunpack.c.l.b16 %v1859
        %v2522 = vunpack.c.h.b16 %v1859
        %v2523 = vunpack.c.l.b16 %v1860
        %v2524 = vunpack.c.h.b16 %v1860
        %v2525 = vunpack.c.l.b16 %v1861
        %v2526 = vunpack.c.l.b16 %v1862
        %v2527 = vunpack.c.h.b16 %v1862
        %v2528 = vunpack.c.l.b16 %v1863
        %v2529 = vunpack.c.h.b16 %v1863
        %v2530 = vunpack.c.l.b16 %v1864
        %v2531 = vunpack.c.h.b16 %v1864
        %v2532 = vunpack.c.l.b16 %v1865
        %v2533 = vunpack.c.h.b16 %v1865
        %v2534 = vunpack.c.l.b16 %v1866
        %v2535 = vunpack.c.l.b16 %v1867
        %v2536 = vunpack.c.h.b16 %v1867
        %v2537 = vunpack.c.l.b16 %v1868
        %v2538 = vunpack.c.h.b16 %v1868
        %v2539 = vunpack.c.l.b16 %v1869
        %v2540 = vunpack.c.h.b16 %v1869
        %v2541 = vunpack.c.l.b16 %v1870
        %v2542 = vunpack.c.h.b16 %v1870
        %v2543 = vunpack.c.l.b16 %v1871
        %v2544 = vpack.c.b16 %v2121, %v2112
        %v2545 = vpack.c.b16 %v2122, %v2113
        %v2546 = vpack.c.b16 %v2123, %v2114
        %v2547 = vpack.c.b16 %v2124, %v2115
        %v2548 = vpack.c.b16 %v2125, %v2116
        %v2549 = vpack.c.b16 %v2126, %v2117
        %v2550 = vpack.c.b16 %v2127, %v2118
        %v2551 = vpack.c.b16 %v2128, %v2119
        %v2552 = vpack.c.b16 %v2129, %v2120
        %v2553 = vpack.c.b16 %v2139, %v2130
        %v2554 = vpack.c.b16 %v2140, %v2131
        %v2555 = vpack.c.b16 %v2141, %v2132
        %v2556 = vpack.c.b16 %v2142, %v2133
        %v2557 = vpack.c.b16 %v2143, %v2134
        %v2558 = vpack.c.b16 %v2144, %v2135
        %v2559 = vpack.c.b16 %v2145, %v2136
        %v2560 = vpack.c.b16 %v2146, %v2137
        %v2561 = vpack.c.b16 %v2147, %v2138
        %v2562 = vpack.c.b16 %v2157, %v2148
        %v2563 = vpack.c.b16 %v2158, %v2149
        %v2564 = vpack.c.b16 %v2159, %v2150
        %v2565 = vpack.c.b16 %v2160, %v2151
        %v2566 = vpack.c.b16 %v2161, %v2152
        %v2567 = vpack.c.b16 %v2162, %v2153
        %v2568 = vpack.c.b16 %v2163, %v2154
        %v2569 = vpack.c.b16 %v2164, %v2155
        %v2570 = vpack.c.b16 %v2165, %v2156
        %v2571 = vpack.c.b16 %v2175, %v2166
        %v2572 = vpack.c.b16 %v2176, %v2167
        %v2573 = vpack.c.b16 %v2177, %v2168
        %v2574 = vpack.c.b16 %v2178, %v2169
        %v2575 = vpack.c.b16 %v2179, %v2170
        %v2576 = vpack.c.b16 %v2180, %v2171
        %v2577 = vpack.c.b16 %v2181, %v2172
        %v2578 = vpack.c.b16 %v2182, %v2173
        %v2579 = vpack.c.b16 %v2183, %v2174
        %v2580 = vpack.c.b16 %v2193, %v2184
        %v2581 = vpack.c.b16 %v2194, %v2185
        %v2582 = vpack.c.b16 %v2195, %v2186
        %v2583 = vpack.c.b16 %v2196, %v2187
        %v2584 = vpack.c.b16 %v2197, %v2188
        %v2585 = vpack.c.b16 %v2198, %v2189
        %v2586 = vpack.c.b16 %v2199, %v2190
        %v2587 = vpack.c.b16 %v2200, %v2191
        %v2588 = vpack.c.b16 %v2201, %v2192
        %v2589 = vpack.c.b16 %v2211, %v2202
        %v2590 = vpack.c.b16 %v2212, %v2203
        %v2591 = vpack.c.b16 %v2213, %v2204
        %v2592 = vpack.c.b16 %v2214, %v2205
        %v2593 = vpack.c.b16 %v2215, %v2206
        %v2594 = vpack.c.b16 %v2216, %v2207
        %v2595 = vpack.c.b16 %v2217, %v2208
        %v2596 = vpack.c.b16 %v2218, %v2209
        %v2597 = vpack.c.b16 %v2219, %v2210
        %v2598 = vpack.c.b16 %v2229, %v2220
        %v2599 = vpack.c.b16 %v2230, %v2221
        %v2600 = vpack.c.b16 %v2231, %v2222
        %v2601 = vpack.c.b16 %v2232, %v2223
        %v2602 = vpack.c.b16 %v2233, %v2224
        %v2603 = vpack.c.b16 %v2234, %v2225
        %v2604 = vpack.c.b16 %v2235, %v2226
        %v2605 = vpack.c.b16 %v2236, %v2227
        %v2606 = vpack.c.b16 %v2237, %v2228
        %v2607 = vpack.c.b16 %v2247, %v2238
        %v2608 = vpack.c.b16 %v2248, %v2239
        %v2609 = vpack.c.b16 %v2249, %v2240
        %v2610 = vpack.c.b16 %v2250, %v2241
        %v2611 = vpack.c.b16 %v2251, %v2242
        %v2612 = vpack.c.b16 %v2252, %v2243
        %v2613 = vpack.c.b16 %v2253, %v2244
        %v2614 = vpack.c.b16 %v2254, %v2245
        %v2615 = vpack.c.b16 %v2255, %v2246
        %v2616 = vpack.c.b16 %v2265, %v2256
        %v2617 = vpack.c.b16 %v2266, %v2257
        %v2618 = vpack.c.b16 %v2267, %v2258
        %v2619 = vpack.c.b16 %v2268, %v2259
        %v2620 = vpack.c.b16 %v2269, %v2260
        %v2621 = vpack.c.b16 %v2270, %v2261
        %v2622 = vpack.c.b16 %v2271, %v2262
        %v2623 = vpack.c.b16 %v2272, %v2263
        %v2624 = vpack.c.b16 %v2273, %v2264
        %v2625 = vpack.c.b16 %v2283, %v2274
        %v2626 = vpack.c.b16 %v2284, %v2275
        %v2627 = vpack.c.b16 %v2285, %v2276
        %v2628 = vpack.c.b16 %v2286, %v2277
        %v2629 = vpack.c.b16 %v2287, %v2278
        %v2630 = vpack.c.b16 %v2288, %v2279
        %v2631 = vpack.c.b16 %v2289, %v2280
        %v2632 = vpack.c.b16 %v2290, %v2281
        %v2633 = vpack.c.b16 %v2291, %v2282
        %v2634 = vpack.c.b16 %v2301, %v2292
        %v2635 = vpack.c.b16 %v2302, %v2293
        %v2636 = vpack.c.b16 %v2303, %v2294
        %v2637 = vpack.c.b16 %v2304, %v2295
        %v2638 = vpack.c.b16 %v2305, %v2296
        %v2639 = vpack.c.b16 %v2306, %v2297
        %v2640 = vpack.c.b16 %v2307, %v2298
        %v2641 = vpack.c.b16 %v2308, %v2299
        %v2642 = vpack.c.b16 %v2309, %v2300
        %v2643 = vpack.c.b16 %v2319, %v2310
        %v2644 = vpack.c.b16 %v2320, %v2311
        %v2645 = vpack.c.b16 %v2321, %v2312
        %v2646 = vpack.c.b16 %v2322, %v2313
        %v2647 = vpack.c.b16 %v2323, %v2314
        %v2648 = vpack.c.b16 %v2324, %v2315
        %v2649 = vpack.c.b16 %v2325, %v2316
        %v2650 = vpack.c.b16 %v2326, %v2317
        %v2651 = vpack.c.b16 %v2327, %v2318
        %v2652 = vpack.c.b16 %v2337, %v2328
        %v2653 = vpack.c.b16 %v2338, %v2329
        %v2654 = vpack.c.b16 %v2339, %v2330
        %v2655 = vpack.c.b16 %v2340, %v2331
        %v2656 = vpack.c.b16 %v2341, %v2332
        %v2657 = vpack.c.b16 %v2342, %v2333
        %v2658 = vpack.c.b16 %v2343, %v2334
        %v2659 = vpack.c.b16 %v2344, %v2335
        %v2660 = vpack.c.b16 %v2345, %v2336
        %v2661 = vpack.c.b16 %v2355, %v2346
        %v2662 = vpack.c.b16 %v2356, %v2347
        %v2663 = vpack.c.b16 %v2357, %v2348
        %v2664 = vpack.c.b16 %v2358, %v2349
        %v2665 = vpack.c.b16 %v2359, %v2350
        %v2666 = vpack.c.b16 %v2360, %v2351
        %v2667 = vpack.c.b16 %v2361, %v2352
        %v2668 = vpack.c.b16 %v2362, %v2353
        %v2669 = vpack.c.b16 %v2363, %v2354
        %v2670 = vpack.c.b16 %v2373, %v2364
        %v2671 = vpack.c.b16 %v2374, %v2365
        %v2672 = vpack.c.b16 %v2375, %v2366
        %v2673 = vpack.c.b16 %v2376, %v2367
        %v2674 = vpack.c.b16 %v2377, %v2368
        %v2675 = vpack.c.b16 %v2378, %v2369
        %v2676 = vpack.c.b16 %v2379, %v2370
        %v2677 = vpack.c.b16 %v2380, %v2371
        %v2678 = vpack.c.b16 %v2381, %v2372
        %v2679 = vpack.c.b16 %v2391, %v2382
        %v2680 = vpack.c.b16 %v2392, %v2383
        %v2681 = vpack.c.b16 %v2393, %v2384
        %v2682 = vpack.c.b16 %v2394, %v2385
        %v2683 = vpack.c.b16 %v2395, %v2386
        %v2684 = vpack.c.b16 %v2396, %v2387
        %v2685 = vpack.c.b16 %v2397, %v2388
        %v2686 = vpack.c.b16 %v2398, %v2389
        %v2687 = vpack.c.b16 %v2399, %v2390
        %v2688 = vpack.c.b16 %v2409, %v2400
        %v2689 = vpack.c.b16 %v2410, %v2401
        %v2690 = vpack.c.b16 %v2411, %v2402
        %v2691 = vpack.c.b16 %v2412, %v2403
        %v2692 = vpack.c.b16 %v2413, %v2404
        %v2693 = vpack.c.b16 %v2414, %v2405
        %v2694 = vpack.c.b16 %v2415, %v2406
        %v2695 = vpack.c.b16 %v2416, %v2407
        %v2696 = vpack.c.b16 %v2417, %v2408
        %v2697 = vpack.c.b16 %v2427, %v2418
        %v2698 = vpack.c.b16 %v2428, %v2419
        %v2699 = vpack.c.b16 %v2429, %v2420
        %v2700 = vpack.c.b16 %v2430, %v2421
        %v2701 = vpack.c.b16 %v2431, %v2422
        %v2702 = vpack.c.b16 %v2432, %v2423
        %v2703 = vpack.c.b16 %v2433, %v2424
        %v2704 = vpack.c.b16 %v2434, %v2425
        %v2705 = vpack.c.b16 %v2435, %v2426
        %v2706 = vpack.c.b16 %v2445, %v2436
        %v2707 = vpack.c.b16 %v2446, %v2437
        %v2708 = vpack.c.b16 %v2447, %v2438
        %v2709 = vpack.c.b16 %v2448, %v2439
        %v2710 = vpack.c.b16 %v2449, %v2440
        %v2711 = vpack.c.b16 %v2450, %v2441
        %v2712 = vpack.c.b16 %v2451, %v2442
        %v2713 = vpack.c.b16 %v2452, %v2443
        %v2714 = vpack.c.b16 %v2453, %v2444
        %v2715 = vpack.c.b16 %v2463, %v2454
        %v2716 = vpack.c.b16 %v2464, %v2455
        %v2717 = vpack.c.b16 %v2465, %v2456
        %v2718 = vpack.c.b16 %v2466, %v2457
        %v2719 = vpack.c.b16 %v2467, %v2458
        %v2720 = vpack.c.b16 %v2468, %v2459
        %v2721 = vpack.c.b16 %v2469, %v2460
        %v2722 = vpack.c.b16 %v2470, %v2461
        %v2723 = vpack.c.b16 %v2471, %v2462
        %v2724 = vpack.c.b16 %v2481, %v2472
        %v2725 = vpack.c.b16 %v2482, %v2473
        %v2726 = vpack.c.b16 %v2483, %v2474
        %v2727 = vpack.c.b16 %v2484, %v2475
        %v2728 = vpack.c.b16 %v2485, %v2476
        %v2729 = vpack.c.b16 %v2486, %v2477
        %v2730 = vpack.c.b16 %v2487, %v2478
        %v2731 = vpack.c.b16 %v2488, %v2479
        %v2732 = vpack.c.b16 %v2489, %v2480
        %v2733 = vpack.c.b16 %v2499, %v2490
        %v2734 = vpack.c.b16 %v2500, %v2491
        %v2735 = vpack.c.b16 %v2501, %v2492
        %v2736 = vpack.c.b16 %v2502, %v2493
        %v2737 = vpack.c.b16 %v2503, %v2494
        %v2738 = vpack.c.b16 %v2504, %v2495
        %v2739 = vpack.c.b16 %v2505, %v2496
        %v2740 = vpack.c.b16 %v2506, %v2497
        %v2741 = vpack.c.b16 %v2507, %v2498
        %v2742 = vpack.c.b16 %v2517, %v2508
        %v2743 = vpack.c.b16 %v2518, %v2509
        %v2744 = vpack.c.b16 %v2519, %v2510
        %v2745 = vpack.c.b16 %v2520, %v2511
        %v2746 = vpack.c.b16 %v2521, %v2512
        %v2747 = vpack.c.b16 %v2522, %v2513
        %v2748 = vpack.c.b16 %v2523, %v2514
        %v2749 = vpack.c.b16 %v2524, %v2515
        %v2750 = vpack.c.b16 %v2525, %v2516
        %v2751 = vpack.c.b16 %v2535, %v2526
        %v2752 = vpack.c.b16 %v2536, %v2527
        %v2753 = vpack.c.b16 %v2537, %v2528
        %v2754 = vpack.c.b16 %v2538, %v2529
        %v2755 = vpack.c.b16 %v2539, %v2530
        %v2756 = vpack.c.b16 %v2540, %v2531
        %v2757 = vpack.c.b16 %v2541, %v2532
        %v2758 = vpack.c.b16 %v2542, %v2533
        %v2759 = vpack.c.b16 %v2543, %v2534
        %2976 = vmatprep.subr.bf16.mxu0 %v2545
        %2977 = vmatpush1.bf16.msra.mxu0 %v2544
        %2978 = vmatprep.subr.bf16.mxu0 %v2554
        %2979 = vmatpush1.bf16.msra.mxu0 %v2553
        %2980 = vmatprep.subr.bf16.mxu0 %v2563
        %2981 = vmatpush1.bf16.msra.mxu0 %v2562
        %2982 = vmatprep.subr.bf16.mxu0 %v2572
        %2983 = vmatpush1.bf16.msra.mxu0 %v2571
        %2984 = vmatprep.subr.bf16.mxu0 %v2581
        %2985 = vmatpush1.bf16.msra.mxu0 %v2580
        %2986 = vmatprep.subr.bf16.mxu0 %v2590
        %2987 = vmatpush1.bf16.msra.mxu0 %v2589
        %2988 = vmatprep.subr.bf16.mxu0 %v2599
        %2989 = vmatpush1.bf16.msra.mxu0 %v2598
        %2990 = vmatprep.subr.bf16.mxu0 %v2608
        %2991 = vmatpush1.bf16.msra.mxu0 %v2607
        %2992 = vmatprep.subr.bf16.mxu0 %v2617
        %2993 = vmatpush1.bf16.msra.mxu0 %v2616
        %2994 = vmatprep.subr.bf16.mxu0 %v2626
        %2995 = vmatpush1.bf16.msra.mxu0 %v2625
        %2996 = vmatprep.subr.bf16.mxu0 %v2635
        %2997 = vmatpush1.bf16.msra.mxu0 %v2634
        %2998 = vmatprep.subr.bf16.mxu0 %v2644
        %2999 = vmatpush1.bf16.msra.mxu0 %v2643
        %3000 = vmatprep.subr.bf16.mxu0 %v2653
        %3001 = vmatpush1.bf16.msra.mxu0 %v2652
        %3002 = vmatprep.subr.bf16.mxu0 %v2662
        %3003 = vmatpush1.bf16.msra.mxu0 %v2661
        %3004 = vmatprep.subr.bf16.mxu0 %v2671
        %3005 = vmatpush1.bf16.msra.mxu0 %v2670
        %3006 = vmatprep.subr.bf16.mxu0 %v2680
        %3007 = vmatpush1.bf16.msra.mxu0 %v2679
        %3008 = vmatprep.mubr.bf16.mxu0 %v1621
        %3009 = vmatmul.mubr.bf16.gmra.mrb[0].mxu0 %v1620
        %v3010 = vpop.f32.mrb[0].mxu0
        %v3011 = vadd.f32 0.0, %v3010
        %v3012 = vpop.f32.mrb[0].mxu0
        %v3013 = vadd.f32 0.0, %v3012
        %v3014 = vpop.f32.mrb[0].mxu0
        %v3015 = vadd.f32 0.0, %v3014
        %v3016 = vpop.f32.mrb[0].mxu0
        %v3017 = vadd.f32 0.0, %v3016
        %3018 = vmatprep.mubr.bf16.mxu0 %v1624
        %3019 = vmatmul.mubr.bf16.gmra.mrb[0].mxu0 %v1623
        %v3020 = vpop.f32.mrb[0].mxu0
        %v3021 = vadd.f32 0.0, %v3020
        %v3022 = vpop.f32.mrb[0].mxu0
        %v3023 = vadd.f32 0.0, %v3022
        %v3024 = vpop.f32.mrb[0].mxu0
        %v3025 = vadd.f32 0.0, %v3024
        %v3026 = vpop.f32.mrb[0].mxu0
        %v3027 = vadd.f32 0.0, %v3026
        %3028 = vmatprep.mubr.bf16.mxu0 %v1627
        %3029 = vmatmul.mubr.bf16.gmra.mrb[0].mxu0 %v1626
        %v3030 = vpop.f32.mrb[0].mxu0
        %v3031 = vadd.f32 0.0, %v3030
        %v3032 = vpop.f32.mrb[0].mxu0
        %v3033 = vadd.f32 0.0, %v3032
        %v3034 = vpop.f32.mrb[0].mxu0
        %v3035 = vadd.f32 0.0, %v3034
        %v3036 = vpop.f32.mrb[0].mxu0
        %v3037 = vadd.f32 0.0, %v3036
        %3038 = vmatprep.mubr.bf16.mxu0 %v1630
        %3039 = vmatmul.mubr.bf16.gmra.mrb[0].mxu0 %v1629
        %v3040 = vpop.f32.mrb[0].mxu0
        %v3041 = vadd.f32 0.0, %v3040
        %v3042 = vpop.f32.mrb[0].mxu0
        %v3043 = vadd.f32 0.0, %v3042
        %v3044 = vpop.f32.mrb[0].mxu0
        %v3045 = vadd.f32 0.0, %v3044
        %v3046 = vpop.f32.mrb[0].mxu0
        %v3047 = vadd.f32 0.0, %v3046
        %3048 = vdwg.mxu0
        %3049 = vmatprep.subr.bf16.mxu0 %v2689
        %3050 = vmatpush1.bf16.msra.mxu0 %v2688
        %3051 = vmatprep.subr.bf16.mxu0 %v2698
        %3052 = vmatpush1.bf16.msra.mxu0 %v2697
        %3053 = vmatprep.subr.bf16.mxu0 %v2707
        %3054 = vmatpush1.bf16.msra.mxu0 %v2706
        %3055 = vmatprep.subr.bf16.mxu0 %v2716
        %3056 = vmatpush1.bf16.msra.mxu0 %v2715
        %3057 = vmatprep.subr.bf16.mxu0 %v2725
        %3058 = vmatpush1.bf16.msra.mxu0 %v2724
        %3059 = vmatprep.subr.bf16.mxu0 %v2734
        %3060 = vmatpush1.bf16.msra.mxu0 %v2733
        %3061 = vmatprep.subr.bf16.mxu0 %v2743
        %3062 = vmatpush1.bf16.msra.mxu0 %v2742
        %3063 = vmatprep.subr.bf16.mxu0 %v2752
        %3064 = vmatpush1.bf16.msra.mxu0 %v2751
        %3065 = vmatprep.subr.bf16.mxu0 0
        %3066 = vmatpush1.bf16.msra.mxu0 0
        %3067 = vmatprep.subr.bf16.mxu0 0
        %3068 = vmatpush1.bf16.msra.mxu0 0
        %3069 = vmatprep.subr.bf16.mxu0 0
        %3070 = vmatpush1.bf16.msra.mxu0 0
        %3071 = vmatprep.subr.bf16.mxu0 0
        %3072 = vmatpush1.bf16.msra.mxu0 0
        %3073 = vmatprep.subr.bf16.mxu0 0
        %3074 = vmatpush1.bf16.msra.mxu0 0
        %3075 = vmatprep.subr.bf16.mxu0 0
        %3076 = vmatpush1.bf16.msra.mxu0 0
        %3077 = vmatprep.subr.bf16.mxu0 0
        %3078 = vmatpush1.bf16.msra.mxu0 0
        %3079 = vmatprep.subr.bf16.mxu0 0
        %3080 = vmatpush1.bf16.msra.mxu0 0
        %3081 = vmatprep.mubr.bf16.mxu0 0
        %3082 = vmatmul.mubr.bf16.gmra.mrb[0].mxu0 %v1622
        %v3083 = vpop.f32.mrb[0].mxu0
        %v3084 = vadd.f32 %v3011, %v3083
        %v3085 = vpop.f32.mrb[0].mxu0
        %v3086 = vadd.f32 %v3013, %v3085
        %v3087 = vpop.f32.mrb[0].mxu0
        %v3088 = vadd.f32 %v3015, %v3087
        %v3089 = vpop.f32.mrb[0].mxu0
        %v3090 = vadd.f32 %v3017, %v3089
        %3091 = vmatprep.mubr.bf16.mxu0 0
        %3092 = vmatmul.mubr.bf16.gmra.mrb[0].mxu0 %v1625
        %v3093 = vpop.f32.mrb[0].mxu0
        %v3094 = vadd.f32 %v3021, %v3093
        %v3095 = vpop.f32.mrb[0].mxu0
        %v3096 = vadd.f32 %v3023, %v3095
        %v3097 = vpop.f32.mrb[0].mxu0
        %v3098 = vadd.f32 %v3025, %v3097
        %v3099 = vpop.f32.mrb[0].mxu0
        %v3100 = vadd.f32 %v3027, %v3099
        %3101 = vmatprep.mubr.bf16.mxu0 0
        %3102 = vmatmul.mubr.bf16.gmra.mrb[0].mxu0 %v1628
        %v3103 = vpop.f32.mrb[0].mxu0
        %v3104 = vadd.f32 %v3031, %v3103
        %v3105 = vpop.f32.mrb[0].mxu0
        %v3106 = vadd.f32 %v3033, %v3105
        %v3107 = vpop.f32.mrb[0].mxu0
        %v3108 = vadd.f32 %v3035, %v3107
        %v3109 = vpop.f32.mrb[0].mxu0
        %v3110 = vadd.f32 %v3037, %v3109
        %3111 = vmatprep.mubr.bf16.mxu0 0
        %3112 = vmatmul.mubr.bf16.gmra.mrb[0].mxu0 %v1631
        %v3113 = vpop.f32.mrb[0].mxu0
        %v3114 = vadd.f32 %v3041, %v3113
        %v3115 = vpop.f32.mrb[0].mxu0
        %v3116 = vadd.f32 %v3043, %v3115
        %v3117 = vpop.f32.mrb[0].mxu0
        %v3118 = vadd.f32 %v3045, %v3117
        %v3119 = vpop.f32.mrb[0].mxu0
        %v3120 = vadd.f32 %v3047, %v3119
        %3121 = vdwg.mxu0
        %3122 = vmatprep.subr.bf16.mxu0 %v2547
        %3123 = vmatpush1.bf16.msra.mxu0 %v2546
        %3124 = vmatprep.subr.bf16.mxu0 %v2556
        %3125 = vmatpush1.bf16.msra.mxu0 %v2555
        %3126 = vmatprep.subr.bf16.mxu0 %v2565
        %3127 = vmatpush1.bf16.msra.mxu0 %v2564
        %3128 = vmatprep.subr.bf16.mxu0 %v2574
        %3129 = vmatpush1.bf16.msra.mxu0 %v2573
        %3130 = vmatprep.subr.bf16.mxu0 %v2583
        %3131 = vmatpush1.bf16.msra.mxu0 %v2582
        %3132 = vmatprep.subr.bf16.mxu0 %v2592
        %3133 = vmatpush1.bf16.msra.mxu0 %v2591
        %3134 = vmatprep.subr.bf16.mxu0 %v2601
        %3135 = vmatpush1.bf16.msra.mxu0 %v2600
        %3136 = vmatprep.subr.bf16.mxu0 %v2610
        %3137 = vmatpush1.bf16.msra.mxu0 %v2609
        %3138 = vmatprep.subr.bf16.mxu0 %v2619
        %3139 = vmatpush1.bf16.msra.mxu0 %v2618
        %3140 = vmatprep.subr.bf16.mxu0 %v2628
        %3141 = vmatpush1.bf16.msra.mxu0 %v2627
        %3142 = vmatprep.subr.bf16.mxu0 %v2637
        %3143 = vmatpush1.bf16.msra.mxu0 %v2636
        %3144 = vmatprep.subr.bf16.mxu0 %v2646
        %3145 = vmatpush1.bf16.msra.mxu0 %v2645
        %3146 = vmatprep.subr.bf16.mxu0 %v2655
        %3147 = vmatpush1.bf16.msra.mxu0 %v2654
        %3148 = vmatprep.subr.bf16.mxu0 %v2664
        %3149 = vmatpush1.bf16.msra.mxu0 %v2663
        %3150 = vmatprep.subr.bf16.mxu0 %v2673
        %3151 = vmatpush1.bf16.msra.mxu0 %v2672
        %3152 = vmatprep.subr.bf16.mxu0 %v2682
        %3153 = vmatpush1.bf16.msra.mxu0 %v2681
        %3154 = vmatprep.mubr.bf16.mxu0 %v1621
        %3155 = vmatmul.mubr.bf16.gmra.mrb[0].mxu0 %v1620
        %v3156 = vpop.f32.mrb[0].mxu0
        %v3157 = vadd.f32 0.0, %v3156
        %v3158 = vpop.f32.mrb[0].mxu0
        %v3159 = vadd.f32 0.0, %v3158
        %v3160 = vpop.f32.mrb[0].mxu0
        %v3161 = vadd.f32 0.0, %v3160
        %v3162 = vpop.f32.mrb[0].mxu0
        %v3163 = vadd.f32 0.0, %v3162
        %3164 = vmatprep.mubr.bf16.mxu0 %v1624
        %3165 = vmatmul.mubr.bf16.gmra.mrb[0].mxu0 %v1623
        %v3166 = vpop.f32.mrb[0].mxu0
        %v3167 = vadd.f32 0.0, %v3166
        %v3168 = vpop.f32.mrb[0].mxu0
        %v3169 = vadd.f32 0.0, %v3168
        %v3170 = vpop.f32.mrb[0].mxu0
        %v3171 = vadd.f32 0.0, %v3170
        %v3172 = vpop.f32.mrb[0].mxu0
        %v3173 = vadd.f32 0.0, %v3172
        %3174 = vmatprep.mubr.bf16.mxu0 %v1627
        %3175 = vmatmul.mubr.bf16.gmra.mrb[0].mxu0 %v1626
        %v3176 = vpop.f32.mrb[0].mxu0
        %v3177 = vadd.f32 0.0, %v3176
        %v3178 = vpop.f32.mrb[0].mxu0
        %v3179 = vadd.f32 0.0, %v3178
        %v3180 = vpop.f32.mrb[0].mxu0
        %v3181 = vadd.f32 0.0, %v3180
        %v3182 = vpop.f32.mrb[0].mxu0
        %v3183 = vadd.f32 0.0, %v3182
        %3184 = vmatprep.mubr.bf16.mxu0 %v1630
        %3185 = vmatmul.mubr.bf16.gmra.mrb[0].mxu0 %v1629
        %v3186 = vpop.f32.mrb[0].mxu0
        %v3187 = vadd.f32 0.0, %v3186
        %v3188 = vpop.f32.mrb[0].mxu0
        %v3189 = vadd.f32 0.0, %v3188
        %v3190 = vpop.f32.mrb[0].mxu0
        %v3191 = vadd.f32 0.0, %v3190
        %v3192 = vpop.f32.mrb[0].mxu0
        %v3193 = vadd.f32 0.0, %v3192
        %3194 = vdwg.mxu0
        %3195 = vmatprep.subr.bf16.mxu0 %v2691
        %3196 = vmatpush1.bf16.msra.mxu0 %v2690
        %3197 = vmatprep.subr.bf16.mxu0 %v2700
        %3198 = vmatpush1.bf16.msra.mxu0 %v2699
        %3199 = vmatprep.subr.bf16.mxu0 %v2709
        %3200 = vmatpush1.bf16.msra.mxu0 %v2708
        %3201 = vmatprep.subr.bf16.mxu0 %v2718
        %3202 = vmatpush1.bf16.msra.mxu0 %v2717
        %3203 = vmatprep.subr.bf16.mxu0 %v2727
        %3204 = vmatpush1.bf16.msra.mxu0 %v2726
        %3205 = vmatprep.subr.bf16.mxu0 %v2736
        %3206 = vmatpush1.bf16.msra.mxu0 %v2735
        %3207 = vmatprep.subr.bf16.mxu0 %v2745
        %3208 = vmatpush1.bf16.msra.mxu0 %v2744
        %3209 = vmatprep.subr.bf16.mxu0 %v2754
        %3210 = vmatpush1.bf16.msra.mxu0 %v2753
        %3211 = vmatprep.subr.bf16.mxu0 0
        %3212 = vmatpush1.bf16.msra.mxu0 0
        %3213 = vmatprep.subr.bf16.mxu0 0
        %3214 = vmatpush1.bf16.msra.mxu0 0
        %3215 = vmatprep.subr.bf16.mxu0 0
        %3216 = vmatpush1.bf16.msra.mxu0 0
        %3217 = vmatprep.subr.bf16.mxu0 0
        %3218 = vmatpush1.bf16.msra.mxu0 0
        %3219 = vmatprep.subr.bf16.mxu0 0
        %3220 = vmatpush1.bf16.msra.mxu0 0
        %3221 = vmatprep.subr.bf16.mxu0 0
        %3222 = vmatpush1.bf16.msra.mxu0 0
        %3223 = vmatprep.subr.bf16.mxu0 0
        %3224 = vmatpush1.bf16.msra.mxu0 0
        %3225 = vmatprep.subr.bf16.mxu0 0
        %3226 = vmatpush1.bf16.msra.mxu0 0
        %3227 = vmatprep.mubr.bf16.mxu0 0
        %3228 = vmatmul.mubr.bf16.gmra.mrb[0].mxu0 %v1622
        %v3229 = vpop.f32.mrb[0].mxu0
        %v3230 = vadd.f32 %v3157, %v3229
        %v3231 = vpop.f32.mrb[0].mxu0
        %v3232 = vadd.f32 %v3159, %v3231
        %v3233 = vpop.f32.mrb[0].mxu0
        %v3234 = vadd.f32 %v3161, %v3233
        %v3235 = vpop.f32.mrb[0].mxu0
        %v3236 = vadd.f32 %v3163, %v3235
        %3237 = vmatprep.mubr.bf16.mxu0 0
        %3238 = vmatmul.mubr.bf16.gmra.mrb[0].mxu0 %v1625
        %v3239 = vpop.f32.mrb[0].mxu0
        %v3240 = vadd.f32 %v3167, %v3239
        %v3241 = vpop.f32.mrb[0].mxu0
        %v3242 = vadd.f32 %v3169, %v3241
        %v3243 = vpop.f32.mrb[0].mxu0
        %v3244 = vadd.f32 %v3171, %v3243
        %v3245 = vpop.f32.mrb[0].mxu0
        %v3246 = vadd.f32 %v3173, %v3245
        %3247 = vmatprep.mubr.bf16.mxu0 0
        %3248 = vmatmul.mubr.bf16.gmra.mrb[0].mxu0 %v1628
        %v3249 = vpop.f32.mrb[0].mxu0
        %v3250 = vadd.f32 %v3177, %v3249
        %v3251 = vpop.f32.mrb[0].mxu0
        %v3252 = vadd.f32 %v3179, %v3251
        %v3253 = vpop.f32.mrb[0].mxu0
        %v3254 = vadd.f32 %v3181, %v3253
        %v3255 = vpop.f32.mrb[0].mxu0
        %v3256 = vadd.f32 %v3183, %v3255
        %3257 = vmatprep.mubr.bf16.mxu0 0
        %3258 = vmatmul.mubr.bf16.gmra.mrb[0].mxu0 %v1631
        %v3259 = vpop.f32.mrb[0].mxu0
        %v3260 = vadd.f32 %v3187, %v3259
        %v3261 = vpop.f32.mrb[0].mxu0
        %v3262 = vadd.f32 %v3189, %v3261
        %v3263 = vpop.f32.mrb[0].mxu0
        %v3264 = vadd.f32 %v3191, %v3263
        %v3265 = vpop.f32.mrb[0].mxu0
        %v3266 = vadd.f32 %v3193, %v3265
        %3267 = vdwg.mxu0
        %3268 = vmatprep.subr.bf16.mxu0 %v2549
        %3269 = vmatpush1.bf16.msra.mxu0 %v2548
        %3270 = vmatprep.subr.bf16.mxu0 %v2558
        %3271 = vmatpush1.bf16.msra.mxu0 %v2557
        %3272 = vmatprep.subr.bf16.mxu0 %v2567
        %3273 = vmatpush1.bf16.msra.mxu0 %v2566
        %3274 = vmatprep.subr.bf16.mxu0 %v2576
        %3275 = vmatpush1.bf16.msra.mxu0 %v2575
        %3276 = vmatprep.subr.bf16.mxu0 %v2585
        %3277 = vmatpush1.bf16.msra.mxu0 %v2584
        %3278 = vmatprep.subr.bf16.mxu0 %v2594
        %3279 = vmatpush1.bf16.msra.mxu0 %v2593
        %3280 = vmatprep.subr.bf16.mxu0 %v2603
        %3281 = vmatpush1.bf16.msra.mxu0 %v2602
        %3282 = vmatprep.subr.bf16.mxu0 %v2612
        %3283 = vmatpush1.bf16.msra.mxu0 %v2611
        %3284 = vmatprep.subr.bf16.mxu0 %v2621
        %3285 = vmatpush1.bf16.msra.mxu0 %v2620
        %3286 = vmatprep.subr.bf16.mxu0 %v2630
        %3287 = vmatpush1.bf16.msra.mxu0 %v2629
        %3288 = vmatprep.subr.bf16.mxu0 %v2639
        %3289 = vmatpush1.bf16.msra.mxu0 %v2638
        %3290 = vmatprep.subr.bf16.mxu0 %v2648
        %3291 = vmatpush1.bf16.msra.mxu0 %v2647
        %3292 = vmatprep.subr.bf16.mxu0 %v2657
        %3293 = vmatpush1.bf16.msra.mxu0 %v2656
        %3294 = vmatprep.subr.bf16.mxu0 %v2666
        %3295 = vmatpush1.bf16.msra.mxu0 %v2665
        %3296 = vmatprep.subr.bf16.mxu0 %v2675
        %3297 = vmatpush1.bf16.msra.mxu0 %v2674
        %3298 = vmatprep.subr.bf16.mxu0 %v2684
        %3299 = vmatpush1.bf16.msra.mxu0 %v2683
        %3300 = vmatprep.mubr.bf16.mxu0 %v1621
        %3301 = vmatmul.mubr.bf16.gmra.mrb[0].mxu0 %v1620
        %v3302 = vpop.f32.mrb[0].mxu0
        %v3303 = vadd.f32 0.0, %v3302
        %v3304 = vpop.f32.mrb[0].mxu0
        %v3305 = vadd.f32 0.0, %v3304
        %v3306 = vpop.f32.mrb[0].mxu0
        %v3307 = vadd.f32 0.0, %v3306
        %v3308 = vpop.f32.mrb[0].mxu0
        %v3309 = vadd.f32 0.0, %v3308
        %3310 = vmatprep.mubr.bf16.mxu0 %v1624
        %3311 = vmatmul.mubr.bf16.gmra.mrb[0].mxu0 %v1623
        %v3312 = vpop.f32.mrb[0].mxu0
        %v3313 = vadd.f32 0.0, %v3312
        %v3314 = vpop.f32.mrb[0].mxu0
        %v3315 = vadd.f32 0.0, %v3314
        %v3316 = vpop.f32.mrb[0].mxu0
        %v3317 = vadd.f32 0.0, %v3316
        %v3318 = vpop.f32.mrb[0].mxu0
        %v3319 = vadd.f32 0.0, %v3318
        %3320 = vmatprep.mubr.bf16.mxu0 %v1627
        %3321 = vmatmul.mubr.bf16.gmra.mrb[0].mxu0 %v1626
        %v3322 = vpop.f32.mrb[0].mxu0
        %v3323 = vadd.f32 0.0, %v3322
        %v3324 = vpop.f32.mrb[0].mxu0
        %v3325 = vadd.f32 0.0, %v3324
        %v3326 = vpop.f32.mrb[0].mxu0
        %v3327 = vadd.f32 0.0, %v3326
        %v3328 = vpop.f32.mrb[0].mxu0
        %v3329 = vadd.f32 0.0, %v3328
        %3330 = vmatprep.mubr.bf16.mxu0 %v1630
        %3331 = vmatmul.mubr.bf16.gmra.mrb[0].mxu0 %v1629
        %v3332 = vpop.f32.mrb[0].mxu0
        %v3333 = vadd.f32 0.0, %v3332
        %v3334 = vpop.f32.mrb[0].mxu0
        %v3335 = vadd.f32 0.0, %v3334
        %v3336 = vpop.f32.mrb[0].mxu0
        %v3337 = vadd.f32 0.0, %v3336
        %v3338 = vpop.f32.mrb[0].mxu0
        %v3339 = vadd.f32 0.0, %v3338
        %3340 = vdwg.mxu0
        %3341 = vmatprep.subr.bf16.mxu0 %v2693
        %3342 = vmatpush1.bf16.msra.mxu0 %v2692
        %3343 = vmatprep.subr.bf16.mxu0 %v2702
        %3344 = vmatpush1.bf16.msra.mxu0 %v2701
        %3345 = vmatprep.subr.bf16.mxu0 %v2711
        %3346 = vmatpush1.bf16.msra.mxu0 %v2710
        %3347 = vmatprep.subr.bf16.mxu0 %v2720
        %3348 = vmatpush1.bf16.msra.mxu0 %v2719
        %3349 = vmatprep.subr.bf16.mxu0 %v2729
        %3350 = vmatpush1.bf16.msra.mxu0 %v2728
        %3351 = vmatprep.subr.bf16.mxu0 %v2738
        %3352 = vmatpush1.bf16.msra.mxu0 %v2737
        %3353 = vmatprep.subr.bf16.mxu0 %v2747
        %3354 = vmatpush1.bf16.msra.mxu0 %v2746
        %3355 = vmatprep.subr.bf16.mxu0 %v2756
        %3356 = vmatpush1.bf16.msra.mxu0 %v2755
        %3357 = vmatprep.subr.bf16.mxu0 0
        %3358 = vmatpush1.bf16.msra.mxu0 0
        %3359 = vmatprep.subr.bf16.mxu0 0
        %3360 = vmatpush1.bf16.msra.mxu0 0
        %3361 = vmatprep.subr.bf16.mxu0 0
        %3362 = vmatpush1.bf16.msra.mxu0 0
        %3363 = vmatprep.subr.bf16.mxu0 0
        %3364 = vmatpush1.bf16.msra.mxu0 0
        %3365 = vmatprep.subr.bf16.mxu0 0
        %3366 = vmatpush1.bf16.msra.mxu0 0
        %3367 = vmatprep.subr.bf16.mxu0 0
        %3368 = vmatpush1.bf16.msra.mxu0 0
        %3369 = vmatprep.subr.bf16.mxu0 0
        %3370 = vmatpush1.bf16.msra.mxu0 0
        %3371 = vmatprep.subr.bf16.mxu0 0
        %3372 = vmatpush1.bf16.msra.mxu0 0
        %3373 = vmatprep.mubr.bf16.mxu0 0
        %3374 = vmatmul.mubr.bf16.gmra.mrb[0].mxu0 %v1622
        %v3375 = vpop.f32.mrb[0].mxu0
        %v3376 = vadd.f32 %v3303, %v3375
        %v3377 = vpop.f32.mrb[0].mxu0
        %v3378 = vadd.f32 %v3305, %v3377
        %v3379 = vpop.f32.mrb[0].mxu0
        %v3380 = vadd.f32 %v3307, %v3379
        %v3381 = vpop.f32.mrb[0].mxu0
        %v3382 = vadd.f32 %v3309, %v3381
        %3383 = vmatprep.mubr.bf16.mxu0 0
        %3384 = vmatmul.mubr.bf16.gmra.mrb[0].mxu0 %v1625
        %v3385 = vpop.f32.mrb[0].mxu0
        %v3386 = vadd.f32 %v3313, %v3385
        %v3387 = vpop.f32.mrb[0].mxu0
        %v3388 = vadd.f32 %v3315, %v3387
        %v3389 = vpop.f32.mrb[0].mxu0
        %v3390 = vadd.f32 %v3317, %v3389
        %v3391 = vpop.f32.mrb[0].mxu0
        %v3392 = vadd.f32 %v3319, %v3391
        %3393 = vmatprep.mubr.bf16.mxu0 0
        %3394 = vmatmul.mubr.bf16.gmra.mrb[0].mxu0 %v1628
        %v3395 = vpop.f32.mrb[0].mxu0
        %v3396 = vadd.f32 %v3323, %v3395
        %v3397 = vpop.f32.mrb[0].mxu0
        %v3398 = vadd.f32 %v3325, %v3397
        %v3399 = vpop.f32.mrb[0].mxu0
        %v3400 = vadd.f32 %v3327, %v3399
        %v3401 = vpop.f32.mrb[0].mxu0
        %v3402 = vadd.f32 %v3329, %v3401
        %3403 = vmatprep.mubr.bf16.mxu0 0
        %3404 = vmatmul.mubr.bf16.gmra.mrb[0].mxu0 %v1631
        %v3405 = vpop.f32.mrb[0].mxu0
        %v3406 = vadd.f32 %v3333, %v3405
        %v3407 = vpop.f32.mrb[0].mxu0
        %v3408 = vadd.f32 %v3335, %v3407
        %v3409 = vpop.f32.mrb[0].mxu0
        %v3410 = vadd.f32 %v3337, %v3409
        %v3411 = vpop.f32.mrb[0].mxu0
        %v3412 = vadd.f32 %v3339, %v3411
        %3413 = vdwg.mxu0
        %3414 = vmatprep.subr.bf16.mxu0 %v2551
        %3415 = vmatpush1.bf16.msra.mxu0 %v2550
        %3416 = vmatprep.subr.bf16.mxu0 %v2560
        %3417 = vmatpush1.bf16.msra.mxu0 %v2559
        %3418 = vmatprep.subr.bf16.mxu0 %v2569
        %3419 = vmatpush1.bf16.msra.mxu0 %v2568
        %3420 = vmatprep.subr.bf16.mxu0 %v2578
        %3421 = vmatpush1.bf16.msra.mxu0 %v2577
        %3422 = vmatprep.subr.bf16.mxu0 %v2587
        %3423 = vmatpush1.bf16.msra.mxu0 %v2586
        %3424 = vmatprep.subr.bf16.mxu0 %v2596
        %3425 = vmatpush1.bf16.msra.mxu0 %v2595
        %3426 = vmatprep.subr.bf16.mxu0 %v2605
        %3427 = vmatpush1.bf16.msra.mxu0 %v2604
        %3428 = vmatprep.subr.bf16.mxu0 %v2614
        %3429 = vmatpush1.bf16.msra.mxu0 %v2613
        %3430 = vmatprep.subr.bf16.mxu0 %v2623
        %3431 = vmatpush1.bf16.msra.mxu0 %v2622
        %3432 = vmatprep.subr.bf16.mxu0 %v2632
        %3433 = vmatpush1.bf16.msra.mxu0 %v2631
        %3434 = vmatprep.subr.bf16.mxu0 %v2641
        %3435 = vmatpush1.bf16.msra.mxu0 %v2640
        %3436 = vmatprep.subr.bf16.mxu0 %v2650
        %3437 = vmatpush1.bf16.msra.mxu0 %v2649
        %3438 = vmatprep.subr.bf16.mxu0 %v2659
        %3439 = vmatpush1.bf16.msra.mxu0 %v2658
        %3440 = vmatprep.subr.bf16.mxu0 %v2668
        %3441 = vmatpush1.bf16.msra.mxu0 %v2667
        %3442 = vmatprep.subr.bf16.mxu0 %v2677
        %3443 = vmatpush1.bf16.msra.mxu0 %v2676
        %3444 = vmatprep.subr.bf16.mxu0 %v2686
        %3445 = vmatpush1.bf16.msra.mxu0 %v2685
        %3446 = vmatprep.mubr.bf16.mxu0 %v1621
        %3447 = vmatmul.mubr.bf16.gmra.mrb[0].mxu0 %v1620
        %v3448 = vpop.f32.mrb[0].mxu0
        %v3449 = vadd.f32 0.0, %v3448
        %v3450 = vpop.f32.mrb[0].mxu0
        %v3451 = vadd.f32 0.0, %v3450
        %v3452 = vpop.f32.mrb[0].mxu0
        %v3453 = vadd.f32 0.0, %v3452
        %v3454 = vpop.f32.mrb[0].mxu0
        %v3455 = vadd.f32 0.0, %v3454
        %3456 = vmatprep.mubr.bf16.mxu0 %v1624
        %3457 = vmatmul.mubr.bf16.gmra.mrb[0].mxu0 %v1623
        %v3458 = vpop.f32.mrb[0].mxu0
        %v3459 = vadd.f32 0.0, %v3458
        %v3460 = vpop.f32.mrb[0].mxu0
        %v3461 = vadd.f32 0.0, %v3460
        %v3462 = vpop.f32.mrb[0].mxu0
        %v3463 = vadd.f32 0.0, %v3462
        %v3464 = vpop.f32.mrb[0].mxu0
        %v3465 = vadd.f32 0.0, %v3464
        %3466 = vmatprep.mubr.bf16.mxu0 %v1627
        %3467 = vmatmul.mubr.bf16.gmra.mrb[0].mxu0 %v1626
        %v3468 = vpop.f32.mrb[0].mxu0
        %v3469 = vadd.f32 0.0, %v3468
        %v3470 = vpop.f32.mrb[0].mxu0
        %v3471 = vadd.f32 0.0, %v3470
        %v3472 = vpop.f32.mrb[0].mxu0
        %v3473 = vadd.f32 0.0, %v3472
        %v3474 = vpop.f32.mrb[0].mxu0
        %v3475 = vadd.f32 0.0, %v3474
        %3476 = vmatprep.mubr.bf16.mxu0 %v1630
        %3477 = vmatmul.mubr.bf16.gmra.mrb[0].mxu0 %v1629
        %v3478 = vpop.f32.mrb[0].mxu0
        %v3479 = vadd.f32 0.0, %v3478
        %v3480 = vpop.f32.mrb[0].mxu0
        %v3481 = vadd.f32 0.0, %v3480
        %v3482 = vpop.f32.mrb[0].mxu0
        %v3483 = vadd.f32 0.0, %v3482
        %v3484 = vpop.f32.mrb[0].mxu0
        %v3485 = vadd.f32 0.0, %v3484
        %3486 = vdwg.mxu0
        %3487 = vmatprep.subr.bf16.mxu0 %v2695
        %3488 = vmatpush1.bf16.msra.mxu0 %v2694
        %3489 = vmatprep.subr.bf16.mxu0 %v2704
        %3490 = vmatpush1.bf16.msra.mxu0 %v2703
        %3491 = vmatprep.subr.bf16.mxu0 %v2713
        %3492 = vmatpush1.bf16.msra.mxu0 %v2712
        %3493 = vmatprep.subr.bf16.mxu0 %v2722
        %3494 = vmatpush1.bf16.msra.mxu0 %v2721
        %3495 = vmatprep.subr.bf16.mxu0 %v2731
        %3496 = vmatpush1.bf16.msra.mxu0 %v2730
        %3497 = vmatprep.subr.bf16.mxu0 %v2740
        %3498 = vmatpush1.bf16.msra.mxu0 %v2739
        %3499 = vmatprep.subr.bf16.mxu0 %v2749
        %3500 = vmatpush1.bf16.msra.mxu0 %v2748
        %3501 = vmatprep.subr.bf16.mxu0 %v2758
        %3502 = vmatpush1.bf16.msra.mxu0 %v2757
        %3503 = vmatprep.subr.bf16.mxu0 0
        %3504 = vmatpush1.bf16.msra.mxu0 0
        %3505 = vmatprep.subr.bf16.mxu0 0
        %3506 = vmatpush1.bf16.msra.mxu0 0
        %3507 = vmatprep.subr.bf16.mxu0 0
        %3508 = vmatpush1.bf16.msra.mxu0 0
        %3509 = vmatprep.subr.bf16.mxu0 0
        %3510 = vmatpush1.bf16.msra.mxu0 0
        %3511 = vmatprep.subr.bf16.mxu0 0
        %3512 = vmatpush1.bf16.msra.mxu0 0
        %3513 = vmatprep.subr.bf16.mxu0 0
        %3514 = vmatpush1.bf16.msra.mxu0 0
        %3515 = vmatprep.subr.bf16.mxu0 0
        %3516 = vmatpush1.bf16.msra.mxu0 0
        %3517 = vmatprep.subr.bf16.mxu0 0
        %3518 = vmatpush1.bf16.msra.mxu0 0
        %3519 = vmatprep.mubr.bf16.mxu0 0
        %3520 = vmatmul.mubr.bf16.gmra.mrb[0].mxu0 %v1622
        %v3521 = vpop.f32.mrb[0].mxu0
        %v3522 = vadd.f32 %v3449, %v3521
        %v3523 = vpop.f32.mrb[0].mxu0
        %v3524 = vadd.f32 %v3451, %v3523
        %v3525 = vpop.f32.mrb[0].mxu0
        %v3526 = vadd.f32 %v3453, %v3525
        %v3527 = vpop.f32.mrb[0].mxu0
        %v3528 = vadd.f32 %v3455, %v3527
        %3529 = vmatprep.mubr.bf16.mxu0 0
        %3530 = vmatmul.mubr.bf16.gmra.mrb[0].mxu0 %v1625
        %v3531 = vpop.f32.mrb[0].mxu0
        %v3532 = vadd.f32 %v3459, %v3531
        %v3533 = vpop.f32.mrb[0].mxu0
        %v3534 = vadd.f32 %v3461, %v3533
        %v3535 = vpop.f32.mrb[0].mxu0
        %v3536 = vadd.f32 %v3463, %v3535
        %v3537 = vpop.f32.mrb[0].mxu0
        %v3538 = vadd.f32 %v3465, %v3537
        %3539 = vmatprep.mubr.bf16.mxu0 0
        %3540 = vmatmul.mubr.bf16.gmra.mrb[0].mxu0 %v1628
        %v3541 = vpop.f32.mrb[0].mxu0
        %v3542 = vadd.f32 %v3469, %v3541
        %v3543 = vpop.f32.mrb[0].mxu0
        %v3544 = vadd.f32 %v3471, %v3543
        %v3545 = vpop.f32.mrb[0].mxu0
        %v3546 = vadd.f32 %v3473, %v3545
        %v3547 = vpop.f32.mrb[0].mxu0
        %v3548 = vadd.f32 %v3475, %v3547
        %3549 = vmatprep.mubr.bf16.mxu0 0
        %3550 = vmatmul.mubr.bf16.gmra.mrb[0].mxu0 %v1631
        %v3551 = vpop.f32.mrb[0].mxu0
        %v3552 = vadd.f32 %v3479, %v3551
        %v3553 = vpop.f32.mrb[0].mxu0
        %v3554 = vadd.f32 %v3481, %v3553
        %v3555 = vpop.f32.mrb[0].mxu0
        %v3556 = vadd.f32 %v3483, %v3555
        %v3557 = vpop.f32.mrb[0].mxu0
        %v3558 = vadd.f32 %v3485, %v3557
        %3559 = vdwg.mxu0
        %3560 = vmatprep.subr.bf16.mxu0 0
        %3561 = vmatpush1.bf16.msra.mxu0 %v2552
        %3562 = vmatprep.subr.bf16.mxu0 0
        %3563 = vmatpush1.bf16.msra.mxu0 %v2561
        %3564 = vmatprep.subr.bf16.mxu0 0
        %3565 = vmatpush1.bf16.msra.mxu0 %v2570
        %3566 = vmatprep.subr.bf16.mxu0 0
        %3567 = vmatpush1.bf16.msra.mxu0 %v2579
        %3568 = vmatprep.subr.bf16.mxu0 0
        %3569 = vmatpush1.bf16.msra.mxu0 %v2588
        %3570 = vmatprep.subr.bf16.mxu0 0
        %3571 = vmatpush1.bf16.msra.mxu0 %v2597
        %3572 = vmatprep.subr.bf16.mxu0 0
        %3573 = vmatpush1.bf16.msra.mxu0 %v2606
        %3574 = vmatprep.subr.bf16.mxu0 0
        %3575 = vmatpush1.bf16.msra.mxu0 %v2615
        %3576 = vmatprep.subr.bf16.mxu0 0
        %3577 = vmatpush1.bf16.msra.mxu0 %v2624
        %3578 = vmatprep.subr.bf16.mxu0 0
        %3579 = vmatpush1.bf16.msra.mxu0 %v2633
        %3580 = vmatprep.subr.bf16.mxu0 0
        %3581 = vmatpush1.bf16.msra.mxu0 %v2642
        %3582 = vmatprep.subr.bf16.mxu0 0
        %3583 = vmatpush1.bf16.msra.mxu0 %v2651
        %3584 = vmatprep.subr.bf16.mxu0 0
        %3585 = vmatpush1.bf16.msra.mxu0 %v2660
        %3586 = vmatprep.subr.bf16.mxu0 0
        %3587 = vmatpush1.bf16.msra.mxu0 %v2669
        %3588 = vmatprep.subr.bf16.mxu0 0
        %3589 = vmatpush1.bf16.msra.mxu0 %v2678
        %3590 = vmatprep.subr.bf16.mxu0 0
        %3591 = vmatpush1.bf16.msra.mxu0 %v2687
        %3592 = vmatprep.mubr.bf16.mxu0 %v1621
        %3593 = vmatmul.mubr.bf16.gmra.mrb[0].mxu0 %v1620
        %v3594 = vpop.f32.mrb[0].mxu0
        %v3595 = vadd.f32 0.0, %v3594
        %v3596 = vpop.f32.mrb[0].mxu0
        %v3597 = vpop.f32.mrb[0].mxu0
        %v3598 = vadd.f32 0.0, %v3597
        %v3599 = vpop.f32.mrb[0].mxu0
        %3600 = vmatprep.mubr.bf16.mxu0 %v1624
        %3601 = vmatmul.mubr.bf16.gmra.mrb[0].mxu0 %v1623
        %v3602 = vpop.f32.mrb[0].mxu0
        %v3603 = vadd.f32 0.0, %v3602
        %v3604 = vpop.f32.mrb[0].mxu0
        %v3605 = vpop.f32.mrb[0].mxu0
        %v3606 = vadd.f32 0.0, %v3605
        %v3607 = vpop.f32.mrb[0].mxu0
        %3608 = vmatprep.mubr.bf16.mxu0 %v1627
        %3609 = vmatmul.mubr.bf16.gmra.mrb[0].mxu0 %v1626
        %v3610 = vpop.f32.mrb[0].mxu0
        %v3611 = vadd.f32 0.0, %v3610
        %v3612 = vpop.f32.mrb[0].mxu0
        %v3613 = vpop.f32.mrb[0].mxu0
        %v3614 = vadd.f32 0.0, %v3613
        %v3615 = vpop.f32.mrb[0].mxu0
        %3616 = vmatprep.mubr.bf16.mxu0 %v1630
        %3617 = vmatmul.mubr.bf16.gmra.mrb[0].mxu0 %v1629
        %v3618 = vpop.f32.mrb[0].mxu0
        %v3619 = vadd.f32 0.0, %v3618
        %v3620 = vpop.f32.mrb[0].mxu0
        %v3621 = vpop.f32.mrb[0].mxu0
        %v3622 = vadd.f32 0.0, %v3621
        %v3623 = vpop.f32.mrb[0].mxu0
        %3624 = vdwg.mxu0
        %3625 = vmatprep.subr.bf16.mxu0 0
        %3626 = vmatpush1.bf16.msra.mxu0 %v2696
        %3627 = vmatprep.subr.bf16.mxu0 0
        %3628 = vmatpush1.bf16.msra.mxu0 %v2705
        %3629 = vmatprep.subr.bf16.mxu0 0
        %3630 = vmatpush1.bf16.msra.mxu0 %v2714
        %3631 = vmatprep.subr.bf16.mxu0 0
        %3632 = vmatpush1.bf16.msra.mxu0 %v2723
        %3633 = vmatprep.subr.bf16.mxu0 0
        %3634 = vmatpush1.bf16.msra.mxu0 %v2732
        %3635 = vmatprep.subr.bf16.mxu0 0
        %3636 = vmatpush1.bf16.msra.mxu0 %v2741
        %3637 = vmatprep.subr.bf16.mxu0 0
        %3638 = vmatpush1.bf16.msra.mxu0 %v2750
        %3639 = vmatprep.subr.bf16.mxu0 0
        %3640 = vmatpush1.bf16.msra.mxu0 %v2759
        %3641 = vmatprep.subr.bf16.mxu0 0
        %3642 = vmatpush1.bf16.msra.mxu0 0
        %3643 = vmatprep.subr.bf16.mxu0 0
        %3644 = vmatpush1.bf16.msra.mxu0 0
        %3645 = vmatprep.subr.bf16.mxu0 0
        %3646 = vmatpush1.bf16.msra.mxu0 0
        %3647 = vmatprep.subr.bf16.mxu0 0
        %3648 = vmatpush1.bf16.msra.mxu0 0
        %3649 = vmatprep.subr.bf16.mxu0 0
        %3650 = vmatpush1.bf16.msra.mxu0 0
        %3651 = vmatprep.subr.bf16.mxu0 0
        %3652 = vmatpush1.bf16.msra.mxu0 0
        %3653 = vmatprep.subr.bf16.mxu0 0
        %3654 = vmatpush1.bf16.msra.mxu0 0
        %3655 = vmatprep.subr.bf16.mxu0 0
        %3656 = vmatpush1.bf16.msra.mxu0 0
        %3657 = vmatprep.mubr.bf16.mxu0 0
        %3658 = vmatmul.mubr.bf16.gmra.mrb[0].mxu0 %v1622
        %v3659 = vpop.f32.mrb[0].mxu0
        %v3660 = vadd.f32 %v3595, %v3659
        %v3661 = vpop.f32.mrb[0].mxu0
        %v3662 = vpop.f32.mrb[0].mxu0
        %v3663 = vadd.f32 %v3598, %v3662
        %v3664 = vpop.f32.mrb[0].mxu0
        %3665 = vmatprep.mubr.bf16.mxu0 0
        %3666 = vmatmul.mubr.bf16.gmra.mrb[0].mxu0 %v1625
        %v3667 = vpop.f32.mrb[0].mxu0
        %v3668 = vadd.f32 %v3603, %v3667
        %v3669 = vpop.f32.mrb[0].mxu0
        %v3670 = vpop.f32.mrb[0].mxu0
        %v3671 = vadd.f32 %v3606, %v3670
        %v3672 = vpop.f32.mrb[0].mxu0
        %3673 = vmatprep.mubr.bf16.mxu0 0
        %3674 = vmatmul.mubr.bf16.gmra.mrb[0].mxu0 %v1628
        %v3675 = vpop.f32.mrb[0].mxu0
        %v3676 = vadd.f32 %v3611, %v3675
        %v3677 = vpop.f32.mrb[0].mxu0
        %v3678 = vpop.f32.mrb[0].mxu0
        %v3679 = vadd.f32 %v3614, %v3678
        %v3680 = vpop.f32.mrb[0].mxu0
        %3681 = vmatprep.mubr.bf16.mxu0 0
        %3682 = vmatmul.mubr.bf16.gmra.mrb[0].mxu0 %v1631
        %v3683 = vpop.f32.mrb[0].mxu0
        %v3684 = vadd.f32 %v3619, %v3683
        %v3685 = vpop.f32.mrb[0].mxu0
        %v3686 = vpop.f32.mrb[0].mxu0
        %v3687 = vadd.f32 %v3622, %v3686
        %v3688 = vpop.f32.mrb[0].mxu0
        %3689 = vdwg.mxu0
        %v3690 = vmul.f32 %v3084, 0.05103104
        %v3691 = vmul.f32 %v3086, 0.05103104
        %v3692 = vmul.f32 %v3230, 0.05103104
        %v3693 = vmul.f32 %v3088, 0.05103104
        %v3694 = vmul.f32 %v3090, 0.05103104
        %v3695 = vmul.f32 %v3234, 0.05103104
        %v3696 = vmul.f32 %v3094, 0.05103104
        %v3697 = vmul.f32 %v3096, 0.05103104
        %v3698 = vmul.f32 %v3240, 0.05103104
        %v3699 = vmul.f32 %v3098, 0.05103104
        %v3700 = vmul.f32 %v3100, 0.05103104
        %v3701 = vmul.f32 %v3244, 0.05103104
        %v3702 = vmul.f32 %v3104, 0.05103104
        %v3703 = vmul.f32 %v3106, 0.05103104
        %v3704 = vmul.f32 %v3250, 0.05103104
        %v3705 = vmul.f32 %v3108, 0.05103104
        %v3706 = vmul.f32 %v3110, 0.05103104
        %v3707 = vmul.f32 %v3254, 0.05103104
        %v3708 = vmul.f32 %v3114, 0.05103104
        %v3709 = vmul.f32 %v3116, 0.05103104
        %v3710 = vmul.f32 %v3260, 0.05103104
        %v3711 = vmul.f32 %v3118, 0.05103104
        %v3712 = vmul.f32 %v3120, 0.05103104
        %v3713 = vmul.f32 %v3264, 0.05103104
        %v3714 = vld [vmem:[#allocation3] sm:$0xff]
        %v3715 = vld [vmem:[#allocation3 + $0x8] sm:$0xff]
        %v3716 = vld [vmem:[#allocation3 + $0x10] sm:$0xff]
        %v3717 = vld [vmem:[#allocation3 + $0x18] sm:$0xff]
        %v3718 = vpack.c.bf16 %v3693, %v3690
        %v3719 = vpack.c.bf16 %v3699, %v3696
        %v3720 = vpack.c.bf16 %v3705, %v3702
        %v3721 = vpack.c.bf16 %v3711, %v3708
        %v3722 = vpack.c.bf16 %v3236, %v3232
        %v3723 = vpack.c.bf16 %v3246, %v3242
        %v3724 = vpack.c.bf16 %v3256, %v3252
        %v3725 = vpack.c.bf16 %v3266, %v3262
        %v3726 = vpack.c.bf16 %v3526, %v3522
        %v3727 = vpack.c.bf16 %v3536, %v3532
        %v3728 = vpack.c.bf16 %v3546, %v3542
        %v3729 = vpack.c.bf16 %v3556, %v3552
        %vm3730 = vcmask 523264
        %v3732 = vsel %vm3730, %v3718, 0
        %v3735 = vsel %vm3730, %v3719, 0
        %v3738 = vsel %vm3730, %v3722, 0
        %v3741 = vsel %vm3730, %v3723, 0
        %3743 = vmatprep.subr.bf16.mxu0 0
        %3744 = vmatpush1.bf16.xpose.msra.mxu0 %v3738
        %3745 = vmatprep.subr.bf16.mxu0 0
        %3746 = vmatpush1.bf16.xpose.msra.mxu0 %v3741
        %3747 = vmatprep.subr.bf16.mxu0 0
        %3748 = vmatpush1.bf16.xpose.msra.mxu0 0
        %3749 = vmatprep.subr.bf16.mxu0 0
        %3750 = vmatpush1.bf16.xpose.msra.mxu0 0
        %3751 = vmatprep.subr.bf16.mxu0 0
        %3752 = vmatpush1.bf16.xpose.msra.mxu0 0
        %3753 = vmatprep.subr.bf16.mxu0 0
        %3754 = vmatpush1.bf16.xpose.msra.mxu0 0
        %3755 = vmatprep.subr.bf16.mxu0 0
        %3756 = vmatpush1.bf16.xpose.msra.mxu0 0
        %3757 = vmatprep.subr.bf16.mxu0 0
        %3758 = vmatpush1.bf16.xpose.msra.mxu0 0
        %3759 = vmatprep.subr.bf16.mxu0 0
        %3760 = vmatpush1.bf16.xpose.msra.mxu0 0
        %3761 = vmatprep.subr.bf16.mxu0 0
        %3762 = vmatpush1.bf16.xpose.msra.mxu0 0
        %3763 = vmatprep.subr.bf16.mxu0 0
        %3764 = vmatpush1.bf16.xpose.msra.mxu0 0
        %3765 = vmatprep.subr.bf16.mxu0 0
        %3766 = vmatpush1.bf16.xpose.msra.mxu0 0
        %3767 = vmatprep.subr.bf16.mxu0 0
        %3768 = vmatpush1.bf16.xpose.msra.mxu0 0
        %3769 = vmatprep.subr.bf16.mxu0 0
        %3770 = vmatpush1.bf16.xpose.msra.mxu0 0
        %3771 = vmatprep.subr.bf16.mxu0 0
        %3772 = vmatpush1.bf16.xpose.msra.mxu0 0
        %3773 = vmatprep.subr.bf16.mxu0 0
        %3774 = vmatpush1.bf16.xpose.msra.mxu0 0
        %3775 = vmatprep.mubr.bf16.mxu0 0
        %3776 = vmatmul.mubr.bf16.gmra.mrb[0].mxu0 %v3732
        %v3777 = vpop.f32.mrb[0].mxu0
        %v3778 = vadd.f32 %v3714, %v3777
        %v3779 = vpop.f32.mrb[0].mxu0
        %v3780 = vpop.f32.mrb[0].mxu0
        %v3781 = vadd.f32 %v3715, %v3780
        %v3782 = vpop.f32.mrb[0].mxu0
        %3783 = vmatprep.mubr.bf16.mxu0 0
        %3784 = vmatmul.mubr.bf16.gmra.mrb[0].mxu0 %v3735
        %v3785 = vpop.f32.mrb[0].mxu0
        %v3786 = vadd.f32 %v3716, %v3785
        %v3787 = vpop.f32.mrb[0].mxu0
        %v3788 = vpop.f32.mrb[0].mxu0
        %v3789 = vadd.f32 %v3717, %v3788
        %v3790 = vpop.f32.mrb[0].mxu0
        %3791 = vdwg.mxu0
        %v3793 = vsel %vm3730, %v3720, 0
        %v3796 = vsel %vm3730, %v3721, 0
        %v3799 = vsel %vm3730, %v3724, 0
        %v3802 = vsel %vm3730, %v3725, 0
        %3804 = vmatprep.subr.bf16.mxu0 0
        %3805 = vmatpush1.bf16.xpose.msra.mxu0 %v3799
        %3806 = vmatprep.subr.bf16.mxu0 0
        %3807 = vmatpush1.bf16.xpose.msra.mxu0 %v3802
        %3808 = vmatprep.subr.bf16.mxu0 0
        %3809 = vmatpush1.bf16.xpose.msra.mxu0 0
        %3810 = vmatprep.subr.bf16.mxu0 0
        %3811 = vmatpush1.bf16.xpose.msra.mxu0 0
        %3812 = vmatprep.subr.bf16.mxu0 0
        %3813 = vmatpush1.bf16.xpose.msra.mxu0 0
        %3814 = vmatprep.subr.bf16.mxu0 0
        %3815 = vmatpush1.bf16.xpose.msra.mxu0 0
        %3816 = vmatprep.subr.bf16.mxu0 0
        %3817 = vmatpush1.bf16.xpose.msra.mxu0 0
        %3818 = vmatprep.subr.bf16.mxu0 0
        %3819 = vmatpush1.bf16.xpose.msra.mxu0 0
        %3820 = vmatprep.subr.bf16.mxu0 0
        %3821 = vmatpush1.bf16.xpose.msra.mxu0 0
        %3822 = vmatprep.subr.bf16.mxu0 0
        %3823 = vmatpush1.bf16.xpose.msra.mxu0 0
        %3824 = vmatprep.subr.bf16.mxu0 0
        %3825 = vmatpush1.bf16.xpose.msra.mxu0 0
        %3826 = vmatprep.subr.bf16.mxu0 0
        %3827 = vmatpush1.bf16.xpose.msra.mxu0 0
        %3828 = vmatprep.subr.bf16.mxu0 0
        %3829 = vmatpush1.bf16.xpose.msra.mxu0 0
        %3830 = vmatprep.subr.bf16.mxu0 0
        %3831 = vmatpush1.bf16.xpose.msra.mxu0 0
        %3832 = vmatprep.subr.bf16.mxu0 0
        %3833 = vmatpush1.bf16.xpose.msra.mxu0 0
        %3834 = vmatprep.subr.bf16.mxu0 0
        %3835 = vmatpush1.bf16.xpose.msra.mxu0 0
        %3836 = vmatprep.mubr.bf16.mxu0 0
        %3837 = vmatmul.mubr.bf16.gmra.mrb[0].mxu0 %v3793
        %v3838 = vpop.f32.mrb[0].mxu0
        %v3839 = vadd.f32 %v3714, %v3838
        %v3840 = vpop.f32.mrb[0].mxu0
        %v3841 = vpop.f32.mrb[0].mxu0
        %v3842 = vadd.f32 %v3715, %v3841
        %v3843 = vpop.f32.mrb[0].mxu0
        %3844 = vmatprep.mubr.bf16.mxu0 0
        %3845 = vmatmul.mubr.bf16.gmra.mrb[0].mxu0 %v3796
        %v3846 = vpop.f32.mrb[0].mxu0
        %v3847 = vadd.f32 %v3716, %v3846
        %v3848 = vpop.f32.mrb[0].mxu0
        %v3849 = vpop.f32.mrb[0].mxu0
        %v3850 = vadd.f32 %v3717, %v3849
        %v3851 = vpop.f32.mrb[0].mxu0
        %3852 = vdwg.mxu0
        %vm3853 = vcmask 261120
        %v3854 = vsel %vm3853, %v3778, -inf
        %3855 = vmax.xlane.f32.xlu0 %v3854
        %v3856 = vpop.xlane.xlu0 %3855
        %v3857 = vsel %vm3853, %v3781, -inf
        %3858 = vmax.xlane.f32.xlu0 %v3857
        %v3859 = vpop.xlane.xlu0 %3858
        %v3860 = vsel %vm3853, %v3786, -inf
        %3861 = vmax.xlane.f32.xlu0 %v3860
        %v3862 = vpop.xlane.xlu0 %3861
        %v3863 = vsel %vm3853, %v3789, -inf
        %3864 = vmax.xlane.f32.xlu0 %v3863
        %v3865 = vpop.xlane.xlu0 %3864
        %v3866 = vsel %vm3853, %v3839, -inf
        %3867 = vmax.xlane.f32.xlu0 %v3866
        %v3868 = vpop.xlane.xlu0 %3867
        %v3869 = vsel %vm3853, %v3842, -inf
        %3870 = vmax.xlane.f32.xlu0 %v3869
        %v3871 = vpop.xlane.xlu0 %3870
        %v3872 = vsel %vm3853, %v3847, -inf
        %3873 = vmax.xlane.f32.xlu0 %v3872
        %v3874 = vpop.xlane.xlu0 %3873
        %v3875 = vsel %vm3853, %v3850, -inf
        %3876 = vmax.xlane.f32.xlu0 %v3875
        %v3877 = vpop.xlane.xlu0 %3876
        %v3878 = vsub.f32 %v3778, %v3856
        %v3879 = vsub.f32 %v3781, %v3859
        %v3880 = vsub.f32 %v3786, %v3862
        %v3881 = vsub.f32 %v3789, %v3865
        %v3882 = vsub.f32 %v3839, %v3868
        %v3883 = vsub.f32 %v3842, %v3871
        %v3884 = vsub.f32 %v3847, %v3874
        %v3885 = vsub.f32 %v3850, %v3877
        %v3886 = vmul.f32 %v3878, 1.442695
        %v3887 = vpow.pop %v3886
        %v3888 = vmul.f32 %v3879, 1.442695
        %v3889 = vpow.pop %v3888
        %v3890 = vmul.f32 %v3880, 1.442695
        %v3891 = vpow.pop %v3890
        %v3892 = vmul.f32 %v3881, 1.442695
        %v3893 = vpow.pop %v3892
        %v3894 = vmul.f32 %v3882, 1.442695
        %v3895 = vpow.pop %v3894
        %v3896 = vmul.f32 %v3883, 1.442695
        %v3897 = vpow.pop %v3896
        %v3898 = vmul.f32 %v3884, 1.442695
        %v3899 = vpow.pop %v3898
        %v3900 = vmul.f32 %v3885, 1.442695
        %v3901 = vpow.pop %v3900
        %v3902 = vsel %vm3853, %v3887, 0.0
        %3903 = vadd.xlane.f32.xlu0 %v3902
        %v3904 = vpop.xlane.xlu0 %3903
        %v3905 = vsel %vm3853, %v3889, 0.0
        %3906 = vadd.xlane.f32.xlu0 %v3905
        %v3907 = vpop.xlane.xlu0 %3906
        %v3908 = vsel %vm3853, %v3891, 0.0
        %3909 = vadd.xlane.f32.xlu0 %v3908
        %v3910 = vpop.xlane.xlu0 %3909
        %v3911 = vsel %vm3853, %v3893, 0.0
        %3912 = vadd.xlane.f32.xlu0 %v3911
        %v3913 = vpop.xlane.xlu0 %3912
        %v3914 = vsel %vm3853, %v3895, 0.0
        %3915 = vadd.xlane.f32.xlu0 %v3914
        %v3916 = vpop.xlane.xlu0 %3915
        %v3917 = vsel %vm3853, %v3897, 0.0
        %3918 = vadd.xlane.f32.xlu0 %v3917
        %v3919 = vpop.xlane.xlu0 %3918
        %v3920 = vsel %vm3853, %v3899, 0.0
        %3921 = vadd.xlane.f32.xlu0 %v3920
        %v3922 = vpop.xlane.xlu0 %3921
        %v3923 = vsel %vm3853, %v3901, 0.0
        %3924 = vadd.xlane.f32.xlu0 %v3923
        %v3925 = vpop.xlane.xlu0 %3924
        %v3926 = vrcp.pop %v3904
        %v3927 = vrcp.pop %v3907
        %v3928 = vrcp.pop %v3910
        %v3929 = vrcp.pop %v3913
        %v3930 = vrcp.pop %v3916
        %v3931 = vrcp.pop %v3919
        %v3932 = vrcp.pop %v3922
        %v3933 = vrcp.pop %v3925
        %v3934 = vmul.f32 %v3887, %v3926
        %v3935 = vmul.f32 %v3889, %v3927
        %v3936 = vmul.f32 %v3891, %v3928
        %v3937 = vmul.f32 %v3893, %v3929
        %v3938 = vmul.f32 %v3895, %v3930
        %v3939 = vmul.f32 %v3897, %v3931
        %v3940 = vmul.f32 %v3899, %v3932
        %v3941 = vmul.f32 %v3901, %v3933
        %v3942 = vpack.c.bf16 %v3935, %v3934
        %v3943 = vpack.c.bf16 %v3937, %v3936
        %v3944 = vpack.c.bf16 %v3939, %v3938
        %v3945 = vpack.c.bf16 %v3941, %v3940
        %v3947 = vsel %vm3853, %v3942, 0
        %v3950 = vsel %vm3853, %v3943, 0
        %3952 = vmatprep.subr.bf16.mxu0 0
        %3953 = vmatpush1.bf16.msra.mxu0 %v3726
        %3954 = vmatprep.subr.bf16.mxu0 0
        %3955 = vmatpush1.bf16.msra.mxu0 %v3727
        %3956 = vmatprep.subr.bf16.mxu0 0
        %3957 = vmatpush1.bf16.msra.mxu0 0
        %3958 = vmatprep.subr.bf16.mxu0 0
        %3959 = vmatpush1.bf16.msra.mxu0 0
        %3960 = vmatprep.subr.bf16.mxu0 0
        %3961 = vmatpush1.bf16.msra.mxu0 0
        %3962 = vmatprep.subr.bf16.mxu0 0
        %3963 = vmatpush1.bf16.msra.mxu0 0
        %3964 = vmatprep.subr.bf16.mxu0 0
        %3965 = vmatpush1.bf16.msra.mxu0 0
        %3966 = vmatprep.subr.bf16.mxu0 0
        %3967 = vmatpush1.bf16.msra.mxu0 0
        %3968 = vmatprep.subr.bf16.mxu0 0
        %3969 = vmatpush1.bf16.msra.mxu0 0
        %3970 = vmatprep.subr.bf16.mxu0 0
        %3971 = vmatpush1.bf16.msra.mxu0 0
        %3972 = vmatprep.subr.bf16.mxu0 0
        %3973 = vmatpush1.bf16.msra.mxu0 0
        %3974 = vmatprep.subr.bf16.mxu0 0
        %3975 = vmatpush1.bf16.msra.mxu0 0
        %3976 = vmatprep.subr.bf16.mxu0 0
        %3977 = vmatpush1.bf16.msra.mxu0 0
        %3978 = vmatprep.subr.bf16.mxu0 0
        %3979 = vmatpush1.bf16.msra.mxu0 0
        %3980 = vmatprep.subr.bf16.mxu0 0
        %3981 = vmatpush1.bf16.msra.mxu0 0
        %3982 = vmatprep.subr.bf16.mxu0 0
        %3983 = vmatpush1.bf16.msra.mxu0 0
        %3984 = vmatprep.mubr.bf16.mxu0 0
        %3985 = vmatmul.mubr.bf16.gmra.mrb[0].mxu0 %v3947
        %v3986 = vpop.f32.mrb[0].mxu0
        %v3987 = vadd.f32 0.0, %v3986
        %v3988 = vpop.f32.mrb[0].mxu0
        %v3989 = vpop.f32.mrb[0].mxu0
        %v3990 = vadd.f32 0.0, %v3989
        %v3991 = vpop.f32.mrb[0].mxu0
        %3992 = vmatprep.mubr.bf16.mxu0 0
        %3993 = vmatmul.mubr.bf16.gmra.mrb[0].mxu0 %v3950
        %v3994 = vpop.f32.mrb[0].mxu0
        %v3995 = vadd.f32 0.0, %v3994
        %v3996 = vpop.f32.mrb[0].mxu0
        %v3997 = vpop.f32.mrb[0].mxu0
        %v3998 = vadd.f32 0.0, %v3997
        %v3999 = vpop.f32.mrb[0].mxu0
        %4000 = vdwg.mxu0
        %v4002 = vsel %vm3853, %v3944, 0
        %v4005 = vsel %vm3853, %v3945, 0
        %4007 = vmatprep.subr.bf16.mxu0 0
        %4008 = vmatpush1.bf16.msra.mxu0 %v3728
        %4009 = vmatprep.subr.bf16.mxu0 0
        %4010 = vmatpush1.bf16.msra.mxu0 %v3729
        %4011 = vmatprep.subr.bf16.mxu0 0
        %4012 = vmatpush1.bf16.msra.mxu0 0
        %4013 = vmatprep.subr.bf16.mxu0 0
        %4014 = vmatpush1.bf16.msra.mxu0 0
        %4015 = vmatprep.subr.bf16.mxu0 0
        %4016 = vmatpush1.bf16.msra.mxu0 0
        %4017 = vmatprep.subr.bf16.mxu0 0
        %4018 = vmatpush1.bf16.msra.mxu0 0
        %4019 = vmatprep.subr.bf16.mxu0 0
        %4020 = vmatpush1.bf16.msra.mxu0 0
        %4021 = vmatprep.subr.bf16.mxu0 0
        %4022 = vmatpush1.bf16.msra.mxu0 0
        %4023 = vmatprep.subr.bf16.mxu0 0
        %4024 = vmatpush1.bf16.msra.mxu0 0
        %4025 = vmatprep.subr.bf16.mxu0 0
        %4026 = vmatpush1.bf16.msra.mxu0 0
        %4027 = vmatprep.subr.bf16.mxu0 0
        %4028 = vmatpush1.bf16.msra.mxu0 0
        %4029 = vmatprep.subr.bf16.mxu0 0
        %4030 = vmatpush1.bf16.msra.mxu0 0
        %4031 = vmatprep.subr.bf16.mxu0 0
        %4032 = vmatpush1.bf16.msra.mxu0 0
        %4033 = vmatprep.subr.bf16.mxu0 0
        %4034 = vmatpush1.bf16.msra.mxu0 0
        %4035 = vmatprep.subr.bf16.mxu0 0
        %4036 = vmatpush1.bf16.msra.mxu0 0
        %4037 = vmatprep.subr.bf16.mxu0 0
        %4038 = vmatpush1.bf16.msra.mxu0 0
        %4039 = vmatprep.mubr.bf16.mxu0 0
        %4040 = vmatmul.mubr.bf16.gmra.mrb[0].mxu0 %v4002
        %v4041 = vpop.f32.mrb[0].mxu0
        %v4042 = vadd.f32 0.0, %v4041
        %v4043 = vpop.f32.mrb[0].mxu0
        %v4044 = vpop.f32.mrb[0].mxu0
        %v4045 = vadd.f32 0.0, %v4044
        %v4046 = vpop.f32.mrb[0].mxu0
        %4047 = vmatprep.mubr.bf16.mxu0 0
        %4048 = vmatmul.mubr.bf16.gmra.mrb[0].mxu0 %v4005
        %v4049 = vpop.f32.mrb[0].mxu0
        %v4050 = vadd.f32 0.0, %v4049
        %v4051 = vpop.f32.mrb[0].mxu0
        %v4052 = vpop.f32.mrb[0].mxu0
        %v4053 = vadd.f32 0.0, %v4052
        %v4054 = vpop.f32.mrb[0].mxu0
        %4055 = vdwg.mxu0
        %4058 = vrot.lane.b32.xlu0 %v3718, 64
        %v4059 = vpop.permute.xlu0 %4058
        %4060 = vrot.lane.b32.xlu0 %v3719, 64
        %v4061 = vpop.permute.xlu0 %4060
        %4064 = vrot.lane.b32.xlu0 %v3722, 64
        %v4065 = vpop.permute.xlu0 %4064
        %4066 = vrot.lane.b32.xlu0 %v3723, 64
        %v4067 = vpop.permute.xlu0 %4066
        %v4069 = vsel %vm3730, %v4059, 0
        %v4072 = vsel %vm3730, %v4061, 0
        %v4075 = vsel %vm3730, %v4065, 0
        %v4078 = vsel %vm3730, %v4067, 0
        %4080 = vmatprep.subr.bf16.mxu0 0
        %4081 = vmatpush1.bf16.xpose.msra.mxu0 %v4075
        %4082 = vmatprep.subr.bf16.mxu0 0
        %4083 = vmatpush1.bf16.xpose.msra.mxu0 %v4078
        %4084 = vmatprep.subr.bf16.mxu0 0
        %4085 = vmatpush1.bf16.xpose.msra.mxu0 0
        %4086 = vmatprep.subr.bf16.mxu0 0
        %4087 = vmatpush1.bf16.xpose.msra.mxu0 0
        %4088 = vmatprep.subr.bf16.mxu0 0
        %4089 = vmatpush1.bf16.xpose.msra.mxu0 0
        %4090 = vmatprep.subr.bf16.mxu0 0
        %4091 = vmatpush1.bf16.xpose.msra.mxu0 0
        %4092 = vmatprep.subr.bf16.mxu0 0
        %4093 = vmatpush1.bf16.xpose.msra.mxu0 0
        %4094 = vmatprep.subr.bf16.mxu0 0
        %4095 = vmatpush1.bf16.xpose.msra.mxu0 0
        %4096 = vmatprep.subr.bf16.mxu0 0
        %4097 = vmatpush1.bf16.xpose.msra.mxu0 0
        %4098 = vmatprep.subr.bf16.mxu0 0
        %4099 = vmatpush1.bf16.xpose.msra.mxu0 0
        %4100 = vmatprep.subr.bf16.mxu0 0
        %4101 = vmatpush1.bf16.xpose.msra.mxu0 0
        %4102 = vmatprep.subr.bf16.mxu0 0
        %4103 = vmatpush1.bf16.xpose.msra.mxu0 0
        %4104 = vmatprep.subr.bf16.mxu0 0
        %4105 = vmatpush1.bf16.xpose.msra.mxu0 0
        %4106 = vmatprep.subr.bf16.mxu0 0
        %4107 = vmatpush1.bf16.xpose.msra.mxu0 0
        %4108 = vmatprep.subr.bf16.mxu0 0
        %4109 = vmatpush1.bf16.xpose.msra.mxu0 0
        %4110 = vmatprep.subr.bf16.mxu0 0
        %4111 = vmatpush1.bf16.xpose.msra.mxu0 0
        %4112 = vmatprep.mubr.bf16.mxu0 0
        %4113 = vmatmul.mubr.bf16.gmra.mrb[0].mxu0 %v4069
        %v4114 = vpop.f32.mrb[0].mxu0
        %v4115 = vadd.f32 %v3714, %v4114
        %v4116 = vpop.f32.mrb[0].mxu0
        %v4117 = vpop.f32.mrb[0].mxu0
        %v4118 = vadd.f32 %v3715, %v4117
        %v4119 = vpop.f32.mrb[0].mxu0
        %4120 = vmatprep.mubr.bf16.mxu0 0
        %4121 = vmatmul.mubr.bf16.gmra.mrb[0].mxu0 %v4072
        %v4122 = vpop.f32.mrb[0].mxu0
        %v4123 = vadd.f32 %v3716, %v4122
        %v4124 = vpop.f32.mrb[0].mxu0
        %v4125 = vpop.f32.mrb[0].mxu0
        %v4126 = vadd.f32 %v3717, %v4125
        %v4127 = vpop.f32.mrb[0].mxu0
        %4128 = vdwg.mxu0
        %4131 = vrot.lane.b32.xlu0 %v3720, 64
        %v4132 = vpop.permute.xlu0 %4131
        %4133 = vrot.lane.b32.xlu0 %v3721, 64
        %v4134 = vpop.permute.xlu0 %4133
        %4137 = vrot.lane.b32.xlu0 %v3724, 64
        %v4138 = vpop.permute.xlu0 %4137
        %4139 = vrot.lane.b32.xlu0 %v3725, 64
        %v4140 = vpop.permute.xlu0 %4139
        %v4142 = vsel %vm3730, %v4132, 0
        %v4145 = vsel %vm3730, %v4134, 0
        %v4148 = vsel %vm3730, %v4138, 0
        %v4151 = vsel %vm3730, %v4140, 0
        %4153 = vmatprep.subr.bf16.mxu0 0
        %4154 = vmatpush1.bf16.xpose.msra.mxu0 %v4148
        %4155 = vmatprep.subr.bf16.mxu0 0
        %4156 = vmatpush1.bf16.xpose.msra.mxu0 %v4151
        %4157 = vmatprep.subr.bf16.mxu0 0
        %4158 = vmatpush1.bf16.xpose.msra.mxu0 0
        %4159 = vmatprep.subr.bf16.mxu0 0
        %4160 = vmatpush1.bf16.xpose.msra.mxu0 0
        %4161 = vmatprep.subr.bf16.mxu0 0
        %4162 = vmatpush1.bf16.xpose.msra.mxu0 0
        %4163 = vmatprep.subr.bf16.mxu0 0
        %4164 = vmatpush1.bf16.xpose.msra.mxu0 0
        %4165 = vmatprep.subr.bf16.mxu0 0
        %4166 = vmatpush1.bf16.xpose.msra.mxu0 0
        %4167 = vmatprep.subr.bf16.mxu0 0
        %4168 = vmatpush1.bf16.xpose.msra.mxu0 0
        %4169 = vmatprep.subr.bf16.mxu0 0
        %4170 = vmatpush1.bf16.xpose.msra.mxu0 0
        %4171 = vmatprep.subr.bf16.mxu0 0
        %4172 = vmatpush1.bf16.xpose.msra.mxu0 0
        %4173 = vmatprep.subr.bf16.mxu0 0
        %4174 = vmatpush1.bf16.xpose.msra.mxu0 0
        %4175 = vmatprep.subr.bf16.mxu0 0
        %4176 = vmatpush1.bf16.xpose.msra.mxu0 0
        %4177 = vmatprep.subr.bf16.mxu0 0
        %4178 = vmatpush1.bf16.xpose.msra.mxu0 0
        %4179 = vmatprep.subr.bf16.mxu0 0
        %4180 = vmatpush1.bf16.xpose.msra.mxu0 0
        %4181 = vmatprep.subr.bf16.mxu0 0
        %4182 = vmatpush1.bf16.xpose.msra.mxu0 0
        %4183 = vmatprep.subr.bf16.mxu0 0
        %4184 = vmatpush1.bf16.xpose.msra.mxu0 0
        %4185 = vmatprep.mubr.bf16.mxu0 0
        %4186 = vmatmul.mubr.bf16.gmra.mrb[0].mxu0 %v4142
        %v4187 = vpop.f32.mrb[0].mxu0
        %v4188 = vadd.f32 %v3714, %v4187
        %v4189 = vpop.f32.mrb[0].mxu0
        %v4190 = vpop.f32.mrb[0].mxu0
        %v4191 = vadd.f32 %v3715, %v4190
        %v4192 = vpop.f32.mrb[0].mxu0
        %4193 = vmatprep.mubr.bf16.mxu0 0
        %4194 = vmatmul.mubr.bf16.gmra.mrb[0].mxu0 %v4145
        %v4195 = vpop.f32.mrb[0].mxu0
        %v4196 = vadd.f32 %v3716, %v4195
        %v4197 = vpop.f32.mrb[0].mxu0
        %v4198 = vpop.f32.mrb[0].mxu0
        %v4199 = vadd.f32 %v3717, %v4198
        %v4200 = vpop.f32.mrb[0].mxu0
        %4201 = vdwg.mxu0
        %v4202 = vsel %vm3853, %v4115, -inf
        %4203 = vmax.xlane.f32.xlu0 %v4202
        %v4204 = vpop.xlane.xlu0 %4203
        %v4205 = vsel %vm3853, %v4118, -inf
        %4206 = vmax.xlane.f32.xlu0 %v4205
        %v4207 = vpop.xlane.xlu0 %4206
        %v4208 = vsel %vm3853, %v4123, -inf
        %4209 = vmax.xlane.f32.xlu0 %v4208
        %v4210 = vpop.xlane.xlu0 %4209
        %v4211 = vsel %vm3853, %v4126, -inf
        %4212 = vmax.xlane.f32.xlu0 %v4211
        %v4213 = vpop.xlane.xlu0 %4212
        %v4214 = vsel %vm3853, %v4188, -inf
        %4215 = vmax.xlane.f32.xlu0 %v4214
        %v4216 = vpop.xlane.xlu0 %4215
        %v4217 = vsel %vm3853, %v4191, -inf
        %4218 = vmax.xlane.f32.xlu0 %v4217
        %v4219 = vpop.xlane.xlu0 %4218
        %v4220 = vsel %vm3853, %v4196, -inf
        %4221 = vmax.xlane.f32.xlu0 %v4220
        %v4222 = vpop.xlane.xlu0 %4221
        %v4223 = vsel %vm3853, %v4199, -inf
        %4224 = vmax.xlane.f32.xlu0 %v4223
        %v4225 = vpop.xlane.xlu0 %4224
        %v4226 = vsub.f32 %v4115, %v4204
        %v4227 = vsub.f32 %v4118, %v4207
        %v4228 = vsub.f32 %v4123, %v4210
        %v4229 = vsub.f32 %v4126, %v4213
        %v4230 = vsub.f32 %v4188, %v4216
        %v4231 = vsub.f32 %v4191, %v4219
        %v4232 = vsub.f32 %v4196, %v4222
        %v4233 = vsub.f32 %v4199, %v4225
        %v4234 = vmul.f32 %v4226, 1.442695
        %v4235 = vpow.pop %v4234
        %v4236 = vmul.f32 %v4227, 1.442695
        %v4237 = vpow.pop %v4236
        %v4238 = vmul.f32 %v4228, 1.442695
        %v4239 = vpow.pop %v4238
        %v4240 = vmul.f32 %v4229, 1.442695
        %v4241 = vpow.pop %v4240
        %v4242 = vmul.f32 %v4230, 1.442695
        %v4243 = vpow.pop %v4242
        %v4244 = vmul.f32 %v4231, 1.442695
        %v4245 = vpow.pop %v4244
        %v4246 = vmul.f32 %v4232, 1.442695
        %v4247 = vpow.pop %v4246
        %v4248 = vmul.f32 %v4233, 1.442695
        %v4249 = vpow.pop %v4248
        %v4250 = vsel %vm3853, %v4235, 0.0
        %4251 = vadd.xlane.f32.xlu0 %v4250
        %v4252 = vpop.xlane.xlu0 %4251
        %v4253 = vsel %vm3853, %v4237, 0.0
        %4254 = vadd.xlane.f32.xlu0 %v4253
        %v4255 = vpop.xlane.xlu0 %4254
        %v4256 = vsel %vm3853, %v4239, 0.0
        %4257 = vadd.xlane.f32.xlu0 %v4256
        %v4258 = vpop.xlane.xlu0 %4257
        %v4259 = vsel %vm3853, %v4241, 0.0
        %4260 = vadd.xlane.f32.xlu0 %v4259
        %v4261 = vpop.xlane.xlu0 %4260
        %v4262 = vsel %vm3853, %v4243, 0.0
        %4263 = vadd.xlane.f32.xlu0 %v4262
        %v4264 = vpop.xlane.xlu0 %4263
        %v4265 = vsel %vm3853, %v4245, 0.0
        %4266 = vadd.xlane.f32.xlu0 %v4265
        %v4267 = vpop.xlane.xlu0 %4266
        %v4268 = vsel %vm3853, %v4247, 0.0
        %4269 = vadd.xlane.f32.xlu0 %v4268
        %v4270 = vpop.xlane.xlu0 %4269
        %v4271 = vsel %vm3853, %v4249, 0.0
        %4272 = vadd.xlane.f32.xlu0 %v4271
        %v4273 = vpop.xlane.xlu0 %4272
        %v4274 = vrcp.pop %v4252
        %v4275 = vrcp.pop %v4255
        %v4276 = vrcp.pop %v4258
        %v4277 = vrcp.pop %v4261
        %v4278 = vrcp.pop %v4264
        %v4279 = vrcp.pop %v4267
        %v4280 = vrcp.pop %v4270
        %v4281 = vrcp.pop %v4273
        %v4282 = vmul.f32 %v4235, %v4274
        %v4283 = vmul.f32 %v4237, %v4275
        %v4284 = vmul.f32 %v4239, %v4276
        %v4285 = vmul.f32 %v4241, %v4277
        %v4286 = vmul.f32 %v4243, %v4278
        %v4287 = vmul.f32 %v4245, %v4279
        %v4288 = vmul.f32 %v4247, %v4280
        %v4289 = vmul.f32 %v4249, %v4281
        %v4290 = vpack.c.bf16 %v4283, %v4282
        %v4291 = vpack.c.bf16 %v4285, %v4284
        %v4292 = vpack.c.bf16 %v4287, %v4286
        %v4293 = vpack.c.bf16 %v4289, %v4288
        %4296 = vrot.lane.b32.xlu0 %v3726, 64
        %v4297 = vpop.permute.xlu0 %4296
        %4298 = vrot.lane.b32.xlu0 %v3727, 64
        %v4299 = vpop.permute.xlu0 %4298
        %v4303 = vsel %vm3853, %v4290, 0
        %v4306 = vsel %vm3853, %v4291, 0
        %4308 = vmatprep.subr.bf16.mxu0 0
        %4309 = vmatpush1.bf16.msra.mxu0 %v4297
        %4310 = vmatprep.subr.bf16.mxu0 0
        %4311 = vmatpush1.bf16.msra.mxu0 %v4299
        %4312 = vmatprep.subr.bf16.mxu0 0
        %4313 = vmatpush1.bf16.msra.mxu0 0
        %4314 = vmatprep.subr.bf16.mxu0 0
        %4315 = vmatpush1.bf16.msra.mxu0 0
        %4316 = vmatprep.subr.bf16.mxu0 0
        %4317 = vmatpush1.bf16.msra.mxu0 0
        %4318 = vmatprep.subr.bf16.mxu0 0
        %4319 = vmatpush1.bf16.msra.mxu0 0
        %4320 = vmatprep.subr.bf16.mxu0 0
        %4321 = vmatpush1.bf16.msra.mxu0 0
        %4322 = vmatprep.subr.bf16.mxu0 0
        %4323 = vmatpush1.bf16.msra.mxu0 0
        %4324 = vmatprep.subr.bf16.mxu0 0
        %4325 = vmatpush1.bf16.msra.mxu0 0
        %4326 = vmatprep.subr.bf16.mxu0 0
        %4327 = vmatpush1.bf16.msra.mxu0 0
        %4328 = vmatprep.subr.bf16.mxu0 0
        %4329 = vmatpush1.bf16.msra.mxu0 0
        %4330 = vmatprep.subr.bf16.mxu0 0
        %4331 = vmatpush1.bf16.msra.mxu0 0
        %4332 = vmatprep.subr.bf16.mxu0 0
        %4333 = vmatpush1.bf16.msra.mxu0 0
        %4334 = vmatprep.subr.bf16.mxu0 0
        %4335 = vmatpush1.bf16.msra.mxu0 0
        %4336 = vmatprep.subr.bf16.mxu0 0
        %4337 = vmatpush1.bf16.msra.mxu0 0
        %4338 = vmatprep.subr.bf16.mxu0 0
        %4339 = vmatpush1.bf16.msra.mxu0 0
        %4340 = vmatprep.mubr.bf16.mxu0 0
        %4341 = vmatmul.mubr.bf16.gmra.mrb[0].mxu0 %v4303
        %v4342 = vpop.f32.mrb[0].mxu0
        %v4343 = vadd.f32 0.0, %v4342
        %v4344 = vpop.f32.mrb[0].mxu0
        %v4345 = vpop.f32.mrb[0].mxu0
        %v4346 = vadd.f32 0.0, %v4345
        %v4347 = vpop.f32.mrb[0].mxu0
        %4348 = vmatprep.mubr.bf16.mxu0 0
        %4349 = vmatmul.mubr.bf16.gmra.mrb[0].mxu0 %v4306
        %v4350 = vpop.f32.mrb[0].mxu0
        %v4351 = vadd.f32 0.0, %v4350
        %v4352 = vpop.f32.mrb[0].mxu0
        %v4353 = vpop.f32.mrb[0].mxu0
        %v4354 = vadd.f32 0.0, %v4353
        %v4355 = vpop.f32.mrb[0].mxu0
        %4356 = vdwg.mxu0
        %4359 = vrot.lane.b32.xlu0 %v3728, 64
        %v4360 = vpop.permute.xlu0 %4359
        %4361 = vrot.lane.b32.xlu0 %v3729, 64
        %v4362 = vpop.permute.xlu0 %4361
        %v4366 = vsel %vm3853, %v4292, 0
        %v4369 = vsel %vm3853, %v4293, 0
        %4371 = vmatprep.subr.bf16.mxu0 0
        %4372 = vmatpush1.bf16.msra.mxu0 %v4360
        %4373 = vmatprep.subr.bf16.mxu0 0
        %4374 = vmatpush1.bf16.msra.mxu0 %v4362
        %4375 = vmatprep.subr.bf16.mxu0 0
        %4376 = vmatpush1.bf16.msra.mxu0 0
        %4377 = vmatprep.subr.bf16.mxu0 0
        %4378 = vmatpush1.bf16.msra.mxu0 0
        %4379 = vmatprep.subr.bf16.mxu0 0
        %4380 = vmatpush1.bf16.msra.mxu0 0
        %4381 = vmatprep.subr.bf16.mxu0 0
        %4382 = vmatpush1.bf16.msra.mxu0 0
        %4383 = vmatprep.subr.bf16.mxu0 0
        %4384 = vmatpush1.bf16.msra.mxu0 0
        %4385 = vmatprep.subr.bf16.mxu0 0
        %4386 = vmatpush1.bf16.msra.mxu0 0
        %4387 = vmatprep.subr.bf16.mxu0 0
        %4388 = vmatpush1.bf16.msra.mxu0 0
        %4389 = vmatprep.subr.bf16.mxu0 0
        %4390 = vmatpush1.bf16.msra.mxu0 0
        %4391 = vmatprep.subr.bf16.mxu0 0
        %4392 = vmatpush1.bf16.msra.mxu0 0
        %4393 = vmatprep.subr.bf16.mxu0 0
        %4394 = vmatpush1.bf16.msra.mxu0 0
        %4395 = vmatprep.subr.bf16.mxu0 0
        %4396 = vmatpush1.bf16.msra.mxu0 0
        %4397 = vmatprep.subr.bf16.mxu0 0
        %4398 = vmatpush1.bf16.msra.mxu0 0
        %4399 = vmatprep.subr.bf16.mxu0 0
        %4400 = vmatpush1.bf16.msra.mxu0 0
        %4401 = vmatprep.subr.bf16.mxu0 0
        %4402 = vmatpush1.bf16.msra.mxu0 0
        %4403 = vmatprep.mubr.bf16.mxu0 0
        %4404 = vmatmul.mubr.bf16.gmra.mrb[0].mxu0 %v4366
        %v4405 = vpop.f32.mrb[0].mxu0
        %v4406 = vadd.f32 0.0, %v4405
        %v4407 = vpop.f32.mrb[0].mxu0
        %v4408 = vpop.f32.mrb[0].mxu0
        %v4409 = vadd.f32 0.0, %v4408
        %v4410 = vpop.f32.mrb[0].mxu0
        %4411 = vmatprep.mubr.bf16.mxu0 0
        %4412 = vmatmul.mubr.bf16.gmra.mrb[0].mxu0 %v4369
        %v4413 = vpop.f32.mrb[0].mxu0
        %v4414 = vadd.f32 0.0, %v4413
        %v4415 = vpop.f32.mrb[0].mxu0
        %v4416 = vpop.f32.mrb[0].mxu0
        %v4417 = vadd.f32 0.0, %v4416
        %v4418 = vpop.f32.mrb[0].mxu0
        %4419 = vdwg.mxu0
        %v4420 = vpack.c.bf16 %v3694, %v3691
        %v4421 = vpack.c.bf16 %v3700, %v3697
        %v4422 = vpack.c.bf16 %v3706, %v3703
        %v4423 = vpack.c.bf16 %v3712, %v3709
        %v4424 = vpack.c.bf16 %v3380, %v3376
        %v4425 = vpack.c.bf16 %v3390, %v3386
        %v4426 = vpack.c.bf16 %v3400, %v3396
        %v4427 = vpack.c.bf16 %v3410, %v3406
        %v4428 = vpack.c.bf16 %v3528, %v3524
        %v4429 = vpack.c.bf16 %v3538, %v3534
        %v4430 = vpack.c.bf16 %v3548, %v3544
        %v4431 = vpack.c.bf16 %v3558, %v3554
        %v4433 = vsel %vm3730, %v4420, 0
        %v4436 = vsel %vm3730, %v4421, 0
        %v4439 = vsel %vm3730, %v4424, 0
        %v4442 = vsel %vm3730, %v4425, 0
        %4444 = vmatprep.subr.bf16.mxu0 0
        %4445 = vmatpush1.bf16.xpose.msra.mxu0 %v4439
        %4446 = vmatprep.subr.bf16.mxu0 0
        %4447 = vmatpush1.bf16.xpose.msra.mxu0 %v4442
        %4448 = vmatprep.subr.bf16.mxu0 0
        %4449 = vmatpush1.bf16.xpose.msra.mxu0 0
        %4450 = vmatprep.subr.bf16.mxu0 0
        %4451 = vmatpush1.bf16.xpose.msra.mxu0 0
        %4452 = vmatprep.subr.bf16.mxu0 0
        %4453 = vmatpush1.bf16.xpose.msra.mxu0 0
        %4454 = vmatprep.subr.bf16.mxu0 0
        %4455 = vmatpush1.bf16.xpose.msra.mxu0 0
        %4456 = vmatprep.subr.bf16.mxu0 0
        %4457 = vmatpush1.bf16.xpose.msra.mxu0 0
        %4458 = vmatprep.subr.bf16.mxu0 0
        %4459 = vmatpush1.bf16.xpose.msra.mxu0 0
        %4460 = vmatprep.subr.bf16.mxu0 0
        %4461 = vmatpush1.bf16.xpose.msra.mxu0 0
        %4462 = vmatprep.subr.bf16.mxu0 0
        %4463 = vmatpush1.bf16.xpose.msra.mxu0 0
        %4464 = vmatprep.subr.bf16.mxu0 0
        %4465 = vmatpush1.bf16.xpose.msra.mxu0 0
        %4466 = vmatprep.subr.bf16.mxu0 0
        %4467 = vmatpush1.bf16.xpose.msra.mxu0 0
        %4468 = vmatprep.subr.bf16.mxu0 0
        %4469 = vmatpush1.bf16.xpose.msra.mxu0 0
        %4470 = vmatprep.subr.bf16.mxu0 0
        %4471 = vmatpush1.bf16.xpose.msra.mxu0 0
        %4472 = vmatprep.subr.bf16.mxu0 0
        %4473 = vmatpush1.bf16.xpose.msra.mxu0 0
        %4474 = vmatprep.subr.bf16.mxu0 0
        %4475 = vmatpush1.bf16.xpose.msra.mxu0 0
        %4476 = vmatprep.mubr.bf16.mxu0 0
        %4477 = vmatmul.mubr.bf16.gmra.mrb[0].mxu0 %v4433
        %v4478 = vpop.f32.mrb[0].mxu0
        %v4479 = vadd.f32 %v3714, %v4478
        %v4480 = vpop.f32.mrb[0].mxu0
        %v4481 = vpop.f32.mrb[0].mxu0
        %v4482 = vadd.f32 %v3715, %v4481
        %v4483 = vpop.f32.mrb[0].mxu0
        %4484 = vmatprep.mubr.bf16.mxu0 0
        %4485 = vmatmul.mubr.bf16.gmra.mrb[0].mxu0 %v4436
        %v4486 = vpop.f32.mrb[0].mxu0
        %v4487 = vadd.f32 %v3716, %v4486
        %v4488 = vpop.f32.mrb[0].mxu0
        %v4489 = vpop.f32.mrb[0].mxu0
        %v4490 = vadd.f32 %v3717, %v4489
        %v4491 = vpop.f32.mrb[0].mxu0
        %4492 = vdwg.mxu0
        %v4494 = vsel %vm3730, %v4422, 0
        %v4497 = vsel %vm3730, %v4423, 0
        %v4500 = vsel %vm3730, %v4426, 0
        %v4503 = vsel %vm3730, %v4427, 0
        %4505 = vmatprep.subr.bf16.mxu0 0
        %4506 = vmatpush1.bf16.xpose.msra.mxu0 %v4500
        %4507 = vmatprep.subr.bf16.mxu0 0
        %4508 = vmatpush1.bf16.xpose.msra.mxu0 %v4503
        %4509 = vmatprep.subr.bf16.mxu0 0
        %4510 = vmatpush1.bf16.xpose.msra.mxu0 0
        %4511 = vmatprep.subr.bf16.mxu0 0
        %4512 = vmatpush1.bf16.xpose.msra.mxu0 0
        %4513 = vmatprep.subr.bf16.mxu0 0
        %4514 = vmatpush1.bf16.xpose.msra.mxu0 0
        %4515 = vmatprep.subr.bf16.mxu0 0
        %4516 = vmatpush1.bf16.xpose.msra.mxu0 0
        %4517 = vmatprep.subr.bf16.mxu0 0
        %4518 = vmatpush1.bf16.xpose.msra.mxu0 0
        %4519 = vmatprep.subr.bf16.mxu0 0
        %4520 = vmatpush1.bf16.xpose.msra.mxu0 0
        %4521 = vmatprep.subr.bf16.mxu0 0
        %4522 = vmatpush1.bf16.xpose.msra.mxu0 0
        %4523 = vmatprep.subr.bf16.mxu0 0
        %4524 = vmatpush1.bf16.xpose.msra.mxu0 0
        %4525 = vmatprep.subr.bf16.mxu0 0
        %4526 = vmatpush1.bf16.xpose.msra.mxu0 0
        %4527 = vmatprep.subr.bf16.mxu0 0
        %4528 = vmatpush1.bf16.xpose.msra.mxu0 0
        %4529 = vmatprep.subr.bf16.mxu0 0
        %4530 = vmatpush1.bf16.xpose.msra.mxu0 0
        %4531 = vmatprep.subr.bf16.mxu0 0
        %4532 = vmatpush1.bf16.xpose.msra.mxu0 0
        %4533 = vmatprep.subr.bf16.mxu0 0
        %4534 = vmatpush1.bf16.xpose.msra.mxu0 0
        %4535 = vmatprep.subr.bf16.mxu0 0
        %4536 = vmatpush1.bf16.xpose.msra.mxu0 0
        %4537 = vmatprep.mubr.bf16.mxu0 0
        %4538 = vmatmul.mubr.bf16.gmra.mrb[0].mxu0 %v4494
        %v4539 = vpop.f32.mrb[0].mxu0
        %v4540 = vadd.f32 %v3714, %v4539
        %v4541 = vpop.f32.mrb[0].mxu0
        %v4542 = vpop.f32.mrb[0].mxu0
        %v4543 = vadd.f32 %v3715, %v4542
        %v4544 = vpop.f32.mrb[0].mxu0
        %4545 = vmatprep.mubr.bf16.mxu0 0
        %4546 = vmatmul.mubr.bf16.gmra.mrb[0].mxu0 %v4497
        %v4547 = vpop.f32.mrb[0].mxu0
        %v4548 = vadd.f32 %v3716, %v4547
        %v4549 = vpop.f32.mrb[0].mxu0
        %v4550 = vpop.f32.mrb[0].mxu0
        %v4551 = vadd.f32 %v3717, %v4550
        %v4552 = vpop.f32.mrb[0].mxu0
        %4553 = vdwg.mxu0
        %v4554 = vsel %vm3853, %v4479, -inf
        %4555 = vmax.xlane.f32.xlu0 %v4554
        %v4556 = vpop.xlane.xlu0 %4555
        %v4557 = vsel %vm3853, %v4482, -inf
        %4558 = vmax.xlane.f32.xlu0 %v4557
        %v4559 = vpop.xlane.xlu0 %4558
        %v4560 = vsel %vm3853, %v4487, -inf
        %4561 = vmax.xlane.f32.xlu0 %v4560
        %v4562 = vpop.xlane.xlu0 %4561
        %v4563 = vsel %vm3853, %v4490, -inf
        %4564 = vmax.xlane.f32.xlu0 %v4563
        %v4565 = vpop.xlane.xlu0 %4564
        %v4566 = vsel %vm3853, %v4540, -inf
        %4567 = vmax.xlane.f32.xlu0 %v4566
        %v4568 = vpop.xlane.xlu0 %4567
        %v4569 = vsel %vm3853, %v4543, -inf
        %4570 = vmax.xlane.f32.xlu0 %v4569
        %v4571 = vpop.xlane.xlu0 %4570
        %v4572 = vsel %vm3853, %v4548, -inf
        %4573 = vmax.xlane.f32.xlu0 %v4572
        %v4574 = vpop.xlane.xlu0 %4573
        %v4575 = vsel %vm3853, %v4551, -inf
        %4576 = vmax.xlane.f32.xlu0 %v4575
        %v4577 = vpop.xlane.xlu0 %4576
        %v4578 = vsub.f32 %v4479, %v4556
        %v4579 = vsub.f32 %v4482, %v4559
        %v4580 = vsub.f32 %v4487, %v4562
        %v4581 = vsub.f32 %v4490, %v4565
        %v4582 = vsub.f32 %v4540, %v4568
        %v4583 = vsub.f32 %v4543, %v4571
        %v4584 = vsub.f32 %v4548, %v4574
        %v4585 = vsub.f32 %v4551, %v4577
        %v4586 = vmul.f32 %v4578, 1.442695
        %v4587 = vpow.pop %v4586
        %v4588 = vmul.f32 %v4579, 1.442695
        %v4589 = vpow.pop %v4588
        %v4590 = vmul.f32 %v4580, 1.442695
        %v4591 = vpow.pop %v4590
        %v4592 = vmul.f32 %v4581, 1.442695
        %v4593 = vpow.pop %v4592
        %v4594 = vmul.f32 %v4582, 1.442695
        %v4595 = vpow.pop %v4594
        %v4596 = vmul.f32 %v4583, 1.442695
        %v4597 = vpow.pop %v4596
        %v4598 = vmul.f32 %v4584, 1.442695
        %v4599 = vpow.pop %v4598
        %v4600 = vmul.f32 %v4585, 1.442695
        %v4601 = vpow.pop %v4600
        %v4602 = vsel %vm3853, %v4587, 0.0
        %4603 = vadd.xlane.f32.xlu0 %v4602
        %v4604 = vpop.xlane.xlu0 %4603
        %v4605 = vsel %vm3853, %v4589, 0.0
        %4606 = vadd.xlane.f32.xlu0 %v4605
        %v4607 = vpop.xlane.xlu0 %4606
        %v4608 = vsel %vm3853, %v4591, 0.0
        %4609 = vadd.xlane.f32.xlu0 %v4608
        %v4610 = vpop.xlane.xlu0 %4609
        %v4611 = vsel %vm3853, %v4593, 0.0
        %4612 = vadd.xlane.f32.xlu0 %v4611
        %v4613 = vpop.xlane.xlu0 %4612
        %v4614 = vsel %vm3853, %v4595, 0.0
        %4615 = vadd.xlane.f32.xlu0 %v4614
        %v4616 = vpop.xlane.xlu0 %4615
        %v4617 = vsel %vm3853, %v4597, 0.0
        %4618 = vadd.xlane.f32.xlu0 %v4617
        %v4619 = vpop.xlane.xlu0 %4618
        %v4620 = vsel %vm3853, %v4599, 0.0
        %4621 = vadd.xlane.f32.xlu0 %v4620
        %v4622 = vpop.xlane.xlu0 %4621
        %v4623 = vsel %vm3853, %v4601, 0.0
        %4624 = vadd.xlane.f32.xlu0 %v4623
        %v4625 = vpop.xlane.xlu0 %4624
        %v4626 = vrcp.pop %v4604
        %v4627 = vrcp.pop %v4607
        %v4628 = vrcp.pop %v4610
        %v4629 = vrcp.pop %v4613
        %v4630 = vrcp.pop %v4616
        %v4631 = vrcp.pop %v4619
        %v4632 = vrcp.pop %v4622
        %v4633 = vrcp.pop %v4625
        %v4634 = vmul.f32 %v4587, %v4626
        %v4635 = vmul.f32 %v4589, %v4627
        %v4636 = vmul.f32 %v4591, %v4628
        %v4637 = vmul.f32 %v4593, %v4629
        %v4638 = vmul.f32 %v4595, %v4630
        %v4639 = vmul.f32 %v4597, %v4631
        %v4640 = vmul.f32 %v4599, %v4632
        %v4641 = vmul.f32 %v4601, %v4633
        %v4642 = vpack.c.bf16 %v4635, %v4634
        %v4643 = vpack.c.bf16 %v4637, %v4636
        %v4644 = vpack.c.bf16 %v4639, %v4638
        %v4645 = vpack.c.bf16 %v4641, %v4640
        %v4647 = vsel %vm3853, %v4642, 0
        %v4650 = vsel %vm3853, %v4643, 0
        %4652 = vmatprep.subr.bf16.mxu0 0
        %4653 = vmatpush1.bf16.msra.mxu0 %v4428
        %4654 = vmatprep.subr.bf16.mxu0 0
        %4655 = vmatpush1.bf16.msra.mxu0 %v4429
        %4656 = vmatprep.subr.bf16.mxu0 0
        %4657 = vmatpush1.bf16.msra.mxu0 0
        %4658 = vmatprep.subr.bf16.mxu0 0
        %4659 = vmatpush1.bf16.msra.mxu0 0
        %4660 = vmatprep.subr.bf16.mxu0 0
        %4661 = vmatpush1.bf16.msra.mxu0 0
        %4662 = vmatprep.subr.bf16.mxu0 0
        %4663 = vmatpush1.bf16.msra.mxu0 0
        %4664 = vmatprep.subr.bf16.mxu0 0
        %4665 = vmatpush1.bf16.msra.mxu0 0
        %4666 = vmatprep.subr.bf16.mxu0 0
        %4667 = vmatpush1.bf16.msra.mxu0 0
        %4668 = vmatprep.subr.bf16.mxu0 0
        %4669 = vmatpush1.bf16.msra.mxu0 0
        %4670 = vmatprep.subr.bf16.mxu0 0
        %4671 = vmatpush1.bf16.msra.mxu0 0
        %4672 = vmatprep.subr.bf16.mxu0 0
        %4673 = vmatpush1.bf16.msra.mxu0 0
        %4674 = vmatprep.subr.bf16.mxu0 0
        %4675 = vmatpush1.bf16.msra.mxu0 0
        %4676 = vmatprep.subr.bf16.mxu0 0
        %4677 = vmatpush1.bf16.msra.mxu0 0
        %4678 = vmatprep.subr.bf16.mxu0 0
        %4679 = vmatpush1.bf16.msra.mxu0 0
        %4680 = vmatprep.subr.bf16.mxu0 0
        %4681 = vmatpush1.bf16.msra.mxu0 0
        %4682 = vmatprep.subr.bf16.mxu0 0
        %4683 = vmatpush1.bf16.msra.mxu0 0
        %4684 = vmatprep.mubr.bf16.mxu0 0
        %4685 = vmatmul.mubr.bf16.gmra.mrb[0].mxu0 %v4647
        %v4686 = vpop.f32.mrb[0].mxu0
        %v4687 = vadd.f32 0.0, %v4686
        %v4688 = vpop.f32.mrb[0].mxu0
        %v4689 = vpop.f32.mrb[0].mxu0
        %v4690 = vadd.f32 0.0, %v4689
        %v4691 = vpop.f32.mrb[0].mxu0
        %4692 = vmatprep.mubr.bf16.mxu0 0
        %4693 = vmatmul.mubr.bf16.gmra.mrb[0].mxu0 %v4650
        %v4694 = vpop.f32.mrb[0].mxu0
        %v4695 = vadd.f32 0.0, %v4694
        %v4696 = vpop.f32.mrb[0].mxu0
        %v4697 = vpop.f32.mrb[0].mxu0
        %v4698 = vadd.f32 0.0, %v4697
        %v4699 = vpop.f32.mrb[0].mxu0
        %4700 = vdwg.mxu0
        %v4702 = vsel %vm3853, %v4644, 0
        %v4705 = vsel %vm3853, %v4645, 0
        %4707 = vmatprep.subr.bf16.mxu0 0
        %4708 = vmatpush1.bf16.msra.mxu0 %v4430
        %4709 = vmatprep.subr.bf16.mxu0 0
        %4710 = vmatpush1.bf16.msra.mxu0 %v4431
        %4711 = vmatprep.subr.bf16.mxu0 0
        %4712 = vmatpush1.bf16.msra.mxu0 0
        %4713 = vmatprep.subr.bf16.mxu0 0
        %4714 = vmatpush1.bf16.msra.mxu0 0
        %4715 = vmatprep.subr.bf16.mxu0 0
        %4716 = vmatpush1.bf16.msra.mxu0 0
        %4717 = vmatprep.subr.bf16.mxu0 0
        %4718 = vmatpush1.bf16.msra.mxu0 0
        %4719 = vmatprep.subr.bf16.mxu0 0
        %4720 = vmatpush1.bf16.msra.mxu0 0
        %4721 = vmatprep.subr.bf16.mxu0 0
        %4722 = vmatpush1.bf16.msra.mxu0 0
        %4723 = vmatprep.subr.bf16.mxu0 0
        %4724 = vmatpush1.bf16.msra.mxu0 0
        %4725 = vmatprep.subr.bf16.mxu0 0
        %4726 = vmatpush1.bf16.msra.mxu0 0
        %4727 = vmatprep.subr.bf16.mxu0 0
        %4728 = vmatpush1.bf16.msra.mxu0 0
        %4729 = vmatprep.subr.bf16.mxu0 0
        %4730 = vmatpush1.bf16.msra.mxu0 0
        %4731 = vmatprep.subr.bf16.mxu0 0
        %4732 = vmatpush1.bf16.msra.mxu0 0
        %4733 = vmatprep.subr.bf16.mxu0 0
        %4734 = vmatpush1.bf16.msra.mxu0 0
        %4735 = vmatprep.subr.bf16.mxu0 0
        %4736 = vmatpush1.bf16.msra.mxu0 0
        %4737 = vmatprep.subr.bf16.mxu0 0
        %4738 = vmatpush1.bf16.msra.mxu0 0
        %4739 = vmatprep.mubr.bf16.mxu0 0
        %4740 = vmatmul.mubr.bf16.gmra.mrb[0].mxu0 %v4702
        %v4741 = vpop.f32.mrb[0].mxu0
        %v4742 = vadd.f32 0.0, %v4741
        %v4743 = vpop.f32.mrb[0].mxu0
        %v4744 = vpop.f32.mrb[0].mxu0
        %v4745 = vadd.f32 0.0, %v4744
        %v4746 = vpop.f32.mrb[0].mxu0
        %4747 = vmatprep.mubr.bf16.mxu0 0
        %4748 = vmatmul.mubr.bf16.gmra.mrb[0].mxu0 %v4705
        %v4749 = vpop.f32.mrb[0].mxu0
        %v4750 = vadd.f32 0.0, %v4749
        %v4751 = vpop.f32.mrb[0].mxu0
        %v4752 = vpop.f32.mrb[0].mxu0
        %v4753 = vadd.f32 0.0, %v4752
        %v4754 = vpop.f32.mrb[0].mxu0
        %4755 = vdwg.mxu0
        %4758 = vrot.lane.b32.xlu0 %v4420, 64
        %v4759 = vpop.permute.xlu0 %4758
        %4760 = vrot.lane.b32.xlu0 %v4421, 64
        %v4761 = vpop.permute.xlu0 %4760
        %4764 = vrot.lane.b32.xlu0 %v4424, 64
        %v4765 = vpop.permute.xlu0 %4764
        %4766 = vrot.lane.b32.xlu0 %v4425, 64
        %v4767 = vpop.permute.xlu0 %4766
        %v4769 = vsel %vm3730, %v4759, 0
        %v4772 = vsel %vm3730, %v4761, 0
        %v4775 = vsel %vm3730, %v4765, 0
        %v4778 = vsel %vm3730, %v4767, 0
        %4780 = vmatprep.subr.bf16.mxu0 0
        %4781 = vmatpush1.bf16.xpose.msra.mxu0 %v4775
        %4782 = vmatprep.subr.bf16.mxu0 0
        %4783 = vmatpush1.bf16.xpose.msra.mxu0 %v4778
        %4784 = vmatprep.subr.bf16.mxu0 0
        %4785 = vmatpush1.bf16.xpose.msra.mxu0 0
        %4786 = vmatprep.subr.bf16.mxu0 0
        %4787 = vmatpush1.bf16.xpose.msra.mxu0 0
        %4788 = vmatprep.subr.bf16.mxu0 0
        %4789 = vmatpush1.bf16.xpose.msra.mxu0 0
        %4790 = vmatprep.subr.bf16.mxu0 0
        %4791 = vmatpush1.bf16.xpose.msra.mxu0 0
        %4792 = vmatprep.subr.bf16.mxu0 0
        %4793 = vmatpush1.bf16.xpose.msra.mxu0 0
        %4794 = vmatprep.subr.bf16.mxu0 0
        %4795 = vmatpush1.bf16.xpose.msra.mxu0 0
        %4796 = vmatprep.subr.bf16.mxu0 0
        %4797 = vmatpush1.bf16.xpose.msra.mxu0 0
        %4798 = vmatprep.subr.bf16.mxu0 0
        %4799 = vmatpush1.bf16.xpose.msra.mxu0 0
        %4800 = vmatprep.subr.bf16.mxu0 0
        %4801 = vmatpush1.bf16.xpose.msra.mxu0 0
        %4802 = vmatprep.subr.bf16.mxu0 0
        %4803 = vmatpush1.bf16.xpose.msra.mxu0 0
        %4804 = vmatprep.subr.bf16.mxu0 0
        %4805 = vmatpush1.bf16.xpose.msra.mxu0 0
        %4806 = vmatprep.subr.bf16.mxu0 0
        %4807 = vmatpush1.bf16.xpose.msra.mxu0 0
        %4808 = vmatprep.subr.bf16.mxu0 0
        %4809 = vmatpush1.bf16.xpose.msra.mxu0 0
        %4810 = vmatprep.subr.bf16.mxu0 0
        %4811 = vmatpush1.bf16.xpose.msra.mxu0 0
        %4812 = vmatprep.mubr.bf16.mxu0 0
        %4813 = vmatmul.mubr.bf16.gmra.mrb[0].mxu0 %v4769
        %v4814 = vpop.f32.mrb[0].mxu0
        %v4815 = vadd.f32 %v3714, %v4814
        %v4816 = vpop.f32.mrb[0].mxu0
        %v4817 = vpop.f32.mrb[0].mxu0
        %v4818 = vadd.f32 %v3715, %v4817
        %v4819 = vpop.f32.mrb[0].mxu0
        %4820 = vmatprep.mubr.bf16.mxu0 0
        %4821 = vmatmul.mubr.bf16.gmra.mrb[0].mxu0 %v4772
        %v4822 = vpop.f32.mrb[0].mxu0
        %v4823 = vadd.f32 %v3716, %v4822
        %v4824 = vpop.f32.mrb[0].mxu0
        %v4825 = vpop.f32.mrb[0].mxu0
        %v4826 = vadd.f32 %v3717, %v4825
        %v4827 = vpop.f32.mrb[0].mxu0
        %4828 = vdwg.mxu0
        %4831 = vrot.lane.b32.xlu0 %v4422, 64
        %v4832 = vpop.permute.xlu0 %4831
        %4833 = vrot.lane.b32.xlu0 %v4423, 64
        %v4834 = vpop.permute.xlu0 %4833
        %4837 = vrot.lane.b32.xlu0 %v4426, 64
        %v4838 = vpop.permute.xlu0 %4837
        %4839 = vrot.lane.b32.xlu0 %v4427, 64
        %v4840 = vpop.permute.xlu0 %4839
        %v4842 = vsel %vm3730, %v4832, 0
        %v4845 = vsel %vm3730, %v4834, 0
        %v4848 = vsel %vm3730, %v4838, 0
        %v4851 = vsel %vm3730, %v4840, 0
        %4853 = vmatprep.subr.bf16.mxu0 0
        %4854 = vmatpush1.bf16.xpose.msra.mxu0 %v4848
        %4855 = vmatprep.subr.bf16.mxu0 0
        %4856 = vmatpush1.bf16.xpose.msra.mxu0 %v4851
        %4857 = vmatprep.subr.bf16.mxu0 0
        %4858 = vmatpush1.bf16.xpose.msra.mxu0 0
        %4859 = vmatprep.subr.bf16.mxu0 0
        %4860 = vmatpush1.bf16.xpose.msra.mxu0 0
        %4861 = vmatprep.subr.bf16.mxu0 0
        %4862 = vmatpush1.bf16.xpose.msra.mxu0 0
        %4863 = vmatprep.subr.bf16.mxu0 0
        %4864 = vmatpush1.bf16.xpose.msra.mxu0 0
        %4865 = vmatprep.subr.bf16.mxu0 0
        %4866 = vmatpush1.bf16.xpose.msra.mxu0 0
        %4867 = vmatprep.subr.bf16.mxu0 0
        %4868 = vmatpush1.bf16.xpose.msra.mxu0 0
        %4869 = vmatprep.subr.bf16.mxu0 0
        %4870 = vmatpush1.bf16.xpose.msra.mxu0 0
        %4871 = vmatprep.subr.bf16.mxu0 0
        %4872 = vmatpush1.bf16.xpose.msra.mxu0 0
        %4873 = vmatprep.subr.bf16.mxu0 0
        %4874 = vmatpush1.bf16.xpose.msra.mxu0 0
        %4875 = vmatprep.subr.bf16.mxu0 0
        %4876 = vmatpush1.bf16.xpose.msra.mxu0 0
        %4877 = vmatprep.subr.bf16.mxu0 0
        %4878 = vmatpush1.bf16.xpose.msra.mxu0 0
        %4879 = vmatprep.subr.bf16.mxu0 0
        %4880 = vmatpush1.bf16.xpose.msra.mxu0 0
        %4881 = vmatprep.subr.bf16.mxu0 0
        %4882 = vmatpush1.bf16.xpose.msra.mxu0 0
        %4883 = vmatprep.subr.bf16.mxu0 0
        %4884 = vmatpush1.bf16.xpose.msra.mxu0 0
        %4885 = vmatprep.mubr.bf16.mxu0 0
        %4886 = vmatmul.mubr.bf16.gmra.mrb[0].mxu0 %v4842
        %v4887 = vpop.f32.mrb[0].mxu0
        %v4888 = vadd.f32 %v3714, %v4887
        %v4889 = vpop.f32.mrb[0].mxu0
        %v4890 = vpop.f32.mrb[0].mxu0
        %v4891 = vadd.f32 %v3715, %v4890
        %v4892 = vpop.f32.mrb[0].mxu0
        %4893 = vmatprep.mubr.bf16.mxu0 0
        %4894 = vmatmul.mubr.bf16.gmra.mrb[0].mxu0 %v4845
        %v4895 = vpop.f32.mrb[0].mxu0
        %v4896 = vadd.f32 %v3716, %v4895
        %v4897 = vpop.f32.mrb[0].mxu0
        %v4898 = vpop.f32.mrb[0].mxu0
        %v4899 = vadd.f32 %v3717, %v4898
        %v4900 = vpop.f32.mrb[0].mxu0
        %4901 = vdwg.mxu0
        %v4902 = vsel %vm3853, %v4815, -inf
        %4903 = vmax.xlane.f32.xlu0 %v4902
        %v4904 = vpop.xlane.xlu0 %4903
        %v4905 = vsel %vm3853, %v4818, -inf
        %4906 = vmax.xlane.f32.xlu0 %v4905
        %v4907 = vpop.xlane.xlu0 %4906
        %v4908 = vsel %vm3853, %v4823, -inf
        %4909 = vmax.xlane.f32.xlu0 %v4908
        %v4910 = vpop.xlane.xlu0 %4909
        %v4911 = vsel %vm3853, %v4826, -inf
        %4912 = vmax.xlane.f32.xlu0 %v4911
        %v4913 = vpop.xlane.xlu0 %4912
        %v4914 = vsel %vm3853, %v4888, -inf
        %4915 = vmax.xlane.f32.xlu0 %v4914
        %v4916 = vpop.xlane.xlu0 %4915
        %v4917 = vsel %vm3853, %v4891, -inf
        %4918 = vmax.xlane.f32.xlu0 %v4917
        %v4919 = vpop.xlane.xlu0 %4918
        %v4920 = vsel %vm3853, %v4896, -inf
        %4921 = vmax.xlane.f32.xlu0 %v4920
        %v4922 = vpop.xlane.xlu0 %4921
        %v4923 = vsel %vm3853, %v4899, -inf
        %4924 = vmax.xlane.f32.xlu0 %v4923
        %v4925 = vpop.xlane.xlu0 %4924
        %v4926 = vsub.f32 %v4815, %v4904
        %v4927 = vsub.f32 %v4818, %v4907
        %v4928 = vsub.f32 %v4823, %v4910
        %v4929 = vsub.f32 %v4826, %v4913
        %v4930 = vsub.f32 %v4888, %v4916
        %v4931 = vsub.f32 %v4891, %v4919
        %v4932 = vsub.f32 %v4896, %v4922
        %v4933 = vsub.f32 %v4899, %v4925
        %v4934 = vmul.f32 %v4926, 1.442695
        %v4935 = vpow.pop %v4934
        %v4936 = vmul.f32 %v4927, 1.442695
        %v4937 = vpow.pop %v4936
        %v4938 = vmul.f32 %v4928, 1.442695
        %v4939 = vpow.pop %v4938
        %v4940 = vmul.f32 %v4929, 1.442695
        %v4941 = vpow.pop %v4940
        %v4942 = vmul.f32 %v4930, 1.442695
        %v4943 = vpow.pop %v4942
        %v4944 = vmul.f32 %v4931, 1.442695
        %v4945 = vpow.pop %v4944
        %v4946 = vmul.f32 %v4932, 1.442695
        %v4947 = vpow.pop %v4946
        %v4948 = vmul.f32 %v4933, 1.442695
        %v4949 = vpow.pop %v4948
        %v4950 = vsel %vm3853, %v4935, 0.0
        %4951 = vadd.xlane.f32.xlu0 %v4950
        %v4952 = vpop.xlane.xlu0 %4951
        %v4953 = vsel %vm3853, %v4937, 0.0
        %4954 = vadd.xlane.f32.xlu0 %v4953
        %v4955 = vpop.xlane.xlu0 %4954
        %v4956 = vsel %vm3853, %v4939, 0.0
        %4957 = vadd.xlane.f32.xlu0 %v4956
        %v4958 = vpop.xlane.xlu0 %4957
        %v4959 = vsel %vm3853, %v4941, 0.0
        %4960 = vadd.xlane.f32.xlu0 %v4959
        %v4961 = vpop.xlane.xlu0 %4960
        %v4962 = vsel %vm3853, %v4943, 0.0
        %4963 = vadd.xlane.f32.xlu0 %v4962
        %v4964 = vpop.xlane.xlu0 %4963
        %v4965 = vsel %vm3853, %v4945, 0.0
        %4966 = vadd.xlane.f32.xlu0 %v4965
        %v4967 = vpop.xlane.xlu0 %4966
        %v4968 = vsel %vm3853, %v4947, 0.0
        %4969 = vadd.xlane.f32.xlu0 %v4968
        %v4970 = vpop.xlane.xlu0 %4969
        %v4971 = vsel %vm3853, %v4949, 0.0
        %4972 = vadd.xlane.f32.xlu0 %v4971
        %v4973 = vpop.xlane.xlu0 %4972
        %v4974 = vrcp.pop %v4952
        %v4975 = vrcp.pop %v4955
        %v4976 = vrcp.pop %v4958
        %v4977 = vrcp.pop %v4961
        %v4978 = vrcp.pop %v4964
        %v4979 = vrcp.pop %v4967
        %v4980 = vrcp.pop %v4970
        %v4981 = vrcp.pop %v4973
        %v4982 = vmul.f32 %v4935, %v4974
        %v4983 = vmul.f32 %v4937, %v4975
        %v4984 = vmul.f32 %v4939, %v4976
        %v4985 = vmul.f32 %v4941, %v4977
        %v4986 = vmul.f32 %v4943, %v4978
        %v4987 = vmul.f32 %v4945, %v4979
        %v4988 = vmul.f32 %v4947, %v4980
        %v4989 = vmul.f32 %v4949, %v4981
        %v4990 = vpack.c.bf16 %v4983, %v4982
        %v4991 = vpack.c.bf16 %v4985, %v4984
        %v4992 = vpack.c.bf16 %v4987, %v4986
        %v4993 = vpack.c.bf16 %v4989, %v4988
        %4996 = vrot.lane.b32.xlu0 %v4428, 64
        %v4997 = vpop.permute.xlu0 %4996
        %4998 = vrot.lane.b32.xlu0 %v4429, 64
        %v4999 = vpop.permute.xlu0 %4998
        %v5003 = vsel %vm3853, %v4990, 0
        %v5006 = vsel %vm3853, %v4991, 0
        %5008 = vmatprep.subr.bf16.mxu0 0
        %5009 = vmatpush1.bf16.msra.mxu0 %v4997
        %5010 = vmatprep.subr.bf16.mxu0 0
        %5011 = vmatpush1.bf16.msra.mxu0 %v4999
        %5012 = vmatprep.subr.bf16.mxu0 0
        %5013 = vmatpush1.bf16.msra.mxu0 0
        %5014 = vmatprep.subr.bf16.mxu0 0
        %5015 = vmatpush1.bf16.msra.mxu0 0
        %5016 = vmatprep.subr.bf16.mxu0 0
        %5017 = vmatpush1.bf16.msra.mxu0 0
        %5018 = vmatprep.subr.bf16.mxu0 0
        %5019 = vmatpush1.bf16.msra.mxu0 0
        %5020 = vmatprep.subr.bf16.mxu0 0
        %5021 = vmatpush1.bf16.msra.mxu0 0
        %5022 = vmatprep.subr.bf16.mxu0 0
        %5023 = vmatpush1.bf16.msra.mxu0 0
        %5024 = vmatprep.subr.bf16.mxu0 0
        %5025 = vmatpush1.bf16.msra.mxu0 0
        %5026 = vmatprep.subr.bf16.mxu0 0
        %5027 = vmatpush1.bf16.msra.mxu0 0
        %5028 = vmatprep.subr.bf16.mxu0 0
        %5029 = vmatpush1.bf16.msra.mxu0 0
        %5030 = vmatprep.subr.bf16.mxu0 0
        %5031 = vmatpush1.bf16.msra.mxu0 0
        %5032 = vmatprep.subr.bf16.mxu0 0
        %5033 = vmatpush1.bf16.msra.mxu0 0
        %5034 = vmatprep.subr.bf16.mxu0 0
        %5035 = vmatpush1.bf16.msra.mxu0 0
        %5036 = vmatprep.subr.bf16.mxu0 0
        %5037 = vmatpush1.bf16.msra.mxu0 0
        %5038 = vmatprep.subr.bf16.mxu0 0
        %5039 = vmatpush1.bf16.msra.mxu0 0
        %5040 = vmatprep.mubr.bf16.mxu0 0
        %5041 = vmatmul.mubr.bf16.gmra.mrb[0].mxu0 %v5003
        %v5042 = vpop.f32.mrb[0].mxu0
        %v5043 = vadd.f32 0.0, %v5042
        %v5044 = vpop.f32.mrb[0].mxu0
        %v5045 = vpop.f32.mrb[0].mxu0
        %v5046 = vadd.f32 0.0, %v5045
        %v5047 = vpop.f32.mrb[0].mxu0
        %5048 = vmatprep.mubr.bf16.mxu0 0
        %5049 = vmatmul.mubr.bf16.gmra.mrb[0].mxu0 %v5006
        %v5050 = vpop.f32.mrb[0].mxu0
        %v5051 = vadd.f32 0.0, %v5050
        %v5052 = vpop.f32.mrb[0].mxu0
        %v5053 = vpop.f32.mrb[0].mxu0
        %v5054 = vadd.f32 0.0, %v5053
        %v5055 = vpop.f32.mrb[0].mxu0
        %5056 = vdwg.mxu0
        %5059 = vrot.lane.b32.xlu0 %v4430, 64
        %v5060 = vpop.permute.xlu0 %5059
        %5061 = vrot.lane.b32.xlu0 %v4431, 64
        %v5062 = vpop.permute.xlu0 %5061
        %v5066 = vsel %vm3853, %v4992, 0
        %v5069 = vsel %vm3853, %v4993, 0
        %5071 = vmatprep.subr.bf16.mxu0 0
        %5072 = vmatpush1.bf16.msra.mxu0 %v5060
        %5073 = vmatprep.subr.bf16.mxu0 0
        %5074 = vmatpush1.bf16.msra.mxu0 %v5062
        %5075 = vmatprep.subr.bf16.mxu0 0
        %5076 = vmatpush1.bf16.msra.mxu0 0
        %5077 = vmatprep.subr.bf16.mxu0 0
        %5078 = vmatpush1.bf16.msra.mxu0 0
        %5079 = vmatprep.subr.bf16.mxu0 0
        %5080 = vmatpush1.bf16.msra.mxu0 0
        %5081 = vmatprep.subr.bf16.mxu0 0
        %5082 = vmatpush1.bf16.msra.mxu0 0
        %5083 = vmatprep.subr.bf16.mxu0 0
        %5084 = vmatpush1.bf16.msra.mxu0 0
        %5085 = vmatprep.subr.bf16.mxu0 0
        %5086 = vmatpush1.bf16.msra.mxu0 0
        %5087 = vmatprep.subr.bf16.mxu0 0
        %5088 = vmatpush1.bf16.msra.mxu0 0
        %5089 = vmatprep.subr.bf16.mxu0 0
        %5090 = vmatpush1.bf16.msra.mxu0 0
        %5091 = vmatprep.subr.bf16.mxu0 0
        %5092 = vmatpush1.bf16.msra.mxu0 0
        %5093 = vmatprep.subr.bf16.mxu0 0
        %5094 = vmatpush1.bf16.msra.mxu0 0
        %5095 = vmatprep.subr.bf16.mxu0 0
        %5096 = vmatpush1.bf16.msra.mxu0 0
        %5097 = vmatprep.subr.bf16.mxu0 0
        %5098 = vmatpush1.bf16.msra.mxu0 0
        %5099 = vmatprep.subr.bf16.mxu0 0
        %5100 = vmatpush1.bf16.msra.mxu0 0
        %5101 = vmatprep.subr.bf16.mxu0 0
        %5102 = vmatpush1.bf16.msra.mxu0 0
        %5103 = vmatprep.mubr.bf16.mxu0 0
        %5104 = vmatmul.mubr.bf16.gmra.mrb[0].mxu0 %v5066
        %v5105 = vpop.f32.mrb[0].mxu0
        %v5106 = vadd.f32 0.0, %v5105
        %v5107 = vpop.f32.mrb[0].mxu0
        %v5108 = vpop.f32.mrb[0].mxu0
        %v5109 = vadd.f32 0.0, %v5108
        %v5110 = vpop.f32.mrb[0].mxu0
        %5111 = vmatprep.mubr.bf16.mxu0 0
        %5112 = vmatmul.mubr.bf16.gmra.mrb[0].mxu0 %v5069
        %v5113 = vpop.f32.mrb[0].mxu0
        %v5114 = vadd.f32 0.0, %v5113
        %v5115 = vpop.f32.mrb[0].mxu0
        %v5116 = vpop.f32.mrb[0].mxu0
        %v5117 = vadd.f32 0.0, %v5116
        %v5118 = vpop.f32.mrb[0].mxu0
        %5119 = vdwg.mxu0
        %v5120 = vpack.c.bf16 %v3695, %v3692
        %v5121 = vpack.c.bf16 %v3701, %v3698
        %v5122 = vpack.c.bf16 %v3707, %v3704
        %v5123 = vpack.c.bf16 %v3713, %v3710
        %v5124 = vpack.c.bf16 %v3382, %v3378
        %v5125 = vpack.c.bf16 %v3392, %v3388
        %v5126 = vpack.c.bf16 %v3402, %v3398
        %v5127 = vpack.c.bf16 %v3412, %v3408
        %v5128 = vpack.c.bf16 %v3663, %v3660
        %v5129 = vpack.c.bf16 %v3671, %v3668
        %v5130 = vpack.c.bf16 %v3679, %v3676
        %v5131 = vpack.c.bf16 %v3687, %v3684
        %v5133 = vsel %vm3730, %v5120, 0
        %v5136 = vsel %vm3730, %v5121, 0
        %v5139 = vsel %vm3730, %v5124, 0
        %v5142 = vsel %vm3730, %v5125, 0
        %5144 = vmatprep.subr.bf16.mxu0 0
        %5145 = vmatpush1.bf16.xpose.msra.mxu0 %v5139
        %5146 = vmatprep.subr.bf16.mxu0 0
        %5147 = vmatpush1.bf16.xpose.msra.mxu0 %v5142
        %5148 = vmatprep.subr.bf16.mxu0 0
        %5149 = vmatpush1.bf16.xpose.msra.mxu0 0
        %5150 = vmatprep.subr.bf16.mxu0 0
        %5151 = vmatpush1.bf16.xpose.msra.mxu0 0
        %5152 = vmatprep.subr.bf16.mxu0 0
        %5153 = vmatpush1.bf16.xpose.msra.mxu0 0
        %5154 = vmatprep.subr.bf16.mxu0 0
        %5155 = vmatpush1.bf16.xpose.msra.mxu0 0
        %5156 = vmatprep.subr.bf16.mxu0 0
        %5157 = vmatpush1.bf16.xpose.msra.mxu0 0
        %5158 = vmatprep.subr.bf16.mxu0 0
        %5159 = vmatpush1.bf16.xpose.msra.mxu0 0
        %5160 = vmatprep.subr.bf16.mxu0 0
        %5161 = vmatpush1.bf16.xpose.msra.mxu0 0
        %5162 = vmatprep.subr.bf16.mxu0 0
        %5163 = vmatpush1.bf16.xpose.msra.mxu0 0
        %5164 = vmatprep.subr.bf16.mxu0 0
        %5165 = vmatpush1.bf16.xpose.msra.mxu0 0
        %5166 = vmatprep.subr.bf16.mxu0 0
        %5167 = vmatpush1.bf16.xpose.msra.mxu0 0
        %5168 = vmatprep.subr.bf16.mxu0 0
        %5169 = vmatpush1.bf16.xpose.msra.mxu0 0
        %5170 = vmatprep.subr.bf16.mxu0 0
        %5171 = vmatpush1.bf16.xpose.msra.mxu0 0
        %5172 = vmatprep.subr.bf16.mxu0 0
        %5173 = vmatpush1.bf16.xpose.msra.mxu0 0
        %5174 = vmatprep.subr.bf16.mxu0 0
        %5175 = vmatpush1.bf16.xpose.msra.mxu0 0
        %5176 = vmatprep.mubr.bf16.mxu0 0
        %5177 = vmatmul.mubr.bf16.gmra.mrb[0].mxu0 %v5133
        %v5178 = vpop.f32.mrb[0].mxu0
        %v5179 = vadd.f32 %v3714, %v5178
        %v5180 = vpop.f32.mrb[0].mxu0
        %v5181 = vpop.f32.mrb[0].mxu0
        %v5182 = vadd.f32 %v3715, %v5181
        %v5183 = vpop.f32.mrb[0].mxu0
        %5184 = vmatprep.mubr.bf16.mxu0 0
        %5185 = vmatmul.mubr.bf16.gmra.mrb[0].mxu0 %v5136
        %v5186 = vpop.f32.mrb[0].mxu0
        %v5187 = vadd.f32 %v3716, %v5186
        %v5188 = vpop.f32.mrb[0].mxu0
        %v5189 = vpop.f32.mrb[0].mxu0
        %v5190 = vadd.f32 %v3717, %v5189
        %v5191 = vpop.f32.mrb[0].mxu0
        %5192 = vdwg.mxu0
        %v5194 = vsel %vm3730, %v5122, 0
        %v5197 = vsel %vm3730, %v5123, 0
        %v5200 = vsel %vm3730, %v5126, 0
        %v5203 = vsel %vm3730, %v5127, 0
        %5205 = vmatprep.subr.bf16.mxu0 0
        %5206 = vmatpush1.bf16.xpose.msra.mxu0 %v5200
        %5207 = vmatprep.subr.bf16.mxu0 0
        %5208 = vmatpush1.bf16.xpose.msra.mxu0 %v5203
        %5209 = vmatprep.subr.bf16.mxu0 0
        %5210 = vmatpush1.bf16.xpose.msra.mxu0 0
        %5211 = vmatprep.subr.bf16.mxu0 0
        %5212 = vmatpush1.bf16.xpose.msra.mxu0 0
        %5213 = vmatprep.subr.bf16.mxu0 0
        %5214 = vmatpush1.bf16.xpose.msra.mxu0 0
        %5215 = vmatprep.subr.bf16.mxu0 0
        %5216 = vmatpush1.bf16.xpose.msra.mxu0 0
        %5217 = vmatprep.subr.bf16.mxu0 0
        %5218 = vmatpush1.bf16.xpose.msra.mxu0 0
        %5219 = vmatprep.subr.bf16.mxu0 0
        %5220 = vmatpush1.bf16.xpose.msra.mxu0 0
        %5221 = vmatprep.subr.bf16.mxu0 0
        %5222 = vmatpush1.bf16.xpose.msra.mxu0 0
        %5223 = vmatprep.subr.bf16.mxu0 0
        %5224 = vmatpush1.bf16.xpose.msra.mxu0 0
        %5225 = vmatprep.subr.bf16.mxu0 0
        %5226 = vmatpush1.bf16.xpose.msra.mxu0 0
        %5227 = vmatprep.subr.bf16.mxu0 0
        %5228 = vmatpush1.bf16.xpose.msra.mxu0 0
        %5229 = vmatprep.subr.bf16.mxu0 0
        %5230 = vmatpush1.bf16.xpose.msra.mxu0 0
        %5231 = vmatprep.subr.bf16.mxu0 0
        %5232 = vmatpush1.bf16.xpose.msra.mxu0 0
        %5233 = vmatprep.subr.bf16.mxu0 0
        %5234 = vmatpush1.bf16.xpose.msra.mxu0 0
        %5235 = vmatprep.subr.bf16.mxu0 0
        %5236 = vmatpush1.bf16.xpose.msra.mxu0 0
        %5237 = vmatprep.mubr.bf16.mxu0 0
        %5238 = vmatmul.mubr.bf16.gmra.mrb[0].mxu0 %v5194
        %v5239 = vpop.f32.mrb[0].mxu0
        %v5240 = vadd.f32 %v3714, %v5239
        %v5241 = vpop.f32.mrb[0].mxu0
        %v5242 = vpop.f32.mrb[0].mxu0
        %v5243 = vadd.f32 %v3715, %v5242
        %v5244 = vpop.f32.mrb[0].mxu0
        %5245 = vmatprep.mubr.bf16.mxu0 0
        %5246 = vmatmul.mubr.bf16.gmra.mrb[0].mxu0 %v5197
        %v5247 = vpop.f32.mrb[0].mxu0
        %v5248 = vadd.f32 %v3716, %v5247
        %v5249 = vpop.f32.mrb[0].mxu0
        %v5250 = vpop.f32.mrb[0].mxu0
        %v5251 = vadd.f32 %v3717, %v5250
        %v5252 = vpop.f32.mrb[0].mxu0
        %5253 = vdwg.mxu0
        %v5254 = vsel %vm3853, %v5179, -inf
        %5255 = vmax.xlane.f32.xlu0 %v5254
        %v5256 = vpop.xlane.xlu0 %5255
        %v5257 = vsel %vm3853, %v5182, -inf
        %5258 = vmax.xlane.f32.xlu0 %v5257
        %v5259 = vpop.xlane.xlu0 %5258
        %v5260 = vsel %vm3853, %v5187, -inf
        %5261 = vmax.xlane.f32.xlu0 %v5260
        %v5262 = vpop.xlane.xlu0 %5261
        %v5263 = vsel %vm3853, %v5190, -inf
        %5264 = vmax.xlane.f32.xlu0 %v5263
        %v5265 = vpop.xlane.xlu0 %5264
        %v5266 = vsel %vm3853, %v5240, -inf
        %5267 = vmax.xlane.f32.xlu0 %v5266
        %v5268 = vpop.xlane.xlu0 %5267
        %v5269 = vsel %vm3853, %v5243, -inf
        %5270 = vmax.xlane.f32.xlu0 %v5269
        %v5271 = vpop.xlane.xlu0 %5270
        %v5272 = vsel %vm3853, %v5248, -inf
        %5273 = vmax.xlane.f32.xlu0 %v5272
        %v5274 = vpop.xlane.xlu0 %5273
        %v5275 = vsel %vm3853, %v5251, -inf
        %5276 = vmax.xlane.f32.xlu0 %v5275
        %v5277 = vpop.xlane.xlu0 %5276
        %v5278 = vsub.f32 %v5179, %v5256
        %v5279 = vsub.f32 %v5182, %v5259
        %v5280 = vsub.f32 %v5187, %v5262
        %v5281 = vsub.f32 %v5190, %v5265
        %v5282 = vsub.f32 %v5240, %v5268
        %v5283 = vsub.f32 %v5243, %v5271
        %v5284 = vsub.f32 %v5248, %v5274
        %v5285 = vsub.f32 %v5251, %v5277
        %v5286 = vmul.f32 %v5278, 1.442695
        %v5287 = vpow.pop %v5286
        %v5288 = vmul.f32 %v5279, 1.442695
        %v5289 = vpow.pop %v5288
        %v5290 = vmul.f32 %v5280, 1.442695
        %v5291 = vpow.pop %v5290
        %v5292 = vmul.f32 %v5281, 1.442695
        %v5293 = vpow.pop %v5292
        %v5294 = vmul.f32 %v5282, 1.442695
        %v5295 = vpow.pop %v5294
        %v5296 = vmul.f32 %v5283, 1.442695
        %v5297 = vpow.pop %v5296
        %v5298 = vmul.f32 %v5284, 1.442695
        %v5299 = vpow.pop %v5298
        %v5300 = vmul.f32 %v5285, 1.442695
        %v5301 = vpow.pop %v5300
        %v5302 = vsel %vm3853, %v5287, 0.0
        %5303 = vadd.xlane.f32.xlu0 %v5302
        %v5304 = vpop.xlane.xlu0 %5303
        %v5305 = vsel %vm3853, %v5289, 0.0
        %5306 = vadd.xlane.f32.xlu0 %v5305
        %v5307 = vpop.xlane.xlu0 %5306
        %v5308 = vsel %vm3853, %v5291, 0.0
        %5309 = vadd.xlane.f32.xlu0 %v5308
        %v5310 = vpop.xlane.xlu0 %5309
        %v5311 = vsel %vm3853, %v5293, 0.0
        %5312 = vadd.xlane.f32.xlu0 %v5311
        %v5313 = vpop.xlane.xlu0 %5312
        %v5314 = vsel %vm3853, %v5295, 0.0
        %5315 = vadd.xlane.f32.xlu0 %v5314
        %v5316 = vpop.xlane.xlu0 %5315
        %v5317 = vsel %vm3853, %v5297, 0.0
        %5318 = vadd.xlane.f32.xlu0 %v5317
        %v5319 = vpop.xlane.xlu0 %5318
        %v5320 = vsel %vm3853, %v5299, 0.0
        %5321 = vadd.xlane.f32.xlu0 %v5320
        %v5322 = vpop.xlane.xlu0 %5321
        %v5323 = vsel %vm3853, %v5301, 0.0
        %5324 = vadd.xlane.f32.xlu0 %v5323
        %v5325 = vpop.xlane.xlu0 %5324
        %v5326 = vrcp.pop %v5304
        %v5327 = vrcp.pop %v5307
        %v5328 = vrcp.pop %v5310
        %v5329 = vrcp.pop %v5313
        %v5330 = vrcp.pop %v5316
        %v5331 = vrcp.pop %v5319
        %v5332 = vrcp.pop %v5322
        %v5333 = vrcp.pop %v5325
        %v5334 = vmul.f32 %v5287, %v5326
        %v5335 = vmul.f32 %v5289, %v5327
        %v5336 = vmul.f32 %v5291, %v5328
        %v5337 = vmul.f32 %v5293, %v5329
        %v5338 = vmul.f32 %v5295, %v5330
        %v5339 = vmul.f32 %v5297, %v5331
        %v5340 = vmul.f32 %v5299, %v5332
        %v5341 = vmul.f32 %v5301, %v5333
        %v5342 = vpack.c.bf16 %v5335, %v5334
        %v5343 = vpack.c.bf16 %v5337, %v5336
        %v5344 = vpack.c.bf16 %v5339, %v5338
        %v5345 = vpack.c.bf16 %v5341, %v5340
        %v5347 = vsel %vm3853, %v5342, 0
        %v5350 = vsel %vm3853, %v5343, 0
        %5352 = vmatprep.subr.bf16.mxu0 0
        %5353 = vmatpush1.bf16.msra.mxu0 %v5128
        %5354 = vmatprep.subr.bf16.mxu0 0
        %5355 = vmatpush1.bf16.msra.mxu0 %v5129
        %5356 = vmatprep.subr.bf16.mxu0 0
        %5357 = vmatpush1.bf16.msra.mxu0 0
        %5358 = vmatprep.subr.bf16.mxu0 0
        %5359 = vmatpush1.bf16.msra.mxu0 0
        %5360 = vmatprep.subr.bf16.mxu0 0
        %5361 = vmatpush1.bf16.msra.mxu0 0
        %5362 = vmatprep.subr.bf16.mxu0 0
        %5363 = vmatpush1.bf16.msra.mxu0 0
        %5364 = vmatprep.subr.bf16.mxu0 0
        %5365 = vmatpush1.bf16.msra.mxu0 0
        %5366 = vmatprep.subr.bf16.mxu0 0
        %5367 = vmatpush1.bf16.msra.mxu0 0
        %5368 = vmatprep.subr.bf16.mxu0 0
        %5369 = vmatpush1.bf16.msra.mxu0 0
        %5370 = vmatprep.subr.bf16.mxu0 0
        %5371 = vmatpush1.bf16.msra.mxu0 0
        %5372 = vmatprep.subr.bf16.mxu0 0
        %5373 = vmatpush1.bf16.msra.mxu0 0
        %5374 = vmatprep.subr.bf16.mxu0 0
        %5375 = vmatpush1.bf16.msra.mxu0 0
        %5376 = vmatprep.subr.bf16.mxu0 0
        %5377 = vmatpush1.bf16.msra.mxu0 0
        %5378 = vmatprep.subr.bf16.mxu0 0
        %5379 = vmatpush1.bf16.msra.mxu0 0
        %5380 = vmatprep.subr.bf16.mxu0 0
        %5381 = vmatpush1.bf16.msra.mxu0 0
        %5382 = vmatprep.subr.bf16.mxu0 0
        %5383 = vmatpush1.bf16.msra.mxu0 0
        %5384 = vmatprep.mubr.bf16.mxu0 0
        %5385 = vmatmul.mubr.bf16.gmra.mrb[0].mxu0 %v5347
        %v5386 = vpop.f32.mrb[0].mxu0
        %v5387 = vadd.f32 0.0, %v5386
        %v5388 = vpop.f32.mrb[0].mxu0
        %v5389 = vpop.f32.mrb[0].mxu0
        %v5390 = vadd.f32 0.0, %v5389
        %v5391 = vpop.f32.mrb[0].mxu0
        %5392 = vmatprep.mubr.bf16.mxu0 0
        %5393 = vmatmul.mubr.bf16.gmra.mrb[0].mxu0 %v5350
        %v5394 = vpop.f32.mrb[0].mxu0
        %v5395 = vadd.f32 0.0, %v5394
        %v5396 = vpop.f32.mrb[0].mxu0
        %v5397 = vpop.f32.mrb[0].mxu0
        %v5398 = vadd.f32 0.0, %v5397
        %v5399 = vpop.f32.mrb[0].mxu0
        %5400 = vdwg.mxu0
        %v5402 = vsel %vm3853, %v5344, 0
        %v5405 = vsel %vm3853, %v5345, 0
        %5407 = vmatprep.subr.bf16.mxu0 0
        %5408 = vmatpush1.bf16.msra.mxu0 %v5130
        %5409 = vmatprep.subr.bf16.mxu0 0
        %5410 = vmatpush1.bf16.msra.mxu0 %v5131
        %5411 = vmatprep.subr.bf16.mxu0 0
        %5412 = vmatpush1.bf16.msra.mxu0 0
        %5413 = vmatprep.subr.bf16.mxu0 0
        %5414 = vmatpush1.bf16.msra.mxu0 0
        %5415 = vmatprep.subr.bf16.mxu0 0
        %5416 = vmatpush1.bf16.msra.mxu0 0
        %5417 = vmatprep.subr.bf16.mxu0 0
        %5418 = vmatpush1.bf16.msra.mxu0 0
        %5419 = vmatprep.subr.bf16.mxu0 0
        %5420 = vmatpush1.bf16.msra.mxu0 0
        %5421 = vmatprep.subr.bf16.mxu0 0
        %5422 = vmatpush1.bf16.msra.mxu0 0
        %5423 = vmatprep.subr.bf16.mxu0 0
        %5424 = vmatpush1.bf16.msra.mxu0 0
        %5425 = vmatprep.subr.bf16.mxu0 0
        %5426 = vmatpush1.bf16.msra.mxu0 0
        %5427 = vmatprep.subr.bf16.mxu0 0
        %5428 = vmatpush1.bf16.msra.mxu0 0
        %5429 = vmatprep.subr.bf16.mxu0 0
        %5430 = vmatpush1.bf16.msra.mxu0 0
        %5431 = vmatprep.subr.bf16.mxu0 0
        %5432 = vmatpush1.bf16.msra.mxu0 0
        %5433 = vmatprep.subr.bf16.mxu0 0
        %5434 = vmatpush1.bf16.msra.mxu0 0
        %5435 = vmatprep.subr.bf16.mxu0 0
        %5436 = vmatpush1.bf16.msra.mxu0 0
        %5437 = vmatprep.subr.bf16.mxu0 0
        %5438 = vmatpush1.bf16.msra.mxu0 0
        %5439 = vmatprep.mubr.bf16.mxu0 0
        %5440 = vmatmul.mubr.bf16.gmra.mrb[0].mxu0 %v5402
        %v5441 = vpop.f32.mrb[0].mxu0
        %v5442 = vadd.f32 0.0, %v5441
        %v5443 = vpop.f32.mrb[0].mxu0
        %v5444 = vpop.f32.mrb[0].mxu0
        %v5445 = vadd.f32 0.0, %v5444
        %v5446 = vpop.f32.mrb[0].mxu0
        %5447 = vmatprep.mubr.bf16.mxu0 0
        %5448 = vmatmul.mubr.bf16.gmra.mrb[0].mxu0 %v5405
        %v5449 = vpop.f32.mrb[0].mxu0
        %v5450 = vadd.f32 0.0, %v5449
        %v5451 = vpop.f32.mrb[0].mxu0
        %v5452 = vpop.f32.mrb[0].mxu0
        %v5453 = vadd.f32 0.0, %v5452
        %v5454 = vpop.f32.mrb[0].mxu0
        %5455 = vdwg.mxu0
        %5458 = vrot.lane.b32.xlu0 %v5120, 64
        %v5459 = vpop.permute.xlu0 %5458
        %5460 = vrot.lane.b32.xlu0 %v5121, 64
        %v5461 = vpop.permute.xlu0 %5460
        %5464 = vrot.lane.b32.xlu0 %v5124, 64
        %v5465 = vpop.permute.xlu0 %5464
        %5466 = vrot.lane.b32.xlu0 %v5125, 64
        %v5467 = vpop.permute.xlu0 %5466
        %v5469 = vsel %vm3730, %v5459, 0
        %v5472 = vsel %vm3730, %v5461, 0
        %v5475 = vsel %vm3730, %v5465, 0
        %v5478 = vsel %vm3730, %v5467, 0
        %5480 = vmatprep.subr.bf16.mxu0 0
        %5481 = vmatpush1.bf16.xpose.msra.mxu0 %v5475
        %5482 = vmatprep.subr.bf16.mxu0 0
        %5483 = vmatpush1.bf16.xpose.msra.mxu0 %v5478
        %5484 = vmatprep.subr.bf16.mxu0 0
        %5485 = vmatpush1.bf16.xpose.msra.mxu0 0
        %5486 = vmatprep.subr.bf16.mxu0 0
        %5487 = vmatpush1.bf16.xpose.msra.mxu0 0
        %5488 = vmatprep.subr.bf16.mxu0 0
        %5489 = vmatpush1.bf16.xpose.msra.mxu0 0
        %5490 = vmatprep.subr.bf16.mxu0 0
        %5491 = vmatpush1.bf16.xpose.msra.mxu0 0
        %5492 = vmatprep.subr.bf16.mxu0 0
        %5493 = vmatpush1.bf16.xpose.msra.mxu0 0
        %5494 = vmatprep.subr.bf16.mxu0 0
        %5495 = vmatpush1.bf16.xpose.msra.mxu0 0
        %5496 = vmatprep.subr.bf16.mxu0 0
        %5497 = vmatpush1.bf16.xpose.msra.mxu0 0
        %5498 = vmatprep.subr.bf16.mxu0 0
        %5499 = vmatpush1.bf16.xpose.msra.mxu0 0
        %5500 = vmatprep.subr.bf16.mxu0 0
        %5501 = vmatpush1.bf16.xpose.msra.mxu0 0
        %5502 = vmatprep.subr.bf16.mxu0 0
        %5503 = vmatpush1.bf16.xpose.msra.mxu0 0
        %5504 = vmatprep.subr.bf16.mxu0 0
        %5505 = vmatpush1.bf16.xpose.msra.mxu0 0
        %5506 = vmatprep.subr.bf16.mxu0 0
        %5507 = vmatpush1.bf16.xpose.msra.mxu0 0
        %5508 = vmatprep.subr.bf16.mxu0 0
        %5509 = vmatpush1.bf16.xpose.msra.mxu0 0
        %5510 = vmatprep.subr.bf16.mxu0 0
        %5511 = vmatpush1.bf16.xpose.msra.mxu0 0
        %5512 = vmatprep.mubr.bf16.mxu0 0
        %5513 = vmatmul.mubr.bf16.gmra.mrb[0].mxu0 %v5469
        %v5514 = vpop.f32.mrb[0].mxu0
        %v5515 = vadd.f32 %v3714, %v5514
        %v5516 = vpop.f32.mrb[0].mxu0
        %v5517 = vpop.f32.mrb[0].mxu0
        %v5518 = vadd.f32 %v3715, %v5517
        %v5519 = vpop.f32.mrb[0].mxu0
        %5520 = vmatprep.mubr.bf16.mxu0 0
        %5521 = vmatmul.mubr.bf16.gmra.mrb[0].mxu0 %v5472
        %v5522 = vpop.f32.mrb[0].mxu0
        %v5523 = vadd.f32 %v3716, %v5522
        %v5524 = vpop.f32.mrb[0].mxu0
        %v5525 = vpop.f32.mrb[0].mxu0
        %v5526 = vadd.f32 %v3717, %v5525
        %v5527 = vpop.f32.mrb[0].mxu0
        %5528 = vdwg.mxu0
        %5531 = vrot.lane.b32.xlu0 %v5122, 64
        %v5532 = vpop.permute.xlu0 %5531
        %5533 = vrot.lane.b32.xlu0 %v5123, 64
        %v5534 = vpop.permute.xlu0 %5533
        %5537 = vrot.lane.b32.xlu0 %v5126, 64
        %v5538 = vpop.permute.xlu0 %5537
        %5539 = vrot.lane.b32.xlu0 %v5127, 64
        %v5540 = vpop.permute.xlu0 %5539
        %v5542 = vsel %vm3730, %v5532, 0
        %v5545 = vsel %vm3730, %v5534, 0
        %v5548 = vsel %vm3730, %v5538, 0
        %v5551 = vsel %vm3730, %v5540, 0
        %5553 = vmatprep.subr.bf16.mxu0 0
        %5554 = vmatpush1.bf16.xpose.msra.mxu0 %v5548
        %5555 = vmatprep.subr.bf16.mxu0 0
        %5556 = vmatpush1.bf16.xpose.msra.mxu0 %v5551
        %5557 = vmatprep.subr.bf16.mxu0 0
        %5558 = vmatpush1.bf16.xpose.msra.mxu0 0
        %5559 = vmatprep.subr.bf16.mxu0 0
        %5560 = vmatpush1.bf16.xpose.msra.mxu0 0
        %5561 = vmatprep.subr.bf16.mxu0 0
        %5562 = vmatpush1.bf16.xpose.msra.mxu0 0
        %5563 = vmatprep.subr.bf16.mxu0 0
        %5564 = vmatpush1.bf16.xpose.msra.mxu0 0
        %5565 = vmatprep.subr.bf16.mxu0 0
        %5566 = vmatpush1.bf16.xpose.msra.mxu0 0
        %5567 = vmatprep.subr.bf16.mxu0 0
        %5568 = vmatpush1.bf16.xpose.msra.mxu0 0
        %5569 = vmatprep.subr.bf16.mxu0 0
        %5570 = vmatpush1.bf16.xpose.msra.mxu0 0
        %5571 = vmatprep.subr.bf16.mxu0 0
        %5572 = vmatpush1.bf16.xpose.msra.mxu0 0
        %5573 = vmatprep.subr.bf16.mxu0 0
        %5574 = vmatpush1.bf16.xpose.msra.mxu0 0
        %5575 = vmatprep.subr.bf16.mxu0 0
        %5576 = vmatpush1.bf16.xpose.msra.mxu0 0
        %5577 = vmatprep.subr.bf16.mxu0 0
        %5578 = vmatpush1.bf16.xpose.msra.mxu0 0
        %5579 = vmatprep.subr.bf16.mxu0 0
        %5580 = vmatpush1.bf16.xpose.msra.mxu0 0
        %5581 = vmatprep.subr.bf16.mxu0 0
        %5582 = vmatpush1.bf16.xpose.msra.mxu0 0
        %5583 = vmatprep.subr.bf16.mxu0 0
        %5584 = vmatpush1.bf16.xpose.msra.mxu0 0
        %5585 = vmatprep.mubr.bf16.mxu0 0
        %5586 = vmatmul.mubr.bf16.gmra.mrb[0].mxu0 %v5542
        %v5587 = vpop.f32.mrb[0].mxu0
        %v5588 = vadd.f32 %v3714, %v5587
        %v5589 = vpop.f32.mrb[0].mxu0
        %v5590 = vpop.f32.mrb[0].mxu0
        %v5591 = vadd.f32 %v3715, %v5590
        %v5592 = vpop.f32.mrb[0].mxu0
        %5593 = vmatprep.mubr.bf16.mxu0 0
        %5594 = vmatmul.mubr.bf16.gmra.mrb[0].mxu0 %v5545
        %v5595 = vpop.f32.mrb[0].mxu0
        %v5596 = vadd.f32 %v3716, %v5595
        %v5597 = vpop.f32.mrb[0].mxu0
        %v5598 = vpop.f32.mrb[0].mxu0
        %v5599 = vadd.f32 %v3717, %v5598
        %v5600 = vpop.f32.mrb[0].mxu0
        %5601 = vdwg.mxu0
        %v5602 = vsel %vm3853, %v5515, -inf
        %5603 = vmax.xlane.f32.xlu0 %v5602
        %v5604 = vpop.xlane.xlu0 %5603
        %v5605 = vsel %vm3853, %v5518, -inf
        %5606 = vmax.xlane.f32.xlu0 %v5605
        %v5607 = vpop.xlane.xlu0 %5606
        %v5608 = vsel %vm3853, %v5523, -inf
        %5609 = vmax.xlane.f32.xlu0 %v5608
        %v5610 = vpop.xlane.xlu0 %5609
        %v5611 = vsel %vm3853, %v5526, -inf
        %5612 = vmax.xlane.f32.xlu0 %v5611
        %v5613 = vpop.xlane.xlu0 %5612
        %v5614 = vsel %vm3853, %v5588, -inf
        %5615 = vmax.xlane.f32.xlu0 %v5614
        %v5616 = vpop.xlane.xlu0 %5615
        %v5617 = vsel %vm3853, %v5591, -inf
        %5618 = vmax.xlane.f32.xlu0 %v5617
        %v5619 = vpop.xlane.xlu0 %5618
        %v5620 = vsel %vm3853, %v5596, -inf
        %5621 = vmax.xlane.f32.xlu0 %v5620
        %v5622 = vpop.xlane.xlu0 %5621
        %v5623 = vsel %vm3853, %v5599, -inf
        %5624 = vmax.xlane.f32.xlu0 %v5623
        %v5625 = vpop.xlane.xlu0 %5624
        %v5626 = vsub.f32 %v5515, %v5604
        %v5627 = vsub.f32 %v5518, %v5607
        %v5628 = vsub.f32 %v5523, %v5610
        %v5629 = vsub.f32 %v5526, %v5613
        %v5630 = vsub.f32 %v5588, %v5616
        %v5631 = vsub.f32 %v5591, %v5619
        %v5632 = vsub.f32 %v5596, %v5622
        %v5633 = vsub.f32 %v5599, %v5625
        %v5634 = vmul.f32 %v5626, 1.442695
        %v5635 = vpow.pop %v5634
        %v5636 = vmul.f32 %v5627, 1.442695
        %v5637 = vpow.pop %v5636
        %v5638 = vmul.f32 %v5628, 1.442695
        %v5639 = vpow.pop %v5638
        %v5640 = vmul.f32 %v5629, 1.442695
        %v5641 = vpow.pop %v5640
        %v5642 = vmul.f32 %v5630, 1.442695
        %v5643 = vpow.pop %v5642
        %v5644 = vmul.f32 %v5631, 1.442695
        %v5645 = vpow.pop %v5644
        %v5646 = vmul.f32 %v5632, 1.442695
        %v5647 = vpow.pop %v5646
        %v5648 = vmul.f32 %v5633, 1.442695
        %v5649 = vpow.pop %v5648
        %v5650 = vsel %vm3853, %v5635, 0.0
        %5651 = vadd.xlane.f32.xlu0 %v5650
        %v5652 = vpop.xlane.xlu0 %5651
        %v5653 = vsel %vm3853, %v5637, 0.0
        %5654 = vadd.xlane.f32.xlu0 %v5653
        %v5655 = vpop.xlane.xlu0 %5654
        %v5656 = vsel %vm3853, %v5639, 0.0
        %5657 = vadd.xlane.f32.xlu0 %v5656
        %v5658 = vpop.xlane.xlu0 %5657
        %v5659 = vsel %vm3853, %v5641, 0.0
        %5660 = vadd.xlane.f32.xlu0 %v5659
        %v5661 = vpop.xlane.xlu0 %5660
        %v5662 = vsel %vm3853, %v5643, 0.0
        %5663 = vadd.xlane.f32.xlu0 %v5662
        %v5664 = vpop.xlane.xlu0 %5663
        %v5665 = vsel %vm3853, %v5645, 0.0
        %5666 = vadd.xlane.f32.xlu0 %v5665
        %v5667 = vpop.xlane.xlu0 %5666
        %v5668 = vsel %vm3853, %v5647, 0.0
        %5669 = vadd.xlane.f32.xlu0 %v5668
        %v5670 = vpop.xlane.xlu0 %5669
        %v5671 = vsel %vm3853, %v5649, 0.0
        %5672 = vadd.xlane.f32.xlu0 %v5671
        %v5673 = vpop.xlane.xlu0 %5672
        %v5674 = vrcp.pop %v5652
        %v5675 = vrcp.pop %v5655
        %v5676 = vrcp.pop %v5658
        %v5677 = vrcp.pop %v5661
        %v5678 = vrcp.pop %v5664
        %v5679 = vrcp.pop %v5667
        %v5680 = vrcp.pop %v5670
        %v5681 = vrcp.pop %v5673
        %v5682 = vmul.f32 %v5635, %v5674
        %v5683 = vmul.f32 %v5637, %v5675
        %v5684 = vmul.f32 %v5639, %v5676
        %v5685 = vmul.f32 %v5641, %v5677
        %v5686 = vmul.f32 %v5643, %v5678
        %v5687 = vmul.f32 %v5645, %v5679
        %v5688 = vmul.f32 %v5647, %v5680
        %v5689 = vmul.f32 %v5649, %v5681
        %v5690 = vpack.c.bf16 %v5683, %v5682
        %v5691 = vpack.c.bf16 %v5685, %v5684
        %v5692 = vpack.c.bf16 %v5687, %v5686
        %v5693 = vpack.c.bf16 %v5689, %v5688
        %5696 = vrot.lane.b32.xlu0 %v5128, 64
        %v5697 = vpop.permute.xlu0 %5696
        %5698 = vrot.lane.b32.xlu0 %v5129, 64
        %v5699 = vpop.permute.xlu0 %5698
        %v5703 = vsel %vm3853, %v5690, 0
        %v5706 = vsel %vm3853, %v5691, 0
        %5708 = vmatprep.subr.bf16.mxu0 0
        %5709 = vmatpush1.bf16.msra.mxu0 %v5697
        %5710 = vmatprep.subr.bf16.mxu0 0
        %5711 = vmatpush1.bf16.msra.mxu0 %v5699
        %5712 = vmatprep.subr.bf16.mxu0 0
        %5713 = vmatpush1.bf16.msra.mxu0 0
        %5714 = vmatprep.subr.bf16.mxu0 0
        %5715 = vmatpush1.bf16.msra.mxu0 0
        %5716 = vmatprep.subr.bf16.mxu0 0
        %5717 = vmatpush1.bf16.msra.mxu0 0
        %5718 = vmatprep.subr.bf16.mxu0 0
        %5719 = vmatpush1.bf16.msra.mxu0 0
        %5720 = vmatprep.subr.bf16.mxu0 0
        %5721 = vmatpush1.bf16.msra.mxu0 0
        %5722 = vmatprep.subr.bf16.mxu0 0
        %5723 = vmatpush1.bf16.msra.mxu0 0
        %5724 = vmatprep.subr.bf16.mxu0 0
        %5725 = vmatpush1.bf16.msra.mxu0 0
        %5726 = vmatprep.subr.bf16.mxu0 0
        %5727 = vmatpush1.bf16.msra.mxu0 0
        %5728 = vmatprep.subr.bf16.mxu0 0
        %5729 = vmatpush1.bf16.msra.mxu0 0
        %5730 = vmatprep.subr.bf16.mxu0 0
        %5731 = vmatpush1.bf16.msra.mxu0 0
        %5732 = vmatprep.subr.bf16.mxu0 0
        %5733 = vmatpush1.bf16.msra.mxu0 0
        %5734 = vmatprep.subr.bf16.mxu0 0
        %5735 = vmatpush1.bf16.msra.mxu0 0
        %5736 = vmatprep.subr.bf16.mxu0 0
        %5737 = vmatpush1.bf16.msra.mxu0 0
        %5738 = vmatprep.subr.bf16.mxu0 0
        %5739 = vmatpush1.bf16.msra.mxu0 0
        %5740 = vmatprep.mubr.bf16.mxu0 0
        %5741 = vmatmul.mubr.bf16.gmra.mrb[0].mxu0 %v5703
        %v5742 = vpop.f32.mrb[0].mxu0
        %v5743 = vadd.f32 0.0, %v5742
        %v5744 = vpop.f32.mrb[0].mxu0
        %v5745 = vpop.f32.mrb[0].mxu0
        %v5746 = vadd.f32 0.0, %v5745
        %v5747 = vpop.f32.mrb[0].mxu0
        %5748 = vmatprep.mubr.bf16.mxu0 0
        %5749 = vmatmul.mubr.bf16.gmra.mrb[0].mxu0 %v5706
        %v5750 = vpop.f32.mrb[0].mxu0
        %v5751 = vadd.f32 0.0, %v5750
        %v5752 = vpop.f32.mrb[0].mxu0
        %v5753 = vpop.f32.mrb[0].mxu0
        %v5754 = vadd.f32 0.0, %v5753
        %v5755 = vpop.f32.mrb[0].mxu0
        %5756 = vdwg.mxu0
        %5759 = vrot.lane.b32.xlu0 %v5130, 64
        %v5760 = vpop.permute.xlu0 %5759
        %5761 = vrot.lane.b32.xlu0 %v5131, 64
        %v5762 = vpop.permute.xlu0 %5761
        %v5766 = vsel %vm3853, %v5692, 0
        %v5769 = vsel %vm3853, %v5693, 0
        %5771 = vmatprep.subr.bf16.mxu0 0
        %5772 = vmatpush1.bf16.msra.mxu0 %v5760
        %5773 = vmatprep.subr.bf16.mxu0 0
        %5774 = vmatpush1.bf16.msra.mxu0 %v5762
        %5775 = vmatprep.subr.bf16.mxu0 0
        %5776 = vmatpush1.bf16.msra.mxu0 0
        %5777 = vmatprep.subr.bf16.mxu0 0
        %5778 = vmatpush1.bf16.msra.mxu0 0
        %5779 = vmatprep.subr.bf16.mxu0 0
        %5780 = vmatpush1.bf16.msra.mxu0 0
        %5781 = vmatprep.subr.bf16.mxu0 0
        %5782 = vmatpush1.bf16.msra.mxu0 0
        %5783 = vmatprep.subr.bf16.mxu0 0
        %5784 = vmatpush1.bf16.msra.mxu0 0
        %5785 = vmatprep.subr.bf16.mxu0 0
        %5786 = vmatpush1.bf16.msra.mxu0 0
        %5787 = vmatprep.subr.bf16.mxu0 0
        %5788 = vmatpush1.bf16.msra.mxu0 0
        %5789 = vmatprep.subr.bf16.mxu0 0
        %5790 = vmatpush1.bf16.msra.mxu0 0
        %5791 = vmatprep.subr.bf16.mxu0 0
        %5792 = vmatpush1.bf16.msra.mxu0 0
        %5793 = vmatprep.subr.bf16.mxu0 0
        %5794 = vmatpush1.bf16.msra.mxu0 0
        %5795 = vmatprep.subr.bf16.mxu0 0
        %5796 = vmatpush1.bf16.msra.mxu0 0
        %5797 = vmatprep.subr.bf16.mxu0 0
        %5798 = vmatpush1.bf16.msra.mxu0 0
        %5799 = vmatprep.subr.bf16.mxu0 0
        %5800 = vmatpush1.bf16.msra.mxu0 0
        %5801 = vmatprep.subr.bf16.mxu0 0
        %5802 = vmatpush1.bf16.msra.mxu0 0
        %5803 = vmatprep.mubr.bf16.mxu0 0
        %5804 = vmatmul.mubr.bf16.gmra.mrb[0].mxu0 %v5766
        %v5805 = vpop.f32.mrb[0].mxu0
        %v5806 = vadd.f32 0.0, %v5805
        %v5807 = vpop.f32.mrb[0].mxu0
        %v5808 = vpop.f32.mrb[0].mxu0
        %v5809 = vadd.f32 0.0, %v5808
        %v5810 = vpop.f32.mrb[0].mxu0
        %5811 = vmatprep.mubr.bf16.mxu0 0
        %5812 = vmatmul.mubr.bf16.gmra.mrb[0].mxu0 %v5769
        %v5813 = vpop.f32.mrb[0].mxu0
        %v5814 = vadd.f32 0.0, %v5813
        %v5815 = vpop.f32.mrb[0].mxu0
        %v5816 = vpop.f32.mrb[0].mxu0
        %v5817 = vadd.f32 0.0, %v5816
        %v5818 = vpop.f32.mrb[0].mxu0
        %5819 = vdwg.mxu0
        %5828 = vrot.lane.b32.xlu0 %v4343, 64
        %v5829 = vpop.permute.xlu0 %5828
        %5830 = vrot.lane.b32.xlu0 %v4346, 64
        %v5831 = vpop.permute.xlu0 %5830
        %5832 = vrot.lane.b32.xlu0 %v4351, 64
        %v5833 = vpop.permute.xlu0 %5832
        %5834 = vrot.lane.b32.xlu0 %v4354, 64
        %v5835 = vpop.permute.xlu0 %5834
        %5836 = vrot.lane.b32.xlu0 %v4406, 64
        %v5837 = vpop.permute.xlu0 %5836
        %5838 = vrot.lane.b32.xlu0 %v4409, 64
        %v5839 = vpop.permute.xlu0 %5838
        %5840 = vrot.lane.b32.xlu0 %v4414, 64
        %v5841 = vpop.permute.xlu0 %5840
        %5842 = vrot.lane.b32.xlu0 %v4417, 64
        %v5843 = vpop.permute.xlu0 %5842
        %5860 = vrot.lane.b32.xlu0 %v5043, 64
        %v5861 = vpop.permute.xlu0 %5860
        %5862 = vrot.lane.b32.xlu0 %v5046, 64
        %v5863 = vpop.permute.xlu0 %5862
        %5864 = vrot.lane.b32.xlu0 %v5051, 64
        %v5865 = vpop.permute.xlu0 %5864
        %5866 = vrot.lane.b32.xlu0 %v5054, 64
        %v5867 = vpop.permute.xlu0 %5866
        %5868 = vrot.lane.b32.xlu0 %v5106, 64
        %v5869 = vpop.permute.xlu0 %5868
        %5870 = vrot.lane.b32.xlu0 %v5109, 64
        %v5871 = vpop.permute.xlu0 %5870
        %5872 = vrot.lane.b32.xlu0 %v5114, 64
        %v5873 = vpop.permute.xlu0 %5872
        %5874 = vrot.lane.b32.xlu0 %v5117, 64
        %v5875 = vpop.permute.xlu0 %5874
        %5892 = vrot.lane.b32.xlu0 %v5743, 64
        %v5893 = vpop.permute.xlu0 %5892
        %5894 = vrot.lane.b32.xlu0 %v5746, 64
        %v5895 = vpop.permute.xlu0 %5894
        %5896 = vrot.lane.b32.xlu0 %v5751, 64
        %v5897 = vpop.permute.xlu0 %5896
        %5898 = vrot.lane.b32.xlu0 %v5754, 64
        %v5899 = vpop.permute.xlu0 %5898
        %5900 = vrot.lane.b32.xlu0 %v5806, 64
        %v5901 = vpop.permute.xlu0 %5900
        %5902 = vrot.lane.b32.xlu0 %v5809, 64
        %v5903 = vpop.permute.xlu0 %5902
        %5904 = vrot.lane.b32.xlu0 %v5814, 64
        %v5905 = vpop.permute.xlu0 %5904
        %5906 = vrot.lane.b32.xlu0 %v5817, 64
        %v5907 = vpop.permute.xlu0 %5906
        %v5916 = vsel %vm3730, %v3987, %v5829
        %v5917 = vsel %vm3730, %v3990, %v5831
        %v5918 = vsel %vm3730, %v3995, %v5833
        %v5919 = vsel %vm3730, %v3998, %v5835
        %v5920 = vsel %vm3730, %v4042, %v5837
        %v5921 = vsel %vm3730, %v4045, %v5839
        %v5922 = vsel %vm3730, %v4050, %v5841
        %v5923 = vsel %vm3730, %v4053, %v5843
        %v5924 = vsel %vm3730, %v4687, %v5861
        %v5925 = vsel %vm3730, %v4690, %v5863
        %v5926 = vsel %vm3730, %v4695, %v5865
        %v5927 = vsel %vm3730, %v4698, %v5867
        %v5928 = vsel %vm3730, %v4742, %v5869
        %v5929 = vsel %vm3730, %v4745, %v5871
        %v5930 = vsel %vm3730, %v4750, %v5873
        %v5931 = vsel %vm3730, %v4753, %v5875
        %v5932 = vsel %vm3730, %v5387, %v5893
        %v5933 = vsel %vm3730, %v5390, %v5895
        %v5934 = vsel %vm3730, %v5395, %v5897
        %v5935 = vsel %vm3730, %v5398, %v5899
        %v5936 = vsel %vm3730, %v5442, %v5901
        %v5937 = vsel %vm3730, %v5445, %v5903
        %v5938 = vsel %vm3730, %v5450, %v5905
        %v5939 = vsel %vm3730, %v5453, %v5907
        %v5940 = vpack.c.bf16 %v5917, %v5916
        %v5941 = vpack.c.bf16 %v5925, %v5924
        %v5942 = vpack.c.bf16 %v5933, %v5932
        %v5943 = vpack.c.bf16 %v5919, %v5918
        %v5944 = vpack.c.bf16 %v5927, %v5926
        %v5945 = vpack.c.bf16 %v5935, %v5934
        %v5946 = vpack.c.bf16 %v5921, %v5920
        %v5947 = vpack.c.bf16 %v5929, %v5928
        %v5948 = vpack.c.bf16 %v5937, %v5936
        %v5949 = vpack.c.bf16 %v5923, %v5922
        %v5950 = vpack.c.bf16 %v5931, %v5930
        %v5951 = vpack.c.bf16 %v5939, %v5938
        %v5952 = vld [vmem:[%s784] sm:$0xff]
        %v5953 = vld [vmem:[%s784 + $0x8] sm:$0xf]
        %v5954 = vld [vmem:[%s784 + $0xc] sm:$0xff]
        %v5955 = vld [vmem:[%s784 + $0x14] sm:$0xf]
        %v5956 = vld [vmem:[%s784 + $0x18] sm:$0xff]
        %v5957 = vld [vmem:[%s784 + $0x20] sm:$0xf]
        %v5958 = vld [vmem:[%s784 + $0x24] sm:$0xff]
        %v5959 = vld [vmem:[%s784 + $0x2c] sm:$0xf]
        %v5960 = vld [vmem:[%s784 + $0x30] sm:$0xff]
        %v5961 = vld [vmem:[%s784 + $0x38] sm:$0xf]
        %v5962 = vld [vmem:[%s784 + $0x3c] sm:$0xff]
        %v5963 = vld [vmem:[%s784 + $0x44] sm:$0xf]
        %v5964 = vld [vmem:[%s784 + $0x48] sm:$0xff]
        %v5965 = vld [vmem:[%s784 + $0x50] sm:$0xf]
        %v5966 = vld [vmem:[%s784 + $0x54] sm:$0xff]
        %v5967 = vld [vmem:[%s784 + $0x5c] sm:$0xf]
        %v5968 = vld [vmem:[%s784 + $0x60] sm:$0xff]
        %v5969 = vld [vmem:[%s784 + $0x68] sm:$0xf]
        %v5970 = vld [vmem:[%s784 + $0x6c] sm:$0xff]
        %v5971 = vld [vmem:[%s784 + $0x74] sm:$0xf]
        %v5972 = vld [vmem:[%s784 + $0x78] sm:$0xff]
        %v5973 = vld [vmem:[%s784 + $0x80] sm:$0xf]
        %v5974 = vld [vmem:[%s784 + $0x84] sm:$0xff]
        %v5975 = vld [vmem:[%s784 + $0x8c] sm:$0xf]
        %v5976 = vld [vmem:[%s784 + $0x90] sm:$0xff]
        %v5977 = vld [vmem:[%s784 + $0x98] sm:$0xf]
        %v5978 = vld [vmem:[%s784 + $0x9c] sm:$0xff]
        %v5979 = vld [vmem:[%s784 + $0xa4] sm:$0xf]
        %v5980 = vld [vmem:[%s784 + $0xa8] sm:$0xff]
        %v5981 = vld [vmem:[%s784 + $0xb0] sm:$0xf]
        %v5982 = vld [vmem:[%s784 + $0xb4] sm:$0xff]
        %v5983 = vld [vmem:[%s784 + $0xbc] sm:$0xf]
        %v5984 = vld [vmem:[%s784 + $0xc0] sm:$0xff]
        %v5985 = vld [vmem:[%s784 + $0xc8] sm:$0xf]
        %v5986 = vld [vmem:[%s784 + $0xcc] sm:$0xff]
        %v5987 = vld [vmem:[%s784 + $0xd4] sm:$0xf]
        %v5988 = vld [vmem:[%s784 + $0xd8] sm:$0xff]
        %v5989 = vld [vmem:[%s784 + $0xe0] sm:$0xf]
        %v5990 = vld [vmem:[%s784 + $0xe4] sm:$0xff]
        %v5991 = vld [vmem:[%s784 + $0xec] sm:$0xf]
        %v5992 = vld [vmem:[%s784 + $0xf0] sm:$0xff]
        %v5993 = vld [vmem:[%s784 + $0xf8] sm:$0xf]
        %v5994 = vld [vmem:[%s784 + $0xfc] sm:$0xff]
        %v5995 = vld [vmem:[%s784 + $0x104] sm:$0xf]
        %v5996 = vld [vmem:[%s784 + $0x108] sm:$0xff]
        %v5997 = vld [vmem:[%s784 + $0x110] sm:$0xf]
        %v5998 = vld [vmem:[%s784 + $0x114] sm:$0xff]
        %v5999 = vld [vmem:[%s784 + $0x11c] sm:$0xf]
        %v6000 = vld [vmem:[%s784 + $0x120] sm:$0xff]
        %v6001 = vld [vmem:[%s784 + $0x128] sm:$0xf]
        %v6002 = vld [vmem:[%s784 + $0x12c] sm:$0xff]
        %v6003 = vld [vmem:[%s784 + $0x134] sm:$0xf]
        %v6004 = vld [vmem:[%s784 + $0x138] sm:$0xff]
        %v6005 = vld [vmem:[%s784 + $0x140] sm:$0xf]
        %v6006 = vld [vmem:[%s784 + $0x144] sm:$0xff]
        %v6007 = vld [vmem:[%s784 + $0x14c] sm:$0xf]
        %v6008 = vld [vmem:[%s784 + $0x150] sm:$0xff]
        %v6009 = vld [vmem:[%s784 + $0x158] sm:$0xf]
        %v6010 = vld [vmem:[%s784 + $0x15c] sm:$0xff]
        %v6011 = vld [vmem:[%s784 + $0x164] sm:$0xf]
        %v6012 = vld [vmem:[%s784 + $0x168] sm:$0xff]
        %v6013 = vld [vmem:[%s784 + $0x170] sm:$0xf]
        %v6014 = vld [vmem:[%s784 + $0x174] sm:$0xff]
        %v6015 = vld [vmem:[%s784 + $0x17c] sm:$0xf]
        %v6016 = vld [vmem:[%s784 + $0x180] sm:$0xff]
        %v6017 = vld [vmem:[%s784 + $0x188] sm:$0xf]
        %v6018 = vld [vmem:[%s784 + $0x18c] sm:$0xff]
        %v6019 = vld [vmem:[%s784 + $0x194] sm:$0xf]
        %v6020 = vld [vmem:[%s784 + $0x198] sm:$0xff]
        %v6021 = vld [vmem:[%s784 + $0x1a0] sm:$0xf]
        %v6022 = vld [vmem:[%s784 + $0x1a4] sm:$0xff]
        %v6023 = vld [vmem:[%s784 + $0x1ac] sm:$0xf]
        %v6024 = vld [vmem:[%s784 + $0x1b0] sm:$0xff]
        %v6025 = vld [vmem:[%s784 + $0x1b8] sm:$0xf]
        %v6026 = vld [vmem:[%s784 + $0x1bc] sm:$0xff]
        %v6027 = vld [vmem:[%s784 + $0x1c4] sm:$0xf]
        %v6028 = vld [vmem:[%s784 + $0x1c8] sm:$0xff]
        %v6029 = vld [vmem:[%s784 + $0x1d0] sm:$0xf]
        %v6030 = vld [vmem:[%s784 + $0x1d4] sm:$0xff]
        %v6031 = vld [vmem:[%s784 + $0x1dc] sm:$0xf]
        %v6032 = vld [vmem:[%s784 + $0x1e0] sm:$0xff]
        %v6033 = vld [vmem:[%s784 + $0x1e8] sm:$0xf]
        %v6034 = vld [vmem:[%s784 + $0x1ec] sm:$0xff]
        %v6035 = vld [vmem:[%s784 + $0x1f4] sm:$0xf]
        %v6036 = vld [vmem:[%s784 + $0x1f8] sm:$0xff]
        %v6037 = vld [vmem:[%s784 + $0x200] sm:$0xf]
        %v6038 = vld [vmem:[%s784 + $0x204] sm:$0xff]
        %v6039 = vld [vmem:[%s784 + $0x20c] sm:$0xf]
        %v6040 = vld [vmem:[%s784 + $0x210] sm:$0xff]
        %v6041 = vld [vmem:[%s784 + $0x218] sm:$0xf]
        %v6042 = vld [vmem:[%s784 + $0x21c] sm:$0xff]
        %v6043 = vld [vmem:[%s784 + $0x224] sm:$0xf]
        %v6044 = vld [vmem:[%s784 + $0x228] sm:$0xff]
        %v6045 = vld [vmem:[%s784 + $0x230] sm:$0xf]
        %v6046 = vld [vmem:[%s784 + $0x234] sm:$0xff]
        %v6047 = vld [vmem:[%s784 + $0x23c] sm:$0xf]
        %s6048 = scalar_lea.vmem [#allocation15], %s1366
        %v6049 = vld [vmem:[%s6048] ss:$8 sm:$0x7]
        %v6051 = vlaneseq
        %v6052 = vshrl.u32 %v6051, 7
        %v6053 = vsub.s32 0, %v6052
        %v6054 = vrot.slane %v6049, %v6053
        %v6055 = vlaneseq
        %v6056 = vshrl.u32 %v6055, 7
        %v6057 = vsub.s32 1, %v6056
        %v6058 = vrot.slane %v6049, %v6057
        %v6059 = vlaneseq
        %v6060 = vshrl.u32 %v6059, 7
        %v6061 = vsub.s32 2, %v6060
        %v6062 = vrot.slane %v6049, %v6061
        %v6162 = vunpack.c.l.b16 %v5952
        %v6163 = vunpack.c.h.b16 %v5952
        %v6164 = vunpack.c.l.b16 %v5953
        %v6165 = vunpack.c.l.b16 %v5954
        %v6166 = vunpack.c.h.b16 %v5954
        %v6167 = vunpack.c.l.b16 %v5955
        %v6168 = vunpack.c.l.b16 %v5956
        %v6169 = vunpack.c.h.b16 %v5956
        %v6170 = vunpack.c.l.b16 %v5957
        %v6171 = vunpack.c.l.b16 %v5958
        %v6172 = vunpack.c.h.b16 %v5958
        %v6173 = vunpack.c.l.b16 %v5959
        %v6174 = vunpack.c.l.b16 %v5960
        %v6175 = vunpack.c.h.b16 %v5960
        %v6176 = vunpack.c.l.b16 %v5961
        %v6177 = vunpack.c.l.b16 %v5962
        %v6178 = vunpack.c.h.b16 %v5962
        %v6179 = vunpack.c.l.b16 %v5963
        %v6180 = vunpack.c.l.b16 %v5964
        %v6181 = vunpack.c.h.b16 %v5964
        %v6182 = vunpack.c.l.b16 %v5965
        %v6183 = vunpack.c.l.b16 %v5966
        %v6184 = vunpack.c.h.b16 %v5966
        %v6185 = vunpack.c.l.b16 %v5967
        %v6186 = vunpack.c.l.b16 %v5968
        %v6187 = vunpack.c.h.b16 %v5968
        %v6188 = vunpack.c.l.b16 %v5969
        %v6189 = vunpack.c.l.b16 %v5970
        %v6190 = vunpack.c.h.b16 %v5970
        %v6191 = vunpack.c.l.b16 %v5971
        %v6192 = vunpack.c.l.b16 %v5972
        %v6193 = vunpack.c.h.b16 %v5972
        %v6194 = vunpack.c.l.b16 %v5973
        %v6195 = vunpack.c.l.b16 %v5974
        %v6196 = vunpack.c.h.b16 %v5974
        %v6197 = vunpack.c.l.b16 %v5975
        %v6198 = vunpack.c.l.b16 %v5976
        %v6199 = vunpack.c.h.b16 %v5976
        %v6200 = vunpack.c.l.b16 %v5977
        %v6201 = vunpack.c.l.b16 %v5978
        %v6202 = vunpack.c.h.b16 %v5978
        %v6203 = vunpack.c.l.b16 %v5979
        %v6204 = vunpack.c.l.b16 %v5980
        %v6205 = vunpack.c.h.b16 %v5980
        %v6206 = vunpack.c.l.b16 %v5981
        %v6207 = vunpack.c.l.b16 %v5982
        %v6208 = vunpack.c.h.b16 %v5982
        %v6209 = vunpack.c.l.b16 %v5983
        %v6210 = vunpack.c.l.b16 %v5984
        %v6211 = vunpack.c.h.b16 %v5984
        %v6212 = vunpack.c.l.b16 %v5985
        %v6213 = vunpack.c.l.b16 %v5986
        %v6214 = vunpack.c.h.b16 %v5986
        %v6215 = vunpack.c.l.b16 %v5987
        %v6216 = vunpack.c.l.b16 %v5988
        %v6217 = vunpack.c.h.b16 %v5988
        %v6218 = vunpack.c.l.b16 %v5989
        %v6219 = vunpack.c.l.b16 %v5990
        %v6220 = vunpack.c.h.b16 %v5990
        %v6221 = vunpack.c.l.b16 %v5991
        %v6222 = vunpack.c.l.b16 %v5992
        %v6223 = vunpack.c.h.b16 %v5992
        %v6224 = vunpack.c.l.b16 %v5993
        %v6225 = vunpack.c.l.b16 %v5994
        %v6226 = vunpack.c.h.b16 %v5994
        %v6227 = vunpack.c.l.b16 %v5995
        %v6228 = vunpack.c.l.b16 %v5996
        %v6229 = vunpack.c.h.b16 %v5996
        %v6230 = vunpack.c.l.b16 %v5997
        %v6231 = vunpack.c.l.b16 %v5998
        %v6232 = vunpack.c.h.b16 %v5998
        %v6233 = vunpack.c.l.b16 %v5999
        %v6234 = vunpack.c.l.b16 %v6000
        %v6235 = vunpack.c.h.b16 %v6000
        %v6236 = vunpack.c.l.b16 %v6001
        %v6237 = vunpack.c.l.b16 %v6002
        %v6238 = vunpack.c.h.b16 %v6002
        %v6239 = vunpack.c.l.b16 %v6003
        %v6240 = vunpack.c.l.b16 %v6004
        %v6241 = vunpack.c.h.b16 %v6004
        %v6242 = vunpack.c.l.b16 %v6005
        %v6243 = vunpack.c.l.b16 %v6006
        %v6244 = vunpack.c.h.b16 %v6006
        %v6245 = vunpack.c.l.b16 %v6007
        %v6246 = vunpack.c.l.b16 %v6008
        %v6247 = vunpack.c.h.b16 %v6008
        %v6248 = vunpack.c.l.b16 %v6009
        %v6249 = vunpack.c.l.b16 %v6010
        %v6250 = vunpack.c.h.b16 %v6010
        %v6251 = vunpack.c.l.b16 %v6011
        %v6252 = vunpack.c.l.b16 %v6012
        %v6253 = vunpack.c.h.b16 %v6012
        %v6254 = vunpack.c.l.b16 %v6013
        %v6255 = vunpack.c.l.b16 %v6014
        %v6256 = vunpack.c.h.b16 %v6014
        %v6257 = vunpack.c.l.b16 %v6015
        %v6258 = vunpack.c.l.b16 %v6016
        %v6259 = vunpack.c.h.b16 %v6016
        %v6260 = vunpack.c.l.b16 %v6017
        %v6261 = vunpack.c.l.b16 %v6018
        %v6262 = vunpack.c.h.b16 %v6018
        %v6263 = vunpack.c.l.b16 %v6019
        %v6264 = vunpack.c.l.b16 %v6020
        %v6265 = vunpack.c.h.b16 %v6020
        %v6266 = vunpack.c.l.b16 %v6021
        %v6267 = vunpack.c.l.b16 %v6022
        %v6268 = vunpack.c.h.b16 %v6022
        %v6269 = vunpack.c.l.b16 %v6023
        %v6270 = vunpack.c.l.b16 %v6024
        %v6271 = vunpack.c.h.b16 %v6024
        %v6272 = vunpack.c.l.b16 %v6025
        %v6273 = vunpack.c.l.b16 %v6026
        %v6274 = vunpack.c.h.b16 %v6026
        %v6275 = vunpack.c.l.b16 %v6027
        %v6276 = vunpack.c.l.b16 %v6028
        %v6277 = vunpack.c.h.b16 %v6028
        %v6278 = vunpack.c.l.b16 %v6029
        %v6279 = vunpack.c.l.b16 %v6030
        %v6280 = vunpack.c.h.b16 %v6030
        %v6281 = vunpack.c.l.b16 %v6031
        %v6282 = vunpack.c.l.b16 %v6032
        %v6283 = vunpack.c.h.b16 %v6032
        %v6284 = vunpack.c.l.b16 %v6033
        %v6285 = vunpack.c.l.b16 %v6034
        %v6286 = vunpack.c.h.b16 %v6034
        %v6287 = vunpack.c.l.b16 %v6035
        %v6288 = vunpack.c.l.b16 %v6036
        %v6289 = vunpack.c.h.b16 %v6036
        %v6290 = vunpack.c.l.b16 %v6037
        %v6291 = vunpack.c.l.b16 %v6038
        %v6292 = vunpack.c.h.b16 %v6038
        %v6293 = vunpack.c.l.b16 %v6039
        %v6294 = vunpack.c.l.b16 %v6040
        %v6295 = vunpack.c.h.b16 %v6040
        %v6296 = vunpack.c.l.b16 %v6041
        %v6297 = vunpack.c.l.b16 %v6042
        %v6298 = vunpack.c.h.b16 %v6042
        %v6299 = vunpack.c.l.b16 %v6043
        %v6300 = vunpack.c.l.b16 %v6044
        %v6301 = vunpack.c.h.b16 %v6044
        %v6302 = vunpack.c.l.b16 %v6045
        %v6303 = vunpack.c.l.b16 %v6046
        %v6304 = vunpack.c.h.b16 %v6046
        %v6305 = vunpack.c.l.b16 %v6047
        %v6306 = vpack.c.b16 %v6165, %v6162
        %v6307 = vpack.c.b16 %v6166, %v6163
        %v6308 = vpack.c.b16 %v6167, %v6164
        %v6309 = vpack.c.b16 %v6171, %v6168
        %v6310 = vpack.c.b16 %v6172, %v6169
        %v6311 = vpack.c.b16 %v6173, %v6170
        %v6312 = vpack.c.b16 %v6177, %v6174
        %v6313 = vpack.c.b16 %v6178, %v6175
        %v6314 = vpack.c.b16 %v6179, %v6176
        %v6315 = vpack.c.b16 %v6183, %v6180
        %v6316 = vpack.c.b16 %v6184, %v6181
        %v6317 = vpack.c.b16 %v6185, %v6182
        %v6318 = vpack.c.b16 %v6189, %v6186
        %v6319 = vpack.c.b16 %v6190, %v6187
        %v6320 = vpack.c.b16 %v6191, %v6188
        %v6321 = vpack.c.b16 %v6195, %v6192
        %v6322 = vpack.c.b16 %v6196, %v6193
        %v6323 = vpack.c.b16 %v6197, %v6194
        %v6324 = vpack.c.b16 %v6201, %v6198
        %v6325 = vpack.c.b16 %v6202, %v6199
        %v6326 = vpack.c.b16 %v6203, %v6200
        %v6327 = vpack.c.b16 %v6207, %v6204
        %v6328 = vpack.c.b16 %v6208, %v6205
        %v6329 = vpack.c.b16 %v6209, %v6206
        %v6330 = vpack.c.b16 %v6213, %v6210
        %v6331 = vpack.c.b16 %v6214, %v6211
        %v6332 = vpack.c.b16 %v6215, %v6212
        %v6333 = vpack.c.b16 %v6219, %v6216
        %v6334 = vpack.c.b16 %v6220, %v6217
        %v6335 = vpack.c.b16 %v6221, %v6218
        %v6336 = vpack.c.b16 %v6225, %v6222
        %v6337 = vpack.c.b16 %v6226, %v6223
        %v6338 = vpack.c.b16 %v6227, %v6224
        %v6339 = vpack.c.b16 %v6231, %v6228
        %v6340 = vpack.c.b16 %v6232, %v6229
        %v6341 = vpack.c.b16 %v6233, %v6230
        %v6342 = vpack.c.b16 %v6237, %v6234
        %v6343 = vpack.c.b16 %v6238, %v6235
        %v6344 = vpack.c.b16 %v6239, %v6236
        %v6345 = vpack.c.b16 %v6243, %v6240
        %v6346 = vpack.c.b16 %v6244, %v6241
        %v6347 = vpack.c.b16 %v6245, %v6242
        %v6348 = vpack.c.b16 %v6249, %v6246
        %v6349 = vpack.c.b16 %v6250, %v6247
        %v6350 = vpack.c.b16 %v6251, %v6248
        %v6351 = vpack.c.b16 %v6255, %v6252
        %v6352 = vpack.c.b16 %v6256, %v6253
        %v6353 = vpack.c.b16 %v6257, %v6254
        %v6354 = vpack.c.b16 %v6261, %v6258
        %v6355 = vpack.c.b16 %v6262, %v6259
        %v6356 = vpack.c.b16 %v6263, %v6260
        %v6357 = vpack.c.b16 %v6267, %v6264
        %v6358 = vpack.c.b16 %v6268, %v6265
        %v6359 = vpack.c.b16 %v6269, %v6266
        %v6360 = vpack.c.b16 %v6273, %v6270
        %v6361 = vpack.c.b16 %v6274, %v6271
        %v6362 = vpack.c.b16 %v6275, %v6272
        %v6363 = vpack.c.b16 %v6279, %v6276
        %v6364 = vpack.c.b16 %v6280, %v6277
        %v6365 = vpack.c.b16 %v6281, %v6278
        %v6366 = vpack.c.b16 %v6285, %v6282
        %v6367 = vpack.c.b16 %v6286, %v6283
        %v6368 = vpack.c.b16 %v6287, %v6284
        %v6369 = vpack.c.b16 %v6291, %v6288
        %v6370 = vpack.c.b16 %v6292, %v6289
        %v6371 = vpack.c.b16 %v6293, %v6290
        %v6372 = vpack.c.b16 %v6297, %v6294
        %v6373 = vpack.c.b16 %v6298, %v6295
        %v6374 = vpack.c.b16 %v6299, %v6296
        %v6375 = vpack.c.b16 %v6303, %v6300
        %v6376 = vpack.c.b16 %v6304, %v6301
        %v6377 = vpack.c.b16 %v6305, %v6302
        %6450 = vmatprep.subr.bf16.mxu0 %v6307
        %6451 = vmatpush1.bf16.msra.mxu0 %v6306
        %6452 = vmatprep.subr.bf16.mxu0 %v6310
        %6453 = vmatpush1.bf16.msra.mxu0 %v6309
        %6454 = vmatprep.subr.bf16.mxu0 %v6313
        %6455 = vmatpush1.bf16.msra.mxu0 %v6312
        %6456 = vmatprep.subr.bf16.mxu0 %v6316
        %6457 = vmatpush1.bf16.msra.mxu0 %v6315
        %6458 = vmatprep.subr.bf16.mxu0 %v6319
        %6459 = vmatpush1.bf16.msra.mxu0 %v6318
        %6460 = vmatprep.subr.bf16.mxu0 %v6322
        %6461 = vmatpush1.bf16.msra.mxu0 %v6321
        %6462 = vmatprep.subr.bf16.mxu0 %v6325
        %6463 = vmatpush1.bf16.msra.mxu0 %v6324
        %6464 = vmatprep.subr.bf16.mxu0 %v6328
        %6465 = vmatpush1.bf16.msra.mxu0 %v6327
        %6466 = vmatprep.subr.bf16.mxu0 %v6331
        %6467 = vmatpush1.bf16.msra.mxu0 %v6330
        %6468 = vmatprep.subr.bf16.mxu0 %v6334
        %6469 = vmatpush1.bf16.msra.mxu0 %v6333
        %6470 = vmatprep.subr.bf16.mxu0 %v6337
        %6471 = vmatpush1.bf16.msra.mxu0 %v6336
        %6472 = vmatprep.subr.bf16.mxu0 %v6340
        %6473 = vmatpush1.bf16.msra.mxu0 %v6339
        %6474 = vmatprep.subr.bf16.mxu0 %v6343
        %6475 = vmatpush1.bf16.msra.mxu0 %v6342
        %6476 = vmatprep.subr.bf16.mxu0 %v6346
        %6477 = vmatpush1.bf16.msra.mxu0 %v6345
        %6478 = vmatprep.subr.bf16.mxu0 %v6349
        %6479 = vmatpush1.bf16.msra.mxu0 %v6348
        %6480 = vmatprep.subr.bf16.mxu0 %v6352
        %6481 = vmatpush1.bf16.msra.mxu0 %v6351
        %6482 = vmatprep.mubr.bf16.mxu0 %v5941
        %6483 = vmatmul.mubr.bf16.gmra.mrb[0].mxu0 %v5940
        %v6484 = vpop.f32.mrb[0].mxu0
        %v6485 = vadd.f32 %v6054, %v6484
        %v6486 = vpop.f32.mrb[0].mxu0
        %v6487 = vadd.f32 %v6058, %v6486
        %v6488 = vpop.f32.mrb[0].mxu0
        %v6489 = vadd.f32 %v6054, %v6488
        %v6490 = vpop.f32.mrb[0].mxu0
        %v6491 = vadd.f32 %v6058, %v6490
        %6492 = vmatprep.mubr.bf16.mxu0 %v5944
        %6493 = vmatmul.mubr.bf16.gmra.mrb[0].mxu0 %v5943
        %v6494 = vpop.f32.mrb[0].mxu0
        %v6495 = vadd.f32 %v6054, %v6494
        %v6496 = vpop.f32.mrb[0].mxu0
        %v6497 = vadd.f32 %v6058, %v6496
        %v6498 = vpop.f32.mrb[0].mxu0
        %v6499 = vadd.f32 %v6054, %v6498
        %v6500 = vpop.f32.mrb[0].mxu0
        %v6501 = vadd.f32 %v6058, %v6500
        %6502 = vmatprep.mubr.bf16.mxu0 %v5947
        %6503 = vmatmul.mubr.bf16.gmra.mrb[0].mxu0 %v5946
        %v6504 = vpop.f32.mrb[0].mxu0
        %v6505 = vadd.f32 %v6054, %v6504
        %v6506 = vpop.f32.mrb[0].mxu0
        %v6507 = vadd.f32 %v6058, %v6506
        %v6508 = vpop.f32.mrb[0].mxu0
        %v6509 = vadd.f32 %v6054, %v6508
        %v6510 = vpop.f32.mrb[0].mxu0
        %v6511 = vadd.f32 %v6058, %v6510
        %6512 = vmatprep.mubr.bf16.mxu0 %v5950
        %6513 = vmatmul.mubr.bf16.gmra.mrb[0].mxu0 %v5949
        %v6514 = vpop.f32.mrb[0].mxu0
        %v6515 = vadd.f32 %v6054, %v6514
        %v6516 = vpop.f32.mrb[0].mxu0
        %v6517 = vadd.f32 %v6058, %v6516
        %v6518 = vpop.f32.mrb[0].mxu0
        %v6519 = vadd.f32 %v6054, %v6518
        %v6520 = vpop.f32.mrb[0].mxu0
        %v6521 = vadd.f32 %v6058, %v6520
        %6522 = vdwg.mxu0
        %6523 = vmatprep.subr.bf16.mxu0 %v6355
        %6524 = vmatpush1.bf16.msra.mxu0 %v6354
        %6525 = vmatprep.subr.bf16.mxu0 %v6358
        %6526 = vmatpush1.bf16.msra.mxu0 %v6357
        %6527 = vmatprep.subr.bf16.mxu0 %v6361
        %6528 = vmatpush1.bf16.msra.mxu0 %v6360
        %6529 = vmatprep.subr.bf16.mxu0 %v6364
        %6530 = vmatpush1.bf16.msra.mxu0 %v6363
        %6531 = vmatprep.subr.bf16.mxu0 %v6367
        %6532 = vmatpush1.bf16.msra.mxu0 %v6366
        %6533 = vmatprep.subr.bf16.mxu0 %v6370
        %6534 = vmatpush1.bf16.msra.mxu0 %v6369
        %6535 = vmatprep.subr.bf16.mxu0 %v6373
        %6536 = vmatpush1.bf16.msra.mxu0 %v6372
        %6537 = vmatprep.subr.bf16.mxu0 %v6376
        %6538 = vmatpush1.bf16.msra.mxu0 %v6375
        %6539 = vmatprep.subr.bf16.mxu0 0
        %6540 = vmatpush1.bf16.msra.mxu0 0
        %6541 = vmatprep.subr.bf16.mxu0 0
        %6542 = vmatpush1.bf16.msra.mxu0 0
        %6543 = vmatprep.subr.bf16.mxu0 0
        %6544 = vmatpush1.bf16.msra.mxu0 0
        %6545 = vmatprep.subr.bf16.mxu0 0
        %6546 = vmatpush1.bf16.msra.mxu0 0
        %6547 = vmatprep.subr.bf16.mxu0 0
        %6548 = vmatpush1.bf16.msra.mxu0 0
        %6549 = vmatprep.subr.bf16.mxu0 0
        %6550 = vmatpush1.bf16.msra.mxu0 0
        %6551 = vmatprep.subr.bf16.mxu0 0
        %6552 = vmatpush1.bf16.msra.mxu0 0
        %6553 = vmatprep.subr.bf16.mxu0 0
        %6554 = vmatpush1.bf16.msra.mxu0 0
        %6555 = vmatprep.mubr.bf16.mxu0 0
        %6556 = vmatmul.mubr.bf16.gmra.mrb[0].mxu0 %v5942
        %v6557 = vpop.f32.mrb[0].mxu0
        %v6558 = vadd.f32 %v6485, %v6557
        %v6559 = vpop.f32.mrb[0].mxu0
        %v6560 = vadd.f32 %v6487, %v6559
        %v6561 = vpop.f32.mrb[0].mxu0
        %v6562 = vadd.f32 %v6489, %v6561
        %v6563 = vpop.f32.mrb[0].mxu0
        %v6564 = vadd.f32 %v6491, %v6563
        %6565 = vmatprep.mubr.bf16.mxu0 0
        %6566 = vmatmul.mubr.bf16.gmra.mrb[0].mxu0 %v5945
        %v6567 = vpop.f32.mrb[0].mxu0
        %v6568 = vadd.f32 %v6495, %v6567
        %v6569 = vpop.f32.mrb[0].mxu0
        %v6570 = vadd.f32 %v6497, %v6569
        %v6571 = vpop.f32.mrb[0].mxu0
        %v6572 = vadd.f32 %v6499, %v6571
        %v6573 = vpop.f32.mrb[0].mxu0
        %v6574 = vadd.f32 %v6501, %v6573
        %6575 = vmatprep.mubr.bf16.mxu0 0
        %6576 = vmatmul.mubr.bf16.gmra.mrb[0].mxu0 %v5948
        %v6577 = vpop.f32.mrb[0].mxu0
        %v6578 = vadd.f32 %v6505, %v6577
        %v6579 = vpop.f32.mrb[0].mxu0
        %v6580 = vadd.f32 %v6507, %v6579
        %v6581 = vpop.f32.mrb[0].mxu0
        %v6582 = vadd.f32 %v6509, %v6581
        %v6583 = vpop.f32.mrb[0].mxu0
        %v6584 = vadd.f32 %v6511, %v6583
        %6585 = vmatprep.mubr.bf16.mxu0 0
        %6586 = vmatmul.mubr.bf16.gmra.mrb[0].mxu0 %v5951
        %v6587 = vpop.f32.mrb[0].mxu0
        %v6588 = vadd.f32 %v6515, %v6587
        %v6589 = vpop.f32.mrb[0].mxu0
        %v6590 = vadd.f32 %v6517, %v6589
        %v6591 = vpop.f32.mrb[0].mxu0
        %v6592 = vadd.f32 %v6519, %v6591
        %v6593 = vpop.f32.mrb[0].mxu0
        %v6594 = vadd.f32 %v6521, %v6593
        %6595 = vdwg.mxu0
        %6596 = vmatprep.subr.bf16.mxu0 0
        %6597 = vmatpush1.bf16.msra.mxu0 %v6308
        %6598 = vmatprep.subr.bf16.mxu0 0
        %6599 = vmatpush1.bf16.msra.mxu0 %v6311
        %6600 = vmatprep.subr.bf16.mxu0 0
        %6601 = vmatpush1.bf16.msra.mxu0 %v6314
        %6602 = vmatprep.subr.bf16.mxu0 0
        %6603 = vmatpush1.bf16.msra.mxu0 %v6317
        %6604 = vmatprep.subr.bf16.mxu0 0
        %6605 = vmatpush1.bf16.msra.mxu0 %v6320
        %6606 = vmatprep.subr.bf16.mxu0 0
        %6607 = vmatpush1.bf16.msra.mxu0 %v6323
        %6608 = vmatprep.subr.bf16.mxu0 0
        %6609 = vmatpush1.bf16.msra.mxu0 %v6326
        %6610 = vmatprep.subr.bf16.mxu0 0
        %6611 = vmatpush1.bf16.msra.mxu0 %v6329
        %6612 = vmatprep.subr.bf16.mxu0 0
        %6613 = vmatpush1.bf16.msra.mxu0 %v6332
        %6614 = vmatprep.subr.bf16.mxu0 0
        %6615 = vmatpush1.bf16.msra.mxu0 %v6335
        %6616 = vmatprep.subr.bf16.mxu0 0
        %6617 = vmatpush1.bf16.msra.mxu0 %v6338
        %6618 = vmatprep.subr.bf16.mxu0 0
        %6619 = vmatpush1.bf16.msra.mxu0 %v6341
        %6620 = vmatprep.subr.bf16.mxu0 0
        %6621 = vmatpush1.bf16.msra.mxu0 %v6344
        %6622 = vmatprep.subr.bf16.mxu0 0
        %6623 = vmatpush1.bf16.msra.mxu0 %v6347
        %6624 = vmatprep.subr.bf16.mxu0 0
        %6625 = vmatpush1.bf16.msra.mxu0 %v6350
        %6626 = vmatprep.subr.bf16.mxu0 0
        %6627 = vmatpush1.bf16.msra.mxu0 %v6353
        %6628 = vmatprep.mubr.bf16.mxu0 %v5941
        %6629 = vmatmul.mubr.bf16.gmra.mrb[0].mxu0 %v5940
        %v6630 = vpop.f32.mrb[0].mxu0
        %v6631 = vadd.f32 %v6062, %v6630
        %v6632 = vpop.f32.mrb[0].mxu0
        %v6633 = vpop.f32.mrb[0].mxu0
        %v6634 = vadd.f32 %v6062, %v6633
        %v6635 = vpop.f32.mrb[0].mxu0
        %6636 = vmatprep.mubr.bf16.mxu0 %v5944
        %6637 = vmatmul.mubr.bf16.gmra.mrb[0].mxu0 %v5943
        %v6638 = vpop.f32.mrb[0].mxu0
        %v6639 = vadd.f32 %v6062, %v6638
        %v6640 = vpop.f32.mrb[0].mxu0
        %v6641 = vpop.f32.mrb[0].mxu0
        %v6642 = vadd.f32 %v6062, %v6641
        %v6643 = vpop.f32.mrb[0].mxu0
        %6644 = vmatprep.mubr.bf16.mxu0 %v5947
        %6645 = vmatmul.mubr.bf16.gmra.mrb[0].mxu0 %v5946
        %v6646 = vpop.f32.mrb[0].mxu0
        %v6647 = vadd.f32 %v6062, %v6646
        %v6648 = vpop.f32.mrb[0].mxu0
        %v6649 = vpop.f32.mrb[0].mxu0
        %v6650 = vadd.f32 %v6062, %v6649
        %v6651 = vpop.f32.mrb[0].mxu0
        %6652 = vmatprep.mubr.bf16.mxu0 %v5950
        %6653 = vmatmul.mubr.bf16.gmra.mrb[0].mxu0 %v5949
        %v6654 = vpop.f32.mrb[0].mxu0
        %v6655 = vadd.f32 %v6062, %v6654
        %v6656 = vpop.f32.mrb[0].mxu0
        %v6657 = vpop.f32.mrb[0].mxu0
        %v6658 = vadd.f32 %v6062, %v6657
        %v6659 = vpop.f32.mrb[0].mxu0
        %6660 = vdwg.mxu0
        %6661 = vmatprep.subr.bf16.mxu0 0
        %6662 = vmatpush1.bf16.msra.mxu0 %v6356
        %6663 = vmatprep.subr.bf16.mxu0 0
        %6664 = vmatpush1.bf16.msra.mxu0 %v6359
        %6665 = vmatprep.subr.bf16.mxu0 0
        %6666 = vmatpush1.bf16.msra.mxu0 %v6362
        %6667 = vmatprep.subr.bf16.mxu0 0
        %6668 = vmatpush1.bf16.msra.mxu0 %v6365
        %6669 = vmatprep.subr.bf16.mxu0 0
        %6670 = vmatpush1.bf16.msra.mxu0 %v6368
        %6671 = vmatprep.subr.bf16.mxu0 0
        %6672 = vmatpush1.bf16.msra.mxu0 %v6371
        %6673 = vmatprep.subr.bf16.mxu0 0
        %6674 = vmatpush1.bf16.msra.mxu0 %v6374
        %6675 = vmatprep.subr.bf16.mxu0 0
        %6676 = vmatpush1.bf16.msra.mxu0 %v6377
        %6677 = vmatprep.subr.bf16.mxu0 0
        %6678 = vmatpush1.bf16.msra.mxu0 0
        %6679 = vmatprep.subr.bf16.mxu0 0
        %6680 = vmatpush1.bf16.msra.mxu0 0
        %6681 = vmatprep.subr.bf16.mxu0 0
        %6682 = vmatpush1.bf16.msra.mxu0 0
        %6683 = vmatprep.subr.bf16.mxu0 0
        %6684 = vmatpush1.bf16.msra.mxu0 0
        %6685 = vmatprep.subr.bf16.mxu0 0
        %6686 = vmatpush1.bf16.msra.mxu0 0
        %6687 = vmatprep.subr.bf16.mxu0 0
        %6688 = vmatpush1.bf16.msra.mxu0 0
        %6689 = vmatprep.subr.bf16.mxu0 0
        %6690 = vmatpush1.bf16.msra.mxu0 0
        %6691 = vmatprep.subr.bf16.mxu0 0
        %6692 = vmatpush1.bf16.msra.mxu0 0
        %6693 = vmatprep.mubr.bf16.mxu0 0
        %6694 = vmatmul.mubr.bf16.gmra.mrb[0].mxu0 %v5942
        %v6695 = vpop.f32.mrb[0].mxu0
        %v6696 = vadd.f32 %v6631, %v6695
        %v6697 = vpop.f32.mrb[0].mxu0
        %v6698 = vpop.f32.mrb[0].mxu0
        %v6699 = vadd.f32 %v6634, %v6698
        %v6700 = vpop.f32.mrb[0].mxu0
        %6701 = vmatprep.mubr.bf16.mxu0 0
        %6702 = vmatmul.mubr.bf16.gmra.mrb[0].mxu0 %v5945
        %v6703 = vpop.f32.mrb[0].mxu0
        %v6704 = vadd.f32 %v6639, %v6703
        %v6705 = vpop.f32.mrb[0].mxu0
        %v6706 = vpop.f32.mrb[0].mxu0
        %v6707 = vadd.f32 %v6642, %v6706
        %v6708 = vpop.f32.mrb[0].mxu0
        %6709 = vmatprep.mubr.bf16.mxu0 0
        %6710 = vmatmul.mubr.bf16.gmra.mrb[0].mxu0 %v5948
        %v6711 = vpop.f32.mrb[0].mxu0
        %v6712 = vadd.f32 %v6647, %v6711
        %v6713 = vpop.f32.mrb[0].mxu0
        %v6714 = vpop.f32.mrb[0].mxu0
        %v6715 = vadd.f32 %v6650, %v6714
        %v6716 = vpop.f32.mrb[0].mxu0
        %6717 = vmatprep.mubr.bf16.mxu0 0
        %6718 = vmatmul.mubr.bf16.gmra.mrb[0].mxu0 %v5951
        %v6719 = vpop.f32.mrb[0].mxu0
        %v6720 = vadd.f32 %v6655, %v6719
        %v6721 = vpop.f32.mrb[0].mxu0
        %v6722 = vpop.f32.mrb[0].mxu0
        %v6723 = vadd.f32 %v6658, %v6722
        %v6724 = vpop.f32.mrb[0].mxu0
        %6725 = vdwg.mxu0
        %v6726 = vadd.f32 %v1336, %v6558
        %v6727 = vadd.f32 %v1337, %v6560
        %v6728 = vadd.f32 %v1338, %v6696
        %v6729 = vadd.f32 %v1339, %v6562
        %v6730 = vadd.f32 %v1340, %v6564
        %v6731 = vadd.f32 %v1341, %v6699
        %v6732 = vadd.f32 %v1342, %v6568
        %v6733 = vadd.f32 %v1343, %v6570
        %v6734 = vadd.f32 %v1344, %v6704
        %v6735 = vadd.f32 %v1345, %v6572
        %v6736 = vadd.f32 %v1346, %v6574
        %v6737 = vadd.f32 %v1347, %v6707
        %v6738 = vadd.f32 %v1348, %v6578
        %v6739 = vadd.f32 %v1349, %v6580
        %v6740 = vadd.f32 %v1350, %v6712
        %v6741 = vadd.f32 %v1351, %v6582
        %v6742 = vadd.f32 %v1352, %v6584
        %v6743 = vadd.f32 %v1353, %v6715
        %v6744 = vadd.f32 %v1354, %v6588
        %v6745 = vadd.f32 %v1355, %v6590
        %v6746 = vadd.f32 %v1356, %v6720
        %v6747 = vadd.f32 %v1357, %v6592
        %v6748 = vadd.f32 %v1358, %v6594
        %v6749 = vadd.f32 %v1359, %v6723
        %s6750 = scalar_lea.vmem [#allocation17], %s1366
        %v6751 = vld [vmem:[%s6750] ss:$8 sm:$0x7]
        %s6752 = scalar_lea.vmem [#allocation18], %s1366
        %v6753 = vld [vmem:[%s6752] ss:$8 sm:$0x7]
        %v6754 = vadd.f32 %v6726, %v6727
        %v6755 = vadd.f32 %v6754, %v6728
        %6756 = vadd.xlane.f32.xlu0 %v6755
        %v6757 = vpop.xlane.xlu0 %6756
        %v6758 = vadd.f32 %v6729, %v6730
        %v6759 = vadd.f32 %v6758, %v6731
        %6760 = vadd.xlane.f32.xlu0 %v6759
        %v6761 = vpop.xlane.xlu0 %6760
        %v6762 = vadd.f32 %v6732, %v6733
        %v6763 = vadd.f32 %v6762, %v6734
        %6764 = vadd.xlane.f32.xlu0 %v6763
        %v6765 = vpop.xlane.xlu0 %6764
        %v6766 = vadd.f32 %v6735, %v6736
        %v6767 = vadd.f32 %v6766, %v6737
        %6768 = vadd.xlane.f32.xlu0 %v6767
        %v6769 = vpop.xlane.xlu0 %6768
        %v6770 = vadd.f32 %v6738, %v6739
        %v6771 = vadd.f32 %v6770, %v6740
        %6772 = vadd.xlane.f32.xlu0 %v6771
        %v6773 = vpop.xlane.xlu0 %6772
        %v6774 = vadd.f32 %v6741, %v6742
        %v6775 = vadd.f32 %v6774, %v6743
        %6776 = vadd.xlane.f32.xlu0 %v6775
        %v6777 = vpop.xlane.xlu0 %6776
        %v6778 = vadd.f32 %v6744, %v6745
        %v6779 = vadd.f32 %v6778, %v6746
        %6780 = vadd.xlane.f32.xlu0 %v6779
        %v6781 = vpop.xlane.xlu0 %6780
        %v6782 = vadd.f32 %v6747, %v6748
        %v6783 = vadd.f32 %v6782, %v6749
        %6784 = vadd.xlane.f32.xlu0 %v6783
        %v6785 = vpop.xlane.xlu0 %6784
        %v6786 = vmul.f32 %v6757, %v1403
        %v6787 = vmul.f32 %v6761, %v1403
        %v6788 = vmul.f32 %v6765, %v1403
        %v6789 = vmul.f32 %v6769, %v1403
        %v6790 = vmul.f32 %v6773, %v1403
        %v6791 = vmul.f32 %v6777, %v1403
        %v6792 = vmul.f32 %v6781, %v1403
        %v6793 = vmul.f32 %v6785, %v1403
        %v6794 = vsub.f32 %v6726, %v6786
        %v6795 = vsub.f32 %v6727, %v6786
        %v6796 = vsub.f32 %v6728, %v6786
        %v6797 = vsub.f32 %v6729, %v6787
        %v6798 = vsub.f32 %v6730, %v6787
        %v6799 = vsub.f32 %v6731, %v6787
        %v6800 = vsub.f32 %v6732, %v6788
        %v6801 = vsub.f32 %v6733, %v6788
        %v6802 = vsub.f32 %v6734, %v6788
        %v6803 = vsub.f32 %v6735, %v6789
        %v6804 = vsub.f32 %v6736, %v6789
        %v6805 = vsub.f32 %v6737, %v6789
        %v6806 = vsub.f32 %v6738, %v6790
        %v6807 = vsub.f32 %v6739, %v6790
        %v6808 = vsub.f32 %v6740, %v6790
        %v6809 = vsub.f32 %v6741, %v6791
        %v6810 = vsub.f32 %v6742, %v6791
        %v6811 = vsub.f32 %v6743, %v6791
        %v6812 = vsub.f32 %v6744, %v6792
        %v6813 = vsub.f32 %v6745, %v6792
        %v6814 = vsub.f32 %v6746, %v6792
        %v6815 = vsub.f32 %v6747, %v6793
        %v6816 = vsub.f32 %v6748, %v6793
        %v6817 = vsub.f32 %v6749, %v6793
        %v6818 = vmul.f32 %v6794, %v6794
        %v6819 = vmul.f32 %v6795, %v6795
        %v6820 = vmul.f32 %v6796, %v6796
        %v6821 = vmul.f32 %v6797, %v6797
        %v6822 = vmul.f32 %v6798, %v6798
        %v6823 = vmul.f32 %v6799, %v6799
        %v6824 = vmul.f32 %v6800, %v6800
        %v6825 = vmul.f32 %v6801, %v6801
        %v6826 = vmul.f32 %v6802, %v6802
        %v6827 = vmul.f32 %v6803, %v6803
        %v6828 = vmul.f32 %v6804, %v6804
        %v6829 = vmul.f32 %v6805, %v6805
        %v6830 = vmul.f32 %v6806, %v6806
        %v6831 = vmul.f32 %v6807, %v6807
        %v6832 = vmul.f32 %v6808, %v6808
        %v6833 = vmul.f32 %v6809, %v6809
        %v6834 = vmul.f32 %v6810, %v6810
        %v6835 = vmul.f32 %v6811, %v6811
        %v6836 = vmul.f32 %v6812, %v6812
        %v6837 = vmul.f32 %v6813, %v6813
        %v6838 = vmul.f32 %v6814, %v6814
        %v6839 = vmul.f32 %v6815, %v6815
        %v6840 = vmul.f32 %v6816, %v6816
        %v6841 = vmul.f32 %v6817, %v6817
        %v6842 = vadd.f32 %v6818, %v6819
        %v6843 = vadd.f32 %v6842, %v6820
        %6844 = vadd.xlane.f32.xlu0 %v6843
        %v6845 = vpop.xlane.xlu0 %6844
        %v6846 = vadd.f32 %v6821, %v6822
        %v6847 = vadd.f32 %v6846, %v6823
        %6848 = vadd.xlane.f32.xlu0 %v6847
        %v6849 = vpop.xlane.xlu0 %6848
        %v6850 = vadd.f32 %v6824, %v6825
        %v6851 = vadd.f32 %v6850, %v6826
        %6852 = vadd.xlane.f32.xlu0 %v6851
        %v6853 = vpop.xlane.xlu0 %6852
        %v6854 = vadd.f32 %v6827, %v6828
        %v6855 = vadd.f32 %v6854, %v6829
        %6856 = vadd.xlane.f32.xlu0 %v6855
        %v6857 = vpop.xlane.xlu0 %6856
        %v6858 = vadd.f32 %v6830, %v6831
        %v6859 = vadd.f32 %v6858, %v6832
        %6860 = vadd.xlane.f32.xlu0 %v6859
        %v6861 = vpop.xlane.xlu0 %6860
        %v6862 = vadd.f32 %v6833, %v6834
        %v6863 = vadd.f32 %v6862, %v6835
        %6864 = vadd.xlane.f32.xlu0 %v6863
        %v6865 = vpop.xlane.xlu0 %6864
        %v6866 = vadd.f32 %v6836, %v6837
        %v6867 = vadd.f32 %v6866, %v6838
        %6868 = vadd.xlane.f32.xlu0 %v6867
        %v6869 = vpop.xlane.xlu0 %6868
        %v6870 = vadd.f32 %v6839, %v6840
        %v6871 = vadd.f32 %v6870, %v6841
        %6872 = vadd.xlane.f32.xlu0 %v6871
        %v6873 = vpop.xlane.xlu0 %6872
        %v6874 = vmul.f32 %v6845, %v1403
        %v6875 = vmul.f32 %v6849, %v1403
        %v6876 = vmul.f32 %v6853, %v1403
        %v6877 = vmul.f32 %v6857, %v1403
        %v6878 = vmul.f32 %v6861, %v1403
        %v6879 = vmul.f32 %v6865, %v1403
        %v6880 = vmul.f32 %v6869, %v1403
        %v6881 = vmul.f32 %v6873, %v1403
        %v6882 = vadd.f32 %v6874, 1e-05
        %v6883 = vadd.f32 %v6875, 1e-05
        %v6884 = vadd.f32 %v6876, 1e-05
        %v6885 = vadd.f32 %v6877, 1e-05
        %v6886 = vadd.f32 %v6878, 1e-05
        %v6887 = vadd.f32 %v6879, 1e-05
        %v6888 = vadd.f32 %v6880, 1e-05
        %v6889 = vadd.f32 %v6881, 1e-05
        %v6890 = vrsqrt.pop %v6882
        %v6891 = vrsqrt.pop %v6883
        %v6892 = vrsqrt.pop %v6884
        %v6893 = vrsqrt.pop %v6885
        %v6894 = vrsqrt.pop %v6886
        %v6895 = vrsqrt.pop %v6887
        %v6896 = vrsqrt.pop %v6888
        %v6897 = vrsqrt.pop %v6889
        %v6898 = vmul.f32 %v6794, %v6890
        %v6899 = vmul.f32 %v6795, %v6890
        %v6900 = vmul.f32 %v6796, %v6890
        %v6901 = vmul.f32 %v6797, %v6891
        %v6902 = vmul.f32 %v6798, %v6891
        %v6903 = vmul.f32 %v6799, %v6891
        %v6904 = vmul.f32 %v6800, %v6892
        %v6905 = vmul.f32 %v6801, %v6892
        %v6906 = vmul.f32 %v6802, %v6892
        %v6907 = vmul.f32 %v6803, %v6893
        %v6908 = vmul.f32 %v6804, %v6893
        %v6909 = vmul.f32 %v6805, %v6893
        %v6910 = vmul.f32 %v6806, %v6894
        %v6911 = vmul.f32 %v6807, %v6894
        %v6912 = vmul.f32 %v6808, %v6894
        %v6913 = vmul.f32 %v6809, %v6895
        %v6914 = vmul.f32 %v6810, %v6895
        %v6915 = vmul.f32 %v6811, %v6895
        %v6916 = vmul.f32 %v6812, %v6896
        %v6917 = vmul.f32 %v6813, %v6896
        %v6918 = vmul.f32 %v6814, %v6896
        %v6919 = vmul.f32 %v6815, %v6897
        %v6920 = vmul.f32 %v6816, %v6897
        %v6921 = vmul.f32 %v6817, %v6897
        %v6923 = vlaneseq
        %v6924 = vshrl.u32 %v6923, 7
        %v6925 = vsub.s32 0, %v6924
        %v6926 = vrot.slane %v6751, %v6925
        %v6927 = vlaneseq
        %v6928 = vshrl.u32 %v6927, 7
        %v6929 = vsub.s32 1, %v6928
        %v6930 = vrot.slane %v6751, %v6929
        %v6931 = vlaneseq
        %v6932 = vshrl.u32 %v6931, 7
        %v6933 = vsub.s32 2, %v6932
        %v6934 = vrot.slane %v6751, %v6933
        %v6938 = vmul.f32 %v6898, %v6926
        %v6939 = vmul.f32 %v6899, %v6930
        %v6940 = vmul.f32 %v6900, %v6934
        %v6941 = vmul.f32 %v6901, %v6926
        %v6942 = vmul.f32 %v6902, %v6930
        %v6943 = vmul.f32 %v6903, %v6934
        %v6944 = vmul.f32 %v6904, %v6926
        %v6945 = vmul.f32 %v6905, %v6930
        %v6946 = vmul.f32 %v6906, %v6934
        %v6947 = vmul.f32 %v6907, %v6926
        %v6948 = vmul.f32 %v6908, %v6930
        %v6949 = vmul.f32 %v6909, %v6934
        %v6950 = vmul.f32 %v6910, %v6926
        %v6951 = vmul.f32 %v6911, %v6930
        %v6952 = vmul.f32 %v6912, %v6934
        %v6953 = vmul.f32 %v6913, %v6926
        %v6954 = vmul.f32 %v6914, %v6930
        %v6955 = vmul.f32 %v6915, %v6934
        %v6956 = vmul.f32 %v6916, %v6926
        %v6957 = vmul.f32 %v6917, %v6930
        %v6958 = vmul.f32 %v6918, %v6934
        %v6959 = vmul.f32 %v6919, %v6926
        %v6960 = vmul.f32 %v6920, %v6930
        %v6961 = vmul.f32 %v6921, %v6934
        %v6963 = vlaneseq
        %v6964 = vshrl.u32 %v6963, 7
        %v6965 = vsub.s32 0, %v6964
        %v6966 = vrot.slane %v6753, %v6965
        %v6967 = vlaneseq
        %v6968 = vshrl.u32 %v6967, 7
        %v6969 = vsub.s32 1, %v6968
        %v6970 = vrot.slane %v6753, %v6969
        %v6971 = vlaneseq
        %v6972 = vshrl.u32 %v6971, 7
        %v6973 = vsub.s32 2, %v6972
        %v6974 = vrot.slane %v6753, %v6973
        %v6978 = vadd.f32 %v6938, %v6966
        %v6979 = vadd.f32 %v6939, %v6970
        %v6980 = vadd.f32 %v6940, %v6974
        %v6981 = vadd.f32 %v6941, %v6966
        %v6982 = vadd.f32 %v6942, %v6970
        %v6983 = vadd.f32 %v6943, %v6974
        %v6984 = vadd.f32 %v6944, %v6966
        %v6985 = vadd.f32 %v6945, %v6970
        %v6986 = vadd.f32 %v6946, %v6974
        %v6987 = vadd.f32 %v6947, %v6966
        %v6988 = vadd.f32 %v6948, %v6970
        %v6989 = vadd.f32 %v6949, %v6974
        %v6990 = vadd.f32 %v6950, %v6966
        %v6991 = vadd.f32 %v6951, %v6970
        %v6992 = vadd.f32 %v6952, %v6974
        %v6993 = vadd.f32 %v6953, %v6966
        %v6994 = vadd.f32 %v6954, %v6970
        %v6995 = vadd.f32 %v6955, %v6974
        %v6996 = vadd.f32 %v6956, %v6966
        %v6997 = vadd.f32 %v6957, %v6970
        %v6998 = vadd.f32 %v6958, %v6974
        %v6999 = vadd.f32 %v6959, %v6966
        %v7000 = vadd.f32 %v6960, %v6970
        %v7001 = vadd.f32 %v6961, %v6974
        %v7002 = vpack.c.bf16 %v6981, %v6978
        %v7003 = vpack.c.bf16 %v6982, %v6979
        %v7004 = vpack.c.bf16 %v6983, %v6980
        %v7005 = vpack.c.bf16 %v6987, %v6984
        %v7006 = vpack.c.bf16 %v6988, %v6985
        %v7007 = vpack.c.bf16 %v6989, %v6986
        %v7008 = vpack.c.bf16 %v6993, %v6990
        %v7009 = vpack.c.bf16 %v6994, %v6991
        %v7010 = vpack.c.bf16 %v6995, %v6992
        %v7011 = vpack.c.bf16 %v6999, %v6996
        %v7012 = vpack.c.bf16 %v7000, %v6997
        %v7013 = vpack.c.bf16 %v7001, %v6998
        %v7014 = vld [vmem:[%s805] sm:$0xff]
        %v7015 = vld [vmem:[%s805 + $0x8] sm:$0xf]
        %v7016 = vld [vmem:[%s805 + $0xc] sm:$0xff]
        %v7017 = vld [vmem:[%s805 + $0x14] sm:$0xf]
        %v7018 = vld [vmem:[%s805 + $0x18] sm:$0xff]
        %v7019 = vld [vmem:[%s805 + $0x20] sm:$0xf]
        %v7020 = vld [vmem:[%s805 + $0x24] sm:$0xff]
        %v7021 = vld [vmem:[%s805 + $0x2c] sm:$0xf]
        %v7022 = vld [vmem:[%s805 + $0x30] sm:$0xff]
        %v7023 = vld [vmem:[%s805 + $0x38] sm:$0xf]
        %v7024 = vld [vmem:[%s805 + $0x3c] sm:$0xff]
        %v7025 = vld [vmem:[%s805 + $0x44] sm:$0xf]
        %v7026 = vld [vmem:[%s805 + $0x48] sm:$0xff]
        %v7027 = vld [vmem:[%s805 + $0x50] sm:$0xf]
        %v7028 = vld [vmem:[%s805 + $0x54] sm:$0xff]
        %v7029 = vld [vmem:[%s805 + $0x5c] sm:$0xf]
        %v7030 = vld [vmem:[%s805 + $0x60] sm:$0xff]
        %v7031 = vld [vmem:[%s805 + $0x68] sm:$0xf]
        %v7032 = vld [vmem:[%s805 + $0x6c] sm:$0xff]
        %v7033 = vld [vmem:[%s805 + $0x74] sm:$0xf]
        %v7034 = vld [vmem:[%s805 + $0x78] sm:$0xff]
        %v7035 = vld [vmem:[%s805 + $0x80] sm:$0xf]
        %v7036 = vld [vmem:[%s805 + $0x84] sm:$0xff]
        %v7037 = vld [vmem:[%s805 + $0x8c] sm:$0xf]
        %v7038 = vld [vmem:[%s805 + $0x90] sm:$0xff]
        %v7039 = vld [vmem:[%s805 + $0x98] sm:$0xf]
        %v7040 = vld [vmem:[%s805 + $0x9c] sm:$0xff]
        %v7041 = vld [vmem:[%s805 + $0xa4] sm:$0xf]
        %v7042 = vld [vmem:[%s805 + $0xa8] sm:$0xff]
        %v7043 = vld [vmem:[%s805 + $0xb0] sm:$0xf]
        %v7044 = vld [vmem:[%s805 + $0xb4] sm:$0xff]
        %v7045 = vld [vmem:[%s805 + $0xbc] sm:$0xf]
        %v7046 = vld [vmem:[%s805 + $0xc0] sm:$0xff]
        %v7047 = vld [vmem:[%s805 + $0xc8] sm:$0xf]
        %v7048 = vld [vmem:[%s805 + $0xcc] sm:$0xff]
        %v7049 = vld [vmem:[%s805 + $0xd4] sm:$0xf]
        %v7050 = vld [vmem:[%s805 + $0xd8] sm:$0xff]
        %v7051 = vld [vmem:[%s805 + $0xe0] sm:$0xf]
        %v7052 = vld [vmem:[%s805 + $0xe4] sm:$0xff]
        %v7053 = vld [vmem:[%s805 + $0xec] sm:$0xf]
        %v7054 = vld [vmem:[%s805 + $0xf0] sm:$0xff]
        %v7055 = vld [vmem:[%s805 + $0xf8] sm:$0xf]
        %v7056 = vld [vmem:[%s805 + $0xfc] sm:$0xff]
        %v7057 = vld [vmem:[%s805 + $0x104] sm:$0xf]
        %v7058 = vld [vmem:[%s805 + $0x108] sm:$0xff]
        %v7059 = vld [vmem:[%s805 + $0x110] sm:$0xf]
        %v7060 = vld [vmem:[%s805 + $0x114] sm:$0xff]
        %v7061 = vld [vmem:[%s805 + $0x11c] sm:$0xf]
        %v7062 = vld [vmem:[%s805 + $0x120] sm:$0xff]
        %v7063 = vld [vmem:[%s805 + $0x128] sm:$0xf]
        %v7064 = vld [vmem:[%s805 + $0x12c] sm:$0xff]
        %v7065 = vld [vmem:[%s805 + $0x134] sm:$0xf]
        %v7066 = vld [vmem:[%s805 + $0x138] sm:$0xff]
        %v7067 = vld [vmem:[%s805 + $0x140] sm:$0xf]
        %v7068 = vld [vmem:[%s805 + $0x144] sm:$0xff]
        %v7069 = vld [vmem:[%s805 + $0x14c] sm:$0xf]
        %v7070 = vld [vmem:[%s805 + $0x150] sm:$0xff]
        %v7071 = vld [vmem:[%s805 + $0x158] sm:$0xf]
        %v7072 = vld [vmem:[%s805 + $0x15c] sm:$0xff]
        %v7073 = vld [vmem:[%s805 + $0x164] sm:$0xf]
        %v7074 = vld [vmem:[%s805 + $0x168] sm:$0xff]
        %v7075 = vld [vmem:[%s805 + $0x170] sm:$0xf]
        %v7076 = vld [vmem:[%s805 + $0x174] sm:$0xff]
        %v7077 = vld [vmem:[%s805 + $0x17c] sm:$0xf]
        %v7078 = vld [vmem:[%s805 + $0x180] sm:$0xff]
        %v7079 = vld [vmem:[%s805 + $0x188] sm:$0xf]
        %v7080 = vld [vmem:[%s805 + $0x18c] sm:$0xff]
        %v7081 = vld [vmem:[%s805 + $0x194] sm:$0xf]
        %v7082 = vld [vmem:[%s805 + $0x198] sm:$0xff]
        %v7083 = vld [vmem:[%s805 + $0x1a0] sm:$0xf]
        %v7084 = vld [vmem:[%s805 + $0x1a4] sm:$0xff]
        %v7085 = vld [vmem:[%s805 + $0x1ac] sm:$0xf]
        %v7086 = vld [vmem:[%s805 + $0x1b0] sm:$0xff]
        %v7087 = vld [vmem:[%s805 + $0x1b8] sm:$0xf]
        %v7088 = vld [vmem:[%s805 + $0x1bc] sm:$0xff]
        %v7089 = vld [vmem:[%s805 + $0x1c4] sm:$0xf]
        %v7090 = vld [vmem:[%s805 + $0x1c8] sm:$0xff]
        %v7091 = vld [vmem:[%s805 + $0x1d0] sm:$0xf]
        %v7092 = vld [vmem:[%s805 + $0x1d4] sm:$0xff]
        %v7093 = vld [vmem:[%s805 + $0x1dc] sm:$0xf]
        %v7094 = vld [vmem:[%s805 + $0x1e0] sm:$0xff]
        %v7095 = vld [vmem:[%s805 + $0x1e8] sm:$0xf]
        %v7096 = vld [vmem:[%s805 + $0x1ec] sm:$0xff]
        %v7097 = vld [vmem:[%s805 + $0x1f4] sm:$0xf]
        %v7098 = vld [vmem:[%s805 + $0x1f8] sm:$0xff]
        %v7099 = vld [vmem:[%s805 + $0x200] sm:$0xf]
        %v7100 = vld [vmem:[%s805 + $0x204] sm:$0xff]
        %v7101 = vld [vmem:[%s805 + $0x20c] sm:$0xf]
        %v7102 = vld [vmem:[%s805 + $0x210] sm:$0xff]
        %v7103 = vld [vmem:[%s805 + $0x218] sm:$0xf]
        %v7104 = vld [vmem:[%s805 + $0x21c] sm:$0xff]
        %v7105 = vld [vmem:[%s805 + $0x224] sm:$0xf]
        %v7106 = vld [vmem:[%s805 + $0x228] sm:$0xff]
        %v7107 = vld [vmem:[%s805 + $0x230] sm:$0xf]
        %v7108 = vld [vmem:[%s805 + $0x234] sm:$0xff]
        %v7109 = vld [vmem:[%s805 + $0x23c] sm:$0xf]
        %s7110 = scalar_lea.vmem [#allocation21], %s1366
        %v7111 = vld [vmem:[%s7110] ss:$8 sm:$0x7]
        %v7113 = vlaneseq
        %v7114 = vshrl.u32 %v7113, 7
        %v7115 = vsub.s32 0, %v7114
        %v7116 = vrot.slane %v7111, %v7115
        %v7117 = vlaneseq
        %v7118 = vshrl.u32 %v7117, 7
        %v7119 = vsub.s32 1, %v7118
        %v7120 = vrot.slane %v7111, %v7119
        %v7121 = vlaneseq
        %v7122 = vshrl.u32 %v7121, 7
        %v7123 = vsub.s32 2, %v7122
        %v7124 = vrot.slane %v7111, %v7123
        %v7224 = vunpack.c.l.b16 %v7014
        %v7225 = vunpack.c.h.b16 %v7014
        %v7226 = vunpack.c.l.b16 %v7015
        %v7227 = vunpack.c.l.b16 %v7016
        %v7228 = vunpack.c.h.b16 %v7016
        %v7229 = vunpack.c.l.b16 %v7017
        %v7230 = vunpack.c.l.b16 %v7018
        %v7231 = vunpack.c.h.b16 %v7018
        %v7232 = vunpack.c.l.b16 %v7019
        %v7233 = vunpack.c.l.b16 %v7020
        %v7234 = vunpack.c.h.b16 %v7020
        %v7235 = vunpack.c.l.b16 %v7021
        %v7236 = vunpack.c.l.b16 %v7022
        %v7237 = vunpack.c.h.b16 %v7022
        %v7238 = vunpack.c.l.b16 %v7023
        %v7239 = vunpack.c.l.b16 %v7024
        %v7240 = vunpack.c.h.b16 %v7024
        %v7241 = vunpack.c.l.b16 %v7025
        %v7242 = vunpack.c.l.b16 %v7026
        %v7243 = vunpack.c.h.b16 %v7026
        %v7244 = vunpack.c.l.b16 %v7027
        %v7245 = vunpack.c.l.b16 %v7028
        %v7246 = vunpack.c.h.b16 %v7028
        %v7247 = vunpack.c.l.b16 %v7029
        %v7248 = vunpack.c.l.b16 %v7030
        %v7249 = vunpack.c.h.b16 %v7030
        %v7250 = vunpack.c.l.b16 %v7031
        %v7251 = vunpack.c.l.b16 %v7032
        %v7252 = vunpack.c.h.b16 %v7032
        %v7253 = vunpack.c.l.b16 %v7033
        %v7254 = vunpack.c.l.b16 %v7034
        %v7255 = vunpack.c.h.b16 %v7034
        %v7256 = vunpack.c.l.b16 %v7035
        %v7257 = vunpack.c.l.b16 %v7036
        %v7258 = vunpack.c.h.b16 %v7036
        %v7259 = vunpack.c.l.b16 %v7037
        %v7260 = vunpack.c.l.b16 %v7038
        %v7261 = vunpack.c.h.b16 %v7038
        %v7262 = vunpack.c.l.b16 %v7039
        %v7263 = vunpack.c.l.b16 %v7040
        %v7264 = vunpack.c.h.b16 %v7040
        %v7265 = vunpack.c.l.b16 %v7041
        %v7266 = vunpack.c.l.b16 %v7042
        %v7267 = vunpack.c.h.b16 %v7042
        %v7268 = vunpack.c.l.b16 %v7043
        %v7269 = vunpack.c.l.b16 %v7044
        %v7270 = vunpack.c.h.b16 %v7044
        %v7271 = vunpack.c.l.b16 %v7045
        %v7272 = vunpack.c.l.b16 %v7046
        %v7273 = vunpack.c.h.b16 %v7046
        %v7274 = vunpack.c.l.b16 %v7047
        %v7275 = vunpack.c.l.b16 %v7048
        %v7276 = vunpack.c.h.b16 %v7048
        %v7277 = vunpack.c.l.b16 %v7049
        %v7278 = vunpack.c.l.b16 %v7050
        %v7279 = vunpack.c.h.b16 %v7050
        %v7280 = vunpack.c.l.b16 %v7051
        %v7281 = vunpack.c.l.b16 %v7052
        %v7282 = vunpack.c.h.b16 %v7052
        %v7283 = vunpack.c.l.b16 %v7053
        %v7284 = vunpack.c.l.b16 %v7054
        %v7285 = vunpack.c.h.b16 %v7054
        %v7286 = vunpack.c.l.b16 %v7055
        %v7287 = vunpack.c.l.b16 %v7056
        %v7288 = vunpack.c.h.b16 %v7056
        %v7289 = vunpack.c.l.b16 %v7057
        %v7290 = vunpack.c.l.b16 %v7058
        %v7291 = vunpack.c.h.b16 %v7058
        %v7292 = vunpack.c.l.b16 %v7059
        %v7293 = vunpack.c.l.b16 %v7060
        %v7294 = vunpack.c.h.b16 %v7060
        %v7295 = vunpack.c.l.b16 %v7061
        %v7296 = vunpack.c.l.b16 %v7062
        %v7297 = vunpack.c.h.b16 %v7062
        %v7298 = vunpack.c.l.b16 %v7063
        %v7299 = vunpack.c.l.b16 %v7064
        %v7300 = vunpack.c.h.b16 %v7064
        %v7301 = vunpack.c.l.b16 %v7065
        %v7302 = vunpack.c.l.b16 %v7066
        %v7303 = vunpack.c.h.b16 %v7066
        %v7304 = vunpack.c.l.b16 %v7067
        %v7305 = vunpack.c.l.b16 %v7068
        %v7306 = vunpack.c.h.b16 %v7068
        %v7307 = vunpack.c.l.b16 %v7069
        %v7308 = vunpack.c.l.b16 %v7070
        %v7309 = vunpack.c.h.b16 %v7070
        %v7310 = vunpack.c.l.b16 %v7071
        %v7311 = vunpack.c.l.b16 %v7072
        %v7312 = vunpack.c.h.b16 %v7072
        %v7313 = vunpack.c.l.b16 %v7073
        %v7314 = vunpack.c.l.b16 %v7074
        %v7315 = vunpack.c.h.b16 %v7074
        %v7316 = vunpack.c.l.b16 %v7075
        %v7317 = vunpack.c.l.b16 %v7076
        %v7318 = vunpack.c.h.b16 %v7076
        %v7319 = vunpack.c.l.b16 %v7077
        %v7320 = vunpack.c.l.b16 %v7078
        %v7321 = vunpack.c.h.b16 %v7078
        %v7322 = vunpack.c.l.b16 %v7079
        %v7323 = vunpack.c.l.b16 %v7080
        %v7324 = vunpack.c.h.b16 %v7080
        %v7325 = vunpack.c.l.b16 %v7081
        %v7326 = vunpack.c.l.b16 %v7082
        %v7327 = vunpack.c.h.b16 %v7082
        %v7328 = vunpack.c.l.b16 %v7083
        %v7329 = vunpack.c.l.b16 %v7084
        %v7330 = vunpack.c.h.b16 %v7084
        %v7331 = vunpack.c.l.b16 %v7085
        %v7332 = vunpack.c.l.b16 %v7086
        %v7333 = vunpack.c.h.b16 %v7086
        %v7334 = vunpack.c.l.b16 %v7087
        %v7335 = vunpack.c.l.b16 %v7088
        %v7336 = vunpack.c.h.b16 %v7088
        %v7337 = vunpack.c.l.b16 %v7089
        %v7338 = vunpack.c.l.b16 %v7090
        %v7339 = vunpack.c.h.b16 %v7090
        %v7340 = vunpack.c.l.b16 %v7091
        %v7341 = vunpack.c.l.b16 %v7092
        %v7342 = vunpack.c.h.b16 %v7092
        %v7343 = vunpack.c.l.b16 %v7093
        %v7344 = vunpack.c.l.b16 %v7094
        %v7345 = vunpack.c.h.b16 %v7094
        %v7346 = vunpack.c.l.b16 %v7095
        %v7347 = vunpack.c.l.b16 %v7096
        %v7348 = vunpack.c.h.b16 %v7096
        %v7349 = vunpack.c.l.b16 %v7097
        %v7350 = vunpack.c.l.b16 %v7098
        %v7351 = vunpack.c.h.b16 %v7098
        %v7352 = vunpack.c.l.b16 %v7099
        %v7353 = vunpack.c.l.b16 %v7100
        %v7354 = vunpack.c.h.b16 %v7100
        %v7355 = vunpack.c.l.b16 %v7101
        %v7356 = vunpack.c.l.b16 %v7102
        %v7357 = vunpack.c.h.b16 %v7102
        %v7358 = vunpack.c.l.b16 %v7103
        %v7359 = vunpack.c.l.b16 %v7104
        %v7360 = vunpack.c.h.b16 %v7104
        %v7361 = vunpack.c.l.b16 %v7105
        %v7362 = vunpack.c.l.b16 %v7106
        %v7363 = vunpack.c.h.b16 %v7106
        %v7364 = vunpack.c.l.b16 %v7107
        %v7365 = vunpack.c.l.b16 %v7108
        %v7366 = vunpack.c.h.b16 %v7108
        %v7367 = vunpack.c.l.b16 %v7109
        %v7368 = vpack.c.b16 %v7227, %v7224
        %v7369 = vpack.c.b16 %v7228, %v7225
        %v7370 = vpack.c.b16 %v7229, %v7226
        %v7371 = vpack.c.b16 %v7233, %v7230
        %v7372 = vpack.c.b16 %v7234, %v7231
        %v7373 = vpack.c.b16 %v7235, %v7232
        %v7374 = vpack.c.b16 %v7239, %v7236
        %v7375 = vpack.c.b16 %v7240, %v7237
        %v7376 = vpack.c.b16 %v7241, %v7238
        %v7377 = vpack.c.b16 %v7245, %v7242
        %v7378 = vpack.c.b16 %v7246, %v7243
        %v7379 = vpack.c.b16 %v7247, %v7244
        %v7380 = vpack.c.b16 %v7251, %v7248
        %v7381 = vpack.c.b16 %v7252, %v7249
        %v7382 = vpack.c.b16 %v7253, %v7250
        %v7383 = vpack.c.b16 %v7257, %v7254
        %v7384 = vpack.c.b16 %v7258, %v7255
        %v7385 = vpack.c.b16 %v7259, %v7256
        %v7386 = vpack.c.b16 %v7263, %v7260
        %v7387 = vpack.c.b16 %v7264, %v7261
        %v7388 = vpack.c.b16 %v7265, %v7262
        %v7389 = vpack.c.b16 %v7269, %v7266
        %v7390 = vpack.c.b16 %v7270, %v7267
        %v7391 = vpack.c.b16 %v7271, %v7268
        %v7392 = vpack.c.b16 %v7275, %v7272
        %v7393 = vpack.c.b16 %v7276, %v7273
        %v7394 = vpack.c.b16 %v7277, %v7274
        %v7395 = vpack.c.b16 %v7281, %v7278
        %v7396 = vpack.c.b16 %v7282, %v7279
        %v7397 = vpack.c.b16 %v7283, %v7280
        %v7398 = vpack.c.b16 %v7287, %v7284
        %v7399 = vpack.c.b16 %v7288, %v7285
        %v7400 = vpack.c.b16 %v7289, %v7286
        %v7401 = vpack.c.b16 %v7293, %v7290
        %v7402 = vpack.c.b16 %v7294, %v7291
        %v7403 = vpack.c.b16 %v7295, %v7292
        %v7404 = vpack.c.b16 %v7299, %v7296
        %v7405 = vpack.c.b16 %v7300, %v7297
        %v7406 = vpack.c.b16 %v7301, %v7298
        %v7407 = vpack.c.b16 %v7305, %v7302
        %v7408 = vpack.c.b16 %v7306, %v7303
        %v7409 = vpack.c.b16 %v7307, %v7304
        %v7410 = vpack.c.b16 %v7311, %v7308
        %v7411 = vpack.c.b16 %v7312, %v7309
        %v7412 = vpack.c.b16 %v7313, %v7310
        %v7413 = vpack.c.b16 %v7317, %v7314
        %v7414 = vpack.c.b16 %v7318, %v7315
        %v7415 = vpack.c.b16 %v7319, %v7316
        %v7416 = vpack.c.b16 %v7323, %v7320
        %v7417 = vpack.c.b16 %v7324, %v7321
        %v7418 = vpack.c.b16 %v7325, %v7322
        %v7419 = vpack.c.b16 %v7329, %v7326
        %v7420 = vpack.c.b16 %v7330, %v7327
        %v7421 = vpack.c.b16 %v7331, %v7328
        %v7422 = vpack.c.b16 %v7335, %v7332
        %v7423 = vpack.c.b16 %v7336, %v7333
        %v7424 = vpack.c.b16 %v7337, %v7334
        %v7425 = vpack.c.b16 %v7341, %v7338
        %v7426 = vpack.c.b16 %v7342, %v7339
        %v7427 = vpack.c.b16 %v7343, %v7340
        %v7428 = vpack.c.b16 %v7347, %v7344
        %v7429 = vpack.c.b16 %v7348, %v7345
        %v7430 = vpack.c.b16 %v7349, %v7346
        %v7431 = vpack.c.b16 %v7353, %v7350
        %v7432 = vpack.c.b16 %v7354, %v7351
        %v7433 = vpack.c.b16 %v7355, %v7352
        %v7434 = vpack.c.b16 %v7359, %v7356
        %v7435 = vpack.c.b16 %v7360, %v7357
        %v7436 = vpack.c.b16 %v7361, %v7358
        %v7437 = vpack.c.b16 %v7365, %v7362
        %v7438 = vpack.c.b16 %v7366, %v7363
        %v7439 = vpack.c.b16 %v7367, %v7364
        %7512 = vmatprep.subr.bf16.mxu0 %v7369
        %7513 = vmatpush1.bf16.msra.mxu0 %v7368
        %7514 = vmatprep.subr.bf16.mxu0 %v7372
        %7515 = vmatpush1.bf16.msra.mxu0 %v7371
        %7516 = vmatprep.subr.bf16.mxu0 %v7375
        %7517 = vmatpush1.bf16.msra.mxu0 %v7374
        %7518 = vmatprep.subr.bf16.mxu0 %v7378
        %7519 = vmatpush1.bf16.msra.mxu0 %v7377
        %7520 = vmatprep.subr.bf16.mxu0 %v7381
        %7521 = vmatpush1.bf16.msra.mxu0 %v7380
        %7522 = vmatprep.subr.bf16.mxu0 %v7384
        %7523 = vmatpush1.bf16.msra.mxu0 %v7383
        %7524 = vmatprep.subr.bf16.mxu0 %v7387
        %7525 = vmatpush1.bf16.msra.mxu0 %v7386
        %7526 = vmatprep.subr.bf16.mxu0 %v7390
        %7527 = vmatpush1.bf16.msra.mxu0 %v7389
        %7528 = vmatprep.subr.bf16.mxu0 %v7393
        %7529 = vmatpush1.bf16.msra.mxu0 %v7392
        %7530 = vmatprep.subr.bf16.mxu0 %v7396
        %7531 = vmatpush1.bf16.msra.mxu0 %v7395
        %7532 = vmatprep.subr.bf16.mxu0 %v7399
        %7533 = vmatpush1.bf16.msra.mxu0 %v7398
        %7534 = vmatprep.subr.bf16.mxu0 %v7402
        %7535 = vmatpush1.bf16.msra.mxu0 %v7401
        %7536 = vmatprep.subr.bf16.mxu0 %v7405
        %7537 = vmatpush1.bf16.msra.mxu0 %v7404
        %7538 = vmatprep.subr.bf16.mxu0 %v7408
        %7539 = vmatpush1.bf16.msra.mxu0 %v7407
        %7540 = vmatprep.subr.bf16.mxu0 %v7411
        %7541 = vmatpush1.bf16.msra.mxu0 %v7410
        %7542 = vmatprep.subr.bf16.mxu0 %v7414
        %7543 = vmatpush1.bf16.msra.mxu0 %v7413
        %7544 = vmatprep.mubr.bf16.mxu0 %v7003
        %7545 = vmatmul.mubr.bf16.gmra.mrb[0].mxu0 %v7002
        %v7546 = vpop.f32.mrb[0].mxu0
        %v7547 = vadd.f32 %v7116, %v7546
        %v7548 = vpop.f32.mrb[0].mxu0
        %v7549 = vadd.f32 %v7120, %v7548
        %v7550 = vpop.f32.mrb[0].mxu0
        %v7551 = vadd.f32 %v7116, %v7550
        %v7552 = vpop.f32.mrb[0].mxu0
        %v7553 = vadd.f32 %v7120, %v7552
        %7554 = vmatprep.mubr.bf16.mxu0 %v7006
        %7555 = vmatmul.mubr.bf16.gmra.mrb[0].mxu0 %v7005
        %v7556 = vpop.f32.mrb[0].mxu0
        %v7557 = vadd.f32 %v7116, %v7556
        %v7558 = vpop.f32.mrb[0].mxu0
        %v7559 = vadd.f32 %v7120, %v7558
        %v7560 = vpop.f32.mrb[0].mxu0
        %v7561 = vadd.f32 %v7116, %v7560
        %v7562 = vpop.f32.mrb[0].mxu0
        %v7563 = vadd.f32 %v7120, %v7562
        %7564 = vmatprep.mubr.bf16.mxu0 %v7009
        %7565 = vmatmul.mubr.bf16.gmra.mrb[0].mxu0 %v7008
        %v7566 = vpop.f32.mrb[0].mxu0
        %v7567 = vadd.f32 %v7116, %v7566
        %v7568 = vpop.f32.mrb[0].mxu0
        %v7569 = vadd.f32 %v7120, %v7568
        %v7570 = vpop.f32.mrb[0].mxu0
        %v7571 = vadd.f32 %v7116, %v7570
        %v7572 = vpop.f32.mrb[0].mxu0
        %v7573 = vadd.f32 %v7120, %v7572
        %7574 = vmatprep.mubr.bf16.mxu0 %v7012
        %7575 = vmatmul.mubr.bf16.gmra.mrb[0].mxu0 %v7011
        %v7576 = vpop.f32.mrb[0].mxu0
        %v7577 = vadd.f32 %v7116, %v7576
        %v7578 = vpop.f32.mrb[0].mxu0
        %v7579 = vadd.f32 %v7120, %v7578
        %v7580 = vpop.f32.mrb[0].mxu0
        %v7581 = vadd.f32 %v7116, %v7580
        %v7582 = vpop.f32.mrb[0].mxu0
        %v7583 = vadd.f32 %v7120, %v7582
        %7584 = vdwg.mxu0
        %7585 = vmatprep.subr.bf16.mxu0 %v7417
        %7586 = vmatpush1.bf16.msra.mxu0 %v7416
        %7587 = vmatprep.subr.bf16.mxu0 %v7420
        %7588 = vmatpush1.bf16.msra.mxu0 %v7419
        %7589 = vmatprep.subr.bf16.mxu0 %v7423
        %7590 = vmatpush1.bf16.msra.mxu0 %v7422
        %7591 = vmatprep.subr.bf16.mxu0 %v7426
        %7592 = vmatpush1.bf16.msra.mxu0 %v7425
        %7593 = vmatprep.subr.bf16.mxu0 %v7429
        %7594 = vmatpush1.bf16.msra.mxu0 %v7428
        %7595 = vmatprep.subr.bf16.mxu0 %v7432
        %7596 = vmatpush1.bf16.msra.mxu0 %v7431
        %7597 = vmatprep.subr.bf16.mxu0 %v7435
        %7598 = vmatpush1.bf16.msra.mxu0 %v7434
        %7599 = vmatprep.subr.bf16.mxu0 %v7438
        %7600 = vmatpush1.bf16.msra.mxu0 %v7437
        %7601 = vmatprep.subr.bf16.mxu0 0
        %7602 = vmatpush1.bf16.msra.mxu0 0
        %7603 = vmatprep.subr.bf16.mxu0 0
        %7604 = vmatpush1.bf16.msra.mxu0 0
        %7605 = vmatprep.subr.bf16.mxu0 0
        %7606 = vmatpush1.bf16.msra.mxu0 0
        %7607 = vmatprep.subr.bf16.mxu0 0
        %7608 = vmatpush1.bf16.msra.mxu0 0
        %7609 = vmatprep.subr.bf16.mxu0 0
        %7610 = vmatpush1.bf16.msra.mxu0 0
        %7611 = vmatprep.subr.bf16.mxu0 0
        %7612 = vmatpush1.bf16.msra.mxu0 0
        %7613 = vmatprep.subr.bf16.mxu0 0
        %7614 = vmatpush1.bf16.msra.mxu0 0
        %7615 = vmatprep.subr.bf16.mxu0 0
        %7616 = vmatpush1.bf16.msra.mxu0 0
        %7617 = vmatprep.mubr.bf16.mxu0 0
        %7618 = vmatmul.mubr.bf16.gmra.mrb[0].mxu0 %v7004
        %v7619 = vpop.f32.mrb[0].mxu0
        %v7620 = vadd.f32 %v7547, %v7619
        %v7621 = vpop.f32.mrb[0].mxu0
        %v7622 = vadd.f32 %v7549, %v7621
        %v7623 = vpop.f32.mrb[0].mxu0
        %v7624 = vadd.f32 %v7551, %v7623
        %v7625 = vpop.f32.mrb[0].mxu0
        %v7626 = vadd.f32 %v7553, %v7625
        %7627 = vmatprep.mubr.bf16.mxu0 0
        %7628 = vmatmul.mubr.bf16.gmra.mrb[0].mxu0 %v7007
        %v7629 = vpop.f32.mrb[0].mxu0
        %v7630 = vadd.f32 %v7557, %v7629
        %v7631 = vpop.f32.mrb[0].mxu0
        %v7632 = vadd.f32 %v7559, %v7631
        %v7633 = vpop.f32.mrb[0].mxu0
        %v7634 = vadd.f32 %v7561, %v7633
        %v7635 = vpop.f32.mrb[0].mxu0
        %v7636 = vadd.f32 %v7563, %v7635
        %7637 = vmatprep.mubr.bf16.mxu0 0
        %7638 = vmatmul.mubr.bf16.gmra.mrb[0].mxu0 %v7010
        %v7639 = vpop.f32.mrb[0].mxu0
        %v7640 = vadd.f32 %v7567, %v7639
        %v7641 = vpop.f32.mrb[0].mxu0
        %v7642 = vadd.f32 %v7569, %v7641
        %v7643 = vpop.f32.mrb[0].mxu0
        %v7644 = vadd.f32 %v7571, %v7643
        %v7645 = vpop.f32.mrb[0].mxu0
        %v7646 = vadd.f32 %v7573, %v7645
        %7647 = vmatprep.mubr.bf16.mxu0 0
        %7648 = vmatmul.mubr.bf16.gmra.mrb[0].mxu0 %v7013
        %v7649 = vpop.f32.mrb[0].mxu0
        %v7650 = vadd.f32 %v7577, %v7649
        %v7651 = vpop.f32.mrb[0].mxu0
        %v7652 = vadd.f32 %v7579, %v7651
        %v7653 = vpop.f32.mrb[0].mxu0
        %v7654 = vadd.f32 %v7581, %v7653
        %v7655 = vpop.f32.mrb[0].mxu0
        %v7656 = vadd.f32 %v7583, %v7655
        %7657 = vdwg.mxu0
        %7658 = vmatprep.subr.bf16.mxu0 0
        %7659 = vmatpush1.bf16.msra.mxu0 %v7370
        %7660 = vmatprep.subr.bf16.mxu0 0
        %7661 = vmatpush1.bf16.msra.mxu0 %v7373
        %7662 = vmatprep.subr.bf16.mxu0 0
        %7663 = vmatpush1.bf16.msra.mxu0 %v7376
        %7664 = vmatprep.subr.bf16.mxu0 0
        %7665 = vmatpush1.bf16.msra.mxu0 %v7379
        %7666 = vmatprep.subr.bf16.mxu0 0
        %7667 = vmatpush1.bf16.msra.mxu0 %v7382
        %7668 = vmatprep.subr.bf16.mxu0 0
        %7669 = vmatpush1.bf16.msra.mxu0 %v7385
        %7670 = vmatprep.subr.bf16.mxu0 0
        %7671 = vmatpush1.bf16.msra.mxu0 %v7388
        %7672 = vmatprep.subr.bf16.mxu0 0
        %7673 = vmatpush1.bf16.msra.mxu0 %v7391
        %7674 = vmatprep.subr.bf16.mxu0 0
        %7675 = vmatpush1.bf16.msra.mxu0 %v7394
        %7676 = vmatprep.subr.bf16.mxu0 0
        %7677 = vmatpush1.bf16.msra.mxu0 %v7397
        %7678 = vmatprep.subr.bf16.mxu0 0
        %7679 = vmatpush1.bf16.msra.mxu0 %v7400
        %7680 = vmatprep.subr.bf16.mxu0 0
        %7681 = vmatpush1.bf16.msra.mxu0 %v7403
        %7682 = vmatprep.subr.bf16.mxu0 0
        %7683 = vmatpush1.bf16.msra.mxu0 %v7406
        %7684 = vmatprep.subr.bf16.mxu0 0
        %7685 = vmatpush1.bf16.msra.mxu0 %v7409
        %7686 = vmatprep.subr.bf16.mxu0 0
        %7687 = vmatpush1.bf16.msra.mxu0 %v7412
        %7688 = vmatprep.subr.bf16.mxu0 0
        %7689 = vmatpush1.bf16.msra.mxu0 %v7415
        %7690 = vmatprep.mubr.bf16.mxu0 %v7003
        %7691 = vmatmul.mubr.bf16.gmra.mrb[0].mxu0 %v7002
        %v7692 = vpop.f32.mrb[0].mxu0
        %v7693 = vadd.f32 %v7124, %v7692
        %v7694 = vpop.f32.mrb[0].mxu0
        %v7695 = vpop.f32.mrb[0].mxu0
        %v7696 = vadd.f32 %v7124, %v7695
        %v7697 = vpop.f32.mrb[0].mxu0
        %7698 = vmatprep.mubr.bf16.mxu0 %v7006
        %7699 = vmatmul.mubr.bf16.gmra.mrb[0].mxu0 %v7005
        %v7700 = vpop.f32.mrb[0].mxu0
        %v7701 = vadd.f32 %v7124, %v7700
        %v7702 = vpop.f32.mrb[0].mxu0
        %v7703 = vpop.f32.mrb[0].mxu0
        %v7704 = vadd.f32 %v7124, %v7703
        %v7705 = vpop.f32.mrb[0].mxu0
        %7706 = vmatprep.mubr.bf16.mxu0 %v7009
        %7707 = vmatmul.mubr.bf16.gmra.mrb[0].mxu0 %v7008
        %v7708 = vpop.f32.mrb[0].mxu0
        %v7709 = vadd.f32 %v7124, %v7708
        %v7710 = vpop.f32.mrb[0].mxu0
        %v7711 = vpop.f32.mrb[0].mxu0
        %v7712 = vadd.f32 %v7124, %v7711
        %v7713 = vpop.f32.mrb[0].mxu0
        %7714 = vmatprep.mubr.bf16.mxu0 %v7012
        %7715 = vmatmul.mubr.bf16.gmra.mrb[0].mxu0 %v7011
        %v7716 = vpop.f32.mrb[0].mxu0
        %v7717 = vadd.f32 %v7124, %v7716
        %v7718 = vpop.f32.mrb[0].mxu0
        %v7719 = vpop.f32.mrb[0].mxu0
        %v7720 = vadd.f32 %v7124, %v7719
        %v7721 = vpop.f32.mrb[0].mxu0
        %7722 = vdwg.mxu0
        %7723 = vmatprep.subr.bf16.mxu0 0
        %7724 = vmatpush1.bf16.msra.mxu0 %v7418
        %7725 = vmatprep.subr.bf16.mxu0 0
        %7726 = vmatpush1.bf16.msra.mxu0 %v7421
        %7727 = vmatprep.subr.bf16.mxu0 0
        %7728 = vmatpush1.bf16.msra.mxu0 %v7424
        %7729 = vmatprep.subr.bf16.mxu0 0
        %7730 = vmatpush1.bf16.msra.mxu0 %v7427
        %7731 = vmatprep.subr.bf16.mxu0 0
        %7732 = vmatpush1.bf16.msra.mxu0 %v7430
        %7733 = vmatprep.subr.bf16.mxu0 0
        %7734 = vmatpush1.bf16.msra.mxu0 %v7433
        %7735 = vmatprep.subr.bf16.mxu0 0
        %7736 = vmatpush1.bf16.msra.mxu0 %v7436
        %7737 = vmatprep.subr.bf16.mxu0 0
        %7738 = vmatpush1.bf16.msra.mxu0 %v7439
        %7739 = vmatprep.subr.bf16.mxu0 0
        %7740 = vmatpush1.bf16.msra.mxu0 0
        %7741 = vmatprep.subr.bf16.mxu0 0
        %7742 = vmatpush1.bf16.msra.mxu0 0
        %7743 = vmatprep.subr.bf16.mxu0 0
        %7744 = vmatpush1.bf16.msra.mxu0 0
        %7745 = vmatprep.subr.bf16.mxu0 0
        %7746 = vmatpush1.bf16.msra.mxu0 0
        %7747 = vmatprep.subr.bf16.mxu0 0
        %7748 = vmatpush1.bf16.msra.mxu0 0
        %7749 = vmatprep.subr.bf16.mxu0 0
        %7750 = vmatpush1.bf16.msra.mxu0 0
        %7751 = vmatprep.subr.bf16.mxu0 0
        %7752 = vmatpush1.bf16.msra.mxu0 0
        %7753 = vmatprep.subr.bf16.mxu0 0
        %7754 = vmatpush1.bf16.msra.mxu0 0
        %7755 = vmatprep.mubr.bf16.mxu0 0
        %7756 = vmatmul.mubr.bf16.gmra.mrb[0].mxu0 %v7004
        %v7757 = vpop.f32.mrb[0].mxu0
        %v7758 = vadd.f32 %v7693, %v7757
        %v7759 = vpop.f32.mrb[0].mxu0
        %v7760 = vpop.f32.mrb[0].mxu0
        %v7761 = vadd.f32 %v7696, %v7760
        %v7762 = vpop.f32.mrb[0].mxu0
        %7763 = vmatprep.mubr.bf16.mxu0 0
        %7764 = vmatmul.mubr.bf16.gmra.mrb[0].mxu0 %v7007
        %v7765 = vpop.f32.mrb[0].mxu0
        %v7766 = vadd.f32 %v7701, %v7765
        %v7767 = vpop.f32.mrb[0].mxu0
        %v7768 = vpop.f32.mrb[0].mxu0
        %v7769 = vadd.f32 %v7704, %v7768
        %v7770 = vpop.f32.mrb[0].mxu0
        %7771 = vmatprep.mubr.bf16.mxu0 0
        %7772 = vmatmul.mubr.bf16.gmra.mrb[0].mxu0 %v7010
        %v7773 = vpop.f32.mrb[0].mxu0
        %v7774 = vadd.f32 %v7709, %v7773
        %v7775 = vpop.f32.mrb[0].mxu0
        %v7776 = vpop.f32.mrb[0].mxu0
        %v7777 = vadd.f32 %v7712, %v7776
        %v7778 = vpop.f32.mrb[0].mxu0
        %7779 = vmatprep.mubr.bf16.mxu0 0
        %7780 = vmatmul.mubr.bf16.gmra.mrb[0].mxu0 %v7013
        %v7781 = vpop.f32.mrb[0].mxu0
        %v7782 = vadd.f32 %v7717, %v7781
        %v7783 = vpop.f32.mrb[0].mxu0
        %v7784 = vpop.f32.mrb[0].mxu0
        %v7785 = vadd.f32 %v7720, %v7784
        %v7786 = vpop.f32.mrb[0].mxu0
        %7787 = vdwg.mxu0
        %v7788 = vmax.f32 %v7620, 0.0
        %v7789 = vmax.f32 %v7622, 0.0
        %v7790 = vmax.f32 %v7758, 0.0
        %v7791 = vmax.f32 %v7624, 0.0
        %v7792 = vmax.f32 %v7626, 0.0
        %v7793 = vmax.f32 %v7761, 0.0
        %v7794 = vmax.f32 %v7630, 0.0
        %v7795 = vmax.f32 %v7632, 0.0
        %v7796 = vmax.f32 %v7766, 0.0
        %v7797 = vmax.f32 %v7634, 0.0
        %v7798 = vmax.f32 %v7636, 0.0
        %v7799 = vmax.f32 %v7769, 0.0
        %v7800 = vmax.f32 %v7640, 0.0
        %v7801 = vmax.f32 %v7642, 0.0
        %v7802 = vmax.f32 %v7774, 0.0
        %v7803 = vmax.f32 %v7644, 0.0
        %v7804 = vmax.f32 %v7646, 0.0
        %v7805 = vmax.f32 %v7777, 0.0
        %v7806 = vmax.f32 %v7650, 0.0
        %v7807 = vmax.f32 %v7652, 0.0
        %v7808 = vmax.f32 %v7782, 0.0
        %v7809 = vmax.f32 %v7654, 0.0
        %v7810 = vmax.f32 %v7656, 0.0
        %v7811 = vmax.f32 %v7785, 0.0
        %v7812 = vpack.c.bf16 %v7791, %v7788
        %v7813 = vpack.c.bf16 %v7792, %v7789
        %v7814 = vpack.c.bf16 %v7793, %v7790
        %v7815 = vpack.c.bf16 %v7797, %v7794
        %v7816 = vpack.c.bf16 %v7798, %v7795
        %v7817 = vpack.c.bf16 %v7799, %v7796
        %v7818 = vpack.c.bf16 %v7803, %v7800
        %v7819 = vpack.c.bf16 %v7804, %v7801
        %v7820 = vpack.c.bf16 %v7805, %v7802
        %v7821 = vpack.c.bf16 %v7809, %v7806
        %v7822 = vpack.c.bf16 %v7810, %v7807
        %v7823 = vpack.c.bf16 %v7811, %v7808
        %v7824 = vld [vmem:[%s818] sm:$0xff]
        %v7825 = vld [vmem:[%s818 + $0x8] sm:$0xf]
        %v7826 = vld [vmem:[%s818 + $0xc] sm:$0xff]
        %v7827 = vld [vmem:[%s818 + $0x14] sm:$0xf]
        %v7828 = vld [vmem:[%s818 + $0x18] sm:$0xff]
        %v7829 = vld [vmem:[%s818 + $0x20] sm:$0xf]
        %v7830 = vld [vmem:[%s818 + $0x24] sm:$0xff]
        %v7831 = vld [vmem:[%s818 + $0x2c] sm:$0xf]
        %v7832 = vld [vmem:[%s818 + $0x30] sm:$0xff]
        %v7833 = vld [vmem:[%s818 + $0x38] sm:$0xf]
        %v7834 = vld [vmem:[%s818 + $0x3c] sm:$0xff]
        %v7835 = vld [vmem:[%s818 + $0x44] sm:$0xf]
        %v7836 = vld [vmem:[%s818 + $0x48] sm:$0xff]
        %v7837 = vld [vmem:[%s818 + $0x50] sm:$0xf]
        %v7838 = vld [vmem:[%s818 + $0x54] sm:$0xff]
        %v7839 = vld [vmem:[%s818 + $0x5c] sm:$0xf]
        %v7840 = vld [vmem:[%s818 + $0x60] sm:$0xff]
        %v7841 = vld [vmem:[%s818 + $0x68] sm:$0xf]
        %v7842 = vld [vmem:[%s818 + $0x6c] sm:$0xff]
        %v7843 = vld [vmem:[%s818 + $0x74] sm:$0xf]
        %v7844 = vld [vmem:[%s818 + $0x78] sm:$0xff]
        %v7845 = vld [vmem:[%s818 + $0x80] sm:$0xf]
        %v7846 = vld [vmem:[%s818 + $0x84] sm:$0xff]
        %v7847 = vld [vmem:[%s818 + $0x8c] sm:$0xf]
        %v7848 = vld [vmem:[%s818 + $0x90] sm:$0xff]
        %v7849 = vld [vmem:[%s818 + $0x98] sm:$0xf]
        %v7850 = vld [vmem:[%s818 + $0x9c] sm:$0xff]
        %v7851 = vld [vmem:[%s818 + $0xa4] sm:$0xf]
        %v7852 = vld [vmem:[%s818 + $0xa8] sm:$0xff]
        %v7853 = vld [vmem:[%s818 + $0xb0] sm:$0xf]
        %v7854 = vld [vmem:[%s818 + $0xb4] sm:$0xff]
        %v7855 = vld [vmem:[%s818 + $0xbc] sm:$0xf]
        %v7856 = vld [vmem:[%s818 + $0xc0] sm:$0xff]
        %v7857 = vld [vmem:[%s818 + $0xc8] sm:$0xf]
        %v7858 = vld [vmem:[%s818 + $0xcc] sm:$0xff]
        %v7859 = vld [vmem:[%s818 + $0xd4] sm:$0xf]
        %v7860 = vld [vmem:[%s818 + $0xd8] sm:$0xff]
        %v7861 = vld [vmem:[%s818 + $0xe0] sm:$0xf]
        %v7862 = vld [vmem:[%s818 + $0xe4] sm:$0xff]
        %v7863 = vld [vmem:[%s818 + $0xec] sm:$0xf]
        %v7864 = vld [vmem:[%s818 + $0xf0] sm:$0xff]
        %v7865 = vld [vmem:[%s818 + $0xf8] sm:$0xf]
        %v7866 = vld [vmem:[%s818 + $0xfc] sm:$0xff]
        %v7867 = vld [vmem:[%s818 + $0x104] sm:$0xf]
        %v7868 = vld [vmem:[%s818 + $0x108] sm:$0xff]
        %v7869 = vld [vmem:[%s818 + $0x110] sm:$0xf]
        %v7870 = vld [vmem:[%s818 + $0x114] sm:$0xff]
        %v7871 = vld [vmem:[%s818 + $0x11c] sm:$0xf]
        %v7872 = vld [vmem:[%s818 + $0x120] sm:$0xff]
        %v7873 = vld [vmem:[%s818 + $0x128] sm:$0xf]
        %v7874 = vld [vmem:[%s818 + $0x12c] sm:$0xff]
        %v7875 = vld [vmem:[%s818 + $0x134] sm:$0xf]
        %v7876 = vld [vmem:[%s818 + $0x138] sm:$0xff]
        %v7877 = vld [vmem:[%s818 + $0x140] sm:$0xf]
        %v7878 = vld [vmem:[%s818 + $0x144] sm:$0xff]
        %v7879 = vld [vmem:[%s818 + $0x14c] sm:$0xf]
        %v7880 = vld [vmem:[%s818 + $0x150] sm:$0xff]
        %v7881 = vld [vmem:[%s818 + $0x158] sm:$0xf]
        %v7882 = vld [vmem:[%s818 + $0x15c] sm:$0xff]
        %v7883 = vld [vmem:[%s818 + $0x164] sm:$0xf]
        %v7884 = vld [vmem:[%s818 + $0x168] sm:$0xff]
        %v7885 = vld [vmem:[%s818 + $0x170] sm:$0xf]
        %v7886 = vld [vmem:[%s818 + $0x174] sm:$0xff]
        %v7887 = vld [vmem:[%s818 + $0x17c] sm:$0xf]
        %v7888 = vld [vmem:[%s818 + $0x180] sm:$0xff]
        %v7889 = vld [vmem:[%s818 + $0x188] sm:$0xf]
        %v7890 = vld [vmem:[%s818 + $0x18c] sm:$0xff]
        %v7891 = vld [vmem:[%s818 + $0x194] sm:$0xf]
        %v7892 = vld [vmem:[%s818 + $0x198] sm:$0xff]
        %v7893 = vld [vmem:[%s818 + $0x1a0] sm:$0xf]
        %v7894 = vld [vmem:[%s818 + $0x1a4] sm:$0xff]
        %v7895 = vld [vmem:[%s818 + $0x1ac] sm:$0xf]
        %v7896 = vld [vmem:[%s818 + $0x1b0] sm:$0xff]
        %v7897 = vld [vmem:[%s818 + $0x1b8] sm:$0xf]
        %v7898 = vld [vmem:[%s818 + $0x1bc] sm:$0xff]
        %v7899 = vld [vmem:[%s818 + $0x1c4] sm:$0xf]
        %v7900 = vld [vmem:[%s818 + $0x1c8] sm:$0xff]
        %v7901 = vld [vmem:[%s818 + $0x1d0] sm:$0xf]
        %v7902 = vld [vmem:[%s818 + $0x1d4] sm:$0xff]
        %v7903 = vld [vmem:[%s818 + $0x1dc] sm:$0xf]
        %v7904 = vld [vmem:[%s818 + $0x1e0] sm:$0xff]
        %v7905 = vld [vmem:[%s818 + $0x1e8] sm:$0xf]
        %v7906 = vld [vmem:[%s818 + $0x1ec] sm:$0xff]
        %v7907 = vld [vmem:[%s818 + $0x1f4] sm:$0xf]
        %v7908 = vld [vmem:[%s818 + $0x1f8] sm:$0xff]
        %v7909 = vld [vmem:[%s818 + $0x200] sm:$0xf]
        %v7910 = vld [vmem:[%s818 + $0x204] sm:$0xff]
        %v7911 = vld [vmem:[%s818 + $0x20c] sm:$0xf]
        %v7912 = vld [vmem:[%s818 + $0x210] sm:$0xff]
        %v7913 = vld [vmem:[%s818 + $0x218] sm:$0xf]
        %v7914 = vld [vmem:[%s818 + $0x21c] sm:$0xff]
        %v7915 = vld [vmem:[%s818 + $0x224] sm:$0xf]
        %v7916 = vld [vmem:[%s818 + $0x228] sm:$0xff]
        %v7917 = vld [vmem:[%s818 + $0x230] sm:$0xf]
        %v7918 = vld [vmem:[%s818 + $0x234] sm:$0xff]
        %v7919 = vld [vmem:[%s818 + $0x23c] sm:$0xf]
        %s7920 = scalar_lea.vmem [#allocation23], %s1366
        %v7921 = vld [vmem:[%s7920] ss:$8 sm:$0x7]
        %v7923 = vlaneseq
        %v7924 = vshrl.u32 %v7923, 7
        %v7925 = vsub.s32 0, %v7924
        %v7926 = vrot.slane %v7921, %v7925
        %v7927 = vlaneseq
        %v7928 = vshrl.u32 %v7927, 7
        %v7929 = vsub.s32 1, %v7928
        %v7930 = vrot.slane %v7921, %v7929
        %v7931 = vlaneseq
        %v7932 = vshrl.u32 %v7931, 7
        %v7933 = vsub.s32 2, %v7932
        %v7934 = vrot.slane %v7921, %v7933
        %v8034 = vunpack.c.l.b16 %v7824
        %v8035 = vunpack.c.h.b16 %v7824
        %v8036 = vunpack.c.l.b16 %v7825
        %v8037 = vunpack.c.l.b16 %v7826
        %v8038 = vunpack.c.h.b16 %v7826
        %v8039 = vunpack.c.l.b16 %v7827
        %v8040 = vunpack.c.l.b16 %v7828
        %v8041 = vunpack.c.h.b16 %v7828
        %v8042 = vunpack.c.l.b16 %v7829
        %v8043 = vunpack.c.l.b16 %v7830
        %v8044 = vunpack.c.h.b16 %v7830
        %v8045 = vunpack.c.l.b16 %v7831
        %v8046 = vunpack.c.l.b16 %v7832
        %v8047 = vunpack.c.h.b16 %v7832
        %v8048 = vunpack.c.l.b16 %v7833
        %v8049 = vunpack.c.l.b16 %v7834
        %v8050 = vunpack.c.h.b16 %v7834
        %v8051 = vunpack.c.l.b16 %v7835
        %v8052 = vunpack.c.l.b16 %v7836
        %v8053 = vunpack.c.h.b16 %v7836
        %v8054 = vunpack.c.l.b16 %v7837
        %v8055 = vunpack.c.l.b16 %v7838
        %v8056 = vunpack.c.h.b16 %v7838
        %v8057 = vunpack.c.l.b16 %v7839
        %v8058 = vunpack.c.l.b16 %v7840
        %v8059 = vunpack.c.h.b16 %v7840
        %v8060 = vunpack.c.l.b16 %v7841
        %v8061 = vunpack.c.l.b16 %v7842
        %v8062 = vunpack.c.h.b16 %v7842
        %v8063 = vunpack.c.l.b16 %v7843
        %v8064 = vunpack.c.l.b16 %v7844
        %v8065 = vunpack.c.h.b16 %v7844
        %v8066 = vunpack.c.l.b16 %v7845
        %v8067 = vunpack.c.l.b16 %v7846
        %v8068 = vunpack.c.h.b16 %v7846
        %v8069 = vunpack.c.l.b16 %v7847
        %v8070 = vunpack.c.l.b16 %v7848
        %v8071 = vunpack.c.h.b16 %v7848
        %v8072 = vunpack.c.l.b16 %v7849
        %v8073 = vunpack.c.l.b16 %v7850
        %v8074 = vunpack.c.h.b16 %v7850
        %v8075 = vunpack.c.l.b16 %v7851
        %v8076 = vunpack.c.l.b16 %v7852
        %v8077 = vunpack.c.h.b16 %v7852
        %v8078 = vunpack.c.l.b16 %v7853
        %v8079 = vunpack.c.l.b16 %v7854
        %v8080 = vunpack.c.h.b16 %v7854
        %v8081 = vunpack.c.l.b16 %v7855
        %v8082 = vunpack.c.l.b16 %v7856
        %v8083 = vunpack.c.h.b16 %v7856
        %v8084 = vunpack.c.l.b16 %v7857
        %v8085 = vunpack.c.l.b16 %v7858
        %v8086 = vunpack.c.h.b16 %v7858
        %v8087 = vunpack.c.l.b16 %v7859
        %v8088 = vunpack.c.l.b16 %v7860
        %v8089 = vunpack.c.h.b16 %v7860
        %v8090 = vunpack.c.l.b16 %v7861
        %v8091 = vunpack.c.l.b16 %v7862
        %v8092 = vunpack.c.h.b16 %v7862
        %v8093 = vunpack.c.l.b16 %v7863
        %v8094 = vunpack.c.l.b16 %v7864
        %v8095 = vunpack.c.h.b16 %v7864
        %v8096 = vunpack.c.l.b16 %v7865
        %v8097 = vunpack.c.l.b16 %v7866
        %v8098 = vunpack.c.h.b16 %v7866
        %v8099 = vunpack.c.l.b16 %v7867
        %v8100 = vunpack.c.l.b16 %v7868
        %v8101 = vunpack.c.h.b16 %v7868
        %v8102 = vunpack.c.l.b16 %v7869
        %v8103 = vunpack.c.l.b16 %v7870
        %v8104 = vunpack.c.h.b16 %v7870
        %v8105 = vunpack.c.l.b16 %v7871
        %v8106 = vunpack.c.l.b16 %v7872
        %v8107 = vunpack.c.h.b16 %v7872
        %v8108 = vunpack.c.l.b16 %v7873
        %v8109 = vunpack.c.l.b16 %v7874
        %v8110 = vunpack.c.h.b16 %v7874
        %v8111 = vunpack.c.l.b16 %v7875
        %v8112 = vunpack.c.l.b16 %v7876
        %v8113 = vunpack.c.h.b16 %v7876
        %v8114 = vunpack.c.l.b16 %v7877
        %v8115 = vunpack.c.l.b16 %v7878
        %v8116 = vunpack.c.h.b16 %v7878
        %v8117 = vunpack.c.l.b16 %v7879
        %v8118 = vunpack.c.l.b16 %v7880
        %v8119 = vunpack.c.h.b16 %v7880
        %v8120 = vunpack.c.l.b16 %v7881
        %v8121 = vunpack.c.l.b16 %v7882
        %v8122 = vunpack.c.h.b16 %v7882
        %v8123 = vunpack.c.l.b16 %v7883
        %v8124 = vunpack.c.l.b16 %v7884
        %v8125 = vunpack.c.h.b16 %v7884
        %v8126 = vunpack.c.l.b16 %v7885
        %v8127 = vunpack.c.l.b16 %v7886
        %v8128 = vunpack.c.h.b16 %v7886
        %v8129 = vunpack.c.l.b16 %v7887
        %v8130 = vunpack.c.l.b16 %v7888
        %v8131 = vunpack.c.h.b16 %v7888
        %v8132 = vunpack.c.l.b16 %v7889
        %v8133 = vunpack.c.l.b16 %v7890
        %v8134 = vunpack.c.h.b16 %v7890
        %v8135 = vunpack.c.l.b16 %v7891
        %v8136 = vunpack.c.l.b16 %v7892
        %v8137 = vunpack.c.h.b16 %v7892
        %v8138 = vunpack.c.l.b16 %v7893
        %v8139 = vunpack.c.l.b16 %v7894
        %v8140 = vunpack.c.h.b16 %v7894
        %v8141 = vunpack.c.l.b16 %v7895
        %v8142 = vunpack.c.l.b16 %v7896
        %v8143 = vunpack.c.h.b16 %v7896
        %v8144 = vunpack.c.l.b16 %v7897
        %v8145 = vunpack.c.l.b16 %v7898
        %v8146 = vunpack.c.h.b16 %v7898
        %v8147 = vunpack.c.l.b16 %v7899
        %v8148 = vunpack.c.l.b16 %v7900
        %v8149 = vunpack.c.h.b16 %v7900
        %v8150 = vunpack.c.l.b16 %v7901
        %v8151 = vunpack.c.l.b16 %v7902
        %v8152 = vunpack.c.h.b16 %v7902
        %v8153 = vunpack.c.l.b16 %v7903
        %v8154 = vunpack.c.l.b16 %v7904
        %v8155 = vunpack.c.h.b16 %v7904
        %v8156 = vunpack.c.l.b16 %v7905
        %v8157 = vunpack.c.l.b16 %v7906
        %v8158 = vunpack.c.h.b16 %v7906
        %v8159 = vunpack.c.l.b16 %v7907
        %v8160 = vunpack.c.l.b16 %v7908
        %v8161 = vunpack.c.h.b16 %v7908
        %v8162 = vunpack.c.l.b16 %v7909
        %v8163 = vunpack.c.l.b16 %v7910
        %v8164 = vunpack.c.h.b16 %v7910
        %v8165 = vunpack.c.l.b16 %v7911
        %v8166 = vunpack.c.l.b16 %v7912
        %v8167 = vunpack.c.h.b16 %v7912
        %v8168 = vunpack.c.l.b16 %v7913
        %v8169 = vunpack.c.l.b16 %v7914
        %v8170 = vunpack.c.h.b16 %v7914
        %v8171 = vunpack.c.l.b16 %v7915
        %v8172 = vunpack.c.l.b16 %v7916
        %v8173 = vunpack.c.h.b16 %v7916
        %v8174 = vunpack.c.l.b16 %v7917
        %v8175 = vunpack.c.l.b16 %v7918
        %v8176 = vunpack.c.h.b16 %v7918
        %v8177 = vunpack.c.l.b16 %v7919
        %v8178 = vpack.c.b16 %v8037, %v8034
        %v8179 = vpack.c.b16 %v8038, %v8035
        %v8180 = vpack.c.b16 %v8039, %v8036
        %v8181 = vpack.c.b16 %v8043, %v8040
        %v8182 = vpack.c.b16 %v8044, %v8041
        %v8183 = vpack.c.b16 %v8045, %v8042
        %v8184 = vpack.c.b16 %v8049, %v8046
        %v8185 = vpack.c.b16 %v8050, %v8047
        %v8186 = vpack.c.b16 %v8051, %v8048
        %v8187 = vpack.c.b16 %v8055, %v8052
        %v8188 = vpack.c.b16 %v8056, %v8053
        %v8189 = vpack.c.b16 %v8057, %v8054
        %v8190 = vpack.c.b16 %v8061, %v8058
        %v8191 = vpack.c.b16 %v8062, %v8059
        %v8192 = vpack.c.b16 %v8063, %v8060
        %v8193 = vpack.c.b16 %v8067, %v8064
        %v8194 = vpack.c.b16 %v8068, %v8065
        %v8195 = vpack.c.b16 %v8069, %v8066
        %v8196 = vpack.c.b16 %v8073, %v8070
        %v8197 = vpack.c.b16 %v8074, %v8071
        %v8198 = vpack.c.b16 %v8075, %v8072
        %v8199 = vpack.c.b16 %v8079, %v8076
        %v8200 = vpack.c.b16 %v8080, %v8077
        %v8201 = vpack.c.b16 %v8081, %v8078
        %v8202 = vpack.c.b16 %v8085, %v8082
        %v8203 = vpack.c.b16 %v8086, %v8083
        %v8204 = vpack.c.b16 %v8087, %v8084
        %v8205 = vpack.c.b16 %v8091, %v8088
        %v8206 = vpack.c.b16 %v8092, %v8089
        %v8207 = vpack.c.b16 %v8093, %v8090
        %v8208 = vpack.c.b16 %v8097, %v8094
        %v8209 = vpack.c.b16 %v8098, %v8095
        %v8210 = vpack.c.b16 %v8099, %v8096
        %v8211 = vpack.c.b16 %v8103, %v8100
        %v8212 = vpack.c.b16 %v8104, %v8101
        %v8213 = vpack.c.b16 %v8105, %v8102
        %v8214 = vpack.c.b16 %v8109, %v8106
        %v8215 = vpack.c.b16 %v8110, %v8107
        %v8216 = vpack.c.b16 %v8111, %v8108
        %v8217 = vpack.c.b16 %v8115, %v8112
        %v8218 = vpack.c.b16 %v8116, %v8113
        %v8219 = vpack.c.b16 %v8117, %v8114
        %v8220 = vpack.c.b16 %v8121, %v8118
        %v8221 = vpack.c.b16 %v8122, %v8119
        %v8222 = vpack.c.b16 %v8123, %v8120
        %v8223 = vpack.c.b16 %v8127, %v8124
        %v8224 = vpack.c.b16 %v8128, %v8125
        %v8225 = vpack.c.b16 %v8129, %v8126
        %v8226 = vpack.c.b16 %v8133, %v8130
        %v8227 = vpack.c.b16 %v8134, %v8131
        %v8228 = vpack.c.b16 %v8135, %v8132
        %v8229 = vpack.c.b16 %v8139, %v8136
        %v8230 = vpack.c.b16 %v8140, %v8137
        %v8231 = vpack.c.b16 %v8141, %v8138
        %v8232 = vpack.c.b16 %v8145, %v8142
        %v8233 = vpack.c.b16 %v8146, %v8143
        %v8234 = vpack.c.b16 %v8147, %v8144
        %v8235 = vpack.c.b16 %v8151, %v8148
        %v8236 = vpack.c.b16 %v8152, %v8149
        %v8237 = vpack.c.b16 %v8153, %v8150
        %v8238 = vpack.c.b16 %v8157, %v8154
        %v8239 = vpack.c.b16 %v8158, %v8155
        %v8240 = vpack.c.b16 %v8159, %v8156
        %v8241 = vpack.c.b16 %v8163, %v8160
        %v8242 = vpack.c.b16 %v8164, %v8161
        %v8243 = vpack.c.b16 %v8165, %v8162
        %v8244 = vpack.c.b16 %v8169, %v8166
        %v8245 = vpack.c.b16 %v8170, %v8167
        %v8246 = vpack.c.b16 %v8171, %v8168
        %v8247 = vpack.c.b16 %v8175, %v8172
        %v8248 = vpack.c.b16 %v8176, %v8173
        %v8249 = vpack.c.b16 %v8177, %v8174
        %8322 = vmatprep.subr.bf16.mxu0 %v8179
        %8323 = vmatpush1.bf16.msra.mxu0 %v8178
        %8324 = vmatprep.subr.bf16.mxu0 %v8182
        %8325 = vmatpush1.bf16.msra.mxu0 %v8181
        %8326 = vmatprep.subr.bf16.mxu0 %v8185
        %8327 = vmatpush1.bf16.msra.mxu0 %v8184
        %8328 = vmatprep.subr.bf16.mxu0 %v8188
        %8329 = vmatpush1.bf16.msra.mxu0 %v8187
        %8330 = vmatprep.subr.bf16.mxu0 %v8191
        %8331 = vmatpush1.bf16.msra.mxu0 %v8190
        %8332 = vmatprep.subr.bf16.mxu0 %v8194
        %8333 = vmatpush1.bf16.msra.mxu0 %v8193
        %8334 = vmatprep.subr.bf16.mxu0 %v8197
        %8335 = vmatpush1.bf16.msra.mxu0 %v8196
        %8336 = vmatprep.subr.bf16.mxu0 %v8200
        %8337 = vmatpush1.bf16.msra.mxu0 %v8199
        %8338 = vmatprep.subr.bf16.mxu0 %v8203
        %8339 = vmatpush1.bf16.msra.mxu0 %v8202
        %8340 = vmatprep.subr.bf16.mxu0 %v8206
        %8341 = vmatpush1.bf16.msra.mxu0 %v8205
        %8342 = vmatprep.subr.bf16.mxu0 %v8209
        %8343 = vmatpush1.bf16.msra.mxu0 %v8208
        %8344 = vmatprep.subr.bf16.mxu0 %v8212
        %8345 = vmatpush1.bf16.msra.mxu0 %v8211
        %8346 = vmatprep.subr.bf16.mxu0 %v8215
        %8347 = vmatpush1.bf16.msra.mxu0 %v8214
        %8348 = vmatprep.subr.bf16.mxu0 %v8218
        %8349 = vmatpush1.bf16.msra.mxu0 %v8217
        %8350 = vmatprep.subr.bf16.mxu0 %v8221
        %8351 = vmatpush1.bf16.msra.mxu0 %v8220
        %8352 = vmatprep.subr.bf16.mxu0 %v8224
        %8353 = vmatpush1.bf16.msra.mxu0 %v8223
        %8354 = vmatprep.mubr.bf16.mxu0 %v7813
        %8355 = vmatmul.mubr.bf16.gmra.mrb[0].mxu0 %v7812
        %v8356 = vpop.f32.mrb[0].mxu0
        %v8357 = vadd.f32 %v7926, %v8356
        %v8358 = vpop.f32.mrb[0].mxu0
        %v8359 = vadd.f32 %v7930, %v8358
        %v8360 = vpop.f32.mrb[0].mxu0
        %v8361 = vadd.f32 %v7926, %v8360
        %v8362 = vpop.f32.mrb[0].mxu0
        %v8363 = vadd.f32 %v7930, %v8362
        %8364 = vmatprep.mubr.bf16.mxu0 %v7816
        %8365 = vmatmul.mubr.bf16.gmra.mrb[0].mxu0 %v7815
        %v8366 = vpop.f32.mrb[0].mxu0
        %v8367 = vadd.f32 %v7926, %v8366
        %v8368 = vpop.f32.mrb[0].mxu0
        %v8369 = vadd.f32 %v7930, %v8368
        %v8370 = vpop.f32.mrb[0].mxu0
        %v8371 = vadd.f32 %v7926, %v8370
        %v8372 = vpop.f32.mrb[0].mxu0
        %v8373 = vadd.f32 %v7930, %v8372
        %8374 = vmatprep.mubr.bf16.mxu0 %v7819
        %8375 = vmatmul.mubr.bf16.gmra.mrb[0].mxu0 %v7818
        %v8376 = vpop.f32.mrb[0].mxu0
        %v8377 = vadd.f32 %v7926, %v8376
        %v8378 = vpop.f32.mrb[0].mxu0
        %v8379 = vadd.f32 %v7930, %v8378
        %v8380 = vpop.f32.mrb[0].mxu0
        %v8381 = vadd.f32 %v7926, %v8380
        %v8382 = vpop.f32.mrb[0].mxu0
        %v8383 = vadd.f32 %v7930, %v8382
        %8384 = vmatprep.mubr.bf16.mxu0 %v7822
        %8385 = vmatmul.mubr.bf16.gmra.mrb[0].mxu0 %v7821
        %v8386 = vpop.f32.mrb[0].mxu0
        %v8387 = vadd.f32 %v7926, %v8386
        %v8388 = vpop.f32.mrb[0].mxu0
        %v8389 = vadd.f32 %v7930, %v8388
        %v8390 = vpop.f32.mrb[0].mxu0
        %v8391 = vadd.f32 %v7926, %v8390
        %v8392 = vpop.f32.mrb[0].mxu0
        %v8393 = vadd.f32 %v7930, %v8392
        %8394 = vdwg.mxu0
        %8395 = vmatprep.subr.bf16.mxu0 %v8227
        %8396 = vmatpush1.bf16.msra.mxu0 %v8226
        %8397 = vmatprep.subr.bf16.mxu0 %v8230
        %8398 = vmatpush1.bf16.msra.mxu0 %v8229
        %8399 = vmatprep.subr.bf16.mxu0 %v8233
        %8400 = vmatpush1.bf16.msra.mxu0 %v8232
        %8401 = vmatprep.subr.bf16.mxu0 %v8236
        %8402 = vmatpush1.bf16.msra.mxu0 %v8235
        %8403 = vmatprep.subr.bf16.mxu0 %v8239
        %8404 = vmatpush1.bf16.msra.mxu0 %v8238
        %8405 = vmatprep.subr.bf16.mxu0 %v8242
        %8406 = vmatpush1.bf16.msra.mxu0 %v8241
        %8407 = vmatprep.subr.bf16.mxu0 %v8245
        %8408 = vmatpush1.bf16.msra.mxu0 %v8244
        %8409 = vmatprep.subr.bf16.mxu0 %v8248
        %8410 = vmatpush1.bf16.msra.mxu0 %v8247
        %8411 = vmatprep.subr.bf16.mxu0 0
        %8412 = vmatpush1.bf16.msra.mxu0 0
        %8413 = vmatprep.subr.bf16.mxu0 0
        %8414 = vmatpush1.bf16.msra.mxu0 0
        %8415 = vmatprep.subr.bf16.mxu0 0
        %8416 = vmatpush1.bf16.msra.mxu0 0
        %8417 = vmatprep.subr.bf16.mxu0 0
        %8418 = vmatpush1.bf16.msra.mxu0 0
        %8419 = vmatprep.subr.bf16.mxu0 0
        %8420 = vmatpush1.bf16.msra.mxu0 0
        %8421 = vmatprep.subr.bf16.mxu0 0
        %8422 = vmatpush1.bf16.msra.mxu0 0
        %8423 = vmatprep.subr.bf16.mxu0 0
        %8424 = vmatpush1.bf16.msra.mxu0 0
        %8425 = vmatprep.subr.bf16.mxu0 0
        %8426 = vmatpush1.bf16.msra.mxu0 0
        %8427 = vmatprep.mubr.bf16.mxu0 0
        %8428 = vmatmul.mubr.bf16.gmra.mrb[0].mxu0 %v7814
        %v8429 = vpop.f32.mrb[0].mxu0
        %v8430 = vadd.f32 %v8357, %v8429
        %v8431 = vpop.f32.mrb[0].mxu0
        %v8432 = vadd.f32 %v8359, %v8431
        %v8433 = vpop.f32.mrb[0].mxu0
        %v8434 = vadd.f32 %v8361, %v8433
        %v8435 = vpop.f32.mrb[0].mxu0
        %v8436 = vadd.f32 %v8363, %v8435
        %8437 = vmatprep.mubr.bf16.mxu0 0
        %8438 = vmatmul.mubr.bf16.gmra.mrb[0].mxu0 %v7817
        %v8439 = vpop.f32.mrb[0].mxu0
        %v8440 = vadd.f32 %v8367, %v8439
        %v8441 = vpop.f32.mrb[0].mxu0
        %v8442 = vadd.f32 %v8369, %v8441
        %v8443 = vpop.f32.mrb[0].mxu0
        %v8444 = vadd.f32 %v8371, %v8443
        %v8445 = vpop.f32.mrb[0].mxu0
        %v8446 = vadd.f32 %v8373, %v8445
        %8447 = vmatprep.mubr.bf16.mxu0 0
        %8448 = vmatmul.mubr.bf16.gmra.mrb[0].mxu0 %v7820
        %v8449 = vpop.f32.mrb[0].mxu0
        %v8450 = vadd.f32 %v8377, %v8449
        %v8451 = vpop.f32.mrb[0].mxu0
        %v8452 = vadd.f32 %v8379, %v8451
        %v8453 = vpop.f32.mrb[0].mxu0
        %v8454 = vadd.f32 %v8381, %v8453
        %v8455 = vpop.f32.mrb[0].mxu0
        %v8456 = vadd.f32 %v8383, %v8455
        %8457 = vmatprep.mubr.bf16.mxu0 0
        %8458 = vmatmul.mubr.bf16.gmra.mrb[0].mxu0 %v7823
        %v8459 = vpop.f32.mrb[0].mxu0
        %v8460 = vadd.f32 %v8387, %v8459
        %v8461 = vpop.f32.mrb[0].mxu0
        %v8462 = vadd.f32 %v8389, %v8461
        %v8463 = vpop.f32.mrb[0].mxu0
        %v8464 = vadd.f32 %v8391, %v8463
        %v8465 = vpop.f32.mrb[0].mxu0
        %v8466 = vadd.f32 %v8393, %v8465
        %8467 = vdwg.mxu0
        %8468 = vmatprep.subr.bf16.mxu0 0
        %8469 = vmatpush1.bf16.msra.mxu0 %v8180
        %8470 = vmatprep.subr.bf16.mxu0 0
        %8471 = vmatpush1.bf16.msra.mxu0 %v8183
        %8472 = vmatprep.subr.bf16.mxu0 0
        %8473 = vmatpush1.bf16.msra.mxu0 %v8186
        %8474 = vmatprep.subr.bf16.mxu0 0
        %8475 = vmatpush1.bf16.msra.mxu0 %v8189
        %8476 = vmatprep.subr.bf16.mxu0 0
        %8477 = vmatpush1.bf16.msra.mxu0 %v8192
        %8478 = vmatprep.subr.bf16.mxu0 0
        %8479 = vmatpush1.bf16.msra.mxu0 %v8195
        %8480 = vmatprep.subr.bf16.mxu0 0
        %8481 = vmatpush1.bf16.msra.mxu0 %v8198
        %8482 = vmatprep.subr.bf16.mxu0 0
        %8483 = vmatpush1.bf16.msra.mxu0 %v8201
        %8484 = vmatprep.subr.bf16.mxu0 0
        %8485 = vmatpush1.bf16.msra.mxu0 %v8204
        %8486 = vmatprep.subr.bf16.mxu0 0
        %8487 = vmatpush1.bf16.msra.mxu0 %v8207
        %8488 = vmatprep.subr.bf16.mxu0 0
        %8489 = vmatpush1.bf16.msra.mxu0 %v8210
        %8490 = vmatprep.subr.bf16.mxu0 0
        %8491 = vmatpush1.bf16.msra.mxu0 %v8213
        %8492 = vmatprep.subr.bf16.mxu0 0
        %8493 = vmatpush1.bf16.msra.mxu0 %v8216
        %8494 = vmatprep.subr.bf16.mxu0 0
        %8495 = vmatpush1.bf16.msra.mxu0 %v8219
        %8496 = vmatprep.subr.bf16.mxu0 0
        %8497 = vmatpush1.bf16.msra.mxu0 %v8222
        %8498 = vmatprep.subr.bf16.mxu0 0
        %8499 = vmatpush1.bf16.msra.mxu0 %v8225
        %8500 = vmatprep.mubr.bf16.mxu0 %v7813
        %8501 = vmatmul.mubr.bf16.gmra.mrb[0].mxu0 %v7812
        %v8502 = vpop.f32.mrb[0].mxu0
        %v8503 = vadd.f32 %v7934, %v8502
        %v8504 = vpop.f32.mrb[0].mxu0
        %v8505 = vpop.f32.mrb[0].mxu0
        %v8506 = vadd.f32 %v7934, %v8505
        %v8507 = vpop.f32.mrb[0].mxu0
        %8508 = vmatprep.mubr.bf16.mxu0 %v7816
        %8509 = vmatmul.mubr.bf16.gmra.mrb[0].mxu0 %v7815
        %v8510 = vpop.f32.mrb[0].mxu0
        %v8511 = vadd.f32 %v7934, %v8510
        %v8512 = vpop.f32.mrb[0].mxu0
        %v8513 = vpop.f32.mrb[0].mxu0
        %v8514 = vadd.f32 %v7934, %v8513
        %v8515 = vpop.f32.mrb[0].mxu0
        %8516 = vmatprep.mubr.bf16.mxu0 %v7819
        %8517 = vmatmul.mubr.bf16.gmra.mrb[0].mxu0 %v7818
        %v8518 = vpop.f32.mrb[0].mxu0
        %v8519 = vadd.f32 %v7934, %v8518
        %v8520 = vpop.f32.mrb[0].mxu0
        %v8521 = vpop.f32.mrb[0].mxu0
        %v8522 = vadd.f32 %v7934, %v8521
        %v8523 = vpop.f32.mrb[0].mxu0
        %8524 = vmatprep.mubr.bf16.mxu0 %v7822
        %8525 = vmatmul.mubr.bf16.gmra.mrb[0].mxu0 %v7821
        %v8526 = vpop.f32.mrb[0].mxu0
        %v8527 = vadd.f32 %v7934, %v8526
        %v8528 = vpop.f32.mrb[0].mxu0
        %v8529 = vpop.f32.mrb[0].mxu0
        %v8530 = vadd.f32 %v7934, %v8529
        %v8531 = vpop.f32.mrb[0].mxu0
        %8532 = vdwg.mxu0
        %8533 = vmatprep.subr.bf16.mxu0 0
        %8534 = vmatpush1.bf16.msra.mxu0 %v8228
        %8535 = vmatprep.subr.bf16.mxu0 0
        %8536 = vmatpush1.bf16.msra.mxu0 %v8231
        %8537 = vmatprep.subr.bf16.mxu0 0
        %8538 = vmatpush1.bf16.msra.mxu0 %v8234
        %8539 = vmatprep.subr.bf16.mxu0 0
        %8540 = vmatpush1.bf16.msra.mxu0 %v8237
        %8541 = vmatprep.subr.bf16.mxu0 0
        %8542 = vmatpush1.bf16.msra.mxu0 %v8240
        %8543 = vmatprep.subr.bf16.mxu0 0
        %8544 = vmatpush1.bf16.msra.mxu0 %v8243
        %8545 = vmatprep.subr.bf16.mxu0 0
        %8546 = vmatpush1.bf16.msra.mxu0 %v8246
        %8547 = vmatprep.subr.bf16.mxu0 0
        %8548 = vmatpush1.bf16.msra.mxu0 %v8249
        %8549 = vmatprep.subr.bf16.mxu0 0
        %8550 = vmatpush1.bf16.msra.mxu0 0
        %8551 = vmatprep.subr.bf16.mxu0 0
        %8552 = vmatpush1.bf16.msra.mxu0 0
        %8553 = vmatprep.subr.bf16.mxu0 0
        %8554 = vmatpush1.bf16.msra.mxu0 0
        %8555 = vmatprep.subr.bf16.mxu0 0
        %8556 = vmatpush1.bf16.msra.mxu0 0
        %8557 = vmatprep.subr.bf16.mxu0 0
        %8558 = vmatpush1.bf16.msra.mxu0 0
        %8559 = vmatprep.subr.bf16.mxu0 0
        %8560 = vmatpush1.bf16.msra.mxu0 0
        %8561 = vmatprep.subr.bf16.mxu0 0
        %8562 = vmatpush1.bf16.msra.mxu0 0
        %8563 = vmatprep.subr.bf16.mxu0 0
        %8564 = vmatpush1.bf16.msra.mxu0 0
        %8565 = vmatprep.mubr.bf16.mxu0 0
        %8566 = vmatmul.mubr.bf16.gmra.mrb[0].mxu0 %v7814
        %v8567 = vpop.f32.mrb[0].mxu0
        %v8568 = vadd.f32 %v8503, %v8567
        %v8569 = vpop.f32.mrb[0].mxu0
        %v8570 = vpop.f32.mrb[0].mxu0
        %v8571 = vadd.f32 %v8506, %v8570
        %v8572 = vpop.f32.mrb[0].mxu0
        %8573 = vmatprep.mubr.bf16.mxu0 0
        %8574 = vmatmul.mubr.bf16.gmra.mrb[0].mxu0 %v7817
        %v8575 = vpop.f32.mrb[0].mxu0
        %v8576 = vadd.f32 %v8511, %v8575
        %v8577 = vpop.f32.mrb[0].mxu0
        %v8578 = vpop.f32.mrb[0].mxu0
        %v8579 = vadd.f32 %v8514, %v8578
        %v8580 = vpop.f32.mrb[0].mxu0
        %8581 = vmatprep.mubr.bf16.mxu0 0
        %8582 = vmatmul.mubr.bf16.gmra.mrb[0].mxu0 %v7820
        %v8583 = vpop.f32.mrb[0].mxu0
        %v8584 = vadd.f32 %v8519, %v8583
        %v8585 = vpop.f32.mrb[0].mxu0
        %v8586 = vpop.f32.mrb[0].mxu0
        %v8587 = vadd.f32 %v8522, %v8586
        %v8588 = vpop.f32.mrb[0].mxu0
        %8589 = vmatprep.mubr.bf16.mxu0 0
        %8590 = vmatmul.mubr.bf16.gmra.mrb[0].mxu0 %v7823
        %v8591 = vpop.f32.mrb[0].mxu0
        %v8592 = vadd.f32 %v8527, %v8591
        %v8593 = vpop.f32.mrb[0].mxu0
        %v8594 = vpop.f32.mrb[0].mxu0
        %v8595 = vadd.f32 %v8530, %v8594
        %v8596 = vpop.f32.mrb[0].mxu0
        %8597 = vdwg.mxu0
        %v8598 = vadd.f32 %v6726, %v8430
        %v8599 = vadd.f32 %v6727, %v8432
        %v8600 = vadd.f32 %v6728, %v8568
        %v8601 = vadd.f32 %v6729, %v8434
        %v8602 = vadd.f32 %v6730, %v8436
        %v8603 = vadd.f32 %v6731, %v8571
        %v8604 = vadd.f32 %v6732, %v8440
        %v8605 = vadd.f32 %v6733, %v8442
        %v8606 = vadd.f32 %v6734, %v8576
        %v8607 = vadd.f32 %v6735, %v8444
        %v8608 = vadd.f32 %v6736, %v8446
        %v8609 = vadd.f32 %v6737, %v8579
        %v8610 = vadd.f32 %v6738, %v8450
        %v8611 = vadd.f32 %v6739, %v8452
        %v8612 = vadd.f32 %v6740, %v8584
        %v8613 = vadd.f32 %v6741, %v8454
        %v8614 = vadd.f32 %v6742, %v8456
        %v8615 = vadd.f32 %v6743, %v8587
        %v8616 = vadd.f32 %v6744, %v8460
        %v8617 = vadd.f32 %v6745, %v8462
        %v8618 = vadd.f32 %v6746, %v8592
        %v8619 = vadd.f32 %v6747, %v8464
        %v8620 = vadd.f32 %v6748, %v8466
        %v8621 = vadd.f32 %v6749, %v8595
        %8622 = vst [vmem:[#allocation2] sm:$0xff] %v8598
        %8623 = vst [vmem:[#allocation2 + $0x8] sm:$0xff] %v8599
        %8624 = vst [vmem:[#allocation2 + $0x10] sm:$0xff] %v8600
        %8625 = vst [vmem:[#allocation2 + $0x18] sm:$0xff] %v8601
        %8626 = vst [vmem:[#allocation2 + $0x20] sm:$0xff] %v8602
        %8627 = vst [vmem:[#allocation2 + $0x28] sm:$0xff] %v8603
        %8628 = vst [vmem:[#allocation2 + $0x30] sm:$0xff] %v8604
        %8629 = vst [vmem:[#allocation2 + $0x38] sm:$0xff] %v8605
        %8630 = vst [vmem:[#allocation2 + $0x40] sm:$0xff] %v8606
        %8631 = vst [vmem:[#allocation2 + $0x48] sm:$0xff] %v8607
        %8632 = vst [vmem:[#allocation2 + $0x50] sm:$0xff] %v8608
        %8633 = vst [vmem:[#allocation2 + $0x58] sm:$0xff] %v8609
        %8634 = vst [vmem:[#allocation2 + $0x60] sm:$0xff] %v8610
        %8635 = vst [vmem:[#allocation2 + $0x68] sm:$0xff] %v8611
        %8636 = vst [vmem:[#allocation2 + $0x70] sm:$0xff] %v8612
        %8637 = vst [vmem:[#allocation2 + $0x78] sm:$0xff] %v8613
        %8638 = vst [vmem:[#allocation2 + $0x80] sm:$0xff] %v8614
        %8639 = vst [vmem:[#allocation2 + $0x88] sm:$0xff] %v8615
        %8640 = vst [vmem:[#allocation2 + $0x90] sm:$0xff] %v8616
        %8641 = vst [vmem:[#allocation2 + $0x98] sm:$0xff] %v8617
        %8642 = vst [vmem:[#allocation2 + $0xa0] sm:$0xff] %v8618
        %8643 = vst [vmem:[#allocation2 + $0xa8] sm:$0xff] %v8619
        %8644 = vst [vmem:[#allocation2 + $0xb0] sm:$0xff] %v8620
        %8645 = vst [vmem:[#allocation2 + $0xb8] sm:$0xff] %v8621
        %p8646 = scmp.eq.s32.totalorder %s41, 5
        // Predicated region
        $region173: #{tpu_custom_call.1} parent=95 // pred_check
          %p8647 = pneg %p8646
        $region174: #{tpu_custom_call.1} parent=95 // pred_check_branch
          %8649 = sbr.rel (%p8647) target = $region176
        $region175: #{tpu_custom_call.1} parent=95 // pred_region
          %v8650 = vld [vmem:[#allocation24] sm:$0x7]
          %v8651 = vld [vmem:[#allocation25] sm:$0x7]
          %v8652 = vadd.f32 %v8598, %v8599
          %v8653 = vadd.f32 %v8652, %v8600
          %8654 = vadd.xlane.f32.xlu0 %v8653
          %v8655 = vpop.xlane.xlu0 %8654
          %v8656 = vadd.f32 %v8601, %v8602
          %v8657 = vadd.f32 %v8656, %v8603
          %8658 = vadd.xlane.f32.xlu0 %v8657
          %v8659 = vpop.xlane.xlu0 %8658
          %v8660 = vadd.f32 %v8604, %v8605
          %v8661 = vadd.f32 %v8660, %v8606
          %8662 = vadd.xlane.f32.xlu0 %v8661
          %v8663 = vpop.xlane.xlu0 %8662
          %v8664 = vadd.f32 %v8607, %v8608
          %v8665 = vadd.f32 %v8664, %v8609
          %8666 = vadd.xlane.f32.xlu0 %v8665
          %v8667 = vpop.xlane.xlu0 %8666
          %v8668 = vadd.f32 %v8610, %v8611
          %v8669 = vadd.f32 %v8668, %v8612
          %8670 = vadd.xlane.f32.xlu0 %v8669
          %v8671 = vpop.xlane.xlu0 %8670
          %v8672 = vadd.f32 %v8613, %v8614
          %v8673 = vadd.f32 %v8672, %v8615
          %8674 = vadd.xlane.f32.xlu0 %v8673
          %v8675 = vpop.xlane.xlu0 %8674
          %v8676 = vadd.f32 %v8616, %v8617
          %v8677 = vadd.f32 %v8676, %v8618
          %8678 = vadd.xlane.f32.xlu0 %v8677
          %v8679 = vpop.xlane.xlu0 %8678
          %v8680 = vadd.f32 %v8619, %v8620
          %v8681 = vadd.f32 %v8680, %v8621
          %8682 = vadd.xlane.f32.xlu0 %v8681
          %v8683 = vpop.xlane.xlu0 %8682
          %v8684 = vmul.f32 %v8655, %v1403
          %v8685 = vmul.f32 %v8659, %v1403
          %v8686 = vmul.f32 %v8663, %v1403
          %v8687 = vmul.f32 %v8667, %v1403
          %v8688 = vmul.f32 %v8671, %v1403
          %v8689 = vmul.f32 %v8675, %v1403
          %v8690 = vmul.f32 %v8679, %v1403
          %v8691 = vmul.f32 %v8683, %v1403
          %v8692 = vsub.f32 %v8598, %v8684
          %v8693 = vsub.f32 %v8599, %v8684
          %v8694 = vsub.f32 %v8600, %v8684
          %v8695 = vsub.f32 %v8601, %v8685
          %v8696 = vsub.f32 %v8602, %v8685
          %v8697 = vsub.f32 %v8603, %v8685
          %v8698 = vsub.f32 %v8604, %v8686
          %v8699 = vsub.f32 %v8605, %v8686
          %v8700 = vsub.f32 %v8606, %v8686
          %v8701 = vsub.f32 %v8607, %v8687
          %v8702 = vsub.f32 %v8608, %v8687
          %v8703 = vsub.f32 %v8609, %v8687
          %v8704 = vsub.f32 %v8610, %v8688
          %v8705 = vsub.f32 %v8611, %v8688
          %v8706 = vsub.f32 %v8612, %v8688
          %v8707 = vsub.f32 %v8613, %v8689
          %v8708 = vsub.f32 %v8614, %v8689
          %v8709 = vsub.f32 %v8615, %v8689
          %v8710 = vsub.f32 %v8616, %v8690
          %v8711 = vsub.f32 %v8617, %v8690
          %v8712 = vsub.f32 %v8618, %v8690
          %v8713 = vsub.f32 %v8619, %v8691
          %v8714 = vsub.f32 %v8620, %v8691
          %v8715 = vsub.f32 %v8621, %v8691
          %v8716 = vmul.f32 %v8692, %v8692
          %v8717 = vmul.f32 %v8693, %v8693
          %v8718 = vmul.f32 %v8694, %v8694
          %v8719 = vmul.f32 %v8695, %v8695
          %v8720 = vmul.f32 %v8696, %v8696
          %v8721 = vmul.f32 %v8697, %v8697
          %v8722 = vmul.f32 %v8698, %v8698
          %v8723 = vmul.f32 %v8699, %v8699
          %v8724 = vmul.f32 %v8700, %v8700
          %v8725 = vmul.f32 %v8701, %v8701
          %v8726 = vmul.f32 %v8702, %v8702
          %v8727 = vmul.f32 %v8703, %v8703
          %v8728 = vmul.f32 %v8704, %v8704
          %v8729 = vmul.f32 %v8705, %v8705
          %v8730 = vmul.f32 %v8706, %v8706
          %v8731 = vmul.f32 %v8707, %v8707
          %v8732 = vmul.f32 %v8708, %v8708
          %v8733 = vmul.f32 %v8709, %v8709
          %v8734 = vmul.f32 %v8710, %v8710
          %v8735 = vmul.f32 %v8711, %v8711
          %v8736 = vmul.f32 %v8712, %v8712
          %v8737 = vmul.f32 %v8713, %v8713
          %v8738 = vmul.f32 %v8714, %v8714
          %v8739 = vmul.f32 %v8715, %v8715
          %v8740 = vadd.f32 %v8716, %v8717
          %v8741 = vadd.f32 %v8740, %v8718
          %8742 = vadd.xlane.f32.xlu0 %v8741
          %v8743 = vpop.xlane.xlu0 %8742
          %v8744 = vadd.f32 %v8719, %v8720
          %v8745 = vadd.f32 %v8744, %v8721
          %8746 = vadd.xlane.f32.xlu0 %v8745
          %v8747 = vpop.xlane.xlu0 %8746
          %v8748 = vadd.f32 %v8722, %v8723
          %v8749 = vadd.f32 %v8748, %v8724
          %8750 = vadd.xlane.f32.xlu0 %v8749
          %v8751 = vpop.xlane.xlu0 %8750
          %v8752 = vadd.f32 %v8725, %v8726
          %v8753 = vadd.f32 %v8752, %v8727
          %8754 = vadd.xlane.f32.xlu0 %v8753
          %v8755 = vpop.xlane.xlu0 %8754
          %v8756 = vadd.f32 %v8728, %v8729
          %v8757 = vadd.f32 %v8756, %v8730
          %8758 = vadd.xlane.f32.xlu0 %v8757
          %v8759 = vpop.xlane.xlu0 %8758
          %v8760 = vadd.f32 %v8731, %v8732
          %v8761 = vadd.f32 %v8760, %v8733
          %8762 = vadd.xlane.f32.xlu0 %v8761
          %v8763 = vpop.xlane.xlu0 %8762
          %v8764 = vadd.f32 %v8734, %v8735
          %v8765 = vadd.f32 %v8764, %v8736
          %8766 = vadd.xlane.f32.xlu0 %v8765
          %v8767 = vpop.xlane.xlu0 %8766
          %v8768 = vadd.f32 %v8737, %v8738
          %v8769 = vadd.f32 %v8768, %v8739
          %8770 = vadd.xlane.f32.xlu0 %v8769
          %v8771 = vpop.xlane.xlu0 %8770
          %v8772 = vmul.f32 %v8743, %v1403
          %v8773 = vmul.f32 %v8747, %v1403
          %v8774 = vmul.f32 %v8751, %v1403
          %v8775 = vmul.f32 %v8755, %v1403
          %v8776 = vmul.f32 %v8759, %v1403
          %v8777 = vmul.f32 %v8763, %v1403
          %v8778 = vmul.f32 %v8767, %v1403
          %v8779 = vmul.f32 %v8771, %v1403
          %v8780 = vadd.f32 %v8772, 1e-05
          %v8781 = vadd.f32 %v8773, 1e-05
          %v8782 = vadd.f32 %v8774, 1e-05
          %v8783 = vadd.f32 %v8775, 1e-05
          %v8784 = vadd.f32 %v8776, 1e-05
          %v8785 = vadd.f32 %v8777, 1e-05
          %v8786 = vadd.f32 %v8778, 1e-05
          %v8787 = vadd.f32 %v8779, 1e-05
          %v8788 = vrsqrt.pop %v8780
          %v8789 = vrsqrt.pop %v8781
          %v8790 = vrsqrt.pop %v8782
          %v8791 = vrsqrt.pop %v8783
          %v8792 = vrsqrt.pop %v8784
          %v8793 = vrsqrt.pop %v8785
          %v8794 = vrsqrt.pop %v8786
          %v8795 = vrsqrt.pop %v8787
          %v8796 = vmul.f32 %v8692, %v8788
          %v8797 = vmul.f32 %v8693, %v8788
          %v8798 = vmul.f32 %v8694, %v8788
          %v8799 = vmul.f32 %v8695, %v8789
          %v8800 = vmul.f32 %v8696, %v8789
          %v8801 = vmul.f32 %v8697, %v8789
          %v8802 = vmul.f32 %v8698, %v8790
          %v8803 = vmul.f32 %v8699, %v8790
          %v8804 = vmul.f32 %v8700, %v8790
          %v8805 = vmul.f32 %v8701, %v8791
          %v8806 = vmul.f32 %v8702, %v8791
          %v8807 = vmul.f32 %v8703, %v8791
          %v8808 = vmul.f32 %v8704, %v8792
          %v8809 = vmul.f32 %v8705, %v8792
          %v8810 = vmul.f32 %v8706, %v8792
          %v8811 = vmul.f32 %v8707, %v8793
          %v8812 = vmul.f32 %v8708, %v8793
          %v8813 = vmul.f32 %v8709, %v8793
          %v8814 = vmul.f32 %v8710, %v8794
          %v8815 = vmul.f32 %v8711, %v8794
          %v8816 = vmul.f32 %v8712, %v8794
          %v8817 = vmul.f32 %v8713, %v8795
          %v8818 = vmul.f32 %v8714, %v8795
          %v8819 = vmul.f32 %v8715, %v8795
          %v8821 = vlaneseq
          %v8822 = vshrl.u32 %v8821, 7
          %v8823 = vsub.s32 0, %v8822
          %v8824 = vrot.slane %v8650, %v8823
          %v8825 = vlaneseq
          %v8826 = vshrl.u32 %v8825, 7
          %v8827 = vsub.s32 1, %v8826
          %v8828 = vrot.slane %v8650, %v8827
          %v8829 = vlaneseq
          %v8830 = vshrl.u32 %v8829, 7
          %v8831 = vsub.s32 2, %v8830
          %v8832 = vrot.slane %v8650, %v8831
          %v8836 = vmul.f32 %v8796, %v8824
          %v8837 = vmul.f32 %v8797, %v8828
          %v8838 = vmul.f32 %v8798, %v8832
          %v8839 = vmul.f32 %v8799, %v8824
          %v8840 = vmul.f32 %v8800, %v8828
          %v8841 = vmul.f32 %v8801, %v8832
          %v8842 = vmul.f32 %v8802, %v8824
          %v8843 = vmul.f32 %v8803, %v8828
          %v8844 = vmul.f32 %v8804, %v8832
          %v8845 = vmul.f32 %v8805, %v8824
          %v8846 = vmul.f32 %v8806, %v8828
          %v8847 = vmul.f32 %v8807, %v8832
          %v8848 = vmul.f32 %v8808, %v8824
          %v8849 = vmul.f32 %v8809, %v8828
          %v8850 = vmul.f32 %v8810, %v8832
          %v8851 = vmul.f32 %v8811, %v8824
          %v8852 = vmul.f32 %v8812, %v8828
          %v8853 = vmul.f32 %v8813, %v8832
          %v8854 = vmul.f32 %v8814, %v8824
          %v8855 = vmul.f32 %v8815, %v8828
          %v8856 = vmul.f32 %v8816, %v8832
          %v8857 = vmul.f32 %v8817, %v8824
          %v8858 = vmul.f32 %v8818, %v8828
          %v8859 = vmul.f32 %v8819, %v8832
          %v8861 = vlaneseq
          %v8862 = vshrl.u32 %v8861, 7
          %v8863 = vsub.s32 0, %v8862
          %v8864 = vrot.slane %v8651, %v8863
          %v8865 = vlaneseq
          %v8866 = vshrl.u32 %v8865, 7
          %v8867 = vsub.s32 1, %v8866
          %v8868 = vrot.slane %v8651, %v8867
          %v8869 = vlaneseq
          %v8870 = vshrl.u32 %v8869, 7
          %v8871 = vsub.s32 2, %v8870
          %v8872 = vrot.slane %v8651, %v8871
          %v8876 = vadd.f32 %v8836, %v8864
          %v8877 = vadd.f32 %v8837, %v8868
          %v8878 = vadd.f32 %v8838, %v8872
          %v8879 = vadd.f32 %v8839, %v8864
          %v8880 = vadd.f32 %v8840, %v8868
          %v8881 = vadd.f32 %v8841, %v8872
          %v8882 = vadd.f32 %v8842, %v8864
          %v8883 = vadd.f32 %v8843, %v8868
          %v8884 = vadd.f32 %v8844, %v8872
          %v8885 = vadd.f32 %v8845, %v8864
          %v8886 = vadd.f32 %v8846, %v8868
          %v8887 = vadd.f32 %v8847, %v8872
          %v8888 = vadd.f32 %v8848, %v8864
          %v8889 = vadd.f32 %v8849, %v8868
          %v8890 = vadd.f32 %v8850, %v8872
          %v8891 = vadd.f32 %v8851, %v8864
          %v8892 = vadd.f32 %v8852, %v8868
          %v8893 = vadd.f32 %v8853, %v8872
          %v8894 = vadd.f32 %v8854, %v8864
          %v8895 = vadd.f32 %v8855, %v8868
          %v8896 = vadd.f32 %v8856, %v8872
          %v8897 = vadd.f32 %v8857, %v8864
          %v8898 = vadd.f32 %v8858, %v8868
          %v8899 = vadd.f32 %v8859, %v8872
          %v8900 = vpack.c.bf16 %v8879, %v8876
          %v8901 = vpack.c.bf16 %v8880, %v8877
          %v8902 = vpack.c.bf16 %v8881, %v8878
          %v8903 = vpack.c.bf16 %v8885, %v8882
          %v8904 = vpack.c.bf16 %v8886, %v8883
          %v8905 = vpack.c.bf16 %v8887, %v8884
          %v8906 = vpack.c.bf16 %v8891, %v8888
          %v8907 = vpack.c.bf16 %v8892, %v8889
          %v8908 = vpack.c.bf16 %v8893, %v8890
          %v8909 = vpack.c.bf16 %v8897, %v8894
          %v8910 = vpack.c.bf16 %v8898, %v8895
          %v8911 = vpack.c.bf16 %v8899, %v8896
          %v8912 = vld [vmem:[#allocation27] sm:$0xf]
          %v8913 = vld [vmem:[#allocation27 + $0x4] sm:$0xf]
          %v8914 = vld [vmem:[#allocation27 + $0x8] sm:$0xf]
          %v8915 = vld [vmem:[#allocation27 + $0xc] sm:$0xf]
          %v8916 = vld [vmem:[#allocation27 + $0x10] sm:$0xf]
          %v8917 = vld [vmem:[#allocation27 + $0x14] sm:$0xf]
          %v8918 = vld [vmem:[#allocation27 + $0x18] sm:$0xf]
          %v8919 = vld [vmem:[#allocation27 + $0x1c] sm:$0xf]
          %v8920 = vld [vmem:[#allocation27 + $0x20] sm:$0xf]
          %v8921 = vld [vmem:[#allocation27 + $0x24] sm:$0xf]
          %v8922 = vld [vmem:[#allocation27 + $0x28] sm:$0xf]
          %v8923 = vld [vmem:[#allocation27 + $0x2c] sm:$0xf]
          %v8924 = vld [vmem:[#allocation27 + $0x30] sm:$0xf]
          %v8925 = vld [vmem:[#allocation27 + $0x34] sm:$0xf]
          %v8926 = vld [vmem:[#allocation27 + $0x38] sm:$0xf]
          %v8927 = vld [vmem:[#allocation27 + $0x3c] sm:$0xf]
          %v8928 = vld [vmem:[#allocation27 + $0x40] sm:$0xf]
          %v8929 = vld [vmem:[#allocation27 + $0x44] sm:$0xf]
          %v8930 = vld [vmem:[#allocation27 + $0x48] sm:$0xf]
          %v8931 = vld [vmem:[#allocation27 + $0x4c] sm:$0xf]
          %v8932 = vld [vmem:[#allocation27 + $0x50] sm:$0xf]
          %v8933 = vld [vmem:[#allocation27 + $0x54] sm:$0xf]
          %v8934 = vld [vmem:[#allocation27 + $0x58] sm:$0xf]
          %v8935 = vld [vmem:[#allocation27 + $0x5c] sm:$0xf]
          %v8936 = vld [vmem:[#allocation27 + $0x60] sm:$0xf]
          %v8937 = vld [vmem:[#allocation27 + $0x64] sm:$0xf]
          %v8938 = vld [vmem:[#allocation27 + $0x68] sm:$0xf]
          %v8939 = vld [vmem:[#allocation27 + $0x6c] sm:$0xf]
          %v8940 = vld [vmem:[#allocation27 + $0x70] sm:$0xf]
          %v8941 = vld [vmem:[#allocation27 + $0x74] sm:$0xf]
          %v8942 = vld [vmem:[#allocation27 + $0x78] sm:$0xf]
          %v8943 = vld [vmem:[#allocation27 + $0x7c] sm:$0xf]
          %v8944 = vld [vmem:[#allocation27 + $0x80] sm:$0xf]
          %v8945 = vld [vmem:[#allocation27 + $0x84] sm:$0xf]
          %v8946 = vld [vmem:[#allocation27 + $0x88] sm:$0xf]
          %v8947 = vld [vmem:[#allocation27 + $0x8c] sm:$0xf]
          %v8948 = vld [vmem:[#allocation27 + $0x90] sm:$0xf]
          %v8949 = vld [vmem:[#allocation27 + $0x94] sm:$0xf]
          %v8950 = vld [vmem:[#allocation27 + $0x98] sm:$0xf]
          %v8951 = vld [vmem:[#allocation27 + $0x9c] sm:$0xf]
          %v8952 = vld [vmem:[#allocation27 + $0xa0] sm:$0xf]
          %v8953 = vld [vmem:[#allocation27 + $0xa4] sm:$0xf]
          %v8954 = vld [vmem:[#allocation27 + $0xa8] sm:$0xf]
          %v8955 = vld [vmem:[#allocation27 + $0xac] sm:$0xf]
          %v8956 = vld [vmem:[#allocation27 + $0xb0] sm:$0xf]
          %v8957 = vld [vmem:[#allocation27 + $0xb4] sm:$0xf]
          %v8958 = vld [vmem:[#allocation27 + $0xb8] sm:$0xf]
          %v8959 = vld [vmem:[#allocation27 + $0xbc] sm:$0xf]
          %v8960 = vld [vmem:[#allocation28] sm:$0x1]
          %v8962 = vlaneseq
          %v8963 = vshrl.u32 %v8962, 7
          %v8964 = vsub.s32 0, %v8963
          %v8965 = vrot.slane %v8960, %v8964
          %v9015 = vunpack.c.l.b16 %v8912
          %v9016 = vunpack.c.l.b16 %v8913
          %v9017 = vunpack.c.l.b16 %v8914
          %v9018 = vunpack.c.l.b16 %v8915
          %v9019 = vunpack.c.l.b16 %v8916
          %v9020 = vunpack.c.l.b16 %v8917
          %v9021 = vunpack.c.l.b16 %v8918
          %v9022 = vunpack.c.l.b16 %v8919
          %v9023 = vunpack.c.l.b16 %v8920
          %v9024 = vunpack.c.l.b16 %v8921
          %v9025 = vunpack.c.l.b16 %v8922
          %v9026 = vunpack.c.l.b16 %v8923
          %v9027 = vunpack.c.l.b16 %v8924
          %v9028 = vunpack.c.l.b16 %v8925
          %v9029 = vunpack.c.l.b16 %v8926
          %v9030 = vunpack.c.l.b16 %v8927
          %v9031 = vunpack.c.l.b16 %v8928
          %v9032 = vunpack.c.l.b16 %v8929
          %v9033 = vunpack.c.l.b16 %v8930
          %v9034 = vunpack.c.l.b16 %v8931
          %v9035 = vunpack.c.l.b16 %v8932
          %v9036 = vunpack.c.l.b16 %v8933
          %v9037 = vunpack.c.l.b16 %v8934
          %v9038 = vunpack.c.l.b16 %v8935
          %v9039 = vunpack.c.l.b16 %v8936
          %v9040 = vunpack.c.l.b16 %v8937
          %v9041 = vunpack.c.l.b16 %v8938
          %v9042 = vunpack.c.l.b16 %v8939
          %v9043 = vunpack.c.l.b16 %v8940
          %v9044 = vunpack.c.l.b16 %v8941
          %v9045 = vunpack.c.l.b16 %v8942
          %v9046 = vunpack.c.l.b16 %v8943
          %v9047 = vunpack.c.l.b16 %v8944
          %v9048 = vunpack.c.l.b16 %v8945
          %v9049 = vunpack.c.l.b16 %v8946
          %v9050 = vunpack.c.l.b16 %v8947
          %v9051 = vunpack.c.l.b16 %v8948
          %v9052 = vunpack.c.l.b16 %v8949
          %v9053 = vunpack.c.l.b16 %v8950
          %v9054 = vunpack.c.l.b16 %v8951
          %v9055 = vunpack.c.l.b16 %v8952
          %v9056 = vunpack.c.l.b16 %v8953
          %v9057 = vunpack.c.l.b16 %v8954
          %v9058 = vunpack.c.l.b16 %v8955
          %v9059 = vunpack.c.l.b16 %v8956
          %v9060 = vunpack.c.l.b16 %v8957
          %v9061 = vunpack.c.l.b16 %v8958
          %v9062 = vunpack.c.l.b16 %v8959
          %v9063 = vpack.c.b16 %v9016, %v9015
          %v9064 = vpack.c.b16 %v9018, %v9017
          %v9065 = vpack.c.b16 %v9020, %v9019
          %v9066 = vpack.c.b16 %v9022, %v9021
          %v9067 = vpack.c.b16 %v9024, %v9023
          %v9068 = vpack.c.b16 %v9026, %v9025
          %v9069 = vpack.c.b16 %v9028, %v9027
          %v9070 = vpack.c.b16 %v9030, %v9029
          %v9071 = vpack.c.b16 %v9032, %v9031
          %v9072 = vpack.c.b16 %v9034, %v9033
          %v9073 = vpack.c.b16 %v9036, %v9035
          %v9074 = vpack.c.b16 %v9038, %v9037
          %v9075 = vpack.c.b16 %v9040, %v9039
          %v9076 = vpack.c.b16 %v9042, %v9041
          %v9077 = vpack.c.b16 %v9044, %v9043
          %v9078 = vpack.c.b16 %v9046, %v9045
          %v9079 = vpack.c.b16 %v9048, %v9047
          %v9080 = vpack.c.b16 %v9050, %v9049
          %v9081 = vpack.c.b16 %v9052, %v9051
          %v9082 = vpack.c.b16 %v9054, %v9053
          %v9083 = vpack.c.b16 %v9056, %v9055
          %v9084 = vpack.c.b16 %v9058, %v9057
          %v9085 = vpack.c.b16 %v9060, %v9059
          %v9086 = vpack.c.b16 %v9062, %v9061
          %9111 = vmatprep.subr.bf16.mxu0 0
          %9112 = vmatpush1.bf16.msra.mxu0 %v9063
          %9113 = vmatprep.subr.bf16.mxu0 0
          %9114 = vmatpush1.bf16.msra.mxu0 %v9064
          %9115 = vmatprep.subr.bf16.mxu0 0
          %9116 = vmatpush1.bf16.msra.mxu0 %v9065
          %9117 = vmatprep.subr.bf16.mxu0 0
          %9118 = vmatpush1.bf16.msra.mxu0 %v9066
          %9119 = vmatprep.subr.bf16.mxu0 0
          %9120 = vmatpush1.bf16.msra.mxu0 %v9067
          %9121 = vmatprep.subr.bf16.mxu0 0
          %9122 = vmatpush1.bf16.msra.mxu0 %v9068
          %9123 = vmatprep.subr.bf16.mxu0 0
          %9124 = vmatpush1.bf16.msra.mxu0 %v9069
          %9125 = vmatprep.subr.bf16.mxu0 0
          %9126 = vmatpush1.bf16.msra.mxu0 %v9070
          %9127 = vmatprep.subr.bf16.mxu0 0
          %9128 = vmatpush1.bf16.msra.mxu0 %v9071
          %9129 = vmatprep.subr.bf16.mxu0 0
          %9130 = vmatpush1.bf16.msra.mxu0 %v9072
          %9131 = vmatprep.subr.bf16.mxu0 0
          %9132 = vmatpush1.bf16.msra.mxu0 %v9073
          %9133 = vmatprep.subr.bf16.mxu0 0
          %9134 = vmatpush1.bf16.msra.mxu0 %v9074
          %9135 = vmatprep.subr.bf16.mxu0 0
          %9136 = vmatpush1.bf16.msra.mxu0 %v9075
          %9137 = vmatprep.subr.bf16.mxu0 0
          %9138 = vmatpush1.bf16.msra.mxu0 %v9076
          %9139 = vmatprep.subr.bf16.mxu0 0
          %9140 = vmatpush1.bf16.msra.mxu0 %v9077
          %9141 = vmatprep.subr.bf16.mxu0 0
          %9142 = vmatpush1.bf16.msra.mxu0 %v9078
          %9143 = vmatprep.mubr.bf16.mxu0 %v8901
          %9144 = vmatmul.mubr.bf16.gmra.mrb[0].mxu0 %v8900
          %v9145 = vpop.f32.mrb[0].mxu0
          %v9146 = vadd.f32 %v8965, %v9145
          %v9147 = vpop.f32.mrb[0].mxu0
          %v9148 = vpop.f32.mrb[0].mxu0
          %v9149 = vadd.f32 %v8965, %v9148
          %v9150 = vpop.f32.mrb[0].mxu0
          %9151 = vmatprep.mubr.bf16.mxu0 %v8904
          %9152 = vmatmul.mubr.bf16.gmra.mrb[0].mxu0 %v8903
          %v9153 = vpop.f32.mrb[0].mxu0
          %v9154 = vadd.f32 %v8965, %v9153
          %v9155 = vpop.f32.mrb[0].mxu0
          %v9156 = vpop.f32.mrb[0].mxu0
          %v9157 = vadd.f32 %v8965, %v9156
          %v9158 = vpop.f32.mrb[0].mxu0
          %9159 = vmatprep.mubr.bf16.mxu0 %v8907
          %9160 = vmatmul.mubr.bf16.gmra.mrb[0].mxu0 %v8906
          %v9161 = vpop.f32.mrb[0].mxu0
          %v9162 = vadd.f32 %v8965, %v9161
          %v9163 = vpop.f32.mrb[0].mxu0
          %v9164 = vpop.f32.mrb[0].mxu0
          %v9165 = vadd.f32 %v8965, %v9164
          %v9166 = vpop.f32.mrb[0].mxu0
          %9167 = vmatprep.mubr.bf16.mxu0 %v8910
          %9168 = vmatmul.mubr.bf16.gmra.mrb[0].mxu0 %v8909
          %v9169 = vpop.f32.mrb[0].mxu0
          %v9170 = vadd.f32 %v8965, %v9169
          %v9171 = vpop.f32.mrb[0].mxu0
          %v9172 = vpop.f32.mrb[0].mxu0
          %v9173 = vadd.f32 %v8965, %v9172
          %v9174 = vpop.f32.mrb[0].mxu0
          %9175 = vdwg.mxu0
          %9176 = vmatprep.subr.bf16.mxu0 0
          %9177 = vmatpush1.bf16.msra.mxu0 %v9079
          %9178 = vmatprep.subr.bf16.mxu0 0
          %9179 = vmatpush1.bf16.msra.mxu0 %v9080
          %9180 = vmatprep.subr.bf16.mxu0 0
          %9181 = vmatpush1.bf16.msra.mxu0 %v9081
          %9182 = vmatprep.subr.bf16.mxu0 0
          %9183 = vmatpush1.bf16.msra.mxu0 %v9082
          %9184 = vmatprep.subr.bf16.mxu0 0
          %9185 = vmatpush1.bf16.msra.mxu0 %v9083
          %9186 = vmatprep.subr.bf16.mxu0 0
          %9187 = vmatpush1.bf16.msra.mxu0 %v9084
          %9188 = vmatprep.subr.bf16.mxu0 0
          %9189 = vmatpush1.bf16.msra.mxu0 %v9085
          %9190 = vmatprep.subr.bf16.mxu0 0
          %9191 = vmatpush1.bf16.msra.mxu0 %v9086
          %9192 = vmatprep.subr.bf16.mxu0 0
          %9193 = vmatpush1.bf16.msra.mxu0 0
          %9194 = vmatprep.subr.bf16.mxu0 0
          %9195 = vmatpush1.bf16.msra.mxu0 0
          %9196 = vmatprep.subr.bf16.mxu0 0
          %9197 = vmatpush1.bf16.msra.mxu0 0
          %9198 = vmatprep.subr.bf16.mxu0 0
          %9199 = vmatpush1.bf16.msra.mxu0 0
          %9200 = vmatprep.subr.bf16.mxu0 0
          %9201 = vmatpush1.bf16.msra.mxu0 0
          %9202 = vmatprep.subr.bf16.mxu0 0
          %9203 = vmatpush1.bf16.msra.mxu0 0
          %9204 = vmatprep.subr.bf16.mxu0 0
          %9205 = vmatpush1.bf16.msra.mxu0 0
          %9206 = vmatprep.subr.bf16.mxu0 0
          %9207 = vmatpush1.bf16.msra.mxu0 0
          %9208 = vmatprep.mubr.bf16.mxu0 0
          %9209 = vmatmul.mubr.bf16.gmra.mrb[0].mxu0 %v8902
          %v9210 = vpop.f32.mrb[0].mxu0
          %v9211 = vadd.f32 %v9146, %v9210
          %v9212 = vpop.f32.mrb[0].mxu0
          %v9213 = vpop.f32.mrb[0].mxu0
          %v9214 = vadd.f32 %v9149, %v9213
          %v9215 = vpop.f32.mrb[0].mxu0
          %9216 = vmatprep.mubr.bf16.mxu0 0
          %9217 = vmatmul.mubr.bf16.gmra.mrb[0].mxu0 %v8905
          %v9218 = vpop.f32.mrb[0].mxu0
          %v9219 = vadd.f32 %v9154, %v9218
          %v9220 = vpop.f32.mrb[0].mxu0
          %v9221 = vpop.f32.mrb[0].mxu0
          %v9222 = vadd.f32 %v9157, %v9221
          %v9223 = vpop.f32.mrb[0].mxu0
          %9224 = vmatprep.mubr.bf16.mxu0 0
          %9225 = vmatmul.mubr.bf16.gmra.mrb[0].mxu0 %v8908
          %v9226 = vpop.f32.mrb[0].mxu0
          %v9227 = vadd.f32 %v9162, %v9226
          %v9228 = vpop.f32.mrb[0].mxu0
          %v9229 = vpop.f32.mrb[0].mxu0
          %v9230 = vadd.f32 %v9165, %v9229
          %v9231 = vpop.f32.mrb[0].mxu0
          %9232 = vmatprep.mubr.bf16.mxu0 0
          %9233 = vmatmul.mubr.bf16.gmra.mrb[0].mxu0 %v8911
          %v9234 = vpop.f32.mrb[0].mxu0
          %v9235 = vadd.f32 %v9170, %v9234
          %v9236 = vpop.f32.mrb[0].mxu0
          %v9237 = vpop.f32.mrb[0].mxu0
          %v9238 = vadd.f32 %v9173, %v9237
          %v9239 = vpop.f32.mrb[0].mxu0
          %9240 = vdwg.mxu0
          %9241 = vst [vmem:[#allocation30] sm:$0xff] %v9211
          %9242 = vst [vmem:[#allocation30 + $0x8] sm:$0xff] %v9214
          %9243 = vst [vmem:[#allocation30 + $0x10] sm:$0xff] %v9219
          %9244 = vst [vmem:[#allocation30 + $0x18] sm:$0xff] %v9222
          %9245 = vst [vmem:[#allocation30 + $0x20] sm:$0xff] %v9227
          %9246 = vst [vmem:[#allocation30 + $0x28] sm:$0xff] %v9230
          %9247 = vst [vmem:[#allocation30 + $0x30] sm:$0xff] %v9235
          %9248 = vst [vmem:[#allocation30 + $0x38] sm:$0xff] %v9238
        $region176: #{tpu_custom_call.1} parent=95 // pred_fallthru
          _
        // Predicated region
        $region177: #{tpu_custom_call.1} parent=95 // pred_check
          %p9249 = pneg %p473
        $region178: #{tpu_custom_call.1} parent=95 // pred_check_branch
          %9251 = sbr.rel (%p9249) target = $region180
        $region179: #{tpu_custom_call.1} parent=95 // pred_region
          %s9253 = ssub.s32 1024, 1024
          %9254 = vsyncadd [#allocation5], %s9253
          %s9255 = sshll.u32 [#allocation30], 4
          %s9256 = int_to_ptr.vmem [resolvable:$true] %s9255
          %9261 = dma.vmem_to_hbm [thread:$0]  %s9256, 1024, %s19, [#allocation5], 128, 128, 8
        $region180: #{tpu_custom_call.1} parent=95 // pred_fallthru
          _
        // Predicated region
        $region181: #{tpu_custom_call.1} parent=95 // pred_check
          %p9262 = pneg %p473
        $region182: #{tpu_custom_call.1} parent=95 // pred_check_branch
          %9264 = sbr.rel (%p9262) target = $region184
        $region183: #{tpu_custom_call.1} parent=95 // pred_region
          %9265 = dma.done [#allocation5], 1024
        $region184: #{tpu_custom_call.1} parent=95 // pred_fallthru
          _
      $region96: #{tpu_custom_call.1} parent=5 // pred_fallthru
        _
      %p9266 = scmp.le.s32.totalorder 2, %s36
      // Predicated region
      $region185: #{tpu_custom_call.1} parent=5 // pred_check
        %p9267 = pneg %p9266
      $region186: #{tpu_custom_call.1} parent=5 // pred_check_branch
        %9269 = sbr.rel (%p9267) target = $region188
      $region187: #{tpu_custom_call.1} parent=5 // pred_region
        %s9270 = ssub.s32 %s36, 2
      $region188: #{tpu_custom_call.1} parent=5 // pred_fallthru
        _
    $region6: #{tpu_custom_call.1} parent=1 // loop_footer
      %s40 = sadd.s32 1, %s36
    $region7: #{tpu_custom_call.1} parent=1 // loop_footer_branch
      %35 = sbr.rel target = $region3
    $region8: #{tpu_custom_call.1} parent=1 // loop_exit
      _
    %9271 = vsyncpa [#allocation4], 1
    %s9272 = scalar_lea.sflag [#allocation4], 1
    %9273 = vsyncpa %s9272, 1
    %9274 = vsyncpa [#allocation7], 1
    %9275 = vsyncpa [#allocation10], 1
    %9276 = vsyncpa [#allocation13], 1
    %s9277 = scalar_lea.sflag [#allocation13], 1
    %9278 = vsyncpa %s9277, 1
    %9279 = vsyncpa [#allocation16], 1
    %9280 = vsyncpa [#allocation19], 1
    %9281 = vsyncpa [#allocation26], 1
    %9282 = vsyncpa [#allocation29], 1
    %9283 = vsyncpa [#allocation5], 1
    %s9284 = scalar_lea.sflag [#allocation5], 1
    %9285 = vsyncpa %s9284, 1

</llo_original>
